<compile_context>
chip_gen: v7x
topology: tpu7x:2x2x1
jax: 0.10.0
libtpu: 0.0.40
codegen_flags: <defaults>
</compile_context>

<pallas_src>
import jax
import jax.numpy as jnp
from jax.experimental import pallas as pl
from jax.experimental.pallas import tpu as pltpu


# ---------------------------------------------------------------------------
# Flat layouts used inside the kernel (lane dim = channels)
# ---------------------------------------------------------------------------
#   x_ref  : (584, 3)    row = h*24 + w          rows 576..583 zero padding
#   y1_ref : (528, 64)   row = ho*24 + wo        conv1+ReLU (wo >= 22 garbage)
#   p1_ref : (192, 64)   row = i*16 + j          pool1      (j >= 11 zero pad)
#   y2_ref : (144, 128)  row = ho*16 + wo        conv2+ReLU (wo >= 9 garbage)
# Garbage rows are never read by any valid downstream element (verified by the
# index arithmetic: valid outputs only ever touch valid/zero rows).
X_ROWS = 584
Y1_ROWS = 528
P1_STRIDE = 16
P1_ROWS = 192
Y2_ROWS = 144


def _image_evaluator_kernel(x_ref, w1_ref, b1_ref, w2_ref, b2_ref,
                            wfc_ref, bfc_ref, o_ref,
                            y1_ref, p1_ref, y2_ref):
    f32 = jnp.float32

    # ---- Conv2d(3, 64, k=3) + ReLU : 9 per-tap matmuls, K = Cin = 3 ----------
    acc1 = jnp.zeros((Y1_ROWS, 64), f32)
    for kh in range(3):
        for kw in range(3):
            off = kh * 24 + kw                         # shifted flat view
            acc1 = acc1 + jnp.dot(x_ref[off:off + Y1_ROWS, :],      # (528, 3)
                                  w1_ref[kh * 3 + kw],              # (3, 64)
                                  preferred_element_type=f32)
    y1_ref[...] = jnp.maximum(acc1 + b1_ref[...], 0.0)              # (528, 64)

    # ---- MaxPool2d(2,2): (22,22,64) -> (11,11,64), stored at row i*16 + j ----
    p1_ref[...] = jnp.zeros_like(p1_ref)               # also zeroes pad rows
    for i in range(11):
        base = 2 * i * 24                              # 8-aligned
        a = y1_ref[pl.ds(base,      11, stride=2), :]  # (2i,   2j)
        b = y1_ref[pl.ds(base + 1,  11, stride=2), :]  # (2i,   2j+1)
        c = y1_ref[pl.ds(base + 24, 11, stride=2), :]  # (2i+1, 2j)
        d = y1_ref[pl.ds(base + 25, 11, stride=2), :]  # (2i+1, 2j+1)
        p1_ref[i * P1_STRIDE:i * P1_STRIDE + 11, :] = jnp.maximum(
            jnp.maximum(a, b), jnp.maximum(c, d))

    # ---- Conv2d(64, 128, k=3) + ReLU : 9 per-tap matmuls, K = Cin = 64 -------
    acc2 = jnp.zeros((Y2_ROWS, 128), f32)
    for kh in range(3):
        for kw in range(3):
            off = kh * P1_STRIDE + kw
            acc2 = acc2 + jnp.dot(p1_ref[off:off + Y2_ROWS, :],     # (144, 64)
                                  w2_ref[kh * 3 + kw],              # (64, 128)
                                  preferred_element_type=f32)
    y2_ref[...] = jnp.maximum(acc2 + b2_ref[...], 0.0)              # (144, 128)

    # ---- MaxPool2d(2,2) (9,9,128)->(4,4,128) fused with fc (VPU mul+reduce) --
    fc_acc = jnp.zeros((4, 128), f32)
    for i2 in range(4):
        base = 2 * i2 * P1_STRIDE                      # 8-aligned
        a = y2_ref[pl.ds(base,                 4, stride=2), :]
        b = y2_ref[pl.ds(base + 1,             4, stride=2), :]
        c = y2_ref[pl.ds(base + P1_STRIDE,     4, stride=2), :]
        d = y2_ref[pl.ds(base + P1_STRIDE + 1, 4, stride=2), :]
        pooled = jnp.maximum(jnp.maximum(a, b), jnp.maximum(c, d))  # (4, 128)
        fc_acc = fc_acc + pooled * wfc_ref[i2 * 4:(i2 + 1) * 4, :]
    s = jnp.sum(fc_acc, axis=0, keepdims=True)         # (1, 128)  sublane red.
    s = jnp.sum(s, axis=1, keepdims=True)              # (1, 1)    lane red.
    # lane-dense (8,128) output slab; score replicated, wrapper reads [0, 0].
    o_ref[...] = jnp.broadcast_to(s + bfc_ref[...], (8, 128))


# ---------------------------------------------------------------------------
# Wrapper
# ---------------------------------------------------------------------------
def image_evaluator_forward(image_nchw, params):
    """Matches ImageEvaluator.forward. image_nchw: (1, 3, 24, 24) float32."""
    assert image_nchw.shape[0] == 1, "module is used at batch 1"
    x = jnp.transpose(image_nchw, (0, 2, 3, 1))[0]                # (24, 24, 3)
    x_flat = x.reshape(24 * 24, 3).astype(jnp.float32)
    x_flat = jnp.pad(x_flat, ((0, X_ROWS - 576), (0, 0)))         # (584, 3)

    w1 = params["w1"].reshape(9, 3, 64).astype(jnp.float32)       # (tap,Ci,Co)
    b1 = params["b1"].reshape(1, 64).astype(jnp.float32)
    w2 = params["w2"].reshape(9, 64, 128).astype(jnp.float32)
    b2 = params["b2"].reshape(1, 128).astype(jnp.float32)
    # NHWC flatten order (h, w, c); a real PyTorch checkpoint (NCHW flatten)
    # would need a host-side permutation of wfc here.
    wfc = params["wfc"].reshape(16, 128).astype(jnp.float32)
    bfc = params["bfc"].reshape(1, 1).astype(jnp.float32)

    vmem = pl.BlockSpec(memory_space=pltpu.MemorySpace.VMEM)
    out = pl.pallas_call(
        _image_evaluator_kernel,
        out_shape=jax.ShapeDtypeStruct((8, 128), jnp.float32),
        in_specs=[vmem] * 7,
        out_specs=vmem,
        scratch_shapes=[
            pltpu.VMEM((Y1_ROWS, 64), jnp.float32),   # conv1 + ReLU
            pltpu.VMEM((P1_ROWS, 64), jnp.float32),   # pool1
            pltpu.VMEM((Y2_ROWS, 128), jnp.float32),  # conv2 + ReLU
        ],
    )(x_flat, w1, b1, w2, b2, wfc, bfc)
    return out[0:1, 0:1]                                          # (1, 1) score


# ---------------------------------------------------------------------------
# Pure-JAX reference (sanity check) and synthetic params
# ---------------------------------------------------------------------------
def reference_forward(image_nchw, params):
    x = jnp.transpose(image_nchw, (0, 2, 3, 1))
    hi = jax.lax.Precision.HIGHEST

    def conv_relu(x, w, b):
        y = jax.lax.conv_general_dilated(
            x, w, window_strides=(1, 1), padding="VALID",
            dimension_numbers=("NHWC", "HWIO", "NHWC"), precision=hi)
        return jax.nn.relu(y + b)

    def pool(x):
        return jax.lax.reduce_window(x, -jnp.inf, jax.lax.max,
                                     (1, 2, 2, 1), (1, 2, 2, 1), "VALID")

    y = pool(conv_relu(x, params["w1"], params["b1"]))
    y = pool(conv_relu(y, params["w2"], params["b2"]))
    feat = y.reshape(x.shape[0], -1)
    return jnp.dot(feat, params["wfc"], precision=hi) + params["bfc"]


def init_params(key):
    k1, k2, k3, k4, k5, k6 = jax.random.split(key, 6)
    return {
        "w1": jax.random.normal(k1, (3, 3, 3, 64), jnp.float32) * 0.1,     # HWIO
        "b1": jax.random.normal(k2, (64,), jnp.float32) * 0.1,
        "w2": jax.random.normal(k3, (3, 3, 64, 128), jnp.float32) * 0.05,  # HWIO
        "b2": jax.random.normal(k4, (128,), jnp.float32) * 0.1,
        "wfc": jax.random.normal(k5, (2048, 1), jnp.float32) * 0.02,
        "bfc": jax.random.normal(k6, (1,), jnp.float32) * 0.1,
    }


if __name__ == "__main__":
    root = jax.random.PRNGKey(0)
    kp, kx = jax.random.split(root)

    params = init_params(kp)
    # evaluate_generated_image unsqueezes to batch 1; 24x24x3 input is the
    # spatial size implied by fc = Linear(128*4*4, 1).
    image = jax.random.normal(kx, (1, 3, 24, 24), jnp.float32)   # NCHW

    fwd = jax.jit(image_evaluator_forward)
    score = jax.block_until_ready(fwd(image, params))

    ref = jax.block_until_ready(reference_forward(image, params))
    assert score.shape == (1, 1)
    assert jnp.allclose(score, ref, rtol=2e-3, atol=2e-3), (score, ref)

    print("KERNEL_OK")
</pallas_src>

<mosaic_0001>
module attributes {stable_mosaic.version = 11 : i64} {
  func.func @_image_evaluator_kernel(%arg0: memref<584x3xf32, #tpu.memory_space<vmem>>, %arg1: memref<9x3x64xf32, #tpu.memory_space<vmem>>, %arg2: memref<1x64xf32, #tpu.memory_space<vmem>>, %arg3: memref<9x64x128xf32, #tpu.memory_space<vmem>>, %arg4: memref<1x128xf32, #tpu.memory_space<vmem>>, %arg5: memref<16x128xf32, #tpu.memory_space<vmem>>, %arg6: memref<1x1xf32, #tpu.memory_space<vmem>>, %arg7: memref<8x128xf32, #tpu.memory_space<vmem>>, %arg8: memref<528x64xf32, #tpu.memory_space<vmem>>, %arg9: memref<192x64xf32, #tpu.memory_space<vmem>>, %arg10: memref<144x128xf32, #tpu.memory_space<vmem>>) attributes {dimension_semantics = [], scalar_prefetch = 0 : i64, scratch_operands = 3 : i64, tpu.core_type = #tpu.core_type<tc>} {
    %cst = arith.constant 0.000000e+00 : f32
    %0 = vector.broadcast %cst : f32 to vector<528x64xf32>
    %c0 = arith.constant 0 : index
    %c0_0 = arith.constant 0 : index
    %1 = vector.load %arg0[%c0, %c0_0] : memref<584x3xf32, #tpu.memory_space<vmem>>, vector<528x3xf32>
    %c0_1 = arith.constant 0 : index
    %c0_2 = arith.constant 0 : index
    %c0_3 = arith.constant 0 : index
    %2 = vector.load %arg1[%c0_1, %c0_2, %c0_3] : memref<9x3x64xf32, #tpu.memory_space<vmem>>, vector<1x3x64xf32>
    %3 = vector.shape_cast %2 : vector<1x3x64xf32> to vector<3x64xf32>
    %cst_4 = arith.constant dense<0.000000e+00> : vector<528x64xf32>
    %4 = tpu.matmul %1, %3, %cst_4 {dimension_numbers = #tpu.dot_dimension_numbers<[1], [0], [0], [1], [0, 0, 1, 1], [], []>} : vector<528x3xf32>, vector<3x64xf32>, vector<528x64xf32> -> vector<528x64xf32>
    %5 = arith.addf %0, %4 : vector<528x64xf32>
    %c1 = arith.constant 1 : index
    %c0_5 = arith.constant 0 : index
    %6 = vector.load %arg0[%c1, %c0_5] : memref<584x3xf32, #tpu.memory_space<vmem>>, vector<528x3xf32>
    %c1_6 = arith.constant 1 : index
    %c0_7 = arith.constant 0 : index
    %c0_8 = arith.constant 0 : index
    %7 = vector.load %arg1[%c1_6, %c0_7, %c0_8] : memref<9x3x64xf32, #tpu.memory_space<vmem>>, vector<1x3x64xf32>
    %8 = vector.shape_cast %7 : vector<1x3x64xf32> to vector<3x64xf32>
    %cst_9 = arith.constant dense<0.000000e+00> : vector<528x64xf32>
    %9 = tpu.matmul %6, %8, %cst_9 {dimension_numbers = #tpu.dot_dimension_numbers<[1], [0], [0], [1], [0, 0, 1, 1], [], []>} : vector<528x3xf32>, vector<3x64xf32>, vector<528x64xf32> -> vector<528x64xf32>
    %10 = arith.addf %5, %9 : vector<528x64xf32>
    %c2 = arith.constant 2 : index
    %c0_10 = arith.constant 0 : index
    %11 = vector.load %arg0[%c2, %c0_10] : memref<584x3xf32, #tpu.memory_space<vmem>>, vector<528x3xf32>
    %c2_11 = arith.constant 2 : index
    %c0_12 = arith.constant 0 : index
    %c0_13 = arith.constant 0 : index
    %12 = vector.load %arg1[%c2_11, %c0_12, %c0_13] : memref<9x3x64xf32, #tpu.memory_space<vmem>>, vector<1x3x64xf32>
    %13 = vector.shape_cast %12 : vector<1x3x64xf32> to vector<3x64xf32>
    %cst_14 = arith.constant dense<0.000000e+00> : vector<528x64xf32>
    %14 = tpu.matmul %11, %13, %cst_14 {dimension_numbers = #tpu.dot_dimension_numbers<[1], [0], [0], [1], [0, 0, 1, 1], [], []>} : vector<528x3xf32>, vector<3x64xf32>, vector<528x64xf32> -> vector<528x64xf32>
    %15 = arith.addf %10, %14 : vector<528x64xf32>
    %c24 = arith.constant 24 : index
    %c0_15 = arith.constant 0 : index
    %16 = vector.load %arg0[%c24, %c0_15] : memref<584x3xf32, #tpu.memory_space<vmem>>, vector<528x3xf32>
    %c3 = arith.constant 3 : index
    %c0_16 = arith.constant 0 : index
    %c0_17 = arith.constant 0 : index
    %17 = vector.load %arg1[%c3, %c0_16, %c0_17] : memref<9x3x64xf32, #tpu.memory_space<vmem>>, vector<1x3x64xf32>
    %18 = vector.shape_cast %17 : vector<1x3x64xf32> to vector<3x64xf32>
    %cst_18 = arith.constant dense<0.000000e+00> : vector<528x64xf32>
    %19 = tpu.matmul %16, %18, %cst_18 {dimension_numbers = #tpu.dot_dimension_numbers<[1], [0], [0], [1], [0, 0, 1, 1], [], []>} : vector<528x3xf32>, vector<3x64xf32>, vector<528x64xf32> -> vector<528x64xf32>
    %20 = arith.addf %15, %19 : vector<528x64xf32>
    %c25 = arith.constant 25 : index
    %c0_19 = arith.constant 0 : index
    %21 = vector.load %arg0[%c25, %c0_19] : memref<584x3xf32, #tpu.memory_space<vmem>>, vector<528x3xf32>
    %c4 = arith.constant 4 : index
    %c0_20 = arith.constant 0 : index
    %c0_21 = arith.constant 0 : index
    %22 = vector.load %arg1[%c4, %c0_20, %c0_21] : memref<9x3x64xf32, #tpu.memory_space<vmem>>, vector<1x3x64xf32>
    %23 = vector.shape_cast %22 : vector<1x3x64xf32> to vector<3x64xf32>
    %cst_22 = arith.constant dense<0.000000e+00> : vector<528x64xf32>
    %24 = tpu.matmul %21, %23, %cst_22 {dimension_numbers = #tpu.dot_dimension_numbers<[1], [0], [0], [1], [0, 0, 1, 1], [], []>} : vector<528x3xf32>, vector<3x64xf32>, vector<528x64xf32> -> vector<528x64xf32>
    %25 = arith.addf %20, %24 : vector<528x64xf32>
    %c26 = arith.constant 26 : index
    %c0_23 = arith.constant 0 : index
    %26 = vector.load %arg0[%c26, %c0_23] : memref<584x3xf32, #tpu.memory_space<vmem>>, vector<528x3xf32>
    %c5 = arith.constant 5 : index
    %c0_24 = arith.constant 0 : index
    %c0_25 = arith.constant 0 : index
    %27 = vector.load %arg1[%c5, %c0_24, %c0_25] : memref<9x3x64xf32, #tpu.memory_space<vmem>>, vector<1x3x64xf32>
    %28 = vector.shape_cast %27 : vector<1x3x64xf32> to vector<3x64xf32>
    %cst_26 = arith.constant dense<0.000000e+00> : vector<528x64xf32>
    %29 = tpu.matmul %26, %28, %cst_26 {dimension_numbers = #tpu.dot_dimension_numbers<[1], [0], [0], [1], [0, 0, 1, 1], [], []>} : vector<528x3xf32>, vector<3x64xf32>, vector<528x64xf32> -> vector<528x64xf32>
    %30 = arith.addf %25, %29 : vector<528x64xf32>
    %c48 = arith.constant 48 : index
    %c0_27 = arith.constant 0 : index
    %31 = vector.load %arg0[%c48, %c0_27] : memref<584x3xf32, #tpu.memory_space<vmem>>, vector<528x3xf32>
    %c6 = arith.constant 6 : index
    %c0_28 = arith.constant 0 : index
    %c0_29 = arith.constant 0 : index
    %32 = vector.load %arg1[%c6, %c0_28, %c0_29] : memref<9x3x64xf32, #tpu.memory_space<vmem>>, vector<1x3x64xf32>
    %33 = vector.shape_cast %32 : vector<1x3x64xf32> to vector<3x64xf32>
    %cst_30 = arith.constant dense<0.000000e+00> : vector<528x64xf32>
    %34 = tpu.matmul %31, %33, %cst_30 {dimension_numbers = #tpu.dot_dimension_numbers<[1], [0], [0], [1], [0, 0, 1, 1], [], []>} : vector<528x3xf32>, vector<3x64xf32>, vector<528x64xf32> -> vector<528x64xf32>
    %35 = arith.addf %30, %34 : vector<528x64xf32>
    %c49 = arith.constant 49 : index
    %c0_31 = arith.constant 0 : index
    %36 = vector.load %arg0[%c49, %c0_31] : memref<584x3xf32, #tpu.memory_space<vmem>>, vector<528x3xf32>
    %c7 = arith.constant 7 : index
    %c0_32 = arith.constant 0 : index
    %c0_33 = arith.constant 0 : index
    %37 = vector.load %arg1[%c7, %c0_32, %c0_33] : memref<9x3x64xf32, #tpu.memory_space<vmem>>, vector<1x3x64xf32>
    %38 = vector.shape_cast %37 : vector<1x3x64xf32> to vector<3x64xf32>
    %cst_34 = arith.constant dense<0.000000e+00> : vector<528x64xf32>
    %39 = tpu.matmul %36, %38, %cst_34 {dimension_numbers = #tpu.dot_dimension_numbers<[1], [0], [0], [1], [0, 0, 1, 1], [], []>} : vector<528x3xf32>, vector<3x64xf32>, vector<528x64xf32> -> vector<528x64xf32>
    %40 = arith.addf %35, %39 : vector<528x64xf32>
    %c50 = arith.constant 50 : index
    %c0_35 = arith.constant 0 : index
    %41 = vector.load %arg0[%c50, %c0_35] : memref<584x3xf32, #tpu.memory_space<vmem>>, vector<528x3xf32>
    %c8 = arith.constant 8 : index
    %c0_36 = arith.constant 0 : index
    %c0_37 = arith.constant 0 : index
    %42 = vector.load %arg1[%c8, %c0_36, %c0_37] : memref<9x3x64xf32, #tpu.memory_space<vmem>>, vector<1x3x64xf32>
    %43 = vector.shape_cast %42 : vector<1x3x64xf32> to vector<3x64xf32>
    %cst_38 = arith.constant dense<0.000000e+00> : vector<528x64xf32>
    %44 = tpu.matmul %41, %43, %cst_38 {dimension_numbers = #tpu.dot_dimension_numbers<[1], [0], [0], [1], [0, 0, 1, 1], [], []>} : vector<528x3xf32>, vector<3x64xf32>, vector<528x64xf32> -> vector<528x64xf32>
    %45 = arith.addf %40, %44 : vector<528x64xf32>
    %c0_39 = arith.constant 0 : index
    %c0_40 = arith.constant 0 : index
    %46 = vector.load %arg2[%c0_39, %c0_40] : memref<1x64xf32, #tpu.memory_space<vmem>>, vector<1x64xf32>
    %47 = vector.broadcast %46 : vector<1x64xf32> to vector<528x64xf32>
    %48 = arith.addf %45, %47 : vector<528x64xf32>
    %cst_41 = arith.constant 0.000000e+00 : f32
    %49 = vector.broadcast %cst_41 : f32 to vector<528x64xf32>
    %50 = arith.maximumf %48, %49 : vector<528x64xf32>
    %c0_42 = arith.constant 0 : index
    %c0_43 = arith.constant 0 : index
    %51 = vector.load %arg8[%c0_42, %c0_43] : memref<528x64xf32, #tpu.memory_space<vmem>>, vector<528x64xf32>
    tpu.vector_store %arg8[%c0_42, %c0_43], %50 {strides = array<i32>} : memref<528x64xf32, #tpu.memory_space<vmem>>, vector<528x64xf32>,
    %cst_44 = arith.constant 0.000000e+00 : f32
    %52 = vector.broadcast %cst_44 : f32 to vector<192x64xf32>
    %c0_45 = arith.constant 0 : index
    %c0_46 = arith.constant 0 : index
    %53 = vector.load %arg9[%c0_45, %c0_46] : memref<192x64xf32, #tpu.memory_space<vmem>>, vector<192x64xf32>
    tpu.vector_store %arg9[%c0_45, %c0_46], %52 {strides = array<i32>} : memref<192x64xf32, #tpu.memory_space<vmem>>, vector<192x64xf32>,
    %c0_47 = arith.constant 0 : index
    %c0_48 = arith.constant 0 : index
    %54 = tpu.strided_load %arg8[%c0_47, %c0_48] {strides = array<i32: 2, 1>} : memref<528x64xf32, #tpu.memory_space<vmem>>, vector<11x64xf32>
    %c1_49 = arith.constant 1 : index
    %c0_50 = arith.constant 0 : index
    %55 = tpu.strided_load %arg8[%c1_49, %c0_50] {strides = array<i32: 2, 1>} : memref<528x64xf32, #tpu.memory_space<vmem>>, vector<11x64xf32>
    %c24_51 = arith.constant 24 : index
    %c0_52 = arith.constant 0 : index
    %56 = tpu.strided_load %arg8[%c24_51, %c0_52] {strides = array<i32: 2, 1>} : memref<528x64xf32, #tpu.memory_space<vmem>>, vector<11x64xf32>
    %c25_53 = arith.constant 25 : index
    %c0_54 = arith.constant 0 : index
    %57 = tpu.strided_load %arg8[%c25_53, %c0_54] {strides = array<i32: 2, 1>} : memref<528x64xf32, #tpu.memory_space<vmem>>, vector<11x64xf32>
    %58 = arith.maximumf %54, %55 : vector<11x64xf32>
    %59 = arith.maximumf %56, %57 : vector<11x64xf32>
    %60 = arith.maximumf %58, %59 : vector<11x64xf32>
    %c0_55 = arith.constant 0 : index
    %c0_56 = arith.constant 0 : index
    %61 = vector.load %arg9[%c0_55, %c0_56] : memref<192x64xf32, #tpu.memory_space<vmem>>, vector<11x64xf32>
    tpu.vector_store %arg9[%c0_55, %c0_56], %60 {strides = array<i32>} : memref<192x64xf32, #tpu.memory_space<vmem>>, vector<11x64xf32>,
    %c48_57 = arith.constant 48 : index
    %c0_58 = arith.constant 0 : index
    %62 = tpu.strided_load %arg8[%c48_57, %c0_58] {strides = array<i32: 2, 1>} : memref<528x64xf32, #tpu.memory_space<vmem>>, vector<11x64xf32>
    %c49_59 = arith.constant 49 : index
    %c0_60 = arith.constant 0 : index
    %63 = tpu.strided_load %arg8[%c49_59, %c0_60] {strides = array<i32: 2, 1>} : memref<528x64xf32, #tpu.memory_space<vmem>>, vector<11x64xf32>
    %c72 = arith.constant 72 : index
    %c0_61 = arith.constant 0 : index
    %64 = tpu.strided_load %arg8[%c72, %c0_61] {strides = array<i32: 2, 1>} : memref<528x64xf32, #tpu.memory_space<vmem>>, vector<11x64xf32>
    %c73 = arith.constant 73 : index
    %c0_62 = arith.constant 0 : index
    %65 = tpu.strided_load %arg8[%c73, %c0_62] {strides = array<i32: 2, 1>} : memref<528x64xf32, #tpu.memory_space<vmem>>, vector<11x64xf32>
    %66 = arith.maximumf %62, %63 : vector<11x64xf32>
    %67 = arith.maximumf %64, %65 : vector<11x64xf32>
    %68 = arith.maximumf %66, %67 : vector<11x64xf32>
    %c16 = arith.constant 16 : index
    %c0_63 = arith.constant 0 : index
    %69 = vector.load %arg9[%c16, %c0_63] : memref<192x64xf32, #tpu.memory_space<vmem>>, vector<11x64xf32>
    tpu.vector_store %arg9[%c16, %c0_63], %68 {strides = array<i32>} : memref<192x64xf32, #tpu.memory_space<vmem>>, vector<11x64xf32>,
    %c96 = arith.constant 96 : index
    %c0_64 = arith.constant 0 : index
    %70 = tpu.strided_load %arg8[%c96, %c0_64] {strides = array<i32: 2, 1>} : memref<528x64xf32, #tpu.memory_space<vmem>>, vector<11x64xf32>
    %c97 = arith.constant 97 : index
    %c0_65 = arith.constant 0 : index
    %71 = tpu.strided_load %arg8[%c97, %c0_65] {strides = array<i32: 2, 1>} : memref<528x64xf32, #tpu.memory_space<vmem>>, vector<11x64xf32>
    %c120 = arith.constant 120 : index
    %c0_66 = arith.constant 0 : index
    %72 = tpu.strided_load %arg8[%c120, %c0_66] {strides = array<i32: 2, 1>} : memref<528x64xf32, #tpu.memory_space<vmem>>, vector<11x64xf32>
    %c121 = arith.constant 121 : index
    %c0_67 = arith.constant 0 : index
    %73 = tpu.strided_load %arg8[%c121, %c0_67] {strides = array<i32: 2, 1>} : memref<528x64xf32, #tpu.memory_space<vmem>>, vector<11x64xf32>
    %74 = arith.maximumf %70, %71 : vector<11x64xf32>
    %75 = arith.maximumf %72, %73 : vector<11x64xf32>
    %76 = arith.maximumf %74, %75 : vector<11x64xf32>
    %c32 = arith.constant 32 : index
    %c0_68 = arith.constant 0 : index
    %77 = vector.load %arg9[%c32, %c0_68] : memref<192x64xf32, #tpu.memory_space<vmem>>, vector<11x64xf32>
    tpu.vector_store %arg9[%c32, %c0_68], %76 {strides = array<i32>} : memref<192x64xf32, #tpu.memory_space<vmem>>, vector<11x64xf32>,
    %c144 = arith.constant 144 : index
    %c0_69 = arith.constant 0 : index
    %78 = tpu.strided_load %arg8[%c144, %c0_69] {strides = array<i32: 2, 1>} : memref<528x64xf32, #tpu.memory_space<vmem>>, vector<11x64xf32>
    %c145 = arith.constant 145 : index
    %c0_70 = arith.constant 0 : index
    %79 = tpu.strided_load %arg8[%c145, %c0_70] {strides = array<i32: 2, 1>} : memref<528x64xf32, #tpu.memory_space<vmem>>, vector<11x64xf32>
    %c168 = arith.constant 168 : index
    %c0_71 = arith.constant 0 : index
    %80 = tpu.strided_load %arg8[%c168, %c0_71] {strides = array<i32: 2, 1>} : memref<528x64xf32, #tpu.memory_space<vmem>>, vector<11x64xf32>
    %c169 = arith.constant 169 : index
    %c0_72 = arith.constant 0 : index
    %81 = tpu.strided_load %arg8[%c169, %c0_72] {strides = array<i32: 2, 1>} : memref<528x64xf32, #tpu.memory_space<vmem>>, vector<11x64xf32>
    %82 = arith.maximumf %78, %79 : vector<11x64xf32>
    %83 = arith.maximumf %80, %81 : vector<11x64xf32>
    %84 = arith.maximumf %82, %83 : vector<11x64xf32>
    %c48_73 = arith.constant 48 : index
    %c0_74 = arith.constant 0 : index
    %85 = vector.load %arg9[%c48_73, %c0_74] : memref<192x64xf32, #tpu.memory_space<vmem>>, vector<11x64xf32>
    tpu.vector_store %arg9[%c48_73, %c0_74], %84 {strides = array<i32>} : memref<192x64xf32, #tpu.memory_space<vmem>>, vector<11x64xf32>,
    %c192 = arith.constant 192 : index
    %c0_75 = arith.constant 0 : index
    %86 = tpu.strided_load %arg8[%c192, %c0_75] {strides = array<i32: 2, 1>} : memref<528x64xf32, #tpu.memory_space<vmem>>, vector<11x64xf32>
    %c193 = arith.constant 193 : index
    %c0_76 = arith.constant 0 : index
    %87 = tpu.strided_load %arg8[%c193, %c0_76] {strides = array<i32: 2, 1>} : memref<528x64xf32, #tpu.memory_space<vmem>>, vector<11x64xf32>
    %c216 = arith.constant 216 : index
    %c0_77 = arith.constant 0 : index
    %88 = tpu.strided_load %arg8[%c216, %c0_77] {strides = array<i32: 2, 1>} : memref<528x64xf32, #tpu.memory_space<vmem>>, vector<11x64xf32>
    %c217 = arith.constant 217 : index
    %c0_78 = arith.constant 0 : index
    %89 = tpu.strided_load %arg8[%c217, %c0_78] {strides = array<i32: 2, 1>} : memref<528x64xf32, #tpu.memory_space<vmem>>, vector<11x64xf32>
    %90 = arith.maximumf %86, %87 : vector<11x64xf32>
    %91 = arith.maximumf %88, %89 : vector<11x64xf32>
    %92 = arith.maximumf %90, %91 : vector<11x64xf32>
    %c64 = arith.constant 64 : index
    %c0_79 = arith.constant 0 : index
    %93 = vector.load %arg9[%c64, %c0_79] : memref<192x64xf32, #tpu.memory_space<vmem>>, vector<11x64xf32>
    tpu.vector_store %arg9[%c64, %c0_79], %92 {strides = array<i32>} : memref<192x64xf32, #tpu.memory_space<vmem>>, vector<11x64xf32>,
    %c240 = arith.constant 240 : index
    %c0_80 = arith.constant 0 : index
    %94 = tpu.strided_load %arg8[%c240, %c0_80] {strides = array<i32: 2, 1>} : memref<528x64xf32, #tpu.memory_space<vmem>>, vector<11x64xf32>
    %c241 = arith.constant 241 : index
    %c0_81 = arith.constant 0 : index
    %95 = tpu.strided_load %arg8[%c241, %c0_81] {strides = array<i32: 2, 1>} : memref<528x64xf32, #tpu.memory_space<vmem>>, vector<11x64xf32>
    %c264 = arith.constant 264 : index
    %c0_82 = arith.constant 0 : index
    %96 = tpu.strided_load %arg8[%c264, %c0_82] {strides = array<i32: 2, 1>} : memref<528x64xf32, #tpu.memory_space<vmem>>, vector<11x64xf32>
    %c265 = arith.constant 265 : index
    %c0_83 = arith.constant 0 : index
    %97 = tpu.strided_load %arg8[%c265, %c0_83] {strides = array<i32: 2, 1>} : memref<528x64xf32, #tpu.memory_space<vmem>>, vector<11x64xf32>
    %98 = arith.maximumf %94, %95 : vector<11x64xf32>
    %99 = arith.maximumf %96, %97 : vector<11x64xf32>
    %100 = arith.maximumf %98, %99 : vector<11x64xf32>
    %c80 = arith.constant 80 : index
    %c0_84 = arith.constant 0 : index
    %101 = vector.load %arg9[%c80, %c0_84] : memref<192x64xf32, #tpu.memory_space<vmem>>, vector<11x64xf32>
    tpu.vector_store %arg9[%c80, %c0_84], %100 {strides = array<i32>} : memref<192x64xf32, #tpu.memory_space<vmem>>, vector<11x64xf32>,
    %c288 = arith.constant 288 : index
    %c0_85 = arith.constant 0 : index
    %102 = tpu.strided_load %arg8[%c288, %c0_85] {strides = array<i32: 2, 1>} : memref<528x64xf32, #tpu.memory_space<vmem>>, vector<11x64xf32>
    %c289 = arith.constant 289 : index
    %c0_86 = arith.constant 0 : index
    %103 = tpu.strided_load %arg8[%c289, %c0_86] {strides = array<i32: 2, 1>} : memref<528x64xf32, #tpu.memory_space<vmem>>, vector<11x64xf32>
    %c312 = arith.constant 312 : index
    %c0_87 = arith.constant 0 : index
    %104 = tpu.strided_load %arg8[%c312, %c0_87] {strides = array<i32: 2, 1>} : memref<528x64xf32, #tpu.memory_space<vmem>>, vector<11x64xf32>
    %c313 = arith.constant 313 : index
    %c0_88 = arith.constant 0 : index
    %105 = tpu.strided_load %arg8[%c313, %c0_88] {strides = array<i32: 2, 1>} : memref<528x64xf32, #tpu.memory_space<vmem>>, vector<11x64xf32>
    %106 = arith.maximumf %102, %103 : vector<11x64xf32>
    %107 = arith.maximumf %104, %105 : vector<11x64xf32>
    %108 = arith.maximumf %106, %107 : vector<11x64xf32>
    %c96_89 = arith.constant 96 : index
    %c0_90 = arith.constant 0 : index
    %109 = vector.load %arg9[%c96_89, %c0_90] : memref<192x64xf32, #tpu.memory_space<vmem>>, vector<11x64xf32>
    tpu.vector_store %arg9[%c96_89, %c0_90], %108 {strides = array<i32>} : memref<192x64xf32, #tpu.memory_space<vmem>>, vector<11x64xf32>,
    %c336 = arith.constant 336 : index
    %c0_91 = arith.constant 0 : index
    %110 = tpu.strided_load %arg8[%c336, %c0_91] {strides = array<i32: 2, 1>} : memref<528x64xf32, #tpu.memory_space<vmem>>, vector<11x64xf32>
    %c337 = arith.constant 337 : index
    %c0_92 = arith.constant 0 : index
    %111 = tpu.strided_load %arg8[%c337, %c0_92] {strides = array<i32: 2, 1>} : memref<528x64xf32, #tpu.memory_space<vmem>>, vector<11x64xf32>
    %c360 = arith.constant 360 : index
    %c0_93 = arith.constant 0 : index
    %112 = tpu.strided_load %arg8[%c360, %c0_93] {strides = array<i32: 2, 1>} : memref<528x64xf32, #tpu.memory_space<vmem>>, vector<11x64xf32>
    %c361 = arith.constant 361 : index
    %c0_94 = arith.constant 0 : index
    %113 = tpu.strided_load %arg8[%c361, %c0_94] {strides = array<i32: 2, 1>} : memref<528x64xf32, #tpu.memory_space<vmem>>, vector<11x64xf32>
    %114 = arith.maximumf %110, %111 : vector<11x64xf32>
    %115 = arith.maximumf %112, %113 : vector<11x64xf32>
    %116 = arith.maximumf %114, %115 : vector<11x64xf32>
    %c112 = arith.constant 112 : index
    %c0_95 = arith.constant 0 : index
    %117 = vector.load %arg9[%c112, %c0_95] : memref<192x64xf32, #tpu.memory_space<vmem>>, vector<11x64xf32>
    tpu.vector_store %arg9[%c112, %c0_95], %116 {strides = array<i32>} : memref<192x64xf32, #tpu.memory_space<vmem>>, vector<11x64xf32>,
    %c384 = arith.constant 384 : index
    %c0_96 = arith.constant 0 : index
    %118 = tpu.strided_load %arg8[%c384, %c0_96] {strides = array<i32: 2, 1>} : memref<528x64xf32, #tpu.memory_space<vmem>>, vector<11x64xf32>
    %c385 = arith.constant 385 : index
    %c0_97 = arith.constant 0 : index
    %119 = tpu.strided_load %arg8[%c385, %c0_97] {strides = array<i32: 2, 1>} : memref<528x64xf32, #tpu.memory_space<vmem>>, vector<11x64xf32>
    %c408 = arith.constant 408 : index
    %c0_98 = arith.constant 0 : index
    %120 = tpu.strided_load %arg8[%c408, %c0_98] {strides = array<i32: 2, 1>} : memref<528x64xf32, #tpu.memory_space<vmem>>, vector<11x64xf32>
    %c409 = arith.constant 409 : index
    %c0_99 = arith.constant 0 : index
    %121 = tpu.strided_load %arg8[%c409, %c0_99] {strides = array<i32: 2, 1>} : memref<528x64xf32, #tpu.memory_space<vmem>>, vector<11x64xf32>
    %122 = arith.maximumf %118, %119 : vector<11x64xf32>
    %123 = arith.maximumf %120, %121 : vector<11x64xf32>
    %124 = arith.maximumf %122, %123 : vector<11x64xf32>
    %c128 = arith.constant 128 : index
    %c0_100 = arith.constant 0 : index
    %125 = vector.load %arg9[%c128, %c0_100] : memref<192x64xf32, #tpu.memory_space<vmem>>, vector<11x64xf32>
    tpu.vector_store %arg9[%c128, %c0_100], %124 {strides = array<i32>} : memref<192x64xf32, #tpu.memory_space<vmem>>, vector<11x64xf32>,
    %c432 = arith.constant 432 : index
    %c0_101 = arith.constant 0 : index
    %126 = tpu.strided_load %arg8[%c432, %c0_101] {strides = array<i32: 2, 1>} : memref<528x64xf32, #tpu.memory_space<vmem>>, vector<11x64xf32>
    %c433 = arith.constant 433 : index
    %c0_102 = arith.constant 0 : index
    %127 = tpu.strided_load %arg8[%c433, %c0_102] {strides = array<i32: 2, 1>} : memref<528x64xf32, #tpu.memory_space<vmem>>, vector<11x64xf32>
    %c456 = arith.constant 456 : index
    %c0_103 = arith.constant 0 : index
    %128 = tpu.strided_load %arg8[%c456, %c0_103] {strides = array<i32: 2, 1>} : memref<528x64xf32, #tpu.memory_space<vmem>>, vector<11x64xf32>
    %c457 = arith.constant 457 : index
    %c0_104 = arith.constant 0 : index
    %129 = tpu.strided_load %arg8[%c457, %c0_104] {strides = array<i32: 2, 1>} : memref<528x64xf32, #tpu.memory_space<vmem>>, vector<11x64xf32>
    %130 = arith.maximumf %126, %127 : vector<11x64xf32>
    %131 = arith.maximumf %128, %129 : vector<11x64xf32>
    %132 = arith.maximumf %130, %131 : vector<11x64xf32>
    %c144_105 = arith.constant 144 : index
    %c0_106 = arith.constant 0 : index
    %133 = vector.load %arg9[%c144_105, %c0_106] : memref<192x64xf32, #tpu.memory_space<vmem>>, vector<11x64xf32>
    tpu.vector_store %arg9[%c144_105, %c0_106], %132 {strides = array<i32>} : memref<192x64xf32, #tpu.memory_space<vmem>>, vector<11x64xf32>,
    %c480 = arith.constant 480 : index
    %c0_107 = arith.constant 0 : index
    %134 = tpu.strided_load %arg8[%c480, %c0_107] {strides = array<i32: 2, 1>} : memref<528x64xf32, #tpu.memory_space<vmem>>, vector<11x64xf32>
    %c481 = arith.constant 481 : index
    %c0_108 = arith.constant 0 : index
    %135 = tpu.strided_load %arg8[%c481, %c0_108] {strides = array<i32: 2, 1>} : memref<528x64xf32, #tpu.memory_space<vmem>>, vector<11x64xf32>
    %c504 = arith.constant 504 : index
    %c0_109 = arith.constant 0 : index
    %136 = tpu.strided_load %arg8[%c504, %c0_109] {strides = array<i32: 2, 1>} : memref<528x64xf32, #tpu.memory_space<vmem>>, vector<11x64xf32>
    %c505 = arith.constant 505 : index
    %c0_110 = arith.constant 0 : index
    %137 = tpu.strided_load %arg8[%c505, %c0_110] {strides = array<i32: 2, 1>} : memref<528x64xf32, #tpu.memory_space<vmem>>, vector<11x64xf32>
    %138 = arith.maximumf %134, %135 : vector<11x64xf32>
    %139 = arith.maximumf %136, %137 : vector<11x64xf32>
    %140 = arith.maximumf %138, %139 : vector<11x64xf32>
    %c160 = arith.constant 160 : index
    %c0_111 = arith.constant 0 : index
    %141 = vector.load %arg9[%c160, %c0_111] : memref<192x64xf32, #tpu.memory_space<vmem>>, vector<11x64xf32>
    tpu.vector_store %arg9[%c160, %c0_111], %140 {strides = array<i32>} : memref<192x64xf32, #tpu.memory_space<vmem>>, vector<11x64xf32>,
    %cst_112 = arith.constant 0.000000e+00 : f32
    %142 = vector.broadcast %cst_112 : f32 to vector<144x128xf32>
    %c0_113 = arith.constant 0 : index
    %c0_114 = arith.constant 0 : index
    %143 = vector.load %arg9[%c0_113, %c0_114] : memref<192x64xf32, #tpu.memory_space<vmem>>, vector<144x64xf32>
    %c0_115 = arith.constant 0 : index
    %c0_116 = arith.constant 0 : index
    %c0_117 = arith.constant 0 : index
    %144 = vector.load %arg3[%c0_115, %c0_116, %c0_117] : memref<9x64x128xf32, #tpu.memory_space<vmem>>, vector<1x64x128xf32>
    %145 = vector.shape_cast %144 : vector<1x64x128xf32> to vector<64x128xf32>
    %cst_118 = arith.constant dense<0.000000e+00> : vector<144x128xf32>
    %146 = tpu.matmul %143, %145, %cst_118 {dimension_numbers = #tpu.dot_dimension_numbers<[1], [0], [0], [1], [0, 0, 1, 1], [], []>} : vector<144x64xf32>, vector<64x128xf32>, vector<144x128xf32> -> vector<144x128xf32>
    %147 = arith.addf %142, %146 : vector<144x128xf32>
    %c1_119 = arith.constant 1 : index
    %c0_120 = arith.constant 0 : index
    %148 = vector.load %arg9[%c1_119, %c0_120] : memref<192x64xf32, #tpu.memory_space<vmem>>, vector<144x64xf32>
    %c1_121 = arith.constant 1 : index
    %c0_122 = arith.constant 0 : index
    %c0_123 = arith.constant 0 : index
    %149 = vector.load %arg3[%c1_121, %c0_122, %c0_123] : memref<9x64x128xf32, #tpu.memory_space<vmem>>, vector<1x64x128xf32>
    %150 = vector.shape_cast %149 : vector<1x64x128xf32> to vector<64x128xf32>
    %cst_124 = arith.constant dense<0.000000e+00> : vector<144x128xf32>
    %151 = tpu.matmul %148, %150, %cst_124 {dimension_numbers = #tpu.dot_dimension_numbers<[1], [0], [0], [1], [0, 0, 1, 1], [], []>} : vector<144x64xf32>, vector<64x128xf32>, vector<144x128xf32> -> vector<144x128xf32>
    %152 = arith.addf %147, %151 : vector<144x128xf32>
    %c2_125 = arith.constant 2 : index
    %c0_126 = arith.constant 0 : index
    %153 = vector.load %arg9[%c2_125, %c0_126] : memref<192x64xf32, #tpu.memory_space<vmem>>, vector<144x64xf32>
    %c2_127 = arith.constant 2 : index
    %c0_128 = arith.constant 0 : index
    %c0_129 = arith.constant 0 : index
    %154 = vector.load %arg3[%c2_127, %c0_128, %c0_129] : memref<9x64x128xf32, #tpu.memory_space<vmem>>, vector<1x64x128xf32>
    %155 = vector.shape_cast %154 : vector<1x64x128xf32> to vector<64x128xf32>
    %cst_130 = arith.constant dense<0.000000e+00> : vector<144x128xf32>
    %156 = tpu.matmul %153, %155, %cst_130 {dimension_numbers = #tpu.dot_dimension_numbers<[1], [0], [0], [1], [0, 0, 1, 1], [], []>} : vector<144x64xf32>, vector<64x128xf32>, vector<144x128xf32> -> vector<144x128xf32>
    %157 = arith.addf %152, %156 : vector<144x128xf32>
    %c16_131 = arith.constant 16 : index
    %c0_132 = arith.constant 0 : index
    %158 = vector.load %arg9[%c16_131, %c0_132] : memref<192x64xf32, #tpu.memory_space<vmem>>, vector<144x64xf32>
    %c3_133 = arith.constant 3 : index
    %c0_134 = arith.constant 0 : index
    %c0_135 = arith.constant 0 : index
    %159 = vector.load %arg3[%c3_133, %c0_134, %c0_135] : memref<9x64x128xf32, #tpu.memory_space<vmem>>, vector<1x64x128xf32>
    %160 = vector.shape_cast %159 : vector<1x64x128xf32> to vector<64x128xf32>
    %cst_136 = arith.constant dense<0.000000e+00> : vector<144x128xf32>
    %161 = tpu.matmul %158, %160, %cst_136 {dimension_numbers = #tpu.dot_dimension_numbers<[1], [0], [0], [1], [0, 0, 1, 1], [], []>} : vector<144x64xf32>, vector<64x128xf32>, vector<144x128xf32> -> vector<144x128xf32>
    %162 = arith.addf %157, %161 : vector<144x128xf32>
    %c17 = arith.constant 17 : index
    %c0_137 = arith.constant 0 : index
    %163 = vector.load %arg9[%c17, %c0_137] : memref<192x64xf32, #tpu.memory_space<vmem>>, vector<144x64xf32>
    %c4_138 = arith.constant 4 : index
    %c0_139 = arith.constant 0 : index
    %c0_140 = arith.constant 0 : index
    %164 = vector.load %arg3[%c4_138, %c0_139, %c0_140] : memref<9x64x128xf32, #tpu.memory_space<vmem>>, vector<1x64x128xf32>
    %165 = vector.shape_cast %164 : vector<1x64x128xf32> to vector<64x128xf32>
    %cst_141 = arith.constant dense<0.000000e+00> : vector<144x128xf32>
    %166 = tpu.matmul %163, %165, %cst_141 {dimension_numbers = #tpu.dot_dimension_numbers<[1], [0], [0], [1], [0, 0, 1, 1], [], []>} : vector<144x64xf32>, vector<64x128xf32>, vector<144x128xf32> -> vector<144x128xf32>
    %167 = arith.addf %162, %166 : vector<144x128xf32>
    %c18 = arith.constant 18 : index
    %c0_142 = arith.constant 0 : index
    %168 = vector.load %arg9[%c18, %c0_142] : memref<192x64xf32, #tpu.memory_space<vmem>>, vector<144x64xf32>
    %c5_143 = arith.constant 5 : index
    %c0_144 = arith.constant 0 : index
    %c0_145 = arith.constant 0 : index
    %169 = vector.load %arg3[%c5_143, %c0_144, %c0_145] : memref<9x64x128xf32, #tpu.memory_space<vmem>>, vector<1x64x128xf32>
    %170 = vector.shape_cast %169 : vector<1x64x128xf32> to vector<64x128xf32>
    %cst_146 = arith.constant dense<0.000000e+00> : vector<144x128xf32>
    %171 = tpu.matmul %168, %170, %cst_146 {dimension_numbers = #tpu.dot_dimension_numbers<[1], [0], [0], [1], [0, 0, 1, 1], [], []>} : vector<144x64xf32>, vector<64x128xf32>, vector<144x128xf32> -> vector<144x128xf32>
    %172 = arith.addf %167, %171 : vector<144x128xf32>
    %c32_147 = arith.constant 32 : index
    %c0_148 = arith.constant 0 : index
    %173 = vector.load %arg9[%c32_147, %c0_148] : memref<192x64xf32, #tpu.memory_space<vmem>>, vector<144x64xf32>
    %c6_149 = arith.constant 6 : index
    %c0_150 = arith.constant 0 : index
    %c0_151 = arith.constant 0 : index
    %174 = vector.load %arg3[%c6_149, %c0_150, %c0_151] : memref<9x64x128xf32, #tpu.memory_space<vmem>>, vector<1x64x128xf32>
    %175 = vector.shape_cast %174 : vector<1x64x128xf32> to vector<64x128xf32>
    %cst_152 = arith.constant dense<0.000000e+00> : vector<144x128xf32>
    %176 = tpu.matmul %173, %175, %cst_152 {dimension_numbers = #tpu.dot_dimension_numbers<[1], [0], [0], [1], [0, 0, 1, 1], [], []>} : vector<144x64xf32>, vector<64x128xf32>, vector<144x128xf32> -> vector<144x128xf32>
    %177 = arith.addf %172, %176 : vector<144x128xf32>
    %c33 = arith.constant 33 : index
    %c0_153 = arith.constant 0 : index
    %178 = vector.load %arg9[%c33, %c0_153] : memref<192x64xf32, #tpu.memory_space<vmem>>, vector<144x64xf32>
    %c7_154 = arith.constant 7 : index
    %c0_155 = arith.constant 0 : index
    %c0_156 = arith.constant 0 : index
    %179 = vector.load %arg3[%c7_154, %c0_155, %c0_156] : memref<9x64x128xf32, #tpu.memory_space<vmem>>, vector<1x64x128xf32>
    %180 = vector.shape_cast %179 : vector<1x64x128xf32> to vector<64x128xf32>
    %cst_157 = arith.constant dense<0.000000e+00> : vector<144x128xf32>
    %181 = tpu.matmul %178, %180, %cst_157 {dimension_numbers = #tpu.dot_dimension_numbers<[1], [0], [0], [1], [0, 0, 1, 1], [], []>} : vector<144x64xf32>, vector<64x128xf32>, vector<144x128xf32> -> vector<144x128xf32>
    %182 = arith.addf %177, %181 : vector<144x128xf32>
    %c34 = arith.constant 34 : index
    %c0_158 = arith.constant 0 : index
    %183 = vector.load %arg9[%c34, %c0_158] : memref<192x64xf32, #tpu.memory_space<vmem>>, vector<144x64xf32>
    %c8_159 = arith.constant 8 : index
    %c0_160 = arith.constant 0 : index
    %c0_161 = arith.constant 0 : index
    %184 = vector.load %arg3[%c8_159, %c0_160, %c0_161] : memref<9x64x128xf32, #tpu.memory_space<vmem>>, vector<1x64x128xf32>
    %185 = vector.shape_cast %184 : vector<1x64x128xf32> to vector<64x128xf32>
    %cst_162 = arith.constant dense<0.000000e+00> : vector<144x128xf32>
    %186 = tpu.matmul %183, %185, %cst_162 {dimension_numbers = #tpu.dot_dimension_numbers<[1], [0], [0], [1], [0, 0, 1, 1], [], []>} : vector<144x64xf32>, vector<64x128xf32>, vector<144x128xf32> -> vector<144x128xf32>
    %187 = arith.addf %182, %186 : vector<144x128xf32>
    %c0_163 = arith.constant 0 : index
    %c0_164 = arith.constant 0 : index
    %188 = vector.load %arg4[%c0_163, %c0_164] : memref<1x128xf32, #tpu.memory_space<vmem>>, vector<1x128xf32>
    %189 = vector.broadcast %188 : vector<1x128xf32> to vector<144x128xf32>
    %190 = arith.addf %187, %189 : vector<144x128xf32>
    %cst_165 = arith.constant 0.000000e+00 : f32
    %191 = vector.broadcast %cst_165 : f32 to vector<144x128xf32>
    %192 = arith.maximumf %190, %191 : vector<144x128xf32>
    %c0_166 = arith.constant 0 : index
    %c0_167 = arith.constant 0 : index
    %193 = vector.load %arg10[%c0_166, %c0_167] : memref<144x128xf32, #tpu.memory_space<vmem>>, vector<144x128xf32>
    tpu.vector_store %arg10[%c0_166, %c0_167], %192 {strides = array<i32>} : memref<144x128xf32, #tpu.memory_space<vmem>>, vector<144x128xf32>,
    %cst_168 = arith.constant 0.000000e+00 : f32
    %194 = vector.broadcast %cst_168 : f32 to vector<4x128xf32>
    %c0_169 = arith.constant 0 : index
    %c0_170 = arith.constant 0 : index
    %195 = tpu.strided_load %arg10[%c0_169, %c0_170] {strides = array<i32: 2, 1>} : memref<144x128xf32, #tpu.memory_space<vmem>>, vector<4x128xf32>
    %c1_171 = arith.constant 1 : index
    %c0_172 = arith.constant 0 : index
    %196 = tpu.strided_load %arg10[%c1_171, %c0_172] {strides = array<i32: 2, 1>} : memref<144x128xf32, #tpu.memory_space<vmem>>, vector<4x128xf32>
    %c16_173 = arith.constant 16 : index
    %c0_174 = arith.constant 0 : index
    %197 = tpu.strided_load %arg10[%c16_173, %c0_174] {strides = array<i32: 2, 1>} : memref<144x128xf32, #tpu.memory_space<vmem>>, vector<4x128xf32>
    %c17_175 = arith.constant 17 : index
    %c0_176 = arith.constant 0 : index
    %198 = tpu.strided_load %arg10[%c17_175, %c0_176] {strides = array<i32: 2, 1>} : memref<144x128xf32, #tpu.memory_space<vmem>>, vector<4x128xf32>
    %199 = arith.maximumf %195, %196 : vector<4x128xf32>
    %200 = arith.maximumf %197, %198 : vector<4x128xf32>
    %201 = arith.maximumf %199, %200 : vector<4x128xf32>
    %c0_177 = arith.constant 0 : index
    %c0_178 = arith.constant 0 : index
    %202 = vector.load %arg5[%c0_177, %c0_178] : memref<16x128xf32, #tpu.memory_space<vmem>>, vector<4x128xf32>
    %203 = arith.mulf %201, %202 : vector<4x128xf32>
    %204 = arith.addf %194, %203 : vector<4x128xf32>
    %c32_179 = arith.constant 32 : index
    %c0_180 = arith.constant 0 : index
    %205 = tpu.strided_load %arg10[%c32_179, %c0_180] {strides = array<i32: 2, 1>} : memref<144x128xf32, #tpu.memory_space<vmem>>, vector<4x128xf32>
    %c33_181 = arith.constant 33 : index
    %c0_182 = arith.constant 0 : index
    %206 = tpu.strided_load %arg10[%c33_181, %c0_182] {strides = array<i32: 2, 1>} : memref<144x128xf32, #tpu.memory_space<vmem>>, vector<4x128xf32>
    %c48_183 = arith.constant 48 : index
    %c0_184 = arith.constant 0 : index
    %207 = tpu.strided_load %arg10[%c48_183, %c0_184] {strides = array<i32: 2, 1>} : memref<144x128xf32, #tpu.memory_space<vmem>>, vector<4x128xf32>
    %c49_185 = arith.constant 49 : index
    %c0_186 = arith.constant 0 : index
    %208 = tpu.strided_load %arg10[%c49_185, %c0_186] {strides = array<i32: 2, 1>} : memref<144x128xf32, #tpu.memory_space<vmem>>, vector<4x128xf32>
    %209 = arith.maximumf %205, %206 : vector<4x128xf32>
    %210 = arith.maximumf %207, %208 : vector<4x128xf32>
    %211 = arith.maximumf %209, %210 : vector<4x128xf32>
    %c4_187 = arith.constant 4 : index
    %c0_188 = arith.constant 0 : index
    %212 = vector.load %arg5[%c4_187, %c0_188] : memref<16x128xf32, #tpu.memory_space<vmem>>, vector<4x128xf32>
    %213 = arith.mulf %211, %212 : vector<4x128xf32>
    %214 = arith.addf %204, %213 : vector<4x128xf32>
    %c64_189 = arith.constant 64 : index
    %c0_190 = arith.constant 0 : index
    %215 = tpu.strided_load %arg10[%c64_189, %c0_190] {strides = array<i32: 2, 1>} : memref<144x128xf32, #tpu.memory_space<vmem>>, vector<4x128xf32>
    %c65 = arith.constant 65 : index
    %c0_191 = arith.constant 0 : index
    %216 = tpu.strided_load %arg10[%c65, %c0_191] {strides = array<i32: 2, 1>} : memref<144x128xf32, #tpu.memory_space<vmem>>, vector<4x128xf32>
    %c80_192 = arith.constant 80 : index
    %c0_193 = arith.constant 0 : index
    %217 = tpu.strided_load %arg10[%c80_192, %c0_193] {strides = array<i32: 2, 1>} : memref<144x128xf32, #tpu.memory_space<vmem>>, vector<4x128xf32>
    %c81 = arith.constant 81 : index
    %c0_194 = arith.constant 0 : index
    %218 = tpu.strided_load %arg10[%c81, %c0_194] {strides = array<i32: 2, 1>} : memref<144x128xf32, #tpu.memory_space<vmem>>, vector<4x128xf32>
    %219 = arith.maximumf %215, %216 : vector<4x128xf32>
    %220 = arith.maximumf %217, %218 : vector<4x128xf32>
    %221 = arith.maximumf %219, %220 : vector<4x128xf32>
    %c8_195 = arith.constant 8 : index
    %c0_196 = arith.constant 0 : index
    %222 = vector.load %arg5[%c8_195, %c0_196] : memref<16x128xf32, #tpu.memory_space<vmem>>, vector<4x128xf32>
    %223 = arith.mulf %221, %222 : vector<4x128xf32>
    %224 = arith.addf %214, %223 : vector<4x128xf32>
    %c96_197 = arith.constant 96 : index
    %c0_198 = arith.constant 0 : index
    %225 = tpu.strided_load %arg10[%c96_197, %c0_198] {strides = array<i32: 2, 1>} : memref<144x128xf32, #tpu.memory_space<vmem>>, vector<4x128xf32>
    %c97_199 = arith.constant 97 : index
    %c0_200 = arith.constant 0 : index
    %226 = tpu.strided_load %arg10[%c97_199, %c0_200] {strides = array<i32: 2, 1>} : memref<144x128xf32, #tpu.memory_space<vmem>>, vector<4x128xf32>
    %c112_201 = arith.constant 112 : index
    %c0_202 = arith.constant 0 : index
    %227 = tpu.strided_load %arg10[%c112_201, %c0_202] {strides = array<i32: 2, 1>} : memref<144x128xf32, #tpu.memory_space<vmem>>, vector<4x128xf32>
    %c113 = arith.constant 113 : index
    %c0_203 = arith.constant 0 : index
    %228 = tpu.strided_load %arg10[%c113, %c0_203] {strides = array<i32: 2, 1>} : memref<144x128xf32, #tpu.memory_space<vmem>>, vector<4x128xf32>
    %229 = arith.maximumf %225, %226 : vector<4x128xf32>
    %230 = arith.maximumf %227, %228 : vector<4x128xf32>
    %231 = arith.maximumf %229, %230 : vector<4x128xf32>
    %c12 = arith.constant 12 : index
    %c0_204 = arith.constant 0 : index
    %232 = vector.load %arg5[%c12, %c0_204] : memref<16x128xf32, #tpu.memory_space<vmem>>, vector<4x128xf32>
    %233 = arith.mulf %231, %232 : vector<4x128xf32>
    %234 = arith.addf %224, %233 : vector<4x128xf32>
    %cst_205 = arith.constant dense<0.000000e+00> : vector<128xf32>
    %235 = vector.multi_reduction <add>, %234, %cst_205 [0] : vector<4x128xf32> to vector<128xf32>
    %236 = vector.shape_cast %235 : vector<128xf32> to vector<1x128xf32>
    %cst_206 = arith.constant dense<0.000000e+00> : vector<1xf32>
    %237 = vector.multi_reduction <add>, %236, %cst_206 [1] : vector<1x128xf32> to vector<1xf32>
    %238 = vector.shape_cast %237 : vector<1xf32> to vector<1x1xf32>
    %c0_207 = arith.constant 0 : index
    %c0_208 = arith.constant 0 : index
    %239 = vector.load %arg6[%c0_207, %c0_208] : memref<1x1xf32, #tpu.memory_space<vmem>>, vector<1x1xf32>
    %240 = arith.addf %238, %239 : vector<1x1xf32>
    %241 = vector.shape_cast %240 : vector<1x1xf32> to vector<1x1xf32>
    %242 = vector.broadcast %241 : vector<1x1xf32> to vector<8x128xf32>
    %c0_209 = arith.constant 0 : index
    %c0_210 = arith.constant 0 : index
    %243 = vector.load %arg7[%c0_209, %c0_210] : memref<8x128xf32, #tpu.memory_space<vmem>>, vector<8x128xf32>
    tpu.vector_store %arg7[%c0_209, %c0_210], %242 {strides = array<i32>} : memref<8x128xf32, #tpu.memory_space<vmem>>, vector<8x128xf32>,
    return
  }
}

</mosaic_0001>

<llo_original>
// kernel: image_evaluator_forward.1
$region0: #{image_evaluator_forward.1}
  #allocation0 [shape = 'u32[]', space=smem, size = 0x4, offset = 0x4, fixed_abs, tag = 'smem constant byte address 0x4 - core index']
  #allocation1 [shape = 'u32[144,128]{1,0:T(1,128)}', space=vmem, size = 0x12000, scoped, tag = 'internal scratch']
  #allocation2 [shape = 'f32[528,64]{1,0:T(8,128)}', space=vmem, size = 0x42000, scoped, tag = 'scratch operand']
  #allocation3 [shape = 'f32[192,64]{1,0:T(8,128)}', space=vmem, size = 0x18000, scoped, tag = 'scratch operand']
  #allocation4 [shape = 'f32[144,128]{1,0:T(8,128)}', space=vmem, size = 0x12000, scoped, tag = 'scratch operand']
  #allocation5 [shape = 'f32[1,1]{1,0:T(1,128)S(1)}', space=vmem, size = 0x200, scoped, tag = 'scoped memory for image_evaluator_forward.1']
  %s0 = inlined_call_operand.vmem [shape: f32[584,3], index: 0, kind: input, shape index: {}]
  %s1 = inlined_call_operand.vmem [shape: f32[9,3,64], index: 1, kind: input, shape index: {}]
  %s2 = inlined_call_operand.vmem [shape: f32[1,64], index: 2, kind: input, shape index: {}]
  %s3 = inlined_call_operand.vmem [shape: f32[9,64,128], index: 3, kind: input, shape index: {}]
  %s4 = inlined_call_operand.vmem [shape: f32[1,128], index: 4, kind: input, shape index: {}]
  %s5 = inlined_call_operand.vmem [shape: f32[16,128], index: 5, kind: input, shape index: {}]
  %s6 = inlined_call_operand.<no memory space> [shape: f32[1,1], index: 6, kind: input, shape index: {}]
  %s7 = inlined_call_operand.vmem [shape: f32[8,128], index: 7, kind: output, shape index: {}]
  %s8 = sld [smem:[#allocation0]]
  $region38: #{image_evaluator_forward.1} parent=0
    _
  %s10 = ssub.s32 1, %s8
  %s11 = scalar_select 0, %s10, %s8
  %v12 = vstv %s6
  %13 = vst [vmem:[#allocation5] sm:$0x1] %v12
  // Predicated region
  $region2: #{image_evaluator_forward.1} parent=0 // pred_check
    _
  $region3: #{image_evaluator_forward.1} parent=0 // pred_check_branch
    %15 = sbr.rel (0) target = $region5
  $region4: #{image_evaluator_forward.1} parent=0 // pred_region
    _
  $region5: #{image_evaluator_forward.1} parent=0 // pred_fallthru
    _
  // Predicated region
  $region6: #{image_evaluator_forward.1} parent=0 // pred_check
    _
  $region7: #{image_evaluator_forward.1} parent=0 // pred_check_branch
    %17 = sbr.rel (0) target = $region9
  $region8: #{image_evaluator_forward.1} parent=0 // pred_region
    _
  $region9: #{image_evaluator_forward.1} parent=0 // pred_fallthru
    _
  // Predicated region
  $region10: #{image_evaluator_forward.1} parent=0 // pred_check
    _
  $region11: #{image_evaluator_forward.1} parent=0 // pred_check_branch
    %19 = sbr.rel (0) target = $region13
  $region12: #{image_evaluator_forward.1} parent=0 // pred_region
    _
  $region13: #{image_evaluator_forward.1} parent=0 // pred_fallthru
    _
  // Predicated region
  $region14: #{image_evaluator_forward.1} parent=0 // pred_check
    _
  $region15: #{image_evaluator_forward.1} parent=0 // pred_check_branch
    %21 = sbr.rel (0) target = $region17
  $region16: #{image_evaluator_forward.1} parent=0 // pred_region
    _
  $region17: #{image_evaluator_forward.1} parent=0 // pred_fallthru
    _
  // Predicated region
  $region18: #{image_evaluator_forward.1} parent=0 // pred_check
    _
  $region19: #{image_evaluator_forward.1} parent=0 // pred_check_branch
    %23 = sbr.rel (0) target = $region21
  $region20: #{image_evaluator_forward.1} parent=0 // pred_region
    _
  $region21: #{image_evaluator_forward.1} parent=0 // pred_fallthru
    _
  // Predicated region
  $region22: #{image_evaluator_forward.1} parent=0 // pred_check
    _
  $region23: #{image_evaluator_forward.1} parent=0 // pred_check_branch
    %25 = sbr.rel (0) target = $region25
  $region24: #{image_evaluator_forward.1} parent=0 // pred_region
    _
  $region25: #{image_evaluator_forward.1} parent=0 // pred_fallthru
    _
  // Predicated region
  $region26: #{image_evaluator_forward.1} parent=0 // pred_check
    _
  $region27: #{image_evaluator_forward.1} parent=0 // pred_check_branch
    %27 = sbr.rel (0) target = $region29
  $region28: #{image_evaluator_forward.1} parent=0 // pred_region
    _
  $region29: #{image_evaluator_forward.1} parent=0 // pred_fallthru
    _
  %v28 = vld [vmem:[%s0] sm:$0xff]
  %v29 = vld [vmem:[%s0 + $0x8] sm:$0xff]
  %v30 = vld [vmem:[%s0 + $0x10] sm:$0xff]
  %v31 = vld [vmem:[%s0 + $0x18] sm:$0xff]
  %v32 = vld [vmem:[%s0 + $0x20] sm:$0xff]
  %v33 = vld [vmem:[%s0 + $0x28] sm:$0xff]
  %v34 = vld [vmem:[%s0 + $0x30] sm:$0xff]
  %v35 = vld [vmem:[%s0 + $0x38] sm:$0xff]
  %v36 = vld [vmem:[%s0 + $0x40] sm:$0xff]
  %v37 = vld [vmem:[%s0 + $0x48] sm:$0xff]
  %v38 = vld [vmem:[%s0 + $0x50] sm:$0xff]
  %v39 = vld [vmem:[%s0 + $0x58] sm:$0xff]
  %v40 = vld [vmem:[%s0 + $0x60] sm:$0xff]
  %v41 = vld [vmem:[%s0 + $0x68] sm:$0xff]
  %v42 = vld [vmem:[%s0 + $0x70] sm:$0xff]
  %v43 = vld [vmem:[%s0 + $0x78] sm:$0xff]
  %v44 = vld [vmem:[%s0 + $0x80] sm:$0xff]
  %v45 = vld [vmem:[%s0 + $0x88] sm:$0xff]
  %v46 = vld [vmem:[%s0 + $0x90] sm:$0xff]
  %v47 = vld [vmem:[%s0 + $0x98] sm:$0xff]
  %v48 = vld [vmem:[%s0 + $0xa0] sm:$0xff]
  %v49 = vld [vmem:[%s0 + $0xa8] sm:$0xff]
  %v50 = vld [vmem:[%s0 + $0xb0] sm:$0xff]
  %v51 = vld [vmem:[%s0 + $0xb8] sm:$0xff]
  %v52 = vld [vmem:[%s0 + $0xc0] sm:$0xff]
  %v53 = vld [vmem:[%s0 + $0xc8] sm:$0xff]
  %v54 = vld [vmem:[%s0 + $0xd0] sm:$0xff]
  %v55 = vld [vmem:[%s0 + $0xd8] sm:$0xff]
  %v56 = vld [vmem:[%s0 + $0xe0] sm:$0xff]
  %v57 = vld [vmem:[%s0 + $0xe8] sm:$0xff]
  %v58 = vld [vmem:[%s0 + $0xf0] sm:$0xff]
  %v59 = vld [vmem:[%s0 + $0xf8] sm:$0xff]
  %v60 = vld [vmem:[%s0 + $0x100] sm:$0xff]
  %v61 = vld [vmem:[%s0 + $0x108] sm:$0xff]
  %v62 = vld [vmem:[%s0 + $0x110] sm:$0xff]
  %v63 = vld [vmem:[%s0 + $0x118] sm:$0xff]
  %v64 = vld [vmem:[%s0 + $0x120] sm:$0xff]
  %v65 = vld [vmem:[%s0 + $0x128] sm:$0xff]
  %v66 = vld [vmem:[%s0 + $0x130] sm:$0xff]
  %v67 = vld [vmem:[%s0 + $0x138] sm:$0xff]
  %v68 = vld [vmem:[%s0 + $0x140] sm:$0xff]
  %v69 = vld [vmem:[%s0 + $0x148] sm:$0xff]
  %v70 = vld [vmem:[%s0 + $0x150] sm:$0xff]
  %v71 = vld [vmem:[%s0 + $0x158] sm:$0xff]
  %v72 = vld [vmem:[%s0 + $0x160] sm:$0xff]
  %v73 = vld [vmem:[%s0 + $0x168] sm:$0xff]
  %v74 = vld [vmem:[%s0 + $0x170] sm:$0xff]
  %v75 = vld [vmem:[%s0 + $0x178] sm:$0xff]
  %v76 = vld [vmem:[%s0 + $0x180] sm:$0xff]
  %v77 = vld [vmem:[%s0 + $0x188] sm:$0xff]
  %v78 = vld [vmem:[%s0 + $0x190] sm:$0xff]
  %v79 = vld [vmem:[%s0 + $0x198] sm:$0xff]
  %v80 = vld [vmem:[%s0 + $0x1a0] sm:$0xff]
  %v81 = vld [vmem:[%s0 + $0x1a8] sm:$0xff]
  %v82 = vld [vmem:[%s0 + $0x1b0] sm:$0xff]
  %v83 = vld [vmem:[%s0 + $0x1b8] sm:$0xff]
  %v84 = vld [vmem:[%s0 + $0x1c0] sm:$0xff]
  %v85 = vld [vmem:[%s0 + $0x1c8] sm:$0xff]
  %v86 = vld [vmem:[%s0 + $0x1d0] sm:$0xff]
  %v87 = vld [vmem:[%s0 + $0x1d8] sm:$0xff]
  %v88 = vld [vmem:[%s0 + $0x1e0] sm:$0xff]
  %v89 = vld [vmem:[%s0 + $0x1e8] sm:$0xff]
  %v90 = vld [vmem:[%s0 + $0x1f0] sm:$0xff]
  %v91 = vld [vmem:[%s0 + $0x1f8] sm:$0xff]
  %v92 = vld [vmem:[%s0 + $0x200] sm:$0xff]
  %v93 = vld [vmem:[%s0 + $0x208] sm:$0xff]
  %v94 = vld [vmem:[%s1] sm:$0x7]
  %v95 = vld [vmem:[%s0 + $0x1] sm:$0xff]
  %v96 = vld [vmem:[%s0 + $0x9] sm:$0xff]
  %v97 = vld [vmem:[%s0 + $0x11] sm:$0xff]
  %v98 = vld [vmem:[%s0 + $0x19] sm:$0xff]
  %v99 = vld [vmem:[%s0 + $0x21] sm:$0xff]
  %v100 = vld [vmem:[%s0 + $0x29] sm:$0xff]
  %v101 = vld [vmem:[%s0 + $0x31] sm:$0xff]
  %v102 = vld [vmem:[%s0 + $0x39] sm:$0xff]
  %v103 = vld [vmem:[%s0 + $0x41] sm:$0xff]
  %v104 = vld [vmem:[%s0 + $0x49] sm:$0xff]
  %v105 = vld [vmem:[%s0 + $0x51] sm:$0xff]
  %v106 = vld [vmem:[%s0 + $0x59] sm:$0xff]
  %v107 = vld [vmem:[%s0 + $0x61] sm:$0xff]
  %v108 = vld [vmem:[%s0 + $0x69] sm:$0xff]
  %v109 = vld [vmem:[%s0 + $0x71] sm:$0xff]
  %v110 = vld [vmem:[%s0 + $0x79] sm:$0xff]
  %v111 = vld [vmem:[%s0 + $0x81] sm:$0xff]
  %v112 = vld [vmem:[%s0 + $0x89] sm:$0xff]
  %v113 = vld [vmem:[%s0 + $0x91] sm:$0xff]
  %v114 = vld [vmem:[%s0 + $0x99] sm:$0xff]
  %v115 = vld [vmem:[%s0 + $0xa1] sm:$0xff]
  %v116 = vld [vmem:[%s0 + $0xa9] sm:$0xff]
  %v117 = vld [vmem:[%s0 + $0xb1] sm:$0xff]
  %v118 = vld [vmem:[%s0 + $0xb9] sm:$0xff]
  %v119 = vld [vmem:[%s0 + $0xc1] sm:$0xff]
  %v120 = vld [vmem:[%s0 + $0xc9] sm:$0xff]
  %v121 = vld [vmem:[%s0 + $0xd1] sm:$0xff]
  %v122 = vld [vmem:[%s0 + $0xd9] sm:$0xff]
  %v123 = vld [vmem:[%s0 + $0xe1] sm:$0xff]
  %v124 = vld [vmem:[%s0 + $0xe9] sm:$0xff]
  %v125 = vld [vmem:[%s0 + $0xf1] sm:$0xff]
  %v126 = vld [vmem:[%s0 + $0xf9] sm:$0xff]
  %v127 = vld [vmem:[%s0 + $0x101] sm:$0xff]
  %v128 = vld [vmem:[%s0 + $0x109] sm:$0xff]
  %v129 = vld [vmem:[%s0 + $0x111] sm:$0xff]
  %v130 = vld [vmem:[%s0 + $0x119] sm:$0xff]
  %v131 = vld [vmem:[%s0 + $0x121] sm:$0xff]
  %v132 = vld [vmem:[%s0 + $0x129] sm:$0xff]
  %v133 = vld [vmem:[%s0 + $0x131] sm:$0xff]
  %v134 = vld [vmem:[%s0 + $0x139] sm:$0xff]
  %v135 = vld [vmem:[%s0 + $0x141] sm:$0xff]
  %v136 = vld [vmem:[%s0 + $0x149] sm:$0xff]
  %v137 = vld [vmem:[%s0 + $0x151] sm:$0xff]
  %v138 = vld [vmem:[%s0 + $0x159] sm:$0xff]
  %v139 = vld [vmem:[%s0 + $0x161] sm:$0xff]
  %v140 = vld [vmem:[%s0 + $0x169] sm:$0xff]
  %v141 = vld [vmem:[%s0 + $0x171] sm:$0xff]
  %v142 = vld [vmem:[%s0 + $0x179] sm:$0xff]
  %v143 = vld [vmem:[%s0 + $0x181] sm:$0xff]
  %v144 = vld [vmem:[%s0 + $0x189] sm:$0xff]
  %v145 = vld [vmem:[%s0 + $0x191] sm:$0xff]
  %v146 = vld [vmem:[%s0 + $0x199] sm:$0xff]
  %v147 = vld [vmem:[%s0 + $0x1a1] sm:$0xff]
  %v148 = vld [vmem:[%s0 + $0x1a9] sm:$0xff]
  %v149 = vld [vmem:[%s0 + $0x1b1] sm:$0xff]
  %v150 = vld [vmem:[%s0 + $0x1b9] sm:$0xff]
  %v151 = vld [vmem:[%s0 + $0x1c1] sm:$0xff]
  %v152 = vld [vmem:[%s0 + $0x1c9] sm:$0xff]
  %v153 = vld [vmem:[%s0 + $0x1d1] sm:$0xff]
  %v154 = vld [vmem:[%s0 + $0x1d9] sm:$0xff]
  %v155 = vld [vmem:[%s0 + $0x1e1] sm:$0xff]
  %v156 = vld [vmem:[%s0 + $0x1e9] sm:$0xff]
  %v157 = vld [vmem:[%s0 + $0x1f1] sm:$0xff]
  %v158 = vld [vmem:[%s0 + $0x1f9] sm:$0xff]
  %v159 = vld [vmem:[%s0 + $0x201] sm:$0xff]
  %v160 = vld [vmem:[%s0 + $0x209] sm:$0xff]
  %s161 = scalar_lea.vmem %s1, 4
  %v162 = vld [vmem:[%s161] sm:$0x7]
  %vm163 = vcmask 23552
  %v165 = vsel %vm163, %v95, 0
  %v168 = vsel %vm163, %v96, 0
  %v171 = vsel %vm163, %v97, 0
  %v174 = vsel %vm163, %v98, 0
  %v177 = vsel %vm163, %v99, 0
  %v180 = vsel %vm163, %v100, 0
  %v183 = vsel %vm163, %v101, 0
  %v186 = vsel %vm163, %v102, 0
  %v189 = vsel %vm163, %v103, 0
  %v192 = vsel %vm163, %v104, 0
  %v195 = vsel %vm163, %v105, 0
  %v198 = vsel %vm163, %v106, 0
  %v201 = vsel %vm163, %v107, 0
  %v204 = vsel %vm163, %v108, 0
  %v207 = vsel %vm163, %v109, 0
  %v210 = vsel %vm163, %v110, 0
  %v213 = vsel %vm163, %v111, 0
  %v216 = vsel %vm163, %v112, 0
  %v219 = vsel %vm163, %v113, 0
  %v222 = vsel %vm163, %v114, 0
  %v225 = vsel %vm163, %v115, 0
  %v228 = vsel %vm163, %v116, 0
  %v231 = vsel %vm163, %v117, 0
  %v234 = vsel %vm163, %v118, 0
  %v237 = vsel %vm163, %v119, 0
  %v240 = vsel %vm163, %v120, 0
  %v243 = vsel %vm163, %v121, 0
  %v246 = vsel %vm163, %v122, 0
  %v249 = vsel %vm163, %v123, 0
  %v252 = vsel %vm163, %v124, 0
  %v255 = vsel %vm163, %v125, 0
  %v258 = vsel %vm163, %v126, 0
  %v261 = vsel %vm163, %v127, 0
  %v264 = vsel %vm163, %v128, 0
  %v267 = vsel %vm163, %v129, 0
  %v270 = vsel %vm163, %v130, 0
  %v273 = vsel %vm163, %v131, 0
  %v276 = vsel %vm163, %v132, 0
  %v279 = vsel %vm163, %v133, 0
  %v282 = vsel %vm163, %v134, 0
  %v285 = vsel %vm163, %v135, 0
  %v288 = vsel %vm163, %v136, 0
  %v291 = vsel %vm163, %v137, 0
  %v294 = vsel %vm163, %v138, 0
  %v297 = vsel %vm163, %v139, 0
  %v300 = vsel %vm163, %v140, 0
  %v303 = vsel %vm163, %v141, 0
  %v306 = vsel %vm163, %v142, 0
  %v309 = vsel %vm163, %v143, 0
  %v312 = vsel %vm163, %v144, 0
  %v315 = vsel %vm163, %v145, 0
  %v318 = vsel %vm163, %v146, 0
  %v321 = vsel %vm163, %v147, 0
  %v324 = vsel %vm163, %v148, 0
  %v327 = vsel %vm163, %v149, 0
  %v330 = vsel %vm163, %v150, 0
  %v333 = vsel %vm163, %v151, 0
  %v336 = vsel %vm163, %v152, 0
  %v339 = vsel %vm163, %v153, 0
  %v342 = vsel %vm163, %v154, 0
  %v345 = vsel %vm163, %v155, 0
  %v348 = vsel %vm163, %v156, 0
  %v351 = vsel %vm163, %v157, 0
  %v354 = vsel %vm163, %v158, 0
  %v357 = vsel %vm163, %v159, 0
  %v360 = vsel %vm163, %v160, 0
  %vm362 = vcmask 1042432
  %v364 = vsel %vm362, %v162, 0
  %366 = vmatprep.subr.mxu0 0.0
  %367 = vmatpush1.msra.mxu0 %v364
  %368 = vmatprep.subr.mxu0 0.0
  %369 = vmatpush1.msra.mxu0 0.0
  %370 = vmatprep.subr.mxu0 0.0
  %371 = vmatpush1.msra.mxu0 0.0
  %372 = vmatprep.subr.mxu0 0.0
  %373 = vmatpush1.msra.mxu0 0.0
  %374 = vmatprep.subr.mxu0 0.0
  %375 = vmatpush1.msra.mxu0 0.0
  %376 = vmatprep.subr.mxu0 0.0
  %377 = vmatpush1.msra.mxu0 0.0
  %378 = vmatprep.subr.mxu0 0.0
  %379 = vmatpush1.msra.mxu0 0.0
  %380 = vmatprep.subr.mxu0 0.0
  %381 = vmatpush1.msra.mxu0 0.0
  %382 = vmatprep.subr.mxu0 0.0
  %383 = vmatpush1.msra.mxu0 0.0
  %384 = vmatprep.subr.mxu0 0.0
  %385 = vmatpush1.msra.mxu0 0.0
  %386 = vmatprep.subr.mxu0 0.0
  %387 = vmatpush1.msra.mxu0 0.0
  %388 = vmatprep.subr.mxu0 0.0
  %389 = vmatpush1.msra.mxu0 0.0
  %390 = vmatprep.subr.mxu0 0.0
  %391 = vmatpush1.msra.mxu0 0.0
  %392 = vmatprep.subr.mxu0 0.0
  %393 = vmatpush1.msra.mxu0 0.0
  %394 = vmatprep.subr.mxu0 0.0
  %395 = vmatpush1.msra.mxu0 0.0
  %396 = vmatprep.subr.mxu0 0.0
  %397 = vmatpush1.msra.mxu0 0.0
  %398 = vmatprep.subr.mxu0 0.0
  %399 = vmatpush1.msra.mxu0 0.0
  %400 = vmatprep.subr.mxu0 0.0
  %401 = vmatpush1.msra.mxu0 0.0
  %402 = vmatprep.subr.mxu0 0.0
  %403 = vmatpush1.msra.mxu0 0.0
  %404 = vmatprep.subr.mxu0 0.0
  %405 = vmatpush1.msra.mxu0 0.0
  %406 = vmatprep.subr.mxu0 0.0
  %407 = vmatpush1.msra.mxu0 0.0
  %408 = vmatprep.subr.mxu0 0.0
  %409 = vmatpush1.msra.mxu0 0.0
  %410 = vmatprep.subr.mxu0 0.0
  %411 = vmatpush1.msra.mxu0 0.0
  %412 = vmatprep.subr.mxu0 0.0
  %413 = vmatpush1.msra.mxu0 0.0
  %414 = vmatprep.subr.mxu0 0.0
  %415 = vmatpush1.msra.mxu0 0.0
  %416 = vmatprep.subr.mxu0 0.0
  %417 = vmatpush1.msra.mxu0 0.0
  %418 = vmatprep.subr.mxu0 0.0
  %419 = vmatpush1.msra.mxu0 0.0
  %420 = vmatprep.subr.mxu0 0.0
  %421 = vmatpush1.msra.mxu0 0.0
  %422 = vmatprep.subr.mxu0 0.0
  %423 = vmatpush1.msra.mxu0 0.0
  %424 = vmatprep.subr.mxu0 0.0
  %425 = vmatpush1.msra.mxu0 0.0
  %426 = vmatprep.subr.mxu0 0.0
  %427 = vmatpush1.msra.mxu0 0.0
  %428 = vmatprep.subr.mxu0 0.0
  %429 = vmatpush1.msra.mxu0 0.0
  %430 = vmatprep.mubr.f32.mxu0 0.0
  %431 = vmatmul.mubr.f32.gmra.mrb[0].mxu0 %v165
  %v432 = vpop.f32.mrb[0].mxu0
  %v433 = vadd.f32 0.0, %v432
  %v434 = vpop.f32.mrb[0].mxu0
  %435 = vmatprep.mubr.f32.mxu0 0.0
  %436 = vmatmul.mubr.f32.gmra.mrb[0].mxu0 %v168
  %v437 = vpop.f32.mrb[0].mxu0
  %v438 = vadd.f32 0.0, %v437
  %v439 = vpop.f32.mrb[0].mxu0
  %440 = vmatprep.mubr.f32.mxu0 0.0
  %441 = vmatmul.mubr.f32.gmra.mrb[0].mxu0 %v171
  %v442 = vpop.f32.mrb[0].mxu0
  %v443 = vadd.f32 0.0, %v442
  %v444 = vpop.f32.mrb[0].mxu0
  %445 = vmatprep.mubr.f32.mxu0 0.0
  %446 = vmatmul.mubr.f32.gmra.mrb[0].mxu0 %v174
  %v447 = vpop.f32.mrb[0].mxu0
  %v448 = vadd.f32 0.0, %v447
  %v449 = vpop.f32.mrb[0].mxu0
  %450 = vmatprep.mubr.f32.mxu0 0.0
  %451 = vmatmul.mubr.f32.gmra.mrb[0].mxu0 %v177
  %v452 = vpop.f32.mrb[0].mxu0
  %v453 = vadd.f32 0.0, %v452
  %v454 = vpop.f32.mrb[0].mxu0
  %455 = vmatprep.mubr.f32.mxu0 0.0
  %456 = vmatmul.mubr.f32.gmra.mrb[0].mxu0 %v180
  %v457 = vpop.f32.mrb[0].mxu0
  %v458 = vadd.f32 0.0, %v457
  %v459 = vpop.f32.mrb[0].mxu0
  %460 = vmatprep.mubr.f32.mxu0 0.0
  %461 = vmatmul.mubr.f32.gmra.mrb[0].mxu0 %v183
  %v462 = vpop.f32.mrb[0].mxu0
  %v463 = vadd.f32 0.0, %v462
  %v464 = vpop.f32.mrb[0].mxu0
  %465 = vmatprep.mubr.f32.mxu0 0.0
  %466 = vmatmul.mubr.f32.gmra.mrb[0].mxu0 %v186
  %v467 = vpop.f32.mrb[0].mxu0
  %v468 = vadd.f32 0.0, %v467
  %v469 = vpop.f32.mrb[0].mxu0
  %470 = vmatprep.mubr.f32.mxu0 0.0
  %471 = vmatmul.mubr.f32.gmra.mrb[0].mxu0 %v189
  %v472 = vpop.f32.mrb[0].mxu0
  %v473 = vadd.f32 0.0, %v472
  %v474 = vpop.f32.mrb[0].mxu0
  %475 = vmatprep.mubr.f32.mxu0 0.0
  %476 = vmatmul.mubr.f32.gmra.mrb[0].mxu0 %v192
  %v477 = vpop.f32.mrb[0].mxu0
  %v478 = vadd.f32 0.0, %v477
  %v479 = vpop.f32.mrb[0].mxu0
  %480 = vmatprep.mubr.f32.mxu0 0.0
  %481 = vmatmul.mubr.f32.gmra.mrb[0].mxu0 %v195
  %v482 = vpop.f32.mrb[0].mxu0
  %v483 = vadd.f32 0.0, %v482
  %v484 = vpop.f32.mrb[0].mxu0
  %485 = vmatprep.mubr.f32.mxu0 0.0
  %486 = vmatmul.mubr.f32.gmra.mrb[0].mxu0 %v198
  %v487 = vpop.f32.mrb[0].mxu0
  %v488 = vadd.f32 0.0, %v487
  %v489 = vpop.f32.mrb[0].mxu0
  %490 = vmatprep.mubr.f32.mxu0 0.0
  %491 = vmatmul.mubr.f32.gmra.mrb[0].mxu0 %v201
  %v492 = vpop.f32.mrb[0].mxu0
  %v493 = vadd.f32 0.0, %v492
  %v494 = vpop.f32.mrb[0].mxu0
  %495 = vmatprep.mubr.f32.mxu0 0.0
  %496 = vmatmul.mubr.f32.gmra.mrb[0].mxu0 %v204
  %v497 = vpop.f32.mrb[0].mxu0
  %v498 = vadd.f32 0.0, %v497
  %v499 = vpop.f32.mrb[0].mxu0
  %500 = vmatprep.mubr.f32.mxu0 0.0
  %501 = vmatmul.mubr.f32.gmra.mrb[0].mxu0 %v207
  %v502 = vpop.f32.mrb[0].mxu0
  %v503 = vadd.f32 0.0, %v502
  %v504 = vpop.f32.mrb[0].mxu0
  %505 = vmatprep.mubr.f32.mxu0 0.0
  %506 = vmatmul.mubr.f32.gmra.mrb[0].mxu0 %v210
  %v507 = vpop.f32.mrb[0].mxu0
  %v508 = vadd.f32 0.0, %v507
  %v509 = vpop.f32.mrb[0].mxu0
  %510 = vmatprep.mubr.f32.mxu0 0.0
  %511 = vmatmul.mubr.f32.gmra.mrb[0].mxu0 %v213
  %v512 = vpop.f32.mrb[0].mxu0
  %v513 = vadd.f32 0.0, %v512
  %v514 = vpop.f32.mrb[0].mxu0
  %515 = vmatprep.mubr.f32.mxu0 0.0
  %516 = vmatmul.mubr.f32.gmra.mrb[0].mxu0 %v216
  %v517 = vpop.f32.mrb[0].mxu0
  %v518 = vadd.f32 0.0, %v517
  %v519 = vpop.f32.mrb[0].mxu0
  %520 = vmatprep.mubr.f32.mxu0 0.0
  %521 = vmatmul.mubr.f32.gmra.mrb[0].mxu0 %v219
  %v522 = vpop.f32.mrb[0].mxu0
  %v523 = vadd.f32 0.0, %v522
  %v524 = vpop.f32.mrb[0].mxu0
  %525 = vmatprep.mubr.f32.mxu0 0.0
  %526 = vmatmul.mubr.f32.gmra.mrb[0].mxu0 %v222
  %v527 = vpop.f32.mrb[0].mxu0
  %v528 = vadd.f32 0.0, %v527
  %v529 = vpop.f32.mrb[0].mxu0
  %530 = vmatprep.mubr.f32.mxu0 0.0
  %531 = vmatmul.mubr.f32.gmra.mrb[0].mxu0 %v225
  %v532 = vpop.f32.mrb[0].mxu0
  %v533 = vadd.f32 0.0, %v532
  %v534 = vpop.f32.mrb[0].mxu0
  %535 = vmatprep.mubr.f32.mxu0 0.0
  %536 = vmatmul.mubr.f32.gmra.mrb[0].mxu0 %v228
  %v537 = vpop.f32.mrb[0].mxu0
  %v538 = vadd.f32 0.0, %v537
  %v539 = vpop.f32.mrb[0].mxu0
  %540 = vmatprep.mubr.f32.mxu0 0.0
  %541 = vmatmul.mubr.f32.gmra.mrb[0].mxu0 %v231
  %v542 = vpop.f32.mrb[0].mxu0
  %v543 = vadd.f32 0.0, %v542
  %v544 = vpop.f32.mrb[0].mxu0
  %545 = vmatprep.mubr.f32.mxu0 0.0
  %546 = vmatmul.mubr.f32.gmra.mrb[0].mxu0 %v234
  %v547 = vpop.f32.mrb[0].mxu0
  %v548 = vadd.f32 0.0, %v547
  %v549 = vpop.f32.mrb[0].mxu0
  %550 = vmatprep.mubr.f32.mxu0 0.0
  %551 = vmatmul.mubr.f32.gmra.mrb[0].mxu0 %v237
  %v552 = vpop.f32.mrb[0].mxu0
  %v553 = vadd.f32 0.0, %v552
  %v554 = vpop.f32.mrb[0].mxu0
  %555 = vmatprep.mubr.f32.mxu0 0.0
  %556 = vmatmul.mubr.f32.gmra.mrb[0].mxu0 %v240
  %v557 = vpop.f32.mrb[0].mxu0
  %v558 = vadd.f32 0.0, %v557
  %v559 = vpop.f32.mrb[0].mxu0
  %560 = vmatprep.mubr.f32.mxu0 0.0
  %561 = vmatmul.mubr.f32.gmra.mrb[0].mxu0 %v243
  %v562 = vpop.f32.mrb[0].mxu0
  %v563 = vadd.f32 0.0, %v562
  %v564 = vpop.f32.mrb[0].mxu0
  %565 = vmatprep.mubr.f32.mxu0 0.0
  %566 = vmatmul.mubr.f32.gmra.mrb[0].mxu0 %v246
  %v567 = vpop.f32.mrb[0].mxu0
  %v568 = vadd.f32 0.0, %v567
  %v569 = vpop.f32.mrb[0].mxu0
  %570 = vmatprep.mubr.f32.mxu0 0.0
  %571 = vmatmul.mubr.f32.gmra.mrb[0].mxu0 %v249
  %v572 = vpop.f32.mrb[0].mxu0
  %v573 = vadd.f32 0.0, %v572
  %v574 = vpop.f32.mrb[0].mxu0
  %575 = vmatprep.mubr.f32.mxu0 0.0
  %576 = vmatmul.mubr.f32.gmra.mrb[0].mxu0 %v252
  %v577 = vpop.f32.mrb[0].mxu0
  %v578 = vadd.f32 0.0, %v577
  %v579 = vpop.f32.mrb[0].mxu0
  %580 = vmatprep.mubr.f32.mxu0 0.0
  %581 = vmatmul.mubr.f32.gmra.mrb[0].mxu0 %v255
  %v582 = vpop.f32.mrb[0].mxu0
  %v583 = vadd.f32 0.0, %v582
  %v584 = vpop.f32.mrb[0].mxu0
  %585 = vmatprep.mubr.f32.mxu0 0.0
  %586 = vmatmul.mubr.f32.gmra.mrb[0].mxu0 %v258
  %v587 = vpop.f32.mrb[0].mxu0
  %v588 = vadd.f32 0.0, %v587
  %v589 = vpop.f32.mrb[0].mxu0
  %590 = vmatprep.mubr.f32.mxu0 0.0
  %591 = vmatmul.mubr.f32.gmra.mrb[0].mxu0 %v261
  %v592 = vpop.f32.mrb[0].mxu0
  %v593 = vadd.f32 0.0, %v592
  %v594 = vpop.f32.mrb[0].mxu0
  %595 = vmatprep.mubr.f32.mxu0 0.0
  %596 = vmatmul.mubr.f32.gmra.mrb[0].mxu0 %v264
  %v597 = vpop.f32.mrb[0].mxu0
  %v598 = vadd.f32 0.0, %v597
  %v599 = vpop.f32.mrb[0].mxu0
  %600 = vmatprep.mubr.f32.mxu0 0.0
  %601 = vmatmul.mubr.f32.gmra.mrb[0].mxu0 %v267
  %v602 = vpop.f32.mrb[0].mxu0
  %v603 = vadd.f32 0.0, %v602
  %v604 = vpop.f32.mrb[0].mxu0
  %605 = vmatprep.mubr.f32.mxu0 0.0
  %606 = vmatmul.mubr.f32.gmra.mrb[0].mxu0 %v270
  %v607 = vpop.f32.mrb[0].mxu0
  %v608 = vadd.f32 0.0, %v607
  %v609 = vpop.f32.mrb[0].mxu0
  %610 = vmatprep.mubr.f32.mxu0 0.0
  %611 = vmatmul.mubr.f32.gmra.mrb[0].mxu0 %v273
  %v612 = vpop.f32.mrb[0].mxu0
  %v613 = vadd.f32 0.0, %v612
  %v614 = vpop.f32.mrb[0].mxu0
  %615 = vmatprep.mubr.f32.mxu0 0.0
  %616 = vmatmul.mubr.f32.gmra.mrb[0].mxu0 %v276
  %v617 = vpop.f32.mrb[0].mxu0
  %v618 = vadd.f32 0.0, %v617
  %v619 = vpop.f32.mrb[0].mxu0
  %620 = vmatprep.mubr.f32.mxu0 0.0
  %621 = vmatmul.mubr.f32.gmra.mrb[0].mxu0 %v279
  %v622 = vpop.f32.mrb[0].mxu0
  %v623 = vadd.f32 0.0, %v622
  %v624 = vpop.f32.mrb[0].mxu0
  %625 = vmatprep.mubr.f32.mxu0 0.0
  %626 = vmatmul.mubr.f32.gmra.mrb[0].mxu0 %v282
  %v627 = vpop.f32.mrb[0].mxu0
  %v628 = vadd.f32 0.0, %v627
  %v629 = vpop.f32.mrb[0].mxu0
  %630 = vmatprep.mubr.f32.mxu0 0.0
  %631 = vmatmul.mubr.f32.gmra.mrb[0].mxu0 %v285
  %v632 = vpop.f32.mrb[0].mxu0
  %v633 = vadd.f32 0.0, %v632
  %v634 = vpop.f32.mrb[0].mxu0
  %635 = vmatprep.mubr.f32.mxu0 0.0
  %636 = vmatmul.mubr.f32.gmra.mrb[0].mxu0 %v288
  %v637 = vpop.f32.mrb[0].mxu0
  %v638 = vadd.f32 0.0, %v637
  %v639 = vpop.f32.mrb[0].mxu0
  %640 = vmatprep.mubr.f32.mxu0 0.0
  %641 = vmatmul.mubr.f32.gmra.mrb[0].mxu0 %v291
  %v642 = vpop.f32.mrb[0].mxu0
  %v643 = vadd.f32 0.0, %v642
  %v644 = vpop.f32.mrb[0].mxu0
  %645 = vmatprep.mubr.f32.mxu0 0.0
  %646 = vmatmul.mubr.f32.gmra.mrb[0].mxu0 %v294
  %v647 = vpop.f32.mrb[0].mxu0
  %v648 = vadd.f32 0.0, %v647
  %v649 = vpop.f32.mrb[0].mxu0
  %650 = vmatprep.mubr.f32.mxu0 0.0
  %651 = vmatmul.mubr.f32.gmra.mrb[0].mxu0 %v297
  %v652 = vpop.f32.mrb[0].mxu0
  %v653 = vadd.f32 0.0, %v652
  %v654 = vpop.f32.mrb[0].mxu0
  %655 = vmatprep.mubr.f32.mxu0 0.0
  %656 = vmatmul.mubr.f32.gmra.mrb[0].mxu0 %v300
  %v657 = vpop.f32.mrb[0].mxu0
  %v658 = vadd.f32 0.0, %v657
  %v659 = vpop.f32.mrb[0].mxu0
  %660 = vmatprep.mubr.f32.mxu0 0.0
  %661 = vmatmul.mubr.f32.gmra.mrb[0].mxu0 %v303
  %v662 = vpop.f32.mrb[0].mxu0
  %v663 = vadd.f32 0.0, %v662
  %v664 = vpop.f32.mrb[0].mxu0
  %665 = vmatprep.mubr.f32.mxu0 0.0
  %666 = vmatmul.mubr.f32.gmra.mrb[0].mxu0 %v306
  %v667 = vpop.f32.mrb[0].mxu0
  %v668 = vadd.f32 0.0, %v667
  %v669 = vpop.f32.mrb[0].mxu0
  %670 = vmatprep.mubr.f32.mxu0 0.0
  %671 = vmatmul.mubr.f32.gmra.mrb[0].mxu0 %v309
  %v672 = vpop.f32.mrb[0].mxu0
  %v673 = vadd.f32 0.0, %v672
  %v674 = vpop.f32.mrb[0].mxu0
  %675 = vmatprep.mubr.f32.mxu0 0.0
  %676 = vmatmul.mubr.f32.gmra.mrb[0].mxu0 %v312
  %v677 = vpop.f32.mrb[0].mxu0
  %v678 = vadd.f32 0.0, %v677
  %v679 = vpop.f32.mrb[0].mxu0
  %680 = vmatprep.mubr.f32.mxu0 0.0
  %681 = vmatmul.mubr.f32.gmra.mrb[0].mxu0 %v315
  %v682 = vpop.f32.mrb[0].mxu0
  %v683 = vadd.f32 0.0, %v682
  %v684 = vpop.f32.mrb[0].mxu0
  %685 = vmatprep.mubr.f32.mxu0 0.0
  %686 = vmatmul.mubr.f32.gmra.mrb[0].mxu0 %v318
  %v687 = vpop.f32.mrb[0].mxu0
  %v688 = vadd.f32 0.0, %v687
  %v689 = vpop.f32.mrb[0].mxu0
  %690 = vmatprep.mubr.f32.mxu0 0.0
  %691 = vmatmul.mubr.f32.gmra.mrb[0].mxu0 %v321
  %v692 = vpop.f32.mrb[0].mxu0
  %v693 = vadd.f32 0.0, %v692
  %v694 = vpop.f32.mrb[0].mxu0
  %695 = vmatprep.mubr.f32.mxu0 0.0
  %696 = vmatmul.mubr.f32.gmra.mrb[0].mxu0 %v324
  %v697 = vpop.f32.mrb[0].mxu0
  %v698 = vadd.f32 0.0, %v697
  %v699 = vpop.f32.mrb[0].mxu0
  %700 = vmatprep.mubr.f32.mxu0 0.0
  %701 = vmatmul.mubr.f32.gmra.mrb[0].mxu0 %v327
  %v702 = vpop.f32.mrb[0].mxu0
  %v703 = vadd.f32 0.0, %v702
  %v704 = vpop.f32.mrb[0].mxu0
  %705 = vmatprep.mubr.f32.mxu0 0.0
  %706 = vmatmul.mubr.f32.gmra.mrb[0].mxu0 %v330
  %v707 = vpop.f32.mrb[0].mxu0
  %v708 = vadd.f32 0.0, %v707
  %v709 = vpop.f32.mrb[0].mxu0
  %710 = vmatprep.mubr.f32.mxu0 0.0
  %711 = vmatmul.mubr.f32.gmra.mrb[0].mxu0 %v333
  %v712 = vpop.f32.mrb[0].mxu0
  %v713 = vadd.f32 0.0, %v712
  %v714 = vpop.f32.mrb[0].mxu0
  %715 = vmatprep.mubr.f32.mxu0 0.0
  %716 = vmatmul.mubr.f32.gmra.mrb[0].mxu0 %v336
  %v717 = vpop.f32.mrb[0].mxu0
  %v718 = vadd.f32 0.0, %v717
  %v719 = vpop.f32.mrb[0].mxu0
  %720 = vmatprep.mubr.f32.mxu0 0.0
  %721 = vmatmul.mubr.f32.gmra.mrb[0].mxu0 %v339
  %v722 = vpop.f32.mrb[0].mxu0
  %v723 = vadd.f32 0.0, %v722
  %v724 = vpop.f32.mrb[0].mxu0
  %725 = vmatprep.mubr.f32.mxu0 0.0
  %726 = vmatmul.mubr.f32.gmra.mrb[0].mxu0 %v342
  %v727 = vpop.f32.mrb[0].mxu0
  %v728 = vadd.f32 0.0, %v727
  %v729 = vpop.f32.mrb[0].mxu0
  %730 = vmatprep.mubr.f32.mxu0 0.0
  %731 = vmatmul.mubr.f32.gmra.mrb[0].mxu0 %v345
  %v732 = vpop.f32.mrb[0].mxu0
  %v733 = vadd.f32 0.0, %v732
  %v734 = vpop.f32.mrb[0].mxu0
  %735 = vmatprep.mubr.f32.mxu0 0.0
  %736 = vmatmul.mubr.f32.gmra.mrb[0].mxu0 %v348
  %v737 = vpop.f32.mrb[0].mxu0
  %v738 = vadd.f32 0.0, %v737
  %v739 = vpop.f32.mrb[0].mxu0
  %740 = vmatprep.mubr.f32.mxu0 0.0
  %741 = vmatmul.mubr.f32.gmra.mrb[0].mxu0 %v351
  %v742 = vpop.f32.mrb[0].mxu0
  %v743 = vadd.f32 0.0, %v742
  %v744 = vpop.f32.mrb[0].mxu0
  %745 = vmatprep.mubr.f32.mxu0 0.0
  %746 = vmatmul.mubr.f32.gmra.mrb[0].mxu0 %v354
  %v747 = vpop.f32.mrb[0].mxu0
  %v748 = vadd.f32 0.0, %v747
  %v749 = vpop.f32.mrb[0].mxu0
  %750 = vmatprep.mubr.f32.mxu0 0.0
  %751 = vmatmul.mubr.f32.gmra.mrb[0].mxu0 %v357
  %v752 = vpop.f32.mrb[0].mxu0
  %v753 = vadd.f32 0.0, %v752
  %v754 = vpop.f32.mrb[0].mxu0
  %755 = vmatprep.mubr.f32.mxu0 0.0
  %756 = vmatmul.mubr.f32.gmra.mrb[0].mxu0 %v360
  %v757 = vpop.f32.mrb[0].mxu0
  %v758 = vadd.f32 0.0, %v757
  %v759 = vpop.f32.mrb[0].mxu0
  %760 = vdwg.mxu0
  %v762 = vsel %vm163, %v28, 0
  %v765 = vsel %vm163, %v29, 0
  %v768 = vsel %vm163, %v30, 0
  %v771 = vsel %vm163, %v31, 0
  %v774 = vsel %vm163, %v32, 0
  %v777 = vsel %vm163, %v33, 0
  %v780 = vsel %vm163, %v34, 0
  %v783 = vsel %vm163, %v35, 0
  %v786 = vsel %vm163, %v36, 0
  %v789 = vsel %vm163, %v37, 0
  %v792 = vsel %vm163, %v38, 0
  %v795 = vsel %vm163, %v39, 0
  %v798 = vsel %vm163, %v40, 0
  %v801 = vsel %vm163, %v41, 0
  %v804 = vsel %vm163, %v42, 0
  %v807 = vsel %vm163, %v43, 0
  %v810 = vsel %vm163, %v44, 0
  %v813 = vsel %vm163, %v45, 0
  %v816 = vsel %vm163, %v46, 0
  %v819 = vsel %vm163, %v47, 0
  %v822 = vsel %vm163, %v48, 0
  %v825 = vsel %vm163, %v49, 0
  %v828 = vsel %vm163, %v50, 0
  %v831 = vsel %vm163, %v51, 0
  %v834 = vsel %vm163, %v52, 0
  %v837 = vsel %vm163, %v53, 0
  %v840 = vsel %vm163, %v54, 0
  %v843 = vsel %vm163, %v55, 0
  %v846 = vsel %vm163, %v56, 0
  %v849 = vsel %vm163, %v57, 0
  %v852 = vsel %vm163, %v58, 0
  %v855 = vsel %vm163, %v59, 0
  %v858 = vsel %vm163, %v60, 0
  %v861 = vsel %vm163, %v61, 0
  %v864 = vsel %vm163, %v62, 0
  %v867 = vsel %vm163, %v63, 0
  %v870 = vsel %vm163, %v64, 0
  %v873 = vsel %vm163, %v65, 0
  %v876 = vsel %vm163, %v66, 0
  %v879 = vsel %vm163, %v67, 0
  %v882 = vsel %vm163, %v68, 0
  %v885 = vsel %vm163, %v69, 0
  %v888 = vsel %vm163, %v70, 0
  %v891 = vsel %vm163, %v71, 0
  %v894 = vsel %vm163, %v72, 0
  %v897 = vsel %vm163, %v73, 0
  %v900 = vsel %vm163, %v74, 0
  %v903 = vsel %vm163, %v75, 0
  %v906 = vsel %vm163, %v76, 0
  %v909 = vsel %vm163, %v77, 0
  %v912 = vsel %vm163, %v78, 0
  %v915 = vsel %vm163, %v79, 0
  %v918 = vsel %vm163, %v80, 0
  %v921 = vsel %vm163, %v81, 0
  %v924 = vsel %vm163, %v82, 0
  %v927 = vsel %vm163, %v83, 0
  %v930 = vsel %vm163, %v84, 0
  %v933 = vsel %vm163, %v85, 0
  %v936 = vsel %vm163, %v86, 0
  %v939 = vsel %vm163, %v87, 0
  %v942 = vsel %vm163, %v88, 0
  %v945 = vsel %vm163, %v89, 0
  %v948 = vsel %vm163, %v90, 0
  %v951 = vsel %vm163, %v91, 0
  %v954 = vsel %vm163, %v92, 0
  %v957 = vsel %vm163, %v93, 0
  %v960 = vsel %vm362, %v94, 0
  %962 = vmatprep.subr.mxu0 0.0
  %963 = vmatpush1.msra.mxu0 %v960
  %964 = vmatprep.subr.mxu0 0.0
  %965 = vmatpush1.msra.mxu0 0.0
  %966 = vmatprep.subr.mxu0 0.0
  %967 = vmatpush1.msra.mxu0 0.0
  %968 = vmatprep.subr.mxu0 0.0
  %969 = vmatpush1.msra.mxu0 0.0
  %970 = vmatprep.subr.mxu0 0.0
  %971 = vmatpush1.msra.mxu0 0.0
  %972 = vmatprep.subr.mxu0 0.0
  %973 = vmatpush1.msra.mxu0 0.0
  %974 = vmatprep.subr.mxu0 0.0
  %975 = vmatpush1.msra.mxu0 0.0
  %976 = vmatprep.subr.mxu0 0.0
  %977 = vmatpush1.msra.mxu0 0.0
  %978 = vmatprep.subr.mxu0 0.0
  %979 = vmatpush1.msra.mxu0 0.0
  %980 = vmatprep.subr.mxu0 0.0
  %981 = vmatpush1.msra.mxu0 0.0
  %982 = vmatprep.subr.mxu0 0.0
  %983 = vmatpush1.msra.mxu0 0.0
  %984 = vmatprep.subr.mxu0 0.0
  %985 = vmatpush1.msra.mxu0 0.0
  %986 = vmatprep.subr.mxu0 0.0
  %987 = vmatpush1.msra.mxu0 0.0
  %988 = vmatprep.subr.mxu0 0.0
  %989 = vmatpush1.msra.mxu0 0.0
  %990 = vmatprep.subr.mxu0 0.0
  %991 = vmatpush1.msra.mxu0 0.0
  %992 = vmatprep.subr.mxu0 0.0
  %993 = vmatpush1.msra.mxu0 0.0
  %994 = vmatprep.subr.mxu0 0.0
  %995 = vmatpush1.msra.mxu0 0.0
  %996 = vmatprep.subr.mxu0 0.0
  %997 = vmatpush1.msra.mxu0 0.0
  %998 = vmatprep.subr.mxu0 0.0
  %999 = vmatpush1.msra.mxu0 0.0
  %1000 = vmatprep.subr.mxu0 0.0
  %1001 = vmatpush1.msra.mxu0 0.0
  %1002 = vmatprep.subr.mxu0 0.0
  %1003 = vmatpush1.msra.mxu0 0.0
  %1004 = vmatprep.subr.mxu0 0.0
  %1005 = vmatpush1.msra.mxu0 0.0
  %1006 = vmatprep.subr.mxu0 0.0
  %1007 = vmatpush1.msra.mxu0 0.0
  %1008 = vmatprep.subr.mxu0 0.0
  %1009 = vmatpush1.msra.mxu0 0.0
  %1010 = vmatprep.subr.mxu0 0.0
  %1011 = vmatpush1.msra.mxu0 0.0
  %1012 = vmatprep.subr.mxu0 0.0
  %1013 = vmatpush1.msra.mxu0 0.0
  %1014 = vmatprep.subr.mxu0 0.0
  %1015 = vmatpush1.msra.mxu0 0.0
  %1016 = vmatprep.subr.mxu0 0.0
  %1017 = vmatpush1.msra.mxu0 0.0
  %1018 = vmatprep.subr.mxu0 0.0
  %1019 = vmatpush1.msra.mxu0 0.0
  %1020 = vmatprep.subr.mxu0 0.0
  %1021 = vmatpush1.msra.mxu0 0.0
  %1022 = vmatprep.subr.mxu0 0.0
  %1023 = vmatpush1.msra.mxu0 0.0
  %1024 = vmatprep.subr.mxu0 0.0
  %1025 = vmatpush1.msra.mxu0 0.0
  %1026 = vmatprep.mubr.f32.mxu0 0.0
  %1027 = vmatmul.mubr.f32.gmra.mrb[0].mxu0 %v762
  %v1028 = vpop.f32.mrb[0].mxu0
  %v1029 = vadd.f32 %v433, %v1028
  %v1030 = vpop.f32.mrb[0].mxu0
  %1031 = vmatprep.mubr.f32.mxu0 0.0
  %1032 = vmatmul.mubr.f32.gmra.mrb[0].mxu0 %v765
  %v1033 = vpop.f32.mrb[0].mxu0
  %v1034 = vadd.f32 %v438, %v1033
  %v1035 = vpop.f32.mrb[0].mxu0
  %1036 = vmatprep.mubr.f32.mxu0 0.0
  %1037 = vmatmul.mubr.f32.gmra.mrb[0].mxu0 %v768
  %v1038 = vpop.f32.mrb[0].mxu0
  %v1039 = vadd.f32 %v443, %v1038
  %v1040 = vpop.f32.mrb[0].mxu0
  %1041 = vmatprep.mubr.f32.mxu0 0.0
  %1042 = vmatmul.mubr.f32.gmra.mrb[0].mxu0 %v771
  %v1043 = vpop.f32.mrb[0].mxu0
  %v1044 = vadd.f32 %v448, %v1043
  %v1045 = vpop.f32.mrb[0].mxu0
  %1046 = vmatprep.mubr.f32.mxu0 0.0
  %1047 = vmatmul.mubr.f32.gmra.mrb[0].mxu0 %v774
  %v1048 = vpop.f32.mrb[0].mxu0
  %v1049 = vadd.f32 %v453, %v1048
  %v1050 = vpop.f32.mrb[0].mxu0
  %1051 = vmatprep.mubr.f32.mxu0 0.0
  %1052 = vmatmul.mubr.f32.gmra.mrb[0].mxu0 %v777
  %v1053 = vpop.f32.mrb[0].mxu0
  %v1054 = vadd.f32 %v458, %v1053
  %v1055 = vpop.f32.mrb[0].mxu0
  %1056 = vmatprep.mubr.f32.mxu0 0.0
  %1057 = vmatmul.mubr.f32.gmra.mrb[0].mxu0 %v780
  %v1058 = vpop.f32.mrb[0].mxu0
  %v1059 = vadd.f32 %v463, %v1058
  %v1060 = vpop.f32.mrb[0].mxu0
  %1061 = vmatprep.mubr.f32.mxu0 0.0
  %1062 = vmatmul.mubr.f32.gmra.mrb[0].mxu0 %v783
  %v1063 = vpop.f32.mrb[0].mxu0
  %v1064 = vadd.f32 %v468, %v1063
  %v1065 = vpop.f32.mrb[0].mxu0
  %1066 = vmatprep.mubr.f32.mxu0 0.0
  %1067 = vmatmul.mubr.f32.gmra.mrb[0].mxu0 %v786
  %v1068 = vpop.f32.mrb[0].mxu0
  %v1069 = vadd.f32 %v473, %v1068
  %v1070 = vpop.f32.mrb[0].mxu0
  %1071 = vmatprep.mubr.f32.mxu0 0.0
  %1072 = vmatmul.mubr.f32.gmra.mrb[0].mxu0 %v789
  %v1073 = vpop.f32.mrb[0].mxu0
  %v1074 = vadd.f32 %v478, %v1073
  %v1075 = vpop.f32.mrb[0].mxu0
  %1076 = vmatprep.mubr.f32.mxu0 0.0
  %1077 = vmatmul.mubr.f32.gmra.mrb[0].mxu0 %v792
  %v1078 = vpop.f32.mrb[0].mxu0
  %v1079 = vadd.f32 %v483, %v1078
  %v1080 = vpop.f32.mrb[0].mxu0
  %1081 = vmatprep.mubr.f32.mxu0 0.0
  %1082 = vmatmul.mubr.f32.gmra.mrb[0].mxu0 %v795
  %v1083 = vpop.f32.mrb[0].mxu0
  %v1084 = vadd.f32 %v488, %v1083
  %v1085 = vpop.f32.mrb[0].mxu0
  %1086 = vmatprep.mubr.f32.mxu0 0.0
  %1087 = vmatmul.mubr.f32.gmra.mrb[0].mxu0 %v798
  %v1088 = vpop.f32.mrb[0].mxu0
  %v1089 = vadd.f32 %v493, %v1088
  %v1090 = vpop.f32.mrb[0].mxu0
  %1091 = vmatprep.mubr.f32.mxu0 0.0
  %1092 = vmatmul.mubr.f32.gmra.mrb[0].mxu0 %v801
  %v1093 = vpop.f32.mrb[0].mxu0
  %v1094 = vadd.f32 %v498, %v1093
  %v1095 = vpop.f32.mrb[0].mxu0
  %1096 = vmatprep.mubr.f32.mxu0 0.0
  %1097 = vmatmul.mubr.f32.gmra.mrb[0].mxu0 %v804
  %v1098 = vpop.f32.mrb[0].mxu0
  %v1099 = vadd.f32 %v503, %v1098
  %v1100 = vpop.f32.mrb[0].mxu0
  %1101 = vmatprep.mubr.f32.mxu0 0.0
  %1102 = vmatmul.mubr.f32.gmra.mrb[0].mxu0 %v807
  %v1103 = vpop.f32.mrb[0].mxu0
  %v1104 = vadd.f32 %v508, %v1103
  %v1105 = vpop.f32.mrb[0].mxu0
  %1106 = vmatprep.mubr.f32.mxu0 0.0
  %1107 = vmatmul.mubr.f32.gmra.mrb[0].mxu0 %v810
  %v1108 = vpop.f32.mrb[0].mxu0
  %v1109 = vadd.f32 %v513, %v1108
  %v1110 = vpop.f32.mrb[0].mxu0
  %1111 = vmatprep.mubr.f32.mxu0 0.0
  %1112 = vmatmul.mubr.f32.gmra.mrb[0].mxu0 %v813
  %v1113 = vpop.f32.mrb[0].mxu0
  %v1114 = vadd.f32 %v518, %v1113
  %v1115 = vpop.f32.mrb[0].mxu0
  %1116 = vmatprep.mubr.f32.mxu0 0.0
  %1117 = vmatmul.mubr.f32.gmra.mrb[0].mxu0 %v816
  %v1118 = vpop.f32.mrb[0].mxu0
  %v1119 = vadd.f32 %v523, %v1118
  %v1120 = vpop.f32.mrb[0].mxu0
  %1121 = vmatprep.mubr.f32.mxu0 0.0
  %1122 = vmatmul.mubr.f32.gmra.mrb[0].mxu0 %v819
  %v1123 = vpop.f32.mrb[0].mxu0
  %v1124 = vadd.f32 %v528, %v1123
  %v1125 = vpop.f32.mrb[0].mxu0
  %1126 = vmatprep.mubr.f32.mxu0 0.0
  %1127 = vmatmul.mubr.f32.gmra.mrb[0].mxu0 %v822
  %v1128 = vpop.f32.mrb[0].mxu0
  %v1129 = vadd.f32 %v533, %v1128
  %v1130 = vpop.f32.mrb[0].mxu0
  %1131 = vmatprep.mubr.f32.mxu0 0.0
  %1132 = vmatmul.mubr.f32.gmra.mrb[0].mxu0 %v825
  %v1133 = vpop.f32.mrb[0].mxu0
  %v1134 = vadd.f32 %v538, %v1133
  %v1135 = vpop.f32.mrb[0].mxu0
  %1136 = vmatprep.mubr.f32.mxu0 0.0
  %1137 = vmatmul.mubr.f32.gmra.mrb[0].mxu0 %v828
  %v1138 = vpop.f32.mrb[0].mxu0
  %v1139 = vadd.f32 %v543, %v1138
  %v1140 = vpop.f32.mrb[0].mxu0
  %1141 = vmatprep.mubr.f32.mxu0 0.0
  %1142 = vmatmul.mubr.f32.gmra.mrb[0].mxu0 %v831
  %v1143 = vpop.f32.mrb[0].mxu0
  %v1144 = vadd.f32 %v548, %v1143
  %v1145 = vpop.f32.mrb[0].mxu0
  %1146 = vmatprep.mubr.f32.mxu0 0.0
  %1147 = vmatmul.mubr.f32.gmra.mrb[0].mxu0 %v834
  %v1148 = vpop.f32.mrb[0].mxu0
  %v1149 = vadd.f32 %v553, %v1148
  %v1150 = vpop.f32.mrb[0].mxu0
  %1151 = vmatprep.mubr.f32.mxu0 0.0
  %1152 = vmatmul.mubr.f32.gmra.mrb[0].mxu0 %v837
  %v1153 = vpop.f32.mrb[0].mxu0
  %v1154 = vadd.f32 %v558, %v1153
  %v1155 = vpop.f32.mrb[0].mxu0
  %1156 = vmatprep.mubr.f32.mxu0 0.0
  %1157 = vmatmul.mubr.f32.gmra.mrb[0].mxu0 %v840
  %v1158 = vpop.f32.mrb[0].mxu0
  %v1159 = vadd.f32 %v563, %v1158
  %v1160 = vpop.f32.mrb[0].mxu0
  %1161 = vmatprep.mubr.f32.mxu0 0.0
  %1162 = vmatmul.mubr.f32.gmra.mrb[0].mxu0 %v843
  %v1163 = vpop.f32.mrb[0].mxu0
  %v1164 = vadd.f32 %v568, %v1163
  %v1165 = vpop.f32.mrb[0].mxu0
  %1166 = vmatprep.mubr.f32.mxu0 0.0
  %1167 = vmatmul.mubr.f32.gmra.mrb[0].mxu0 %v846
  %v1168 = vpop.f32.mrb[0].mxu0
  %v1169 = vadd.f32 %v573, %v1168
  %v1170 = vpop.f32.mrb[0].mxu0
  %1171 = vmatprep.mubr.f32.mxu0 0.0
  %1172 = vmatmul.mubr.f32.gmra.mrb[0].mxu0 %v849
  %v1173 = vpop.f32.mrb[0].mxu0
  %v1174 = vadd.f32 %v578, %v1173
  %v1175 = vpop.f32.mrb[0].mxu0
  %1176 = vmatprep.mubr.f32.mxu0 0.0
  %1177 = vmatmul.mubr.f32.gmra.mrb[0].mxu0 %v852
  %v1178 = vpop.f32.mrb[0].mxu0
  %v1179 = vadd.f32 %v583, %v1178
  %v1180 = vpop.f32.mrb[0].mxu0
  %1181 = vmatprep.mubr.f32.mxu0 0.0
  %1182 = vmatmul.mubr.f32.gmra.mrb[0].mxu0 %v855
  %v1183 = vpop.f32.mrb[0].mxu0
  %v1184 = vadd.f32 %v588, %v1183
  %v1185 = vpop.f32.mrb[0].mxu0
  %1186 = vmatprep.mubr.f32.mxu0 0.0
  %1187 = vmatmul.mubr.f32.gmra.mrb[0].mxu0 %v858
  %v1188 = vpop.f32.mrb[0].mxu0
  %v1189 = vadd.f32 %v593, %v1188
  %v1190 = vpop.f32.mrb[0].mxu0
  %1191 = vmatprep.mubr.f32.mxu0 0.0
  %1192 = vmatmul.mubr.f32.gmra.mrb[0].mxu0 %v861
  %v1193 = vpop.f32.mrb[0].mxu0
  %v1194 = vadd.f32 %v598, %v1193
  %v1195 = vpop.f32.mrb[0].mxu0
  %1196 = vmatprep.mubr.f32.mxu0 0.0
  %1197 = vmatmul.mubr.f32.gmra.mrb[0].mxu0 %v864
  %v1198 = vpop.f32.mrb[0].mxu0
  %v1199 = vadd.f32 %v603, %v1198
  %v1200 = vpop.f32.mrb[0].mxu0
  %1201 = vmatprep.mubr.f32.mxu0 0.0
  %1202 = vmatmul.mubr.f32.gmra.mrb[0].mxu0 %v867
  %v1203 = vpop.f32.mrb[0].mxu0
  %v1204 = vadd.f32 %v608, %v1203
  %v1205 = vpop.f32.mrb[0].mxu0
  %1206 = vmatprep.mubr.f32.mxu0 0.0
  %1207 = vmatmul.mubr.f32.gmra.mrb[0].mxu0 %v870
  %v1208 = vpop.f32.mrb[0].mxu0
  %v1209 = vadd.f32 %v613, %v1208
  %v1210 = vpop.f32.mrb[0].mxu0
  %1211 = vmatprep.mubr.f32.mxu0 0.0
  %1212 = vmatmul.mubr.f32.gmra.mrb[0].mxu0 %v873
  %v1213 = vpop.f32.mrb[0].mxu0
  %v1214 = vadd.f32 %v618, %v1213
  %v1215 = vpop.f32.mrb[0].mxu0
  %1216 = vmatprep.mubr.f32.mxu0 0.0
  %1217 = vmatmul.mubr.f32.gmra.mrb[0].mxu0 %v876
  %v1218 = vpop.f32.mrb[0].mxu0
  %v1219 = vadd.f32 %v623, %v1218
  %v1220 = vpop.f32.mrb[0].mxu0
  %1221 = vmatprep.mubr.f32.mxu0 0.0
  %1222 = vmatmul.mubr.f32.gmra.mrb[0].mxu0 %v879
  %v1223 = vpop.f32.mrb[0].mxu0
  %v1224 = vadd.f32 %v628, %v1223
  %v1225 = vpop.f32.mrb[0].mxu0
  %1226 = vmatprep.mubr.f32.mxu0 0.0
  %1227 = vmatmul.mubr.f32.gmra.mrb[0].mxu0 %v882
  %v1228 = vpop.f32.mrb[0].mxu0
  %v1229 = vadd.f32 %v633, %v1228
  %v1230 = vpop.f32.mrb[0].mxu0
  %1231 = vmatprep.mubr.f32.mxu0 0.0
  %1232 = vmatmul.mubr.f32.gmra.mrb[0].mxu0 %v885
  %v1233 = vpop.f32.mrb[0].mxu0
  %v1234 = vadd.f32 %v638, %v1233
  %v1235 = vpop.f32.mrb[0].mxu0
  %1236 = vmatprep.mubr.f32.mxu0 0.0
  %1237 = vmatmul.mubr.f32.gmra.mrb[0].mxu0 %v888
  %v1238 = vpop.f32.mrb[0].mxu0
  %v1239 = vadd.f32 %v643, %v1238
  %v1240 = vpop.f32.mrb[0].mxu0
  %1241 = vmatprep.mubr.f32.mxu0 0.0
  %1242 = vmatmul.mubr.f32.gmra.mrb[0].mxu0 %v891
  %v1243 = vpop.f32.mrb[0].mxu0
  %v1244 = vadd.f32 %v648, %v1243
  %v1245 = vpop.f32.mrb[0].mxu0
  %1246 = vmatprep.mubr.f32.mxu0 0.0
  %1247 = vmatmul.mubr.f32.gmra.mrb[0].mxu0 %v894
  %v1248 = vpop.f32.mrb[0].mxu0
  %v1249 = vadd.f32 %v653, %v1248
  %v1250 = vpop.f32.mrb[0].mxu0
  %1251 = vmatprep.mubr.f32.mxu0 0.0
  %1252 = vmatmul.mubr.f32.gmra.mrb[0].mxu0 %v897
  %v1253 = vpop.f32.mrb[0].mxu0
  %v1254 = vadd.f32 %v658, %v1253
  %v1255 = vpop.f32.mrb[0].mxu0
  %1256 = vmatprep.mubr.f32.mxu0 0.0
  %1257 = vmatmul.mubr.f32.gmra.mrb[0].mxu0 %v900
  %v1258 = vpop.f32.mrb[0].mxu0
  %v1259 = vadd.f32 %v663, %v1258
  %v1260 = vpop.f32.mrb[0].mxu0
  %1261 = vmatprep.mubr.f32.mxu0 0.0
  %1262 = vmatmul.mubr.f32.gmra.mrb[0].mxu0 %v903
  %v1263 = vpop.f32.mrb[0].mxu0
  %v1264 = vadd.f32 %v668, %v1263
  %v1265 = vpop.f32.mrb[0].mxu0
  %1266 = vmatprep.mubr.f32.mxu0 0.0
  %1267 = vmatmul.mubr.f32.gmra.mrb[0].mxu0 %v906
  %v1268 = vpop.f32.mrb[0].mxu0
  %v1269 = vadd.f32 %v673, %v1268
  %v1270 = vpop.f32.mrb[0].mxu0
  %1271 = vmatprep.mubr.f32.mxu0 0.0
  %1272 = vmatmul.mubr.f32.gmra.mrb[0].mxu0 %v909
  %v1273 = vpop.f32.mrb[0].mxu0
  %v1274 = vadd.f32 %v678, %v1273
  %v1275 = vpop.f32.mrb[0].mxu0
  %1276 = vmatprep.mubr.f32.mxu0 0.0
  %1277 = vmatmul.mubr.f32.gmra.mrb[0].mxu0 %v912
  %v1278 = vpop.f32.mrb[0].mxu0
  %v1279 = vadd.f32 %v683, %v1278
  %v1280 = vpop.f32.mrb[0].mxu0
  %1281 = vmatprep.mubr.f32.mxu0 0.0
  %1282 = vmatmul.mubr.f32.gmra.mrb[0].mxu0 %v915
  %v1283 = vpop.f32.mrb[0].mxu0
  %v1284 = vadd.f32 %v688, %v1283
  %v1285 = vpop.f32.mrb[0].mxu0
  %1286 = vmatprep.mubr.f32.mxu0 0.0
  %1287 = vmatmul.mubr.f32.gmra.mrb[0].mxu0 %v918
  %v1288 = vpop.f32.mrb[0].mxu0
  %v1289 = vadd.f32 %v693, %v1288
  %v1290 = vpop.f32.mrb[0].mxu0
  %1291 = vmatprep.mubr.f32.mxu0 0.0
  %1292 = vmatmul.mubr.f32.gmra.mrb[0].mxu0 %v921
  %v1293 = vpop.f32.mrb[0].mxu0
  %v1294 = vadd.f32 %v698, %v1293
  %v1295 = vpop.f32.mrb[0].mxu0
  %1296 = vmatprep.mubr.f32.mxu0 0.0
  %1297 = vmatmul.mubr.f32.gmra.mrb[0].mxu0 %v924
  %v1298 = vpop.f32.mrb[0].mxu0
  %v1299 = vadd.f32 %v703, %v1298
  %v1300 = vpop.f32.mrb[0].mxu0
  %1301 = vmatprep.mubr.f32.mxu0 0.0
  %1302 = vmatmul.mubr.f32.gmra.mrb[0].mxu0 %v927
  %v1303 = vpop.f32.mrb[0].mxu0
  %v1304 = vadd.f32 %v708, %v1303
  %v1305 = vpop.f32.mrb[0].mxu0
  %1306 = vmatprep.mubr.f32.mxu0 0.0
  %1307 = vmatmul.mubr.f32.gmra.mrb[0].mxu0 %v930
  %v1308 = vpop.f32.mrb[0].mxu0
  %v1309 = vadd.f32 %v713, %v1308
  %v1310 = vpop.f32.mrb[0].mxu0
  %1311 = vmatprep.mubr.f32.mxu0 0.0
  %1312 = vmatmul.mubr.f32.gmra.mrb[0].mxu0 %v933
  %v1313 = vpop.f32.mrb[0].mxu0
  %v1314 = vadd.f32 %v718, %v1313
  %v1315 = vpop.f32.mrb[0].mxu0
  %1316 = vmatprep.mubr.f32.mxu0 0.0
  %1317 = vmatmul.mubr.f32.gmra.mrb[0].mxu0 %v936
  %v1318 = vpop.f32.mrb[0].mxu0
  %v1319 = vadd.f32 %v723, %v1318
  %v1320 = vpop.f32.mrb[0].mxu0
  %1321 = vmatprep.mubr.f32.mxu0 0.0
  %1322 = vmatmul.mubr.f32.gmra.mrb[0].mxu0 %v939
  %v1323 = vpop.f32.mrb[0].mxu0
  %v1324 = vadd.f32 %v728, %v1323
  %v1325 = vpop.f32.mrb[0].mxu0
  %1326 = vmatprep.mubr.f32.mxu0 0.0
  %1327 = vmatmul.mubr.f32.gmra.mrb[0].mxu0 %v942
  %v1328 = vpop.f32.mrb[0].mxu0
  %v1329 = vadd.f32 %v733, %v1328
  %v1330 = vpop.f32.mrb[0].mxu0
  %1331 = vmatprep.mubr.f32.mxu0 0.0
  %1332 = vmatmul.mubr.f32.gmra.mrb[0].mxu0 %v945
  %v1333 = vpop.f32.mrb[0].mxu0
  %v1334 = vadd.f32 %v738, %v1333
  %v1335 = vpop.f32.mrb[0].mxu0
  %1336 = vmatprep.mubr.f32.mxu0 0.0
  %1337 = vmatmul.mubr.f32.gmra.mrb[0].mxu0 %v948
  %v1338 = vpop.f32.mrb[0].mxu0
  %v1339 = vadd.f32 %v743, %v1338
  %v1340 = vpop.f32.mrb[0].mxu0
  %1341 = vmatprep.mubr.f32.mxu0 0.0
  %1342 = vmatmul.mubr.f32.gmra.mrb[0].mxu0 %v951
  %v1343 = vpop.f32.mrb[0].mxu0
  %v1344 = vadd.f32 %v748, %v1343
  %v1345 = vpop.f32.mrb[0].mxu0
  %1346 = vmatprep.mubr.f32.mxu0 0.0
  %1347 = vmatmul.mubr.f32.gmra.mrb[0].mxu0 %v954
  %v1348 = vpop.f32.mrb[0].mxu0
  %v1349 = vadd.f32 %v753, %v1348
  %v1350 = vpop.f32.mrb[0].mxu0
  %1351 = vmatprep.mubr.f32.mxu0 0.0
  %1352 = vmatmul.mubr.f32.gmra.mrb[0].mxu0 %v957
  %v1353 = vpop.f32.mrb[0].mxu0
  %v1354 = vadd.f32 %v758, %v1353
  %v1355 = vpop.f32.mrb[0].mxu0
  %1356 = vdwg.mxu0
  %v1357 = vld [vmem:[%s0 + $0x2] sm:$0xff]
  %v1358 = vld [vmem:[%s0 + $0xa] sm:$0xff]
  %v1359 = vld [vmem:[%s0 + $0x12] sm:$0xff]
  %v1360 = vld [vmem:[%s0 + $0x1a] sm:$0xff]
  %v1361 = vld [vmem:[%s0 + $0x22] sm:$0xff]
  %v1362 = vld [vmem:[%s0 + $0x2a] sm:$0xff]
  %v1363 = vld [vmem:[%s0 + $0x32] sm:$0xff]
  %v1364 = vld [vmem:[%s0 + $0x3a] sm:$0xff]
  %v1365 = vld [vmem:[%s0 + $0x42] sm:$0xff]
  %v1366 = vld [vmem:[%s0 + $0x4a] sm:$0xff]
  %v1367 = vld [vmem:[%s0 + $0x52] sm:$0xff]
  %v1368 = vld [vmem:[%s0 + $0x5a] sm:$0xff]
  %v1369 = vld [vmem:[%s0 + $0x62] sm:$0xff]
  %v1370 = vld [vmem:[%s0 + $0x6a] sm:$0xff]
  %v1371 = vld [vmem:[%s0 + $0x72] sm:$0xff]
  %v1372 = vld [vmem:[%s0 + $0x7a] sm:$0xff]
  %v1373 = vld [vmem:[%s0 + $0x82] sm:$0xff]
  %v1374 = vld [vmem:[%s0 + $0x8a] sm:$0xff]
  %v1375 = vld [vmem:[%s0 + $0x92] sm:$0xff]
  %v1376 = vld [vmem:[%s0 + $0x9a] sm:$0xff]
  %v1377 = vld [vmem:[%s0 + $0xa2] sm:$0xff]
  %v1378 = vld [vmem:[%s0 + $0xaa] sm:$0xff]
  %v1379 = vld [vmem:[%s0 + $0xb2] sm:$0xff]
  %v1380 = vld [vmem:[%s0 + $0xba] sm:$0xff]
  %v1381 = vld [vmem:[%s0 + $0xc2] sm:$0xff]
  %v1382 = vld [vmem:[%s0 + $0xca] sm:$0xff]
  %v1383 = vld [vmem:[%s0 + $0xd2] sm:$0xff]
  %v1384 = vld [vmem:[%s0 + $0xda] sm:$0xff]
  %v1385 = vld [vmem:[%s0 + $0xe2] sm:$0xff]
  %v1386 = vld [vmem:[%s0 + $0xea] sm:$0xff]
  %v1387 = vld [vmem:[%s0 + $0xf2] sm:$0xff]
  %v1388 = vld [vmem:[%s0 + $0xfa] sm:$0xff]
  %v1389 = vld [vmem:[%s0 + $0x102] sm:$0xff]
  %v1390 = vld [vmem:[%s0 + $0x10a] sm:$0xff]
  %v1391 = vld [vmem:[%s0 + $0x112] sm:$0xff]
  %v1392 = vld [vmem:[%s0 + $0x11a] sm:$0xff]
  %v1393 = vld [vmem:[%s0 + $0x122] sm:$0xff]
  %v1394 = vld [vmem:[%s0 + $0x12a] sm:$0xff]
  %v1395 = vld [vmem:[%s0 + $0x132] sm:$0xff]
  %v1396 = vld [vmem:[%s0 + $0x13a] sm:$0xff]
  %v1397 = vld [vmem:[%s0 + $0x142] sm:$0xff]
  %v1398 = vld [vmem:[%s0 + $0x14a] sm:$0xff]
  %v1399 = vld [vmem:[%s0 + $0x152] sm:$0xff]
  %v1400 = vld [vmem:[%s0 + $0x15a] sm:$0xff]
  %v1401 = vld [vmem:[%s0 + $0x162] sm:$0xff]
  %v1402 = vld [vmem:[%s0 + $0x16a] sm:$0xff]
  %v1403 = vld [vmem:[%s0 + $0x172] sm:$0xff]
  %v1404 = vld [vmem:[%s0 + $0x17a] sm:$0xff]
  %v1405 = vld [vmem:[%s0 + $0x182] sm:$0xff]
  %v1406 = vld [vmem:[%s0 + $0x18a] sm:$0xff]
  %v1407 = vld [vmem:[%s0 + $0x192] sm:$0xff]
  %v1408 = vld [vmem:[%s0 + $0x19a] sm:$0xff]
  %v1409 = vld [vmem:[%s0 + $0x1a2] sm:$0xff]
  %v1410 = vld [vmem:[%s0 + $0x1aa] sm:$0xff]
  %v1411 = vld [vmem:[%s0 + $0x1b2] sm:$0xff]
  %v1412 = vld [vmem:[%s0 + $0x1ba] sm:$0xff]
  %v1413 = vld [vmem:[%s0 + $0x1c2] sm:$0xff]
  %v1414 = vld [vmem:[%s0 + $0x1ca] sm:$0xff]
  %v1415 = vld [vmem:[%s0 + $0x1d2] sm:$0xff]
  %v1416 = vld [vmem:[%s0 + $0x1da] sm:$0xff]
  %v1417 = vld [vmem:[%s0 + $0x1e2] sm:$0xff]
  %v1418 = vld [vmem:[%s0 + $0x1ea] sm:$0xff]
  %v1419 = vld [vmem:[%s0 + $0x1f2] sm:$0xff]
  %v1420 = vld [vmem:[%s0 + $0x1fa] sm:$0xff]
  %v1421 = vld [vmem:[%s0 + $0x202] sm:$0xff]
  %v1422 = vld [vmem:[%s0 + $0x20a] sm:$0xff]
  %s1423 = scalar_lea.vmem %s1, 8
  %v1424 = vld [vmem:[%s1423] sm:$0x7]
  %v1426 = vsel %vm163, %v1357, 0
  %v1429 = vsel %vm163, %v1358, 0
  %v1432 = vsel %vm163, %v1359, 0
  %v1435 = vsel %vm163, %v1360, 0
  %v1438 = vsel %vm163, %v1361, 0
  %v1441 = vsel %vm163, %v1362, 0
  %v1444 = vsel %vm163, %v1363, 0
  %v1447 = vsel %vm163, %v1364, 0
  %v1450 = vsel %vm163, %v1365, 0
  %v1453 = vsel %vm163, %v1366, 0
  %v1456 = vsel %vm163, %v1367, 0
  %v1459 = vsel %vm163, %v1368, 0
  %v1462 = vsel %vm163, %v1369, 0
  %v1465 = vsel %vm163, %v1370, 0
  %v1468 = vsel %vm163, %v1371, 0
  %v1471 = vsel %vm163, %v1372, 0
  %v1474 = vsel %vm163, %v1373, 0
  %v1477 = vsel %vm163, %v1374, 0
  %v1480 = vsel %vm163, %v1375, 0
  %v1483 = vsel %vm163, %v1376, 0
  %v1486 = vsel %vm163, %v1377, 0
  %v1489 = vsel %vm163, %v1378, 0
  %v1492 = vsel %vm163, %v1379, 0
  %v1495 = vsel %vm163, %v1380, 0
  %v1498 = vsel %vm163, %v1381, 0
  %v1501 = vsel %vm163, %v1382, 0
  %v1504 = vsel %vm163, %v1383, 0
  %v1507 = vsel %vm163, %v1384, 0
  %v1510 = vsel %vm163, %v1385, 0
  %v1513 = vsel %vm163, %v1386, 0
  %v1516 = vsel %vm163, %v1387, 0
  %v1519 = vsel %vm163, %v1388, 0
  %v1522 = vsel %vm163, %v1389, 0
  %v1525 = vsel %vm163, %v1390, 0
  %v1528 = vsel %vm163, %v1391, 0
  %v1531 = vsel %vm163, %v1392, 0
  %v1534 = vsel %vm163, %v1393, 0
  %v1537 = vsel %vm163, %v1394, 0
  %v1540 = vsel %vm163, %v1395, 0
  %v1543 = vsel %vm163, %v1396, 0
  %v1546 = vsel %vm163, %v1397, 0
  %v1549 = vsel %vm163, %v1398, 0
  %v1552 = vsel %vm163, %v1399, 0
  %v1555 = vsel %vm163, %v1400, 0
  %v1558 = vsel %vm163, %v1401, 0
  %v1561 = vsel %vm163, %v1402, 0
  %v1564 = vsel %vm163, %v1403, 0
  %v1567 = vsel %vm163, %v1404, 0
  %v1570 = vsel %vm163, %v1405, 0
  %v1573 = vsel %vm163, %v1406, 0
  %v1576 = vsel %vm163, %v1407, 0
  %v1579 = vsel %vm163, %v1408, 0
  %v1582 = vsel %vm163, %v1409, 0
  %v1585 = vsel %vm163, %v1410, 0
  %v1588 = vsel %vm163, %v1411, 0
  %v1591 = vsel %vm163, %v1412, 0
  %v1594 = vsel %vm163, %v1413, 0
  %v1597 = vsel %vm163, %v1414, 0
  %v1600 = vsel %vm163, %v1415, 0
  %v1603 = vsel %vm163, %v1416, 0
  %v1606 = vsel %vm163, %v1417, 0
  %v1609 = vsel %vm163, %v1418, 0
  %v1612 = vsel %vm163, %v1419, 0
  %v1615 = vsel %vm163, %v1420, 0
  %v1618 = vsel %vm163, %v1421, 0
  %v1621 = vsel %vm163, %v1422, 0
  %v1624 = vsel %vm362, %v1424, 0
  %1626 = vmatprep.subr.mxu0 0.0
  %1627 = vmatpush1.msra.mxu0 %v1624
  %1628 = vmatprep.subr.mxu0 0.0
  %1629 = vmatpush1.msra.mxu0 0.0
  %1630 = vmatprep.subr.mxu0 0.0
  %1631 = vmatpush1.msra.mxu0 0.0
  %1632 = vmatprep.subr.mxu0 0.0
  %1633 = vmatpush1.msra.mxu0 0.0
  %1634 = vmatprep.subr.mxu0 0.0
  %1635 = vmatpush1.msra.mxu0 0.0
  %1636 = vmatprep.subr.mxu0 0.0
  %1637 = vmatpush1.msra.mxu0 0.0
  %1638 = vmatprep.subr.mxu0 0.0
  %1639 = vmatpush1.msra.mxu0 0.0
  %1640 = vmatprep.subr.mxu0 0.0
  %1641 = vmatpush1.msra.mxu0 0.0
  %1642 = vmatprep.subr.mxu0 0.0
  %1643 = vmatpush1.msra.mxu0 0.0
  %1644 = vmatprep.subr.mxu0 0.0
  %1645 = vmatpush1.msra.mxu0 0.0
  %1646 = vmatprep.subr.mxu0 0.0
  %1647 = vmatpush1.msra.mxu0 0.0
  %1648 = vmatprep.subr.mxu0 0.0
  %1649 = vmatpush1.msra.mxu0 0.0
  %1650 = vmatprep.subr.mxu0 0.0
  %1651 = vmatpush1.msra.mxu0 0.0
  %1652 = vmatprep.subr.mxu0 0.0
  %1653 = vmatpush1.msra.mxu0 0.0
  %1654 = vmatprep.subr.mxu0 0.0
  %1655 = vmatpush1.msra.mxu0 0.0
  %1656 = vmatprep.subr.mxu0 0.0
  %1657 = vmatpush1.msra.mxu0 0.0
  %1658 = vmatprep.subr.mxu0 0.0
  %1659 = vmatpush1.msra.mxu0 0.0
  %1660 = vmatprep.subr.mxu0 0.0
  %1661 = vmatpush1.msra.mxu0 0.0
  %1662 = vmatprep.subr.mxu0 0.0
  %1663 = vmatpush1.msra.mxu0 0.0
  %1664 = vmatprep.subr.mxu0 0.0
  %1665 = vmatpush1.msra.mxu0 0.0
  %1666 = vmatprep.subr.mxu0 0.0
  %1667 = vmatpush1.msra.mxu0 0.0
  %1668 = vmatprep.subr.mxu0 0.0
  %1669 = vmatpush1.msra.mxu0 0.0
  %1670 = vmatprep.subr.mxu0 0.0
  %1671 = vmatpush1.msra.mxu0 0.0
  %1672 = vmatprep.subr.mxu0 0.0
  %1673 = vmatpush1.msra.mxu0 0.0
  %1674 = vmatprep.subr.mxu0 0.0
  %1675 = vmatpush1.msra.mxu0 0.0
  %1676 = vmatprep.subr.mxu0 0.0
  %1677 = vmatpush1.msra.mxu0 0.0
  %1678 = vmatprep.subr.mxu0 0.0
  %1679 = vmatpush1.msra.mxu0 0.0
  %1680 = vmatprep.subr.mxu0 0.0
  %1681 = vmatpush1.msra.mxu0 0.0
  %1682 = vmatprep.subr.mxu0 0.0
  %1683 = vmatpush1.msra.mxu0 0.0
  %1684 = vmatprep.subr.mxu0 0.0
  %1685 = vmatpush1.msra.mxu0 0.0
  %1686 = vmatprep.subr.mxu0 0.0
  %1687 = vmatpush1.msra.mxu0 0.0
  %1688 = vmatprep.subr.mxu0 0.0
  %1689 = vmatpush1.msra.mxu0 0.0
  %1690 = vmatprep.mubr.f32.mxu0 0.0
  %1691 = vmatmul.mubr.f32.gmra.mrb[0].mxu0 %v1426
  %v1692 = vpop.f32.mrb[0].mxu0
  %v1693 = vadd.f32 0.0, %v1692
  %v1694 = vpop.f32.mrb[0].mxu0
  %1695 = vmatprep.mubr.f32.mxu0 0.0
  %1696 = vmatmul.mubr.f32.gmra.mrb[0].mxu0 %v1429
  %v1697 = vpop.f32.mrb[0].mxu0
  %v1698 = vadd.f32 0.0, %v1697
  %v1699 = vpop.f32.mrb[0].mxu0
  %1700 = vmatprep.mubr.f32.mxu0 0.0
  %1701 = vmatmul.mubr.f32.gmra.mrb[0].mxu0 %v1432
  %v1702 = vpop.f32.mrb[0].mxu0
  %v1703 = vadd.f32 0.0, %v1702
  %v1704 = vpop.f32.mrb[0].mxu0
  %1705 = vmatprep.mubr.f32.mxu0 0.0
  %1706 = vmatmul.mubr.f32.gmra.mrb[0].mxu0 %v1435
  %v1707 = vpop.f32.mrb[0].mxu0
  %v1708 = vadd.f32 0.0, %v1707
  %v1709 = vpop.f32.mrb[0].mxu0
  %1710 = vmatprep.mubr.f32.mxu0 0.0
  %1711 = vmatmul.mubr.f32.gmra.mrb[0].mxu0 %v1438
  %v1712 = vpop.f32.mrb[0].mxu0
  %v1713 = vadd.f32 0.0, %v1712
  %v1714 = vpop.f32.mrb[0].mxu0
  %1715 = vmatprep.mubr.f32.mxu0 0.0
  %1716 = vmatmul.mubr.f32.gmra.mrb[0].mxu0 %v1441
  %v1717 = vpop.f32.mrb[0].mxu0
  %v1718 = vadd.f32 0.0, %v1717
  %v1719 = vpop.f32.mrb[0].mxu0
  %1720 = vmatprep.mubr.f32.mxu0 0.0
  %1721 = vmatmul.mubr.f32.gmra.mrb[0].mxu0 %v1444
  %v1722 = vpop.f32.mrb[0].mxu0
  %v1723 = vadd.f32 0.0, %v1722
  %v1724 = vpop.f32.mrb[0].mxu0
  %1725 = vmatprep.mubr.f32.mxu0 0.0
  %1726 = vmatmul.mubr.f32.gmra.mrb[0].mxu0 %v1447
  %v1727 = vpop.f32.mrb[0].mxu0
  %v1728 = vadd.f32 0.0, %v1727
  %v1729 = vpop.f32.mrb[0].mxu0
  %1730 = vmatprep.mubr.f32.mxu0 0.0
  %1731 = vmatmul.mubr.f32.gmra.mrb[0].mxu0 %v1450
  %v1732 = vpop.f32.mrb[0].mxu0
  %v1733 = vadd.f32 0.0, %v1732
  %v1734 = vpop.f32.mrb[0].mxu0
  %1735 = vmatprep.mubr.f32.mxu0 0.0
  %1736 = vmatmul.mubr.f32.gmra.mrb[0].mxu0 %v1453
  %v1737 = vpop.f32.mrb[0].mxu0
  %v1738 = vadd.f32 0.0, %v1737
  %v1739 = vpop.f32.mrb[0].mxu0
  %1740 = vmatprep.mubr.f32.mxu0 0.0
  %1741 = vmatmul.mubr.f32.gmra.mrb[0].mxu0 %v1456
  %v1742 = vpop.f32.mrb[0].mxu0
  %v1743 = vadd.f32 0.0, %v1742
  %v1744 = vpop.f32.mrb[0].mxu0
  %1745 = vmatprep.mubr.f32.mxu0 0.0
  %1746 = vmatmul.mubr.f32.gmra.mrb[0].mxu0 %v1459
  %v1747 = vpop.f32.mrb[0].mxu0
  %v1748 = vadd.f32 0.0, %v1747
  %v1749 = vpop.f32.mrb[0].mxu0
  %1750 = vmatprep.mubr.f32.mxu0 0.0
  %1751 = vmatmul.mubr.f32.gmra.mrb[0].mxu0 %v1462
  %v1752 = vpop.f32.mrb[0].mxu0
  %v1753 = vadd.f32 0.0, %v1752
  %v1754 = vpop.f32.mrb[0].mxu0
  %1755 = vmatprep.mubr.f32.mxu0 0.0
  %1756 = vmatmul.mubr.f32.gmra.mrb[0].mxu0 %v1465
  %v1757 = vpop.f32.mrb[0].mxu0
  %v1758 = vadd.f32 0.0, %v1757
  %v1759 = vpop.f32.mrb[0].mxu0
  %1760 = vmatprep.mubr.f32.mxu0 0.0
  %1761 = vmatmul.mubr.f32.gmra.mrb[0].mxu0 %v1468
  %v1762 = vpop.f32.mrb[0].mxu0
  %v1763 = vadd.f32 0.0, %v1762
  %v1764 = vpop.f32.mrb[0].mxu0
  %1765 = vmatprep.mubr.f32.mxu0 0.0
  %1766 = vmatmul.mubr.f32.gmra.mrb[0].mxu0 %v1471
  %v1767 = vpop.f32.mrb[0].mxu0
  %v1768 = vadd.f32 0.0, %v1767
  %v1769 = vpop.f32.mrb[0].mxu0
  %1770 = vmatprep.mubr.f32.mxu0 0.0
  %1771 = vmatmul.mubr.f32.gmra.mrb[0].mxu0 %v1474
  %v1772 = vpop.f32.mrb[0].mxu0
  %v1773 = vadd.f32 0.0, %v1772
  %v1774 = vpop.f32.mrb[0].mxu0
  %1775 = vmatprep.mubr.f32.mxu0 0.0
  %1776 = vmatmul.mubr.f32.gmra.mrb[0].mxu0 %v1477
  %v1777 = vpop.f32.mrb[0].mxu0
  %v1778 = vadd.f32 0.0, %v1777
  %v1779 = vpop.f32.mrb[0].mxu0
  %1780 = vmatprep.mubr.f32.mxu0 0.0
  %1781 = vmatmul.mubr.f32.gmra.mrb[0].mxu0 %v1480
  %v1782 = vpop.f32.mrb[0].mxu0
  %v1783 = vadd.f32 0.0, %v1782
  %v1784 = vpop.f32.mrb[0].mxu0
  %1785 = vmatprep.mubr.f32.mxu0 0.0
  %1786 = vmatmul.mubr.f32.gmra.mrb[0].mxu0 %v1483
  %v1787 = vpop.f32.mrb[0].mxu0
  %v1788 = vadd.f32 0.0, %v1787
  %v1789 = vpop.f32.mrb[0].mxu0
  %1790 = vmatprep.mubr.f32.mxu0 0.0
  %1791 = vmatmul.mubr.f32.gmra.mrb[0].mxu0 %v1486
  %v1792 = vpop.f32.mrb[0].mxu0
  %v1793 = vadd.f32 0.0, %v1792
  %v1794 = vpop.f32.mrb[0].mxu0
  %1795 = vmatprep.mubr.f32.mxu0 0.0
  %1796 = vmatmul.mubr.f32.gmra.mrb[0].mxu0 %v1489
  %v1797 = vpop.f32.mrb[0].mxu0
  %v1798 = vadd.f32 0.0, %v1797
  %v1799 = vpop.f32.mrb[0].mxu0
  %1800 = vmatprep.mubr.f32.mxu0 0.0
  %1801 = vmatmul.mubr.f32.gmra.mrb[0].mxu0 %v1492
  %v1802 = vpop.f32.mrb[0].mxu0
  %v1803 = vadd.f32 0.0, %v1802
  %v1804 = vpop.f32.mrb[0].mxu0
  %1805 = vmatprep.mubr.f32.mxu0 0.0
  %1806 = vmatmul.mubr.f32.gmra.mrb[0].mxu0 %v1495
  %v1807 = vpop.f32.mrb[0].mxu0
  %v1808 = vadd.f32 0.0, %v1807
  %v1809 = vpop.f32.mrb[0].mxu0
  %1810 = vmatprep.mubr.f32.mxu0 0.0
  %1811 = vmatmul.mubr.f32.gmra.mrb[0].mxu0 %v1498
  %v1812 = vpop.f32.mrb[0].mxu0
  %v1813 = vadd.f32 0.0, %v1812
  %v1814 = vpop.f32.mrb[0].mxu0
  %1815 = vmatprep.mubr.f32.mxu0 0.0
  %1816 = vmatmul.mubr.f32.gmra.mrb[0].mxu0 %v1501
  %v1817 = vpop.f32.mrb[0].mxu0
  %v1818 = vadd.f32 0.0, %v1817
  %v1819 = vpop.f32.mrb[0].mxu0
  %1820 = vmatprep.mubr.f32.mxu0 0.0
  %1821 = vmatmul.mubr.f32.gmra.mrb[0].mxu0 %v1504
  %v1822 = vpop.f32.mrb[0].mxu0
  %v1823 = vadd.f32 0.0, %v1822
  %v1824 = vpop.f32.mrb[0].mxu0
  %1825 = vmatprep.mubr.f32.mxu0 0.0
  %1826 = vmatmul.mubr.f32.gmra.mrb[0].mxu0 %v1507
  %v1827 = vpop.f32.mrb[0].mxu0
  %v1828 = vadd.f32 0.0, %v1827
  %v1829 = vpop.f32.mrb[0].mxu0
  %1830 = vmatprep.mubr.f32.mxu0 0.0
  %1831 = vmatmul.mubr.f32.gmra.mrb[0].mxu0 %v1510
  %v1832 = vpop.f32.mrb[0].mxu0
  %v1833 = vadd.f32 0.0, %v1832
  %v1834 = vpop.f32.mrb[0].mxu0
  %1835 = vmatprep.mubr.f32.mxu0 0.0
  %1836 = vmatmul.mubr.f32.gmra.mrb[0].mxu0 %v1513
  %v1837 = vpop.f32.mrb[0].mxu0
  %v1838 = vadd.f32 0.0, %v1837
  %v1839 = vpop.f32.mrb[0].mxu0
  %1840 = vmatprep.mubr.f32.mxu0 0.0
  %1841 = vmatmul.mubr.f32.gmra.mrb[0].mxu0 %v1516
  %v1842 = vpop.f32.mrb[0].mxu0
  %v1843 = vadd.f32 0.0, %v1842
  %v1844 = vpop.f32.mrb[0].mxu0
  %1845 = vmatprep.mubr.f32.mxu0 0.0
  %1846 = vmatmul.mubr.f32.gmra.mrb[0].mxu0 %v1519
  %v1847 = vpop.f32.mrb[0].mxu0
  %v1848 = vadd.f32 0.0, %v1847
  %v1849 = vpop.f32.mrb[0].mxu0
  %1850 = vmatprep.mubr.f32.mxu0 0.0
  %1851 = vmatmul.mubr.f32.gmra.mrb[0].mxu0 %v1522
  %v1852 = vpop.f32.mrb[0].mxu0
  %v1853 = vadd.f32 0.0, %v1852
  %v1854 = vpop.f32.mrb[0].mxu0
  %1855 = vmatprep.mubr.f32.mxu0 0.0
  %1856 = vmatmul.mubr.f32.gmra.mrb[0].mxu0 %v1525
  %v1857 = vpop.f32.mrb[0].mxu0
  %v1858 = vadd.f32 0.0, %v1857
  %v1859 = vpop.f32.mrb[0].mxu0
  %1860 = vmatprep.mubr.f32.mxu0 0.0
  %1861 = vmatmul.mubr.f32.gmra.mrb[0].mxu0 %v1528
  %v1862 = vpop.f32.mrb[0].mxu0
  %v1863 = vadd.f32 0.0, %v1862
  %v1864 = vpop.f32.mrb[0].mxu0
  %1865 = vmatprep.mubr.f32.mxu0 0.0
  %1866 = vmatmul.mubr.f32.gmra.mrb[0].mxu0 %v1531
  %v1867 = vpop.f32.mrb[0].mxu0
  %v1868 = vadd.f32 0.0, %v1867
  %v1869 = vpop.f32.mrb[0].mxu0
  %1870 = vmatprep.mubr.f32.mxu0 0.0
  %1871 = vmatmul.mubr.f32.gmra.mrb[0].mxu0 %v1534
  %v1872 = vpop.f32.mrb[0].mxu0
  %v1873 = vadd.f32 0.0, %v1872
  %v1874 = vpop.f32.mrb[0].mxu0
  %1875 = vmatprep.mubr.f32.mxu0 0.0
  %1876 = vmatmul.mubr.f32.gmra.mrb[0].mxu0 %v1537
  %v1877 = vpop.f32.mrb[0].mxu0
  %v1878 = vadd.f32 0.0, %v1877
  %v1879 = vpop.f32.mrb[0].mxu0
  %1880 = vmatprep.mubr.f32.mxu0 0.0
  %1881 = vmatmul.mubr.f32.gmra.mrb[0].mxu0 %v1540
  %v1882 = vpop.f32.mrb[0].mxu0
  %v1883 = vadd.f32 0.0, %v1882
  %v1884 = vpop.f32.mrb[0].mxu0
  %1885 = vmatprep.mubr.f32.mxu0 0.0
  %1886 = vmatmul.mubr.f32.gmra.mrb[0].mxu0 %v1543
  %v1887 = vpop.f32.mrb[0].mxu0
  %v1888 = vadd.f32 0.0, %v1887
  %v1889 = vpop.f32.mrb[0].mxu0
  %1890 = vmatprep.mubr.f32.mxu0 0.0
  %1891 = vmatmul.mubr.f32.gmra.mrb[0].mxu0 %v1546
  %v1892 = vpop.f32.mrb[0].mxu0
  %v1893 = vadd.f32 0.0, %v1892
  %v1894 = vpop.f32.mrb[0].mxu0
  %1895 = vmatprep.mubr.f32.mxu0 0.0
  %1896 = vmatmul.mubr.f32.gmra.mrb[0].mxu0 %v1549
  %v1897 = vpop.f32.mrb[0].mxu0
  %v1898 = vadd.f32 0.0, %v1897
  %v1899 = vpop.f32.mrb[0].mxu0
  %1900 = vmatprep.mubr.f32.mxu0 0.0
  %1901 = vmatmul.mubr.f32.gmra.mrb[0].mxu0 %v1552
  %v1902 = vpop.f32.mrb[0].mxu0
  %v1903 = vadd.f32 0.0, %v1902
  %v1904 = vpop.f32.mrb[0].mxu0
  %1905 = vmatprep.mubr.f32.mxu0 0.0
  %1906 = vmatmul.mubr.f32.gmra.mrb[0].mxu0 %v1555
  %v1907 = vpop.f32.mrb[0].mxu0
  %v1908 = vadd.f32 0.0, %v1907
  %v1909 = vpop.f32.mrb[0].mxu0
  %1910 = vmatprep.mubr.f32.mxu0 0.0
  %1911 = vmatmul.mubr.f32.gmra.mrb[0].mxu0 %v1558
  %v1912 = vpop.f32.mrb[0].mxu0
  %v1913 = vadd.f32 0.0, %v1912
  %v1914 = vpop.f32.mrb[0].mxu0
  %1915 = vmatprep.mubr.f32.mxu0 0.0
  %1916 = vmatmul.mubr.f32.gmra.mrb[0].mxu0 %v1561
  %v1917 = vpop.f32.mrb[0].mxu0
  %v1918 = vadd.f32 0.0, %v1917
  %v1919 = vpop.f32.mrb[0].mxu0
  %1920 = vmatprep.mubr.f32.mxu0 0.0
  %1921 = vmatmul.mubr.f32.gmra.mrb[0].mxu0 %v1564
  %v1922 = vpop.f32.mrb[0].mxu0
  %v1923 = vadd.f32 0.0, %v1922
  %v1924 = vpop.f32.mrb[0].mxu0
  %1925 = vmatprep.mubr.f32.mxu0 0.0
  %1926 = vmatmul.mubr.f32.gmra.mrb[0].mxu0 %v1567
  %v1927 = vpop.f32.mrb[0].mxu0
  %v1928 = vadd.f32 0.0, %v1927
  %v1929 = vpop.f32.mrb[0].mxu0
  %1930 = vmatprep.mubr.f32.mxu0 0.0
  %1931 = vmatmul.mubr.f32.gmra.mrb[0].mxu0 %v1570
  %v1932 = vpop.f32.mrb[0].mxu0
  %v1933 = vadd.f32 0.0, %v1932
  %v1934 = vpop.f32.mrb[0].mxu0
  %1935 = vmatprep.mubr.f32.mxu0 0.0
  %1936 = vmatmul.mubr.f32.gmra.mrb[0].mxu0 %v1573
  %v1937 = vpop.f32.mrb[0].mxu0
  %v1938 = vadd.f32 0.0, %v1937
  %v1939 = vpop.f32.mrb[0].mxu0
  %1940 = vmatprep.mubr.f32.mxu0 0.0
  %1941 = vmatmul.mubr.f32.gmra.mrb[0].mxu0 %v1576
  %v1942 = vpop.f32.mrb[0].mxu0
  %v1943 = vadd.f32 0.0, %v1942
  %v1944 = vpop.f32.mrb[0].mxu0
  %1945 = vmatprep.mubr.f32.mxu0 0.0
  %1946 = vmatmul.mubr.f32.gmra.mrb[0].mxu0 %v1579
  %v1947 = vpop.f32.mrb[0].mxu0
  %v1948 = vadd.f32 0.0, %v1947
  %v1949 = vpop.f32.mrb[0].mxu0
  %1950 = vmatprep.mubr.f32.mxu0 0.0
  %1951 = vmatmul.mubr.f32.gmra.mrb[0].mxu0 %v1582
  %v1952 = vpop.f32.mrb[0].mxu0
  %v1953 = vadd.f32 0.0, %v1952
  %v1954 = vpop.f32.mrb[0].mxu0
  %1955 = vmatprep.mubr.f32.mxu0 0.0
  %1956 = vmatmul.mubr.f32.gmra.mrb[0].mxu0 %v1585
  %v1957 = vpop.f32.mrb[0].mxu0
  %v1958 = vadd.f32 0.0, %v1957
  %v1959 = vpop.f32.mrb[0].mxu0
  %1960 = vmatprep.mubr.f32.mxu0 0.0
  %1961 = vmatmul.mubr.f32.gmra.mrb[0].mxu0 %v1588
  %v1962 = vpop.f32.mrb[0].mxu0
  %v1963 = vadd.f32 0.0, %v1962
  %v1964 = vpop.f32.mrb[0].mxu0
  %1965 = vmatprep.mubr.f32.mxu0 0.0
  %1966 = vmatmul.mubr.f32.gmra.mrb[0].mxu0 %v1591
  %v1967 = vpop.f32.mrb[0].mxu0
  %v1968 = vadd.f32 0.0, %v1967
  %v1969 = vpop.f32.mrb[0].mxu0
  %1970 = vmatprep.mubr.f32.mxu0 0.0
  %1971 = vmatmul.mubr.f32.gmra.mrb[0].mxu0 %v1594
  %v1972 = vpop.f32.mrb[0].mxu0
  %v1973 = vadd.f32 0.0, %v1972
  %v1974 = vpop.f32.mrb[0].mxu0
  %1975 = vmatprep.mubr.f32.mxu0 0.0
  %1976 = vmatmul.mubr.f32.gmra.mrb[0].mxu0 %v1597
  %v1977 = vpop.f32.mrb[0].mxu0
  %v1978 = vadd.f32 0.0, %v1977
  %v1979 = vpop.f32.mrb[0].mxu0
  %1980 = vmatprep.mubr.f32.mxu0 0.0
  %1981 = vmatmul.mubr.f32.gmra.mrb[0].mxu0 %v1600
  %v1982 = vpop.f32.mrb[0].mxu0
  %v1983 = vadd.f32 0.0, %v1982
  %v1984 = vpop.f32.mrb[0].mxu0
  %1985 = vmatprep.mubr.f32.mxu0 0.0
  %1986 = vmatmul.mubr.f32.gmra.mrb[0].mxu0 %v1603
  %v1987 = vpop.f32.mrb[0].mxu0
  %v1988 = vadd.f32 0.0, %v1987
  %v1989 = vpop.f32.mrb[0].mxu0
  %1990 = vmatprep.mubr.f32.mxu0 0.0
  %1991 = vmatmul.mubr.f32.gmra.mrb[0].mxu0 %v1606
  %v1992 = vpop.f32.mrb[0].mxu0
  %v1993 = vadd.f32 0.0, %v1992
  %v1994 = vpop.f32.mrb[0].mxu0
  %1995 = vmatprep.mubr.f32.mxu0 0.0
  %1996 = vmatmul.mubr.f32.gmra.mrb[0].mxu0 %v1609
  %v1997 = vpop.f32.mrb[0].mxu0
  %v1998 = vadd.f32 0.0, %v1997
  %v1999 = vpop.f32.mrb[0].mxu0
  %2000 = vmatprep.mubr.f32.mxu0 0.0
  %2001 = vmatmul.mubr.f32.gmra.mrb[0].mxu0 %v1612
  %v2002 = vpop.f32.mrb[0].mxu0
  %v2003 = vadd.f32 0.0, %v2002
  %v2004 = vpop.f32.mrb[0].mxu0
  %2005 = vmatprep.mubr.f32.mxu0 0.0
  %2006 = vmatmul.mubr.f32.gmra.mrb[0].mxu0 %v1615
  %v2007 = vpop.f32.mrb[0].mxu0
  %v2008 = vadd.f32 0.0, %v2007
  %v2009 = vpop.f32.mrb[0].mxu0
  %2010 = vmatprep.mubr.f32.mxu0 0.0
  %2011 = vmatmul.mubr.f32.gmra.mrb[0].mxu0 %v1618
  %v2012 = vpop.f32.mrb[0].mxu0
  %v2013 = vadd.f32 0.0, %v2012
  %v2014 = vpop.f32.mrb[0].mxu0
  %2015 = vmatprep.mubr.f32.mxu0 0.0
  %2016 = vmatmul.mubr.f32.gmra.mrb[0].mxu0 %v1621
  %v2017 = vpop.f32.mrb[0].mxu0
  %v2018 = vadd.f32 0.0, %v2017
  %v2019 = vpop.f32.mrb[0].mxu0
  %2020 = vdwg.mxu0
  %v2021 = vadd.f32 %v1029, %v1693
  %v2022 = vadd.f32 %v1034, %v1698
  %v2023 = vadd.f32 %v1039, %v1703
  %v2024 = vadd.f32 %v1044, %v1708
  %v2025 = vadd.f32 %v1049, %v1713
  %v2026 = vadd.f32 %v1054, %v1718
  %v2027 = vadd.f32 %v1059, %v1723
  %v2028 = vadd.f32 %v1064, %v1728
  %v2029 = vadd.f32 %v1069, %v1733
  %v2030 = vadd.f32 %v1074, %v1738
  %v2031 = vadd.f32 %v1079, %v1743
  %v2032 = vadd.f32 %v1084, %v1748
  %v2033 = vadd.f32 %v1089, %v1753
  %v2034 = vadd.f32 %v1094, %v1758
  %v2035 = vadd.f32 %v1099, %v1763
  %v2036 = vadd.f32 %v1104, %v1768
  %v2037 = vadd.f32 %v1109, %v1773
  %v2038 = vadd.f32 %v1114, %v1778
  %v2039 = vadd.f32 %v1119, %v1783
  %v2040 = vadd.f32 %v1124, %v1788
  %v2041 = vadd.f32 %v1129, %v1793
  %v2042 = vadd.f32 %v1134, %v1798
  %v2043 = vadd.f32 %v1139, %v1803
  %v2044 = vadd.f32 %v1144, %v1808
  %v2045 = vadd.f32 %v1149, %v1813
  %v2046 = vadd.f32 %v1154, %v1818
  %v2047 = vadd.f32 %v1159, %v1823
  %v2048 = vadd.f32 %v1164, %v1828
  %v2049 = vadd.f32 %v1169, %v1833
  %v2050 = vadd.f32 %v1174, %v1838
  %v2051 = vadd.f32 %v1179, %v1843
  %v2052 = vadd.f32 %v1184, %v1848
  %v2053 = vadd.f32 %v1189, %v1853
  %v2054 = vadd.f32 %v1194, %v1858
  %v2055 = vadd.f32 %v1199, %v1863
  %v2056 = vadd.f32 %v1204, %v1868
  %v2057 = vadd.f32 %v1209, %v1873
  %v2058 = vadd.f32 %v1214, %v1878
  %v2059 = vadd.f32 %v1219, %v1883
  %v2060 = vadd.f32 %v1224, %v1888
  %v2061 = vadd.f32 %v1229, %v1893
  %v2062 = vadd.f32 %v1234, %v1898
  %v2063 = vadd.f32 %v1239, %v1903
  %v2064 = vadd.f32 %v1244, %v1908
  %v2065 = vadd.f32 %v1249, %v1913
  %v2066 = vadd.f32 %v1254, %v1918
  %v2067 = vadd.f32 %v1259, %v1923
  %v2068 = vadd.f32 %v1264, %v1928
  %v2069 = vadd.f32 %v1269, %v1933
  %v2070 = vadd.f32 %v1274, %v1938
  %v2071 = vadd.f32 %v1279, %v1943
  %v2072 = vadd.f32 %v1284, %v1948
  %v2073 = vadd.f32 %v1289, %v1953
  %v2074 = vadd.f32 %v1294, %v1958
  %v2075 = vadd.f32 %v1299, %v1963
  %v2076 = vadd.f32 %v1304, %v1968
  %v2077 = vadd.f32 %v1309, %v1973
  %v2078 = vadd.f32 %v1314, %v1978
  %v2079 = vadd.f32 %v1319, %v1983
  %v2080 = vadd.f32 %v1324, %v1988
  %v2081 = vadd.f32 %v1329, %v1993
  %v2082 = vadd.f32 %v1334, %v1998
  %v2083 = vadd.f32 %v1339, %v2003
  %v2084 = vadd.f32 %v1344, %v2008
  %v2085 = vadd.f32 %v1349, %v2013
  %v2086 = vadd.f32 %v1354, %v2018
  %v2087 = vld [vmem:[%s0 + $0x18] sm:$0xff]
  %v2088 = vld [vmem:[%s0 + $0x20] sm:$0xff]
  %v2089 = vld [vmem:[%s0 + $0x28] sm:$0xff]
  %v2090 = vld [vmem:[%s0 + $0x30] sm:$0xff]
  %v2091 = vld [vmem:[%s0 + $0x38] sm:$0xff]
  %v2092 = vld [vmem:[%s0 + $0x40] sm:$0xff]
  %v2093 = vld [vmem:[%s0 + $0x48] sm:$0xff]
  %v2094 = vld [vmem:[%s0 + $0x50] sm:$0xff]
  %v2095 = vld [vmem:[%s0 + $0x58] sm:$0xff]
  %v2096 = vld [vmem:[%s0 + $0x60] sm:$0xff]
  %v2097 = vld [vmem:[%s0 + $0x68] sm:$0xff]
  %v2098 = vld [vmem:[%s0 + $0x70] sm:$0xff]
  %v2099 = vld [vmem:[%s0 + $0x78] sm:$0xff]
  %v2100 = vld [vmem:[%s0 + $0x80] sm:$0xff]
  %v2101 = vld [vmem:[%s0 + $0x88] sm:$0xff]
  %v2102 = vld [vmem:[%s0 + $0x90] sm:$0xff]
  %v2103 = vld [vmem:[%s0 + $0x98] sm:$0xff]
  %v2104 = vld [vmem:[%s0 + $0xa0] sm:$0xff]
  %v2105 = vld [vmem:[%s0 + $0xa8] sm:$0xff]
  %v2106 = vld [vmem:[%s0 + $0xb0] sm:$0xff]
  %v2107 = vld [vmem:[%s0 + $0xb8] sm:$0xff]
  %v2108 = vld [vmem:[%s0 + $0xc0] sm:$0xff]
  %v2109 = vld [vmem:[%s0 + $0xc8] sm:$0xff]
  %v2110 = vld [vmem:[%s0 + $0xd0] sm:$0xff]
  %v2111 = vld [vmem:[%s0 + $0xd8] sm:$0xff]
  %v2112 = vld [vmem:[%s0 + $0xe0] sm:$0xff]
  %v2113 = vld [vmem:[%s0 + $0xe8] sm:$0xff]
  %v2114 = vld [vmem:[%s0 + $0xf0] sm:$0xff]
  %v2115 = vld [vmem:[%s0 + $0xf8] sm:$0xff]
  %v2116 = vld [vmem:[%s0 + $0x100] sm:$0xff]
  %v2117 = vld [vmem:[%s0 + $0x108] sm:$0xff]
  %v2118 = vld [vmem:[%s0 + $0x110] sm:$0xff]
  %v2119 = vld [vmem:[%s0 + $0x118] sm:$0xff]
  %v2120 = vld [vmem:[%s0 + $0x120] sm:$0xff]
  %v2121 = vld [vmem:[%s0 + $0x128] sm:$0xff]
  %v2122 = vld [vmem:[%s0 + $0x130] sm:$0xff]
  %v2123 = vld [vmem:[%s0 + $0x138] sm:$0xff]
  %v2124 = vld [vmem:[%s0 + $0x140] sm:$0xff]
  %v2125 = vld [vmem:[%s0 + $0x148] sm:$0xff]
  %v2126 = vld [vmem:[%s0 + $0x150] sm:$0xff]
  %v2127 = vld [vmem:[%s0 + $0x158] sm:$0xff]
  %v2128 = vld [vmem:[%s0 + $0x160] sm:$0xff]
  %v2129 = vld [vmem:[%s0 + $0x168] sm:$0xff]
  %v2130 = vld [vmem:[%s0 + $0x170] sm:$0xff]
  %v2131 = vld [vmem:[%s0 + $0x178] sm:$0xff]
  %v2132 = vld [vmem:[%s0 + $0x180] sm:$0xff]
  %v2133 = vld [vmem:[%s0 + $0x188] sm:$0xff]
  %v2134 = vld [vmem:[%s0 + $0x190] sm:$0xff]
  %v2135 = vld [vmem:[%s0 + $0x198] sm:$0xff]
  %v2136 = vld [vmem:[%s0 + $0x1a0] sm:$0xff]
  %v2137 = vld [vmem:[%s0 + $0x1a8] sm:$0xff]
  %v2138 = vld [vmem:[%s0 + $0x1b0] sm:$0xff]
  %v2139 = vld [vmem:[%s0 + $0x1b8] sm:$0xff]
  %v2140 = vld [vmem:[%s0 + $0x1c0] sm:$0xff]
  %v2141 = vld [vmem:[%s0 + $0x1c8] sm:$0xff]
  %v2142 = vld [vmem:[%s0 + $0x1d0] sm:$0xff]
  %v2143 = vld [vmem:[%s0 + $0x1d8] sm:$0xff]
  %v2144 = vld [vmem:[%s0 + $0x1e0] sm:$0xff]
  %v2145 = vld [vmem:[%s0 + $0x1e8] sm:$0xff]
  %v2146 = vld [vmem:[%s0 + $0x1f0] sm:$0xff]
  %v2147 = vld [vmem:[%s0 + $0x1f8] sm:$0xff]
  %v2148 = vld [vmem:[%s0 + $0x200] sm:$0xff]
  %v2149 = vld [vmem:[%s0 + $0x208] sm:$0xff]
  %v2150 = vld [vmem:[%s0 + $0x210] sm:$0xff]
  %v2151 = vld [vmem:[%s0 + $0x218] sm:$0xff]
  %v2152 = vld [vmem:[%s0 + $0x220] sm:$0xff]
  %s2153 = scalar_lea.vmem %s1, 12
  %v2154 = vld [vmem:[%s2153] sm:$0x7]
  %v2156 = vsel %vm163, %v2087, 0
  %v2159 = vsel %vm163, %v2088, 0
  %v2162 = vsel %vm163, %v2089, 0
  %v2165 = vsel %vm163, %v2090, 0
  %v2168 = vsel %vm163, %v2091, 0
  %v2171 = vsel %vm163, %v2092, 0
  %v2174 = vsel %vm163, %v2093, 0
  %v2177 = vsel %vm163, %v2094, 0
  %v2180 = vsel %vm163, %v2095, 0
  %v2183 = vsel %vm163, %v2096, 0
  %v2186 = vsel %vm163, %v2097, 0
  %v2189 = vsel %vm163, %v2098, 0
  %v2192 = vsel %vm163, %v2099, 0
  %v2195 = vsel %vm163, %v2100, 0
  %v2198 = vsel %vm163, %v2101, 0
  %v2201 = vsel %vm163, %v2102, 0
  %v2204 = vsel %vm163, %v2103, 0
  %v2207 = vsel %vm163, %v2104, 0
  %v2210 = vsel %vm163, %v2105, 0
  %v2213 = vsel %vm163, %v2106, 0
  %v2216 = vsel %vm163, %v2107, 0
  %v2219 = vsel %vm163, %v2108, 0
  %v2222 = vsel %vm163, %v2109, 0
  %v2225 = vsel %vm163, %v2110, 0
  %v2228 = vsel %vm163, %v2111, 0
  %v2231 = vsel %vm163, %v2112, 0
  %v2234 = vsel %vm163, %v2113, 0
  %v2237 = vsel %vm163, %v2114, 0
  %v2240 = vsel %vm163, %v2115, 0
  %v2243 = vsel %vm163, %v2116, 0
  %v2246 = vsel %vm163, %v2117, 0
  %v2249 = vsel %vm163, %v2118, 0
  %v2252 = vsel %vm163, %v2119, 0
  %v2255 = vsel %vm163, %v2120, 0
  %v2258 = vsel %vm163, %v2121, 0
  %v2261 = vsel %vm163, %v2122, 0
  %v2264 = vsel %vm163, %v2123, 0
  %v2267 = vsel %vm163, %v2124, 0
  %v2270 = vsel %vm163, %v2125, 0
  %v2273 = vsel %vm163, %v2126, 0
  %v2276 = vsel %vm163, %v2127, 0
  %v2279 = vsel %vm163, %v2128, 0
  %v2282 = vsel %vm163, %v2129, 0
  %v2285 = vsel %vm163, %v2130, 0
  %v2288 = vsel %vm163, %v2131, 0
  %v2291 = vsel %vm163, %v2132, 0
  %v2294 = vsel %vm163, %v2133, 0
  %v2297 = vsel %vm163, %v2134, 0
  %v2300 = vsel %vm163, %v2135, 0
  %v2303 = vsel %vm163, %v2136, 0
  %v2306 = vsel %vm163, %v2137, 0
  %v2309 = vsel %vm163, %v2138, 0
  %v2312 = vsel %vm163, %v2139, 0
  %v2315 = vsel %vm163, %v2140, 0
  %v2318 = vsel %vm163, %v2141, 0
  %v2321 = vsel %vm163, %v2142, 0
  %v2324 = vsel %vm163, %v2143, 0
  %v2327 = vsel %vm163, %v2144, 0
  %v2330 = vsel %vm163, %v2145, 0
  %v2333 = vsel %vm163, %v2146, 0
  %v2336 = vsel %vm163, %v2147, 0
  %v2339 = vsel %vm163, %v2148, 0
  %v2342 = vsel %vm163, %v2149, 0
  %v2345 = vsel %vm163, %v2150, 0
  %v2348 = vsel %vm163, %v2151, 0
  %v2351 = vsel %vm163, %v2152, 0
  %v2354 = vsel %vm362, %v2154, 0
  %2356 = vmatprep.subr.mxu0 0.0
  %2357 = vmatpush1.msra.mxu0 %v2354
  %2358 = vmatprep.subr.mxu0 0.0
  %2359 = vmatpush1.msra.mxu0 0.0
  %2360 = vmatprep.subr.mxu0 0.0
  %2361 = vmatpush1.msra.mxu0 0.0
  %2362 = vmatprep.subr.mxu0 0.0
  %2363 = vmatpush1.msra.mxu0 0.0
  %2364 = vmatprep.subr.mxu0 0.0
  %2365 = vmatpush1.msra.mxu0 0.0
  %2366 = vmatprep.subr.mxu0 0.0
  %2367 = vmatpush1.msra.mxu0 0.0
  %2368 = vmatprep.subr.mxu0 0.0
  %2369 = vmatpush1.msra.mxu0 0.0
  %2370 = vmatprep.subr.mxu0 0.0
  %2371 = vmatpush1.msra.mxu0 0.0
  %2372 = vmatprep.subr.mxu0 0.0
  %2373 = vmatpush1.msra.mxu0 0.0
  %2374 = vmatprep.subr.mxu0 0.0
  %2375 = vmatpush1.msra.mxu0 0.0
  %2376 = vmatprep.subr.mxu0 0.0
  %2377 = vmatpush1.msra.mxu0 0.0
  %2378 = vmatprep.subr.mxu0 0.0
  %2379 = vmatpush1.msra.mxu0 0.0
  %2380 = vmatprep.subr.mxu0 0.0
  %2381 = vmatpush1.msra.mxu0 0.0
  %2382 = vmatprep.subr.mxu0 0.0
  %2383 = vmatpush1.msra.mxu0 0.0
  %2384 = vmatprep.subr.mxu0 0.0
  %2385 = vmatpush1.msra.mxu0 0.0
  %2386 = vmatprep.subr.mxu0 0.0
  %2387 = vmatpush1.msra.mxu0 0.0
  %2388 = vmatprep.subr.mxu0 0.0
  %2389 = vmatpush1.msra.mxu0 0.0
  %2390 = vmatprep.subr.mxu0 0.0
  %2391 = vmatpush1.msra.mxu0 0.0
  %2392 = vmatprep.subr.mxu0 0.0
  %2393 = vmatpush1.msra.mxu0 0.0
  %2394 = vmatprep.subr.mxu0 0.0
  %2395 = vmatpush1.msra.mxu0 0.0
  %2396 = vmatprep.subr.mxu0 0.0
  %2397 = vmatpush1.msra.mxu0 0.0
  %2398 = vmatprep.subr.mxu0 0.0
  %2399 = vmatpush1.msra.mxu0 0.0
  %2400 = vmatprep.subr.mxu0 0.0
  %2401 = vmatpush1.msra.mxu0 0.0
  %2402 = vmatprep.subr.mxu0 0.0
  %2403 = vmatpush1.msra.mxu0 0.0
  %2404 = vmatprep.subr.mxu0 0.0
  %2405 = vmatpush1.msra.mxu0 0.0
  %2406 = vmatprep.subr.mxu0 0.0
  %2407 = vmatpush1.msra.mxu0 0.0
  %2408 = vmatprep.subr.mxu0 0.0
  %2409 = vmatpush1.msra.mxu0 0.0
  %2410 = vmatprep.subr.mxu0 0.0
  %2411 = vmatpush1.msra.mxu0 0.0
  %2412 = vmatprep.subr.mxu0 0.0
  %2413 = vmatpush1.msra.mxu0 0.0
  %2414 = vmatprep.subr.mxu0 0.0
  %2415 = vmatpush1.msra.mxu0 0.0
  %2416 = vmatprep.subr.mxu0 0.0
  %2417 = vmatpush1.msra.mxu0 0.0
  %2418 = vmatprep.subr.mxu0 0.0
  %2419 = vmatpush1.msra.mxu0 0.0
  %2420 = vmatprep.mubr.f32.mxu0 0.0
  %2421 = vmatmul.mubr.f32.gmra.mrb[0].mxu0 %v2156
  %v2422 = vpop.f32.mrb[0].mxu0
  %v2423 = vadd.f32 0.0, %v2422
  %v2424 = vpop.f32.mrb[0].mxu0
  %2425 = vmatprep.mubr.f32.mxu0 0.0
  %2426 = vmatmul.mubr.f32.gmra.mrb[0].mxu0 %v2159
  %v2427 = vpop.f32.mrb[0].mxu0
  %v2428 = vadd.f32 0.0, %v2427
  %v2429 = vpop.f32.mrb[0].mxu0
  %2430 = vmatprep.mubr.f32.mxu0 0.0
  %2431 = vmatmul.mubr.f32.gmra.mrb[0].mxu0 %v2162
  %v2432 = vpop.f32.mrb[0].mxu0
  %v2433 = vadd.f32 0.0, %v2432
  %v2434 = vpop.f32.mrb[0].mxu0
  %2435 = vmatprep.mubr.f32.mxu0 0.0
  %2436 = vmatmul.mubr.f32.gmra.mrb[0].mxu0 %v2165
  %v2437 = vpop.f32.mrb[0].mxu0
  %v2438 = vadd.f32 0.0, %v2437
  %v2439 = vpop.f32.mrb[0].mxu0
  %2440 = vmatprep.mubr.f32.mxu0 0.0
  %2441 = vmatmul.mubr.f32.gmra.mrb[0].mxu0 %v2168
  %v2442 = vpop.f32.mrb[0].mxu0
  %v2443 = vadd.f32 0.0, %v2442
  %v2444 = vpop.f32.mrb[0].mxu0
  %2445 = vmatprep.mubr.f32.mxu0 0.0
  %2446 = vmatmul.mubr.f32.gmra.mrb[0].mxu0 %v2171
  %v2447 = vpop.f32.mrb[0].mxu0
  %v2448 = vadd.f32 0.0, %v2447
  %v2449 = vpop.f32.mrb[0].mxu0
  %2450 = vmatprep.mubr.f32.mxu0 0.0
  %2451 = vmatmul.mubr.f32.gmra.mrb[0].mxu0 %v2174
  %v2452 = vpop.f32.mrb[0].mxu0
  %v2453 = vadd.f32 0.0, %v2452
  %v2454 = vpop.f32.mrb[0].mxu0
  %2455 = vmatprep.mubr.f32.mxu0 0.0
  %2456 = vmatmul.mubr.f32.gmra.mrb[0].mxu0 %v2177
  %v2457 = vpop.f32.mrb[0].mxu0
  %v2458 = vadd.f32 0.0, %v2457
  %v2459 = vpop.f32.mrb[0].mxu0
  %2460 = vmatprep.mubr.f32.mxu0 0.0
  %2461 = vmatmul.mubr.f32.gmra.mrb[0].mxu0 %v2180
  %v2462 = vpop.f32.mrb[0].mxu0
  %v2463 = vadd.f32 0.0, %v2462
  %v2464 = vpop.f32.mrb[0].mxu0
  %2465 = vmatprep.mubr.f32.mxu0 0.0
  %2466 = vmatmul.mubr.f32.gmra.mrb[0].mxu0 %v2183
  %v2467 = vpop.f32.mrb[0].mxu0
  %v2468 = vadd.f32 0.0, %v2467
  %v2469 = vpop.f32.mrb[0].mxu0
  %2470 = vmatprep.mubr.f32.mxu0 0.0
  %2471 = vmatmul.mubr.f32.gmra.mrb[0].mxu0 %v2186
  %v2472 = vpop.f32.mrb[0].mxu0
  %v2473 = vadd.f32 0.0, %v2472
  %v2474 = vpop.f32.mrb[0].mxu0
  %2475 = vmatprep.mubr.f32.mxu0 0.0
  %2476 = vmatmul.mubr.f32.gmra.mrb[0].mxu0 %v2189
  %v2477 = vpop.f32.mrb[0].mxu0
  %v2478 = vadd.f32 0.0, %v2477
  %v2479 = vpop.f32.mrb[0].mxu0
  %2480 = vmatprep.mubr.f32.mxu0 0.0
  %2481 = vmatmul.mubr.f32.gmra.mrb[0].mxu0 %v2192
  %v2482 = vpop.f32.mrb[0].mxu0
  %v2483 = vadd.f32 0.0, %v2482
  %v2484 = vpop.f32.mrb[0].mxu0
  %2485 = vmatprep.mubr.f32.mxu0 0.0
  %2486 = vmatmul.mubr.f32.gmra.mrb[0].mxu0 %v2195
  %v2487 = vpop.f32.mrb[0].mxu0
  %v2488 = vadd.f32 0.0, %v2487
  %v2489 = vpop.f32.mrb[0].mxu0
  %2490 = vmatprep.mubr.f32.mxu0 0.0
  %2491 = vmatmul.mubr.f32.gmra.mrb[0].mxu0 %v2198
  %v2492 = vpop.f32.mrb[0].mxu0
  %v2493 = vadd.f32 0.0, %v2492
  %v2494 = vpop.f32.mrb[0].mxu0
  %2495 = vmatprep.mubr.f32.mxu0 0.0
  %2496 = vmatmul.mubr.f32.gmra.mrb[0].mxu0 %v2201
  %v2497 = vpop.f32.mrb[0].mxu0
  %v2498 = vadd.f32 0.0, %v2497
  %v2499 = vpop.f32.mrb[0].mxu0
  %2500 = vmatprep.mubr.f32.mxu0 0.0
  %2501 = vmatmul.mubr.f32.gmra.mrb[0].mxu0 %v2204
  %v2502 = vpop.f32.mrb[0].mxu0
  %v2503 = vadd.f32 0.0, %v2502
  %v2504 = vpop.f32.mrb[0].mxu0
  %2505 = vmatprep.mubr.f32.mxu0 0.0
  %2506 = vmatmul.mubr.f32.gmra.mrb[0].mxu0 %v2207
  %v2507 = vpop.f32.mrb[0].mxu0
  %v2508 = vadd.f32 0.0, %v2507
  %v2509 = vpop.f32.mrb[0].mxu0
  %2510 = vmatprep.mubr.f32.mxu0 0.0
  %2511 = vmatmul.mubr.f32.gmra.mrb[0].mxu0 %v2210
  %v2512 = vpop.f32.mrb[0].mxu0
  %v2513 = vadd.f32 0.0, %v2512
  %v2514 = vpop.f32.mrb[0].mxu0
  %2515 = vmatprep.mubr.f32.mxu0 0.0
  %2516 = vmatmul.mubr.f32.gmra.mrb[0].mxu0 %v2213
  %v2517 = vpop.f32.mrb[0].mxu0
  %v2518 = vadd.f32 0.0, %v2517
  %v2519 = vpop.f32.mrb[0].mxu0
  %2520 = vmatprep.mubr.f32.mxu0 0.0
  %2521 = vmatmul.mubr.f32.gmra.mrb[0].mxu0 %v2216
  %v2522 = vpop.f32.mrb[0].mxu0
  %v2523 = vadd.f32 0.0, %v2522
  %v2524 = vpop.f32.mrb[0].mxu0
  %2525 = vmatprep.mubr.f32.mxu0 0.0
  %2526 = vmatmul.mubr.f32.gmra.mrb[0].mxu0 %v2219
  %v2527 = vpop.f32.mrb[0].mxu0
  %v2528 = vadd.f32 0.0, %v2527
  %v2529 = vpop.f32.mrb[0].mxu0
  %2530 = vmatprep.mubr.f32.mxu0 0.0
  %2531 = vmatmul.mubr.f32.gmra.mrb[0].mxu0 %v2222
  %v2532 = vpop.f32.mrb[0].mxu0
  %v2533 = vadd.f32 0.0, %v2532
  %v2534 = vpop.f32.mrb[0].mxu0
  %2535 = vmatprep.mubr.f32.mxu0 0.0
  %2536 = vmatmul.mubr.f32.gmra.mrb[0].mxu0 %v2225
  %v2537 = vpop.f32.mrb[0].mxu0
  %v2538 = vadd.f32 0.0, %v2537
  %v2539 = vpop.f32.mrb[0].mxu0
  %2540 = vmatprep.mubr.f32.mxu0 0.0
  %2541 = vmatmul.mubr.f32.gmra.mrb[0].mxu0 %v2228
  %v2542 = vpop.f32.mrb[0].mxu0
  %v2543 = vadd.f32 0.0, %v2542
  %v2544 = vpop.f32.mrb[0].mxu0
  %2545 = vmatprep.mubr.f32.mxu0 0.0
  %2546 = vmatmul.mubr.f32.gmra.mrb[0].mxu0 %v2231
  %v2547 = vpop.f32.mrb[0].mxu0
  %v2548 = vadd.f32 0.0, %v2547
  %v2549 = vpop.f32.mrb[0].mxu0
  %2550 = vmatprep.mubr.f32.mxu0 0.0
  %2551 = vmatmul.mubr.f32.gmra.mrb[0].mxu0 %v2234
  %v2552 = vpop.f32.mrb[0].mxu0
  %v2553 = vadd.f32 0.0, %v2552
  %v2554 = vpop.f32.mrb[0].mxu0
  %2555 = vmatprep.mubr.f32.mxu0 0.0
  %2556 = vmatmul.mubr.f32.gmra.mrb[0].mxu0 %v2237
  %v2557 = vpop.f32.mrb[0].mxu0
  %v2558 = vadd.f32 0.0, %v2557
  %v2559 = vpop.f32.mrb[0].mxu0
  %2560 = vmatprep.mubr.f32.mxu0 0.0
  %2561 = vmatmul.mubr.f32.gmra.mrb[0].mxu0 %v2240
  %v2562 = vpop.f32.mrb[0].mxu0
  %v2563 = vadd.f32 0.0, %v2562
  %v2564 = vpop.f32.mrb[0].mxu0
  %2565 = vmatprep.mubr.f32.mxu0 0.0
  %2566 = vmatmul.mubr.f32.gmra.mrb[0].mxu0 %v2243
  %v2567 = vpop.f32.mrb[0].mxu0
  %v2568 = vadd.f32 0.0, %v2567
  %v2569 = vpop.f32.mrb[0].mxu0
  %2570 = vmatprep.mubr.f32.mxu0 0.0
  %2571 = vmatmul.mubr.f32.gmra.mrb[0].mxu0 %v2246
  %v2572 = vpop.f32.mrb[0].mxu0
  %v2573 = vadd.f32 0.0, %v2572
  %v2574 = vpop.f32.mrb[0].mxu0
  %2575 = vmatprep.mubr.f32.mxu0 0.0
  %2576 = vmatmul.mubr.f32.gmra.mrb[0].mxu0 %v2249
  %v2577 = vpop.f32.mrb[0].mxu0
  %v2578 = vadd.f32 0.0, %v2577
  %v2579 = vpop.f32.mrb[0].mxu0
  %2580 = vmatprep.mubr.f32.mxu0 0.0
  %2581 = vmatmul.mubr.f32.gmra.mrb[0].mxu0 %v2252
  %v2582 = vpop.f32.mrb[0].mxu0
  %v2583 = vadd.f32 0.0, %v2582
  %v2584 = vpop.f32.mrb[0].mxu0
  %2585 = vmatprep.mubr.f32.mxu0 0.0
  %2586 = vmatmul.mubr.f32.gmra.mrb[0].mxu0 %v2255
  %v2587 = vpop.f32.mrb[0].mxu0
  %v2588 = vadd.f32 0.0, %v2587
  %v2589 = vpop.f32.mrb[0].mxu0
  %2590 = vmatprep.mubr.f32.mxu0 0.0
  %2591 = vmatmul.mubr.f32.gmra.mrb[0].mxu0 %v2258
  %v2592 = vpop.f32.mrb[0].mxu0
  %v2593 = vadd.f32 0.0, %v2592
  %v2594 = vpop.f32.mrb[0].mxu0
  %2595 = vmatprep.mubr.f32.mxu0 0.0
  %2596 = vmatmul.mubr.f32.gmra.mrb[0].mxu0 %v2261
  %v2597 = vpop.f32.mrb[0].mxu0
  %v2598 = vadd.f32 0.0, %v2597
  %v2599 = vpop.f32.mrb[0].mxu0
  %2600 = vmatprep.mubr.f32.mxu0 0.0
  %2601 = vmatmul.mubr.f32.gmra.mrb[0].mxu0 %v2264
  %v2602 = vpop.f32.mrb[0].mxu0
  %v2603 = vadd.f32 0.0, %v2602
  %v2604 = vpop.f32.mrb[0].mxu0
  %2605 = vmatprep.mubr.f32.mxu0 0.0
  %2606 = vmatmul.mubr.f32.gmra.mrb[0].mxu0 %v2267
  %v2607 = vpop.f32.mrb[0].mxu0
  %v2608 = vadd.f32 0.0, %v2607
  %v2609 = vpop.f32.mrb[0].mxu0
  %2610 = vmatprep.mubr.f32.mxu0 0.0
  %2611 = vmatmul.mubr.f32.gmra.mrb[0].mxu0 %v2270
  %v2612 = vpop.f32.mrb[0].mxu0
  %v2613 = vadd.f32 0.0, %v2612
  %v2614 = vpop.f32.mrb[0].mxu0
  %2615 = vmatprep.mubr.f32.mxu0 0.0
  %2616 = vmatmul.mubr.f32.gmra.mrb[0].mxu0 %v2273
  %v2617 = vpop.f32.mrb[0].mxu0
  %v2618 = vadd.f32 0.0, %v2617
  %v2619 = vpop.f32.mrb[0].mxu0
  %2620 = vmatprep.mubr.f32.mxu0 0.0
  %2621 = vmatmul.mubr.f32.gmra.mrb[0].mxu0 %v2276
  %v2622 = vpop.f32.mrb[0].mxu0
  %v2623 = vadd.f32 0.0, %v2622
  %v2624 = vpop.f32.mrb[0].mxu0
  %2625 = vmatprep.mubr.f32.mxu0 0.0
  %2626 = vmatmul.mubr.f32.gmra.mrb[0].mxu0 %v2279
  %v2627 = vpop.f32.mrb[0].mxu0
  %v2628 = vadd.f32 0.0, %v2627
  %v2629 = vpop.f32.mrb[0].mxu0
  %2630 = vmatprep.mubr.f32.mxu0 0.0
  %2631 = vmatmul.mubr.f32.gmra.mrb[0].mxu0 %v2282
  %v2632 = vpop.f32.mrb[0].mxu0
  %v2633 = vadd.f32 0.0, %v2632
  %v2634 = vpop.f32.mrb[0].mxu0
  %2635 = vmatprep.mubr.f32.mxu0 0.0
  %2636 = vmatmul.mubr.f32.gmra.mrb[0].mxu0 %v2285
  %v2637 = vpop.f32.mrb[0].mxu0
  %v2638 = vadd.f32 0.0, %v2637
  %v2639 = vpop.f32.mrb[0].mxu0
  %2640 = vmatprep.mubr.f32.mxu0 0.0
  %2641 = vmatmul.mubr.f32.gmra.mrb[0].mxu0 %v2288
  %v2642 = vpop.f32.mrb[0].mxu0
  %v2643 = vadd.f32 0.0, %v2642
  %v2644 = vpop.f32.mrb[0].mxu0
  %2645 = vmatprep.mubr.f32.mxu0 0.0
  %2646 = vmatmul.mubr.f32.gmra.mrb[0].mxu0 %v2291
  %v2647 = vpop.f32.mrb[0].mxu0
  %v2648 = vadd.f32 0.0, %v2647
  %v2649 = vpop.f32.mrb[0].mxu0
  %2650 = vmatprep.mubr.f32.mxu0 0.0
  %2651 = vmatmul.mubr.f32.gmra.mrb[0].mxu0 %v2294
  %v2652 = vpop.f32.mrb[0].mxu0
  %v2653 = vadd.f32 0.0, %v2652
  %v2654 = vpop.f32.mrb[0].mxu0
  %2655 = vmatprep.mubr.f32.mxu0 0.0
  %2656 = vmatmul.mubr.f32.gmra.mrb[0].mxu0 %v2297
  %v2657 = vpop.f32.mrb[0].mxu0
  %v2658 = vadd.f32 0.0, %v2657
  %v2659 = vpop.f32.mrb[0].mxu0
  %2660 = vmatprep.mubr.f32.mxu0 0.0
  %2661 = vmatmul.mubr.f32.gmra.mrb[0].mxu0 %v2300
  %v2662 = vpop.f32.mrb[0].mxu0
  %v2663 = vadd.f32 0.0, %v2662
  %v2664 = vpop.f32.mrb[0].mxu0
  %2665 = vmatprep.mubr.f32.mxu0 0.0
  %2666 = vmatmul.mubr.f32.gmra.mrb[0].mxu0 %v2303
  %v2667 = vpop.f32.mrb[0].mxu0
  %v2668 = vadd.f32 0.0, %v2667
  %v2669 = vpop.f32.mrb[0].mxu0
  %2670 = vmatprep.mubr.f32.mxu0 0.0
  %2671 = vmatmul.mubr.f32.gmra.mrb[0].mxu0 %v2306
  %v2672 = vpop.f32.mrb[0].mxu0
  %v2673 = vadd.f32 0.0, %v2672
  %v2674 = vpop.f32.mrb[0].mxu0
  %2675 = vmatprep.mubr.f32.mxu0 0.0
  %2676 = vmatmul.mubr.f32.gmra.mrb[0].mxu0 %v2309
  %v2677 = vpop.f32.mrb[0].mxu0
  %v2678 = vadd.f32 0.0, %v2677
  %v2679 = vpop.f32.mrb[0].mxu0
  %2680 = vmatprep.mubr.f32.mxu0 0.0
  %2681 = vmatmul.mubr.f32.gmra.mrb[0].mxu0 %v2312
  %v2682 = vpop.f32.mrb[0].mxu0
  %v2683 = vadd.f32 0.0, %v2682
  %v2684 = vpop.f32.mrb[0].mxu0
  %2685 = vmatprep.mubr.f32.mxu0 0.0
  %2686 = vmatmul.mubr.f32.gmra.mrb[0].mxu0 %v2315
  %v2687 = vpop.f32.mrb[0].mxu0
  %v2688 = vadd.f32 0.0, %v2687
  %v2689 = vpop.f32.mrb[0].mxu0
  %2690 = vmatprep.mubr.f32.mxu0 0.0
  %2691 = vmatmul.mubr.f32.gmra.mrb[0].mxu0 %v2318
  %v2692 = vpop.f32.mrb[0].mxu0
  %v2693 = vadd.f32 0.0, %v2692
  %v2694 = vpop.f32.mrb[0].mxu0
  %2695 = vmatprep.mubr.f32.mxu0 0.0
  %2696 = vmatmul.mubr.f32.gmra.mrb[0].mxu0 %v2321
  %v2697 = vpop.f32.mrb[0].mxu0
  %v2698 = vadd.f32 0.0, %v2697
  %v2699 = vpop.f32.mrb[0].mxu0
  %2700 = vmatprep.mubr.f32.mxu0 0.0
  %2701 = vmatmul.mubr.f32.gmra.mrb[0].mxu0 %v2324
  %v2702 = vpop.f32.mrb[0].mxu0
  %v2703 = vadd.f32 0.0, %v2702
  %v2704 = vpop.f32.mrb[0].mxu0
  %2705 = vmatprep.mubr.f32.mxu0 0.0
  %2706 = vmatmul.mubr.f32.gmra.mrb[0].mxu0 %v2327
  %v2707 = vpop.f32.mrb[0].mxu0
  %v2708 = vadd.f32 0.0, %v2707
  %v2709 = vpop.f32.mrb[0].mxu0
  %2710 = vmatprep.mubr.f32.mxu0 0.0
  %2711 = vmatmul.mubr.f32.gmra.mrb[0].mxu0 %v2330
  %v2712 = vpop.f32.mrb[0].mxu0
  %v2713 = vadd.f32 0.0, %v2712
  %v2714 = vpop.f32.mrb[0].mxu0
  %2715 = vmatprep.mubr.f32.mxu0 0.0
  %2716 = vmatmul.mubr.f32.gmra.mrb[0].mxu0 %v2333
  %v2717 = vpop.f32.mrb[0].mxu0
  %v2718 = vadd.f32 0.0, %v2717
  %v2719 = vpop.f32.mrb[0].mxu0
  %2720 = vmatprep.mubr.f32.mxu0 0.0
  %2721 = vmatmul.mubr.f32.gmra.mrb[0].mxu0 %v2336
  %v2722 = vpop.f32.mrb[0].mxu0
  %v2723 = vadd.f32 0.0, %v2722
  %v2724 = vpop.f32.mrb[0].mxu0
  %2725 = vmatprep.mubr.f32.mxu0 0.0
  %2726 = vmatmul.mubr.f32.gmra.mrb[0].mxu0 %v2339
  %v2727 = vpop.f32.mrb[0].mxu0
  %v2728 = vadd.f32 0.0, %v2727
  %v2729 = vpop.f32.mrb[0].mxu0
  %2730 = vmatprep.mubr.f32.mxu0 0.0
  %2731 = vmatmul.mubr.f32.gmra.mrb[0].mxu0 %v2342
  %v2732 = vpop.f32.mrb[0].mxu0
  %v2733 = vadd.f32 0.0, %v2732
  %v2734 = vpop.f32.mrb[0].mxu0
  %2735 = vmatprep.mubr.f32.mxu0 0.0
  %2736 = vmatmul.mubr.f32.gmra.mrb[0].mxu0 %v2345
  %v2737 = vpop.f32.mrb[0].mxu0
  %v2738 = vadd.f32 0.0, %v2737
  %v2739 = vpop.f32.mrb[0].mxu0
  %2740 = vmatprep.mubr.f32.mxu0 0.0
  %2741 = vmatmul.mubr.f32.gmra.mrb[0].mxu0 %v2348
  %v2742 = vpop.f32.mrb[0].mxu0
  %v2743 = vadd.f32 0.0, %v2742
  %v2744 = vpop.f32.mrb[0].mxu0
  %2745 = vmatprep.mubr.f32.mxu0 0.0
  %2746 = vmatmul.mubr.f32.gmra.mrb[0].mxu0 %v2351
  %v2747 = vpop.f32.mrb[0].mxu0
  %v2748 = vadd.f32 0.0, %v2747
  %v2749 = vpop.f32.mrb[0].mxu0
  %2750 = vdwg.mxu0
  %v2751 = vadd.f32 %v2021, %v2423
  %v2752 = vadd.f32 %v2022, %v2428
  %v2753 = vadd.f32 %v2023, %v2433
  %v2754 = vadd.f32 %v2024, %v2438
  %v2755 = vadd.f32 %v2025, %v2443
  %v2756 = vadd.f32 %v2026, %v2448
  %v2757 = vadd.f32 %v2027, %v2453
  %v2758 = vadd.f32 %v2028, %v2458
  %v2759 = vadd.f32 %v2029, %v2463
  %v2760 = vadd.f32 %v2030, %v2468
  %v2761 = vadd.f32 %v2031, %v2473
  %v2762 = vadd.f32 %v2032, %v2478
  %v2763 = vadd.f32 %v2033, %v2483
  %v2764 = vadd.f32 %v2034, %v2488
  %v2765 = vadd.f32 %v2035, %v2493
  %v2766 = vadd.f32 %v2036, %v2498
  %v2767 = vadd.f32 %v2037, %v2503
  %v2768 = vadd.f32 %v2038, %v2508
  %v2769 = vadd.f32 %v2039, %v2513
  %v2770 = vadd.f32 %v2040, %v2518
  %v2771 = vadd.f32 %v2041, %v2523
  %v2772 = vadd.f32 %v2042, %v2528
  %v2773 = vadd.f32 %v2043, %v2533
  %v2774 = vadd.f32 %v2044, %v2538
  %v2775 = vadd.f32 %v2045, %v2543
  %v2776 = vadd.f32 %v2046, %v2548
  %v2777 = vadd.f32 %v2047, %v2553
  %v2778 = vadd.f32 %v2048, %v2558
  %v2779 = vadd.f32 %v2049, %v2563
  %v2780 = vadd.f32 %v2050, %v2568
  %v2781 = vadd.f32 %v2051, %v2573
  %v2782 = vadd.f32 %v2052, %v2578
  %v2783 = vadd.f32 %v2053, %v2583
  %v2784 = vadd.f32 %v2054, %v2588
  %v2785 = vadd.f32 %v2055, %v2593
  %v2786 = vadd.f32 %v2056, %v2598
  %v2787 = vadd.f32 %v2057, %v2603
  %v2788 = vadd.f32 %v2058, %v2608
  %v2789 = vadd.f32 %v2059, %v2613
  %v2790 = vadd.f32 %v2060, %v2618
  %v2791 = vadd.f32 %v2061, %v2623
  %v2792 = vadd.f32 %v2062, %v2628
  %v2793 = vadd.f32 %v2063, %v2633
  %v2794 = vadd.f32 %v2064, %v2638
  %v2795 = vadd.f32 %v2065, %v2643
  %v2796 = vadd.f32 %v2066, %v2648
  %v2797 = vadd.f32 %v2067, %v2653
  %v2798 = vadd.f32 %v2068, %v2658
  %v2799 = vadd.f32 %v2069, %v2663
  %v2800 = vadd.f32 %v2070, %v2668
  %v2801 = vadd.f32 %v2071, %v2673
  %v2802 = vadd.f32 %v2072, %v2678
  %v2803 = vadd.f32 %v2073, %v2683
  %v2804 = vadd.f32 %v2074, %v2688
  %v2805 = vadd.f32 %v2075, %v2693
  %v2806 = vadd.f32 %v2076, %v2698
  %v2807 = vadd.f32 %v2077, %v2703
  %v2808 = vadd.f32 %v2078, %v2708
  %v2809 = vadd.f32 %v2079, %v2713
  %v2810 = vadd.f32 %v2080, %v2718
  %v2811 = vadd.f32 %v2081, %v2723
  %v2812 = vadd.f32 %v2082, %v2728
  %v2813 = vadd.f32 %v2083, %v2733
  %v2814 = vadd.f32 %v2084, %v2738
  %v2815 = vadd.f32 %v2085, %v2743
  %v2816 = vadd.f32 %v2086, %v2748
  %v2817 = vld [vmem:[%s0 + $0x19] sm:$0xff]
  %v2818 = vld [vmem:[%s0 + $0x21] sm:$0xff]
  %v2819 = vld [vmem:[%s0 + $0x29] sm:$0xff]
  %v2820 = vld [vmem:[%s0 + $0x31] sm:$0xff]
  %v2821 = vld [vmem:[%s0 + $0x39] sm:$0xff]
  %v2822 = vld [vmem:[%s0 + $0x41] sm:$0xff]
  %v2823 = vld [vmem:[%s0 + $0x49] sm:$0xff]
  %v2824 = vld [vmem:[%s0 + $0x51] sm:$0xff]
  %v2825 = vld [vmem:[%s0 + $0x59] sm:$0xff]
  %v2826 = vld [vmem:[%s0 + $0x61] sm:$0xff]
  %v2827 = vld [vmem:[%s0 + $0x69] sm:$0xff]
  %v2828 = vld [vmem:[%s0 + $0x71] sm:$0xff]
  %v2829 = vld [vmem:[%s0 + $0x79] sm:$0xff]
  %v2830 = vld [vmem:[%s0 + $0x81] sm:$0xff]
  %v2831 = vld [vmem:[%s0 + $0x89] sm:$0xff]
  %v2832 = vld [vmem:[%s0 + $0x91] sm:$0xff]
  %v2833 = vld [vmem:[%s0 + $0x99] sm:$0xff]
  %v2834 = vld [vmem:[%s0 + $0xa1] sm:$0xff]
  %v2835 = vld [vmem:[%s0 + $0xa9] sm:$0xff]
  %v2836 = vld [vmem:[%s0 + $0xb1] sm:$0xff]
  %v2837 = vld [vmem:[%s0 + $0xb9] sm:$0xff]
  %v2838 = vld [vmem:[%s0 + $0xc1] sm:$0xff]
  %v2839 = vld [vmem:[%s0 + $0xc9] sm:$0xff]
  %v2840 = vld [vmem:[%s0 + $0xd1] sm:$0xff]
  %v2841 = vld [vmem:[%s0 + $0xd9] sm:$0xff]
  %v2842 = vld [vmem:[%s0 + $0xe1] sm:$0xff]
  %v2843 = vld [vmem:[%s0 + $0xe9] sm:$0xff]
  %v2844 = vld [vmem:[%s0 + $0xf1] sm:$0xff]
  %v2845 = vld [vmem:[%s0 + $0xf9] sm:$0xff]
  %v2846 = vld [vmem:[%s0 + $0x101] sm:$0xff]
  %v2847 = vld [vmem:[%s0 + $0x109] sm:$0xff]
  %v2848 = vld [vmem:[%s0 + $0x111] sm:$0xff]
  %v2849 = vld [vmem:[%s0 + $0x119] sm:$0xff]
  %v2850 = vld [vmem:[%s0 + $0x121] sm:$0xff]
  %v2851 = vld [vmem:[%s0 + $0x129] sm:$0xff]
  %v2852 = vld [vmem:[%s0 + $0x131] sm:$0xff]
  %v2853 = vld [vmem:[%s0 + $0x139] sm:$0xff]
  %v2854 = vld [vmem:[%s0 + $0x141] sm:$0xff]
  %v2855 = vld [vmem:[%s0 + $0x149] sm:$0xff]
  %v2856 = vld [vmem:[%s0 + $0x151] sm:$0xff]
  %v2857 = vld [vmem:[%s0 + $0x159] sm:$0xff]
  %v2858 = vld [vmem:[%s0 + $0x161] sm:$0xff]
  %v2859 = vld [vmem:[%s0 + $0x169] sm:$0xff]
  %v2860 = vld [vmem:[%s0 + $0x171] sm:$0xff]
  %v2861 = vld [vmem:[%s0 + $0x179] sm:$0xff]
  %v2862 = vld [vmem:[%s0 + $0x181] sm:$0xff]
  %v2863 = vld [vmem:[%s0 + $0x189] sm:$0xff]
  %v2864 = vld [vmem:[%s0 + $0x191] sm:$0xff]
  %v2865 = vld [vmem:[%s0 + $0x199] sm:$0xff]
  %v2866 = vld [vmem:[%s0 + $0x1a1] sm:$0xff]
  %v2867 = vld [vmem:[%s0 + $0x1a9] sm:$0xff]
  %v2868 = vld [vmem:[%s0 + $0x1b1] sm:$0xff]
  %v2869 = vld [vmem:[%s0 + $0x1b9] sm:$0xff]
  %v2870 = vld [vmem:[%s0 + $0x1c1] sm:$0xff]
  %v2871 = vld [vmem:[%s0 + $0x1c9] sm:$0xff]
  %v2872 = vld [vmem:[%s0 + $0x1d1] sm:$0xff]
  %v2873 = vld [vmem:[%s0 + $0x1d9] sm:$0xff]
  %v2874 = vld [vmem:[%s0 + $0x1e1] sm:$0xff]
  %v2875 = vld [vmem:[%s0 + $0x1e9] sm:$0xff]
  %v2876 = vld [vmem:[%s0 + $0x1f1] sm:$0xff]
  %v2877 = vld [vmem:[%s0 + $0x1f9] sm:$0xff]
  %v2878 = vld [vmem:[%s0 + $0x201] sm:$0xff]
  %v2879 = vld [vmem:[%s0 + $0x209] sm:$0xff]
  %v2880 = vld [vmem:[%s0 + $0x211] sm:$0xff]
  %v2881 = vld [vmem:[%s0 + $0x219] sm:$0xff]
  %v2882 = vld [vmem:[%s0 + $0x221] sm:$0xff]
  %s2883 = scalar_lea.vmem %s1, 16
  %v2884 = vld [vmem:[%s2883] sm:$0x7]
  %v2886 = vsel %vm163, %v2817, 0
  %v2889 = vsel %vm163, %v2818, 0
  %v2892 = vsel %vm163, %v2819, 0
  %v2895 = vsel %vm163, %v2820, 0
  %v2898 = vsel %vm163, %v2821, 0
  %v2901 = vsel %vm163, %v2822, 0
  %v2904 = vsel %vm163, %v2823, 0
  %v2907 = vsel %vm163, %v2824, 0
  %v2910 = vsel %vm163, %v2825, 0
  %v2913 = vsel %vm163, %v2826, 0
  %v2916 = vsel %vm163, %v2827, 0
  %v2919 = vsel %vm163, %v2828, 0
  %v2922 = vsel %vm163, %v2829, 0
  %v2925 = vsel %vm163, %v2830, 0
  %v2928 = vsel %vm163, %v2831, 0
  %v2931 = vsel %vm163, %v2832, 0
  %v2934 = vsel %vm163, %v2833, 0
  %v2937 = vsel %vm163, %v2834, 0
  %v2940 = vsel %vm163, %v2835, 0
  %v2943 = vsel %vm163, %v2836, 0
  %v2946 = vsel %vm163, %v2837, 0
  %v2949 = vsel %vm163, %v2838, 0
  %v2952 = vsel %vm163, %v2839, 0
  %v2955 = vsel %vm163, %v2840, 0
  %v2958 = vsel %vm163, %v2841, 0
  %v2961 = vsel %vm163, %v2842, 0
  %v2964 = vsel %vm163, %v2843, 0
  %v2967 = vsel %vm163, %v2844, 0
  %v2970 = vsel %vm163, %v2845, 0
  %v2973 = vsel %vm163, %v2846, 0
  %v2976 = vsel %vm163, %v2847, 0
  %v2979 = vsel %vm163, %v2848, 0
  %v2982 = vsel %vm163, %v2849, 0
  %v2985 = vsel %vm163, %v2850, 0
  %v2988 = vsel %vm163, %v2851, 0
  %v2991 = vsel %vm163, %v2852, 0
  %v2994 = vsel %vm163, %v2853, 0
  %v2997 = vsel %vm163, %v2854, 0
  %v3000 = vsel %vm163, %v2855, 0
  %v3003 = vsel %vm163, %v2856, 0
  %v3006 = vsel %vm163, %v2857, 0
  %v3009 = vsel %vm163, %v2858, 0
  %v3012 = vsel %vm163, %v2859, 0
  %v3015 = vsel %vm163, %v2860, 0
  %v3018 = vsel %vm163, %v2861, 0
  %v3021 = vsel %vm163, %v2862, 0
  %v3024 = vsel %vm163, %v2863, 0
  %v3027 = vsel %vm163, %v2864, 0
  %v3030 = vsel %vm163, %v2865, 0
  %v3033 = vsel %vm163, %v2866, 0
  %v3036 = vsel %vm163, %v2867, 0
  %v3039 = vsel %vm163, %v2868, 0
  %v3042 = vsel %vm163, %v2869, 0
  %v3045 = vsel %vm163, %v2870, 0
  %v3048 = vsel %vm163, %v2871, 0
  %v3051 = vsel %vm163, %v2872, 0
  %v3054 = vsel %vm163, %v2873, 0
  %v3057 = vsel %vm163, %v2874, 0
  %v3060 = vsel %vm163, %v2875, 0
  %v3063 = vsel %vm163, %v2876, 0
  %v3066 = vsel %vm163, %v2877, 0
  %v3069 = vsel %vm163, %v2878, 0
  %v3072 = vsel %vm163, %v2879, 0
  %v3075 = vsel %vm163, %v2880, 0
  %v3078 = vsel %vm163, %v2881, 0
  %v3081 = vsel %vm163, %v2882, 0
  %v3084 = vsel %vm362, %v2884, 0
  %3086 = vmatprep.subr.mxu0 0.0
  %3087 = vmatpush1.msra.mxu0 %v3084
  %3088 = vmatprep.subr.mxu0 0.0
  %3089 = vmatpush1.msra.mxu0 0.0
  %3090 = vmatprep.subr.mxu0 0.0
  %3091 = vmatpush1.msra.mxu0 0.0
  %3092 = vmatprep.subr.mxu0 0.0
  %3093 = vmatpush1.msra.mxu0 0.0
  %3094 = vmatprep.subr.mxu0 0.0
  %3095 = vmatpush1.msra.mxu0 0.0
  %3096 = vmatprep.subr.mxu0 0.0
  %3097 = vmatpush1.msra.mxu0 0.0
  %3098 = vmatprep.subr.mxu0 0.0
  %3099 = vmatpush1.msra.mxu0 0.0
  %3100 = vmatprep.subr.mxu0 0.0
  %3101 = vmatpush1.msra.mxu0 0.0
  %3102 = vmatprep.subr.mxu0 0.0
  %3103 = vmatpush1.msra.mxu0 0.0
  %3104 = vmatprep.subr.mxu0 0.0
  %3105 = vmatpush1.msra.mxu0 0.0
  %3106 = vmatprep.subr.mxu0 0.0
  %3107 = vmatpush1.msra.mxu0 0.0
  %3108 = vmatprep.subr.mxu0 0.0
  %3109 = vmatpush1.msra.mxu0 0.0
  %3110 = vmatprep.subr.mxu0 0.0
  %3111 = vmatpush1.msra.mxu0 0.0
  %3112 = vmatprep.subr.mxu0 0.0
  %3113 = vmatpush1.msra.mxu0 0.0
  %3114 = vmatprep.subr.mxu0 0.0
  %3115 = vmatpush1.msra.mxu0 0.0
  %3116 = vmatprep.subr.mxu0 0.0
  %3117 = vmatpush1.msra.mxu0 0.0
  %3118 = vmatprep.subr.mxu0 0.0
  %3119 = vmatpush1.msra.mxu0 0.0
  %3120 = vmatprep.subr.mxu0 0.0
  %3121 = vmatpush1.msra.mxu0 0.0
  %3122 = vmatprep.subr.mxu0 0.0
  %3123 = vmatpush1.msra.mxu0 0.0
  %3124 = vmatprep.subr.mxu0 0.0
  %3125 = vmatpush1.msra.mxu0 0.0
  %3126 = vmatprep.subr.mxu0 0.0
  %3127 = vmatpush1.msra.mxu0 0.0
  %3128 = vmatprep.subr.mxu0 0.0
  %3129 = vmatpush1.msra.mxu0 0.0
  %3130 = vmatprep.subr.mxu0 0.0
  %3131 = vmatpush1.msra.mxu0 0.0
  %3132 = vmatprep.subr.mxu0 0.0
  %3133 = vmatpush1.msra.mxu0 0.0
  %3134 = vmatprep.subr.mxu0 0.0
  %3135 = vmatpush1.msra.mxu0 0.0
  %3136 = vmatprep.subr.mxu0 0.0
  %3137 = vmatpush1.msra.mxu0 0.0
  %3138 = vmatprep.subr.mxu0 0.0
  %3139 = vmatpush1.msra.mxu0 0.0
  %3140 = vmatprep.subr.mxu0 0.0
  %3141 = vmatpush1.msra.mxu0 0.0
  %3142 = vmatprep.subr.mxu0 0.0
  %3143 = vmatpush1.msra.mxu0 0.0
  %3144 = vmatprep.subr.mxu0 0.0
  %3145 = vmatpush1.msra.mxu0 0.0
  %3146 = vmatprep.subr.mxu0 0.0
  %3147 = vmatpush1.msra.mxu0 0.0
  %3148 = vmatprep.subr.mxu0 0.0
  %3149 = vmatpush1.msra.mxu0 0.0
  %3150 = vmatprep.mubr.f32.mxu0 0.0
  %3151 = vmatmul.mubr.f32.gmra.mrb[0].mxu0 %v2886
  %v3152 = vpop.f32.mrb[0].mxu0
  %v3153 = vadd.f32 0.0, %v3152
  %v3154 = vpop.f32.mrb[0].mxu0
  %3155 = vmatprep.mubr.f32.mxu0 0.0
  %3156 = vmatmul.mubr.f32.gmra.mrb[0].mxu0 %v2889
  %v3157 = vpop.f32.mrb[0].mxu0
  %v3158 = vadd.f32 0.0, %v3157
  %v3159 = vpop.f32.mrb[0].mxu0
  %3160 = vmatprep.mubr.f32.mxu0 0.0
  %3161 = vmatmul.mubr.f32.gmra.mrb[0].mxu0 %v2892
  %v3162 = vpop.f32.mrb[0].mxu0
  %v3163 = vadd.f32 0.0, %v3162
  %v3164 = vpop.f32.mrb[0].mxu0
  %3165 = vmatprep.mubr.f32.mxu0 0.0
  %3166 = vmatmul.mubr.f32.gmra.mrb[0].mxu0 %v2895
  %v3167 = vpop.f32.mrb[0].mxu0
  %v3168 = vadd.f32 0.0, %v3167
  %v3169 = vpop.f32.mrb[0].mxu0
  %3170 = vmatprep.mubr.f32.mxu0 0.0
  %3171 = vmatmul.mubr.f32.gmra.mrb[0].mxu0 %v2898
  %v3172 = vpop.f32.mrb[0].mxu0
  %v3173 = vadd.f32 0.0, %v3172
  %v3174 = vpop.f32.mrb[0].mxu0
  %3175 = vmatprep.mubr.f32.mxu0 0.0
  %3176 = vmatmul.mubr.f32.gmra.mrb[0].mxu0 %v2901
  %v3177 = vpop.f32.mrb[0].mxu0
  %v3178 = vadd.f32 0.0, %v3177
  %v3179 = vpop.f32.mrb[0].mxu0
  %3180 = vmatprep.mubr.f32.mxu0 0.0
  %3181 = vmatmul.mubr.f32.gmra.mrb[0].mxu0 %v2904
  %v3182 = vpop.f32.mrb[0].mxu0
  %v3183 = vadd.f32 0.0, %v3182
  %v3184 = vpop.f32.mrb[0].mxu0
  %3185 = vmatprep.mubr.f32.mxu0 0.0
  %3186 = vmatmul.mubr.f32.gmra.mrb[0].mxu0 %v2907
  %v3187 = vpop.f32.mrb[0].mxu0
  %v3188 = vadd.f32 0.0, %v3187
  %v3189 = vpop.f32.mrb[0].mxu0
  %3190 = vmatprep.mubr.f32.mxu0 0.0
  %3191 = vmatmul.mubr.f32.gmra.mrb[0].mxu0 %v2910
  %v3192 = vpop.f32.mrb[0].mxu0
  %v3193 = vadd.f32 0.0, %v3192
  %v3194 = vpop.f32.mrb[0].mxu0
  %3195 = vmatprep.mubr.f32.mxu0 0.0
  %3196 = vmatmul.mubr.f32.gmra.mrb[0].mxu0 %v2913
  %v3197 = vpop.f32.mrb[0].mxu0
  %v3198 = vadd.f32 0.0, %v3197
  %v3199 = vpop.f32.mrb[0].mxu0
  %3200 = vmatprep.mubr.f32.mxu0 0.0
  %3201 = vmatmul.mubr.f32.gmra.mrb[0].mxu0 %v2916
  %v3202 = vpop.f32.mrb[0].mxu0
  %v3203 = vadd.f32 0.0, %v3202
  %v3204 = vpop.f32.mrb[0].mxu0
  %3205 = vmatprep.mubr.f32.mxu0 0.0
  %3206 = vmatmul.mubr.f32.gmra.mrb[0].mxu0 %v2919
  %v3207 = vpop.f32.mrb[0].mxu0
  %v3208 = vadd.f32 0.0, %v3207
  %v3209 = vpop.f32.mrb[0].mxu0
  %3210 = vmatprep.mubr.f32.mxu0 0.0
  %3211 = vmatmul.mubr.f32.gmra.mrb[0].mxu0 %v2922
  %v3212 = vpop.f32.mrb[0].mxu0
  %v3213 = vadd.f32 0.0, %v3212
  %v3214 = vpop.f32.mrb[0].mxu0
  %3215 = vmatprep.mubr.f32.mxu0 0.0
  %3216 = vmatmul.mubr.f32.gmra.mrb[0].mxu0 %v2925
  %v3217 = vpop.f32.mrb[0].mxu0
  %v3218 = vadd.f32 0.0, %v3217
  %v3219 = vpop.f32.mrb[0].mxu0
  %3220 = vmatprep.mubr.f32.mxu0 0.0
  %3221 = vmatmul.mubr.f32.gmra.mrb[0].mxu0 %v2928
  %v3222 = vpop.f32.mrb[0].mxu0
  %v3223 = vadd.f32 0.0, %v3222
  %v3224 = vpop.f32.mrb[0].mxu0
  %3225 = vmatprep.mubr.f32.mxu0 0.0
  %3226 = vmatmul.mubr.f32.gmra.mrb[0].mxu0 %v2931
  %v3227 = vpop.f32.mrb[0].mxu0
  %v3228 = vadd.f32 0.0, %v3227
  %v3229 = vpop.f32.mrb[0].mxu0
  %3230 = vmatprep.mubr.f32.mxu0 0.0
  %3231 = vmatmul.mubr.f32.gmra.mrb[0].mxu0 %v2934
  %v3232 = vpop.f32.mrb[0].mxu0
  %v3233 = vadd.f32 0.0, %v3232
  %v3234 = vpop.f32.mrb[0].mxu0
  %3235 = vmatprep.mubr.f32.mxu0 0.0
  %3236 = vmatmul.mubr.f32.gmra.mrb[0].mxu0 %v2937
  %v3237 = vpop.f32.mrb[0].mxu0
  %v3238 = vadd.f32 0.0, %v3237
  %v3239 = vpop.f32.mrb[0].mxu0
  %3240 = vmatprep.mubr.f32.mxu0 0.0
  %3241 = vmatmul.mubr.f32.gmra.mrb[0].mxu0 %v2940
  %v3242 = vpop.f32.mrb[0].mxu0
  %v3243 = vadd.f32 0.0, %v3242
  %v3244 = vpop.f32.mrb[0].mxu0
  %3245 = vmatprep.mubr.f32.mxu0 0.0
  %3246 = vmatmul.mubr.f32.gmra.mrb[0].mxu0 %v2943
  %v3247 = vpop.f32.mrb[0].mxu0
  %v3248 = vadd.f32 0.0, %v3247
  %v3249 = vpop.f32.mrb[0].mxu0
  %3250 = vmatprep.mubr.f32.mxu0 0.0
  %3251 = vmatmul.mubr.f32.gmra.mrb[0].mxu0 %v2946
  %v3252 = vpop.f32.mrb[0].mxu0
  %v3253 = vadd.f32 0.0, %v3252
  %v3254 = vpop.f32.mrb[0].mxu0
  %3255 = vmatprep.mubr.f32.mxu0 0.0
  %3256 = vmatmul.mubr.f32.gmra.mrb[0].mxu0 %v2949
  %v3257 = vpop.f32.mrb[0].mxu0
  %v3258 = vadd.f32 0.0, %v3257
  %v3259 = vpop.f32.mrb[0].mxu0
  %3260 = vmatprep.mubr.f32.mxu0 0.0
  %3261 = vmatmul.mubr.f32.gmra.mrb[0].mxu0 %v2952
  %v3262 = vpop.f32.mrb[0].mxu0
  %v3263 = vadd.f32 0.0, %v3262
  %v3264 = vpop.f32.mrb[0].mxu0
  %3265 = vmatprep.mubr.f32.mxu0 0.0
  %3266 = vmatmul.mubr.f32.gmra.mrb[0].mxu0 %v2955
  %v3267 = vpop.f32.mrb[0].mxu0
  %v3268 = vadd.f32 0.0, %v3267
  %v3269 = vpop.f32.mrb[0].mxu0
  %3270 = vmatprep.mubr.f32.mxu0 0.0
  %3271 = vmatmul.mubr.f32.gmra.mrb[0].mxu0 %v2958
  %v3272 = vpop.f32.mrb[0].mxu0
  %v3273 = vadd.f32 0.0, %v3272
  %v3274 = vpop.f32.mrb[0].mxu0
  %3275 = vmatprep.mubr.f32.mxu0 0.0
  %3276 = vmatmul.mubr.f32.gmra.mrb[0].mxu0 %v2961
  %v3277 = vpop.f32.mrb[0].mxu0
  %v3278 = vadd.f32 0.0, %v3277
  %v3279 = vpop.f32.mrb[0].mxu0
  %3280 = vmatprep.mubr.f32.mxu0 0.0
  %3281 = vmatmul.mubr.f32.gmra.mrb[0].mxu0 %v2964
  %v3282 = vpop.f32.mrb[0].mxu0
  %v3283 = vadd.f32 0.0, %v3282
  %v3284 = vpop.f32.mrb[0].mxu0
  %3285 = vmatprep.mubr.f32.mxu0 0.0
  %3286 = vmatmul.mubr.f32.gmra.mrb[0].mxu0 %v2967
  %v3287 = vpop.f32.mrb[0].mxu0
  %v3288 = vadd.f32 0.0, %v3287
  %v3289 = vpop.f32.mrb[0].mxu0
  %3290 = vmatprep.mubr.f32.mxu0 0.0
  %3291 = vmatmul.mubr.f32.gmra.mrb[0].mxu0 %v2970
  %v3292 = vpop.f32.mrb[0].mxu0
  %v3293 = vadd.f32 0.0, %v3292
  %v3294 = vpop.f32.mrb[0].mxu0
  %3295 = vmatprep.mubr.f32.mxu0 0.0
  %3296 = vmatmul.mubr.f32.gmra.mrb[0].mxu0 %v2973
  %v3297 = vpop.f32.mrb[0].mxu0
  %v3298 = vadd.f32 0.0, %v3297
  %v3299 = vpop.f32.mrb[0].mxu0
  %3300 = vmatprep.mubr.f32.mxu0 0.0
  %3301 = vmatmul.mubr.f32.gmra.mrb[0].mxu0 %v2976
  %v3302 = vpop.f32.mrb[0].mxu0
  %v3303 = vadd.f32 0.0, %v3302
  %v3304 = vpop.f32.mrb[0].mxu0
  %3305 = vmatprep.mubr.f32.mxu0 0.0
  %3306 = vmatmul.mubr.f32.gmra.mrb[0].mxu0 %v2979
  %v3307 = vpop.f32.mrb[0].mxu0
  %v3308 = vadd.f32 0.0, %v3307
  %v3309 = vpop.f32.mrb[0].mxu0
  %3310 = vmatprep.mubr.f32.mxu0 0.0
  %3311 = vmatmul.mubr.f32.gmra.mrb[0].mxu0 %v2982
  %v3312 = vpop.f32.mrb[0].mxu0
  %v3313 = vadd.f32 0.0, %v3312
  %v3314 = vpop.f32.mrb[0].mxu0
  %3315 = vmatprep.mubr.f32.mxu0 0.0
  %3316 = vmatmul.mubr.f32.gmra.mrb[0].mxu0 %v2985
  %v3317 = vpop.f32.mrb[0].mxu0
  %v3318 = vadd.f32 0.0, %v3317
  %v3319 = vpop.f32.mrb[0].mxu0
  %3320 = vmatprep.mubr.f32.mxu0 0.0
  %3321 = vmatmul.mubr.f32.gmra.mrb[0].mxu0 %v2988
  %v3322 = vpop.f32.mrb[0].mxu0
  %v3323 = vadd.f32 0.0, %v3322
  %v3324 = vpop.f32.mrb[0].mxu0
  %3325 = vmatprep.mubr.f32.mxu0 0.0
  %3326 = vmatmul.mubr.f32.gmra.mrb[0].mxu0 %v2991
  %v3327 = vpop.f32.mrb[0].mxu0
  %v3328 = vadd.f32 0.0, %v3327
  %v3329 = vpop.f32.mrb[0].mxu0
  %3330 = vmatprep.mubr.f32.mxu0 0.0
  %3331 = vmatmul.mubr.f32.gmra.mrb[0].mxu0 %v2994
  %v3332 = vpop.f32.mrb[0].mxu0
  %v3333 = vadd.f32 0.0, %v3332
  %v3334 = vpop.f32.mrb[0].mxu0
  %3335 = vmatprep.mubr.f32.mxu0 0.0
  %3336 = vmatmul.mubr.f32.gmra.mrb[0].mxu0 %v2997
  %v3337 = vpop.f32.mrb[0].mxu0
  %v3338 = vadd.f32 0.0, %v3337
  %v3339 = vpop.f32.mrb[0].mxu0
  %3340 = vmatprep.mubr.f32.mxu0 0.0
  %3341 = vmatmul.mubr.f32.gmra.mrb[0].mxu0 %v3000
  %v3342 = vpop.f32.mrb[0].mxu0
  %v3343 = vadd.f32 0.0, %v3342
  %v3344 = vpop.f32.mrb[0].mxu0
  %3345 = vmatprep.mubr.f32.mxu0 0.0
  %3346 = vmatmul.mubr.f32.gmra.mrb[0].mxu0 %v3003
  %v3347 = vpop.f32.mrb[0].mxu0
  %v3348 = vadd.f32 0.0, %v3347
  %v3349 = vpop.f32.mrb[0].mxu0
  %3350 = vmatprep.mubr.f32.mxu0 0.0
  %3351 = vmatmul.mubr.f32.gmra.mrb[0].mxu0 %v3006
  %v3352 = vpop.f32.mrb[0].mxu0
  %v3353 = vadd.f32 0.0, %v3352
  %v3354 = vpop.f32.mrb[0].mxu0
  %3355 = vmatprep.mubr.f32.mxu0 0.0
  %3356 = vmatmul.mubr.f32.gmra.mrb[0].mxu0 %v3009
  %v3357 = vpop.f32.mrb[0].mxu0
  %v3358 = vadd.f32 0.0, %v3357
  %v3359 = vpop.f32.mrb[0].mxu0
  %3360 = vmatprep.mubr.f32.mxu0 0.0
  %3361 = vmatmul.mubr.f32.gmra.mrb[0].mxu0 %v3012
  %v3362 = vpop.f32.mrb[0].mxu0
  %v3363 = vadd.f32 0.0, %v3362
  %v3364 = vpop.f32.mrb[0].mxu0
  %3365 = vmatprep.mubr.f32.mxu0 0.0
  %3366 = vmatmul.mubr.f32.gmra.mrb[0].mxu0 %v3015
  %v3367 = vpop.f32.mrb[0].mxu0
  %v3368 = vadd.f32 0.0, %v3367
  %v3369 = vpop.f32.mrb[0].mxu0
  %3370 = vmatprep.mubr.f32.mxu0 0.0
  %3371 = vmatmul.mubr.f32.gmra.mrb[0].mxu0 %v3018
  %v3372 = vpop.f32.mrb[0].mxu0
  %v3373 = vadd.f32 0.0, %v3372
  %v3374 = vpop.f32.mrb[0].mxu0
  %3375 = vmatprep.mubr.f32.mxu0 0.0
  %3376 = vmatmul.mubr.f32.gmra.mrb[0].mxu0 %v3021
  %v3377 = vpop.f32.mrb[0].mxu0
  %v3378 = vadd.f32 0.0, %v3377
  %v3379 = vpop.f32.mrb[0].mxu0
  %3380 = vmatprep.mubr.f32.mxu0 0.0
  %3381 = vmatmul.mubr.f32.gmra.mrb[0].mxu0 %v3024
  %v3382 = vpop.f32.mrb[0].mxu0
  %v3383 = vadd.f32 0.0, %v3382
  %v3384 = vpop.f32.mrb[0].mxu0
  %3385 = vmatprep.mubr.f32.mxu0 0.0
  %3386 = vmatmul.mubr.f32.gmra.mrb[0].mxu0 %v3027
  %v3387 = vpop.f32.mrb[0].mxu0
  %v3388 = vadd.f32 0.0, %v3387
  %v3389 = vpop.f32.mrb[0].mxu0
  %3390 = vmatprep.mubr.f32.mxu0 0.0
  %3391 = vmatmul.mubr.f32.gmra.mrb[0].mxu0 %v3030
  %v3392 = vpop.f32.mrb[0].mxu0
  %v3393 = vadd.f32 0.0, %v3392
  %v3394 = vpop.f32.mrb[0].mxu0
  %3395 = vmatprep.mubr.f32.mxu0 0.0
  %3396 = vmatmul.mubr.f32.gmra.mrb[0].mxu0 %v3033
  %v3397 = vpop.f32.mrb[0].mxu0
  %v3398 = vadd.f32 0.0, %v3397
  %v3399 = vpop.f32.mrb[0].mxu0
  %3400 = vmatprep.mubr.f32.mxu0 0.0
  %3401 = vmatmul.mubr.f32.gmra.mrb[0].mxu0 %v3036
  %v3402 = vpop.f32.mrb[0].mxu0
  %v3403 = vadd.f32 0.0, %v3402
  %v3404 = vpop.f32.mrb[0].mxu0
  %3405 = vmatprep.mubr.f32.mxu0 0.0
  %3406 = vmatmul.mubr.f32.gmra.mrb[0].mxu0 %v3039
  %v3407 = vpop.f32.mrb[0].mxu0
  %v3408 = vadd.f32 0.0, %v3407
  %v3409 = vpop.f32.mrb[0].mxu0
  %3410 = vmatprep.mubr.f32.mxu0 0.0
  %3411 = vmatmul.mubr.f32.gmra.mrb[0].mxu0 %v3042
  %v3412 = vpop.f32.mrb[0].mxu0
  %v3413 = vadd.f32 0.0, %v3412
  %v3414 = vpop.f32.mrb[0].mxu0
  %3415 = vmatprep.mubr.f32.mxu0 0.0
  %3416 = vmatmul.mubr.f32.gmra.mrb[0].mxu0 %v3045
  %v3417 = vpop.f32.mrb[0].mxu0
  %v3418 = vadd.f32 0.0, %v3417
  %v3419 = vpop.f32.mrb[0].mxu0
  %3420 = vmatprep.mubr.f32.mxu0 0.0
  %3421 = vmatmul.mubr.f32.gmra.mrb[0].mxu0 %v3048
  %v3422 = vpop.f32.mrb[0].mxu0
  %v3423 = vadd.f32 0.0, %v3422
  %v3424 = vpop.f32.mrb[0].mxu0
  %3425 = vmatprep.mubr.f32.mxu0 0.0
  %3426 = vmatmul.mubr.f32.gmra.mrb[0].mxu0 %v3051
  %v3427 = vpop.f32.mrb[0].mxu0
  %v3428 = vadd.f32 0.0, %v3427
  %v3429 = vpop.f32.mrb[0].mxu0
  %3430 = vmatprep.mubr.f32.mxu0 0.0
  %3431 = vmatmul.mubr.f32.gmra.mrb[0].mxu0 %v3054
  %v3432 = vpop.f32.mrb[0].mxu0
  %v3433 = vadd.f32 0.0, %v3432
  %v3434 = vpop.f32.mrb[0].mxu0
  %3435 = vmatprep.mubr.f32.mxu0 0.0
  %3436 = vmatmul.mubr.f32.gmra.mrb[0].mxu0 %v3057
  %v3437 = vpop.f32.mrb[0].mxu0
  %v3438 = vadd.f32 0.0, %v3437
  %v3439 = vpop.f32.mrb[0].mxu0
  %3440 = vmatprep.mubr.f32.mxu0 0.0
  %3441 = vmatmul.mubr.f32.gmra.mrb[0].mxu0 %v3060
  %v3442 = vpop.f32.mrb[0].mxu0
  %v3443 = vadd.f32 0.0, %v3442
  %v3444 = vpop.f32.mrb[0].mxu0
  %3445 = vmatprep.mubr.f32.mxu0 0.0
  %3446 = vmatmul.mubr.f32.gmra.mrb[0].mxu0 %v3063
  %v3447 = vpop.f32.mrb[0].mxu0
  %v3448 = vadd.f32 0.0, %v3447
  %v3449 = vpop.f32.mrb[0].mxu0
  %3450 = vmatprep.mubr.f32.mxu0 0.0
  %3451 = vmatmul.mubr.f32.gmra.mrb[0].mxu0 %v3066
  %v3452 = vpop.f32.mrb[0].mxu0
  %v3453 = vadd.f32 0.0, %v3452
  %v3454 = vpop.f32.mrb[0].mxu0
  %3455 = vmatprep.mubr.f32.mxu0 0.0
  %3456 = vmatmul.mubr.f32.gmra.mrb[0].mxu0 %v3069
  %v3457 = vpop.f32.mrb[0].mxu0
  %v3458 = vadd.f32 0.0, %v3457
  %v3459 = vpop.f32.mrb[0].mxu0
  %3460 = vmatprep.mubr.f32.mxu0 0.0
  %3461 = vmatmul.mubr.f32.gmra.mrb[0].mxu0 %v3072
  %v3462 = vpop.f32.mrb[0].mxu0
  %v3463 = vadd.f32 0.0, %v3462
  %v3464 = vpop.f32.mrb[0].mxu0
  %3465 = vmatprep.mubr.f32.mxu0 0.0
  %3466 = vmatmul.mubr.f32.gmra.mrb[0].mxu0 %v3075
  %v3467 = vpop.f32.mrb[0].mxu0
  %v3468 = vadd.f32 0.0, %v3467
  %v3469 = vpop.f32.mrb[0].mxu0
  %3470 = vmatprep.mubr.f32.mxu0 0.0
  %3471 = vmatmul.mubr.f32.gmra.mrb[0].mxu0 %v3078
  %v3472 = vpop.f32.mrb[0].mxu0
  %v3473 = vadd.f32 0.0, %v3472
  %v3474 = vpop.f32.mrb[0].mxu0
  %3475 = vmatprep.mubr.f32.mxu0 0.0
  %3476 = vmatmul.mubr.f32.gmra.mrb[0].mxu0 %v3081
  %v3477 = vpop.f32.mrb[0].mxu0
  %v3478 = vadd.f32 0.0, %v3477
  %v3479 = vpop.f32.mrb[0].mxu0
  %3480 = vdwg.mxu0
  %v3481 = vadd.f32 %v2751, %v3153
  %v3482 = vadd.f32 %v2752, %v3158
  %v3483 = vadd.f32 %v2753, %v3163
  %v3484 = vadd.f32 %v2754, %v3168
  %v3485 = vadd.f32 %v2755, %v3173
  %v3486 = vadd.f32 %v2756, %v3178
  %v3487 = vadd.f32 %v2757, %v3183
  %v3488 = vadd.f32 %v2758, %v3188
  %v3489 = vadd.f32 %v2759, %v3193
  %v3490 = vadd.f32 %v2760, %v3198
  %v3491 = vadd.f32 %v2761, %v3203
  %v3492 = vadd.f32 %v2762, %v3208
  %v3493 = vadd.f32 %v2763, %v3213
  %v3494 = vadd.f32 %v2764, %v3218
  %v3495 = vadd.f32 %v2765, %v3223
  %v3496 = vadd.f32 %v2766, %v3228
  %v3497 = vadd.f32 %v2767, %v3233
  %v3498 = vadd.f32 %v2768, %v3238
  %v3499 = vadd.f32 %v2769, %v3243
  %v3500 = vadd.f32 %v2770, %v3248
  %v3501 = vadd.f32 %v2771, %v3253
  %v3502 = vadd.f32 %v2772, %v3258
  %v3503 = vadd.f32 %v2773, %v3263
  %v3504 = vadd.f32 %v2774, %v3268
  %v3505 = vadd.f32 %v2775, %v3273
  %v3506 = vadd.f32 %v2776, %v3278
  %v3507 = vadd.f32 %v2777, %v3283
  %v3508 = vadd.f32 %v2778, %v3288
  %v3509 = vadd.f32 %v2779, %v3293
  %v3510 = vadd.f32 %v2780, %v3298
  %v3511 = vadd.f32 %v2781, %v3303
  %v3512 = vadd.f32 %v2782, %v3308
  %v3513 = vadd.f32 %v2783, %v3313
  %v3514 = vadd.f32 %v2784, %v3318
  %v3515 = vadd.f32 %v2785, %v3323
  %v3516 = vadd.f32 %v2786, %v3328
  %v3517 = vadd.f32 %v2787, %v3333
  %v3518 = vadd.f32 %v2788, %v3338
  %v3519 = vadd.f32 %v2789, %v3343
  %v3520 = vadd.f32 %v2790, %v3348
  %v3521 = vadd.f32 %v2791, %v3353
  %v3522 = vadd.f32 %v2792, %v3358
  %v3523 = vadd.f32 %v2793, %v3363
  %v3524 = vadd.f32 %v2794, %v3368
  %v3525 = vadd.f32 %v2795, %v3373
  %v3526 = vadd.f32 %v2796, %v3378
  %v3527 = vadd.f32 %v2797, %v3383
  %v3528 = vadd.f32 %v2798, %v3388
  %v3529 = vadd.f32 %v2799, %v3393
  %v3530 = vadd.f32 %v2800, %v3398
  %v3531 = vadd.f32 %v2801, %v3403
  %v3532 = vadd.f32 %v2802, %v3408
  %v3533 = vadd.f32 %v2803, %v3413
  %v3534 = vadd.f32 %v2804, %v3418
  %v3535 = vadd.f32 %v2805, %v3423
  %v3536 = vadd.f32 %v2806, %v3428
  %v3537 = vadd.f32 %v2807, %v3433
  %v3538 = vadd.f32 %v2808, %v3438
  %v3539 = vadd.f32 %v2809, %v3443
  %v3540 = vadd.f32 %v2810, %v3448
  %v3541 = vadd.f32 %v2811, %v3453
  %v3542 = vadd.f32 %v2812, %v3458
  %v3543 = vadd.f32 %v2813, %v3463
  %v3544 = vadd.f32 %v2814, %v3468
  %v3545 = vadd.f32 %v2815, %v3473
  %v3546 = vadd.f32 %v2816, %v3478
  %v3547 = vld [vmem:[%s0 + $0x1a] sm:$0xff]
  %v3548 = vld [vmem:[%s0 + $0x22] sm:$0xff]
  %v3549 = vld [vmem:[%s0 + $0x2a] sm:$0xff]
  %v3550 = vld [vmem:[%s0 + $0x32] sm:$0xff]
  %v3551 = vld [vmem:[%s0 + $0x3a] sm:$0xff]
  %v3552 = vld [vmem:[%s0 + $0x42] sm:$0xff]
  %v3553 = vld [vmem:[%s0 + $0x4a] sm:$0xff]
  %v3554 = vld [vmem:[%s0 + $0x52] sm:$0xff]
  %v3555 = vld [vmem:[%s0 + $0x5a] sm:$0xff]
  %v3556 = vld [vmem:[%s0 + $0x62] sm:$0xff]
  %v3557 = vld [vmem:[%s0 + $0x6a] sm:$0xff]
  %v3558 = vld [vmem:[%s0 + $0x72] sm:$0xff]
  %v3559 = vld [vmem:[%s0 + $0x7a] sm:$0xff]
  %v3560 = vld [vmem:[%s0 + $0x82] sm:$0xff]
  %v3561 = vld [vmem:[%s0 + $0x8a] sm:$0xff]
  %v3562 = vld [vmem:[%s0 + $0x92] sm:$0xff]
  %v3563 = vld [vmem:[%s0 + $0x9a] sm:$0xff]
  %v3564 = vld [vmem:[%s0 + $0xa2] sm:$0xff]
  %v3565 = vld [vmem:[%s0 + $0xaa] sm:$0xff]
  %v3566 = vld [vmem:[%s0 + $0xb2] sm:$0xff]
  %v3567 = vld [vmem:[%s0 + $0xba] sm:$0xff]
  %v3568 = vld [vmem:[%s0 + $0xc2] sm:$0xff]
  %v3569 = vld [vmem:[%s0 + $0xca] sm:$0xff]
  %v3570 = vld [vmem:[%s0 + $0xd2] sm:$0xff]
  %v3571 = vld [vmem:[%s0 + $0xda] sm:$0xff]
  %v3572 = vld [vmem:[%s0 + $0xe2] sm:$0xff]
  %v3573 = vld [vmem:[%s0 + $0xea] sm:$0xff]
  %v3574 = vld [vmem:[%s0 + $0xf2] sm:$0xff]
  %v3575 = vld [vmem:[%s0 + $0xfa] sm:$0xff]
  %v3576 = vld [vmem:[%s0 + $0x102] sm:$0xff]
  %v3577 = vld [vmem:[%s0 + $0x10a] sm:$0xff]
  %v3578 = vld [vmem:[%s0 + $0x112] sm:$0xff]
  %v3579 = vld [vmem:[%s0 + $0x11a] sm:$0xff]
  %v3580 = vld [vmem:[%s0 + $0x122] sm:$0xff]
  %v3581 = vld [vmem:[%s0 + $0x12a] sm:$0xff]
  %v3582 = vld [vmem:[%s0 + $0x132] sm:$0xff]
  %v3583 = vld [vmem:[%s0 + $0x13a] sm:$0xff]
  %v3584 = vld [vmem:[%s0 + $0x142] sm:$0xff]
  %v3585 = vld [vmem:[%s0 + $0x14a] sm:$0xff]
  %v3586 = vld [vmem:[%s0 + $0x152] sm:$0xff]
  %v3587 = vld [vmem:[%s0 + $0x15a] sm:$0xff]
  %v3588 = vld [vmem:[%s0 + $0x162] sm:$0xff]
  %v3589 = vld [vmem:[%s0 + $0x16a] sm:$0xff]
  %v3590 = vld [vmem:[%s0 + $0x172] sm:$0xff]
  %v3591 = vld [vmem:[%s0 + $0x17a] sm:$0xff]
  %v3592 = vld [vmem:[%s0 + $0x182] sm:$0xff]
  %v3593 = vld [vmem:[%s0 + $0x18a] sm:$0xff]
  %v3594 = vld [vmem:[%s0 + $0x192] sm:$0xff]
  %v3595 = vld [vmem:[%s0 + $0x19a] sm:$0xff]
  %v3596 = vld [vmem:[%s0 + $0x1a2] sm:$0xff]
  %v3597 = vld [vmem:[%s0 + $0x1aa] sm:$0xff]
  %v3598 = vld [vmem:[%s0 + $0x1b2] sm:$0xff]
  %v3599 = vld [vmem:[%s0 + $0x1ba] sm:$0xff]
  %v3600 = vld [vmem:[%s0 + $0x1c2] sm:$0xff]
  %v3601 = vld [vmem:[%s0 + $0x1ca] sm:$0xff]
  %v3602 = vld [vmem:[%s0 + $0x1d2] sm:$0xff]
  %v3603 = vld [vmem:[%s0 + $0x1da] sm:$0xff]
  %v3604 = vld [vmem:[%s0 + $0x1e2] sm:$0xff]
  %v3605 = vld [vmem:[%s0 + $0x1ea] sm:$0xff]
  %v3606 = vld [vmem:[%s0 + $0x1f2] sm:$0xff]
  %v3607 = vld [vmem:[%s0 + $0x1fa] sm:$0xff]
  %v3608 = vld [vmem:[%s0 + $0x202] sm:$0xff]
  %v3609 = vld [vmem:[%s0 + $0x20a] sm:$0xff]
  %v3610 = vld [vmem:[%s0 + $0x212] sm:$0xff]
  %v3611 = vld [vmem:[%s0 + $0x21a] sm:$0xff]
  %v3612 = vld [vmem:[%s0 + $0x222] sm:$0xff]
  %s3613 = scalar_lea.vmem %s1, 20
  %v3614 = vld [vmem:[%s3613] sm:$0x7]
  %v3616 = vsel %vm163, %v3547, 0
  %v3619 = vsel %vm163, %v3548, 0
  %v3622 = vsel %vm163, %v3549, 0
  %v3625 = vsel %vm163, %v3550, 0
  %v3628 = vsel %vm163, %v3551, 0
  %v3631 = vsel %vm163, %v3552, 0
  %v3634 = vsel %vm163, %v3553, 0
  %v3637 = vsel %vm163, %v3554, 0
  %v3640 = vsel %vm163, %v3555, 0
  %v3643 = vsel %vm163, %v3556, 0
  %v3646 = vsel %vm163, %v3557, 0
  %v3649 = vsel %vm163, %v3558, 0
  %v3652 = vsel %vm163, %v3559, 0
  %v3655 = vsel %vm163, %v3560, 0
  %v3658 = vsel %vm163, %v3561, 0
  %v3661 = vsel %vm163, %v3562, 0
  %v3664 = vsel %vm163, %v3563, 0
  %v3667 = vsel %vm163, %v3564, 0
  %v3670 = vsel %vm163, %v3565, 0
  %v3673 = vsel %vm163, %v3566, 0
  %v3676 = vsel %vm163, %v3567, 0
  %v3679 = vsel %vm163, %v3568, 0
  %v3682 = vsel %vm163, %v3569, 0
  %v3685 = vsel %vm163, %v3570, 0
  %v3688 = vsel %vm163, %v3571, 0
  %v3691 = vsel %vm163, %v3572, 0
  %v3694 = vsel %vm163, %v3573, 0
  %v3697 = vsel %vm163, %v3574, 0
  %v3700 = vsel %vm163, %v3575, 0
  %v3703 = vsel %vm163, %v3576, 0
  %v3706 = vsel %vm163, %v3577, 0
  %v3709 = vsel %vm163, %v3578, 0
  %v3712 = vsel %vm163, %v3579, 0
  %v3715 = vsel %vm163, %v3580, 0
  %v3718 = vsel %vm163, %v3581, 0
  %v3721 = vsel %vm163, %v3582, 0
  %v3724 = vsel %vm163, %v3583, 0
  %v3727 = vsel %vm163, %v3584, 0
  %v3730 = vsel %vm163, %v3585, 0
  %v3733 = vsel %vm163, %v3586, 0
  %v3736 = vsel %vm163, %v3587, 0
  %v3739 = vsel %vm163, %v3588, 0
  %v3742 = vsel %vm163, %v3589, 0
  %v3745 = vsel %vm163, %v3590, 0
  %v3748 = vsel %vm163, %v3591, 0
  %v3751 = vsel %vm163, %v3592, 0
  %v3754 = vsel %vm163, %v3593, 0
  %v3757 = vsel %vm163, %v3594, 0
  %v3760 = vsel %vm163, %v3595, 0
  %v3763 = vsel %vm163, %v3596, 0
  %v3766 = vsel %vm163, %v3597, 0
  %v3769 = vsel %vm163, %v3598, 0
  %v3772 = vsel %vm163, %v3599, 0
  %v3775 = vsel %vm163, %v3600, 0
  %v3778 = vsel %vm163, %v3601, 0
  %v3781 = vsel %vm163, %v3602, 0
  %v3784 = vsel %vm163, %v3603, 0
  %v3787 = vsel %vm163, %v3604, 0
  %v3790 = vsel %vm163, %v3605, 0
  %v3793 = vsel %vm163, %v3606, 0
  %v3796 = vsel %vm163, %v3607, 0
  %v3799 = vsel %vm163, %v3608, 0
  %v3802 = vsel %vm163, %v3609, 0
  %v3805 = vsel %vm163, %v3610, 0
  %v3808 = vsel %vm163, %v3611, 0
  %v3811 = vsel %vm163, %v3612, 0
  %v3814 = vsel %vm362, %v3614, 0
  %3816 = vmatprep.subr.mxu0 0.0
  %3817 = vmatpush1.msra.mxu0 %v3814
  %3818 = vmatprep.subr.mxu0 0.0
  %3819 = vmatpush1.msra.mxu0 0.0
  %3820 = vmatprep.subr.mxu0 0.0
  %3821 = vmatpush1.msra.mxu0 0.0
  %3822 = vmatprep.subr.mxu0 0.0
  %3823 = vmatpush1.msra.mxu0 0.0
  %3824 = vmatprep.subr.mxu0 0.0
  %3825 = vmatpush1.msra.mxu0 0.0
  %3826 = vmatprep.subr.mxu0 0.0
  %3827 = vmatpush1.msra.mxu0 0.0
  %3828 = vmatprep.subr.mxu0 0.0
  %3829 = vmatpush1.msra.mxu0 0.0
  %3830 = vmatprep.subr.mxu0 0.0
  %3831 = vmatpush1.msra.mxu0 0.0
  %3832 = vmatprep.subr.mxu0 0.0
  %3833 = vmatpush1.msra.mxu0 0.0
  %3834 = vmatprep.subr.mxu0 0.0
  %3835 = vmatpush1.msra.mxu0 0.0
  %3836 = vmatprep.subr.mxu0 0.0
  %3837 = vmatpush1.msra.mxu0 0.0
  %3838 = vmatprep.subr.mxu0 0.0
  %3839 = vmatpush1.msra.mxu0 0.0
  %3840 = vmatprep.subr.mxu0 0.0
  %3841 = vmatpush1.msra.mxu0 0.0
  %3842 = vmatprep.subr.mxu0 0.0
  %3843 = vmatpush1.msra.mxu0 0.0
  %3844 = vmatprep.subr.mxu0 0.0
  %3845 = vmatpush1.msra.mxu0 0.0
  %3846 = vmatprep.subr.mxu0 0.0
  %3847 = vmatpush1.msra.mxu0 0.0
  %3848 = vmatprep.subr.mxu0 0.0
  %3849 = vmatpush1.msra.mxu0 0.0
  %3850 = vmatprep.subr.mxu0 0.0
  %3851 = vmatpush1.msra.mxu0 0.0
  %3852 = vmatprep.subr.mxu0 0.0
  %3853 = vmatpush1.msra.mxu0 0.0
  %3854 = vmatprep.subr.mxu0 0.0
  %3855 = vmatpush1.msra.mxu0 0.0
  %3856 = vmatprep.subr.mxu0 0.0
  %3857 = vmatpush1.msra.mxu0 0.0
  %3858 = vmatprep.subr.mxu0 0.0
  %3859 = vmatpush1.msra.mxu0 0.0
  %3860 = vmatprep.subr.mxu0 0.0
  %3861 = vmatpush1.msra.mxu0 0.0
  %3862 = vmatprep.subr.mxu0 0.0
  %3863 = vmatpush1.msra.mxu0 0.0
  %3864 = vmatprep.subr.mxu0 0.0
  %3865 = vmatpush1.msra.mxu0 0.0
  %3866 = vmatprep.subr.mxu0 0.0
  %3867 = vmatpush1.msra.mxu0 0.0
  %3868 = vmatprep.subr.mxu0 0.0
  %3869 = vmatpush1.msra.mxu0 0.0
  %3870 = vmatprep.subr.mxu0 0.0
  %3871 = vmatpush1.msra.mxu0 0.0
  %3872 = vmatprep.subr.mxu0 0.0
  %3873 = vmatpush1.msra.mxu0 0.0
  %3874 = vmatprep.subr.mxu0 0.0
  %3875 = vmatpush1.msra.mxu0 0.0
  %3876 = vmatprep.subr.mxu0 0.0
  %3877 = vmatpush1.msra.mxu0 0.0
  %3878 = vmatprep.subr.mxu0 0.0
  %3879 = vmatpush1.msra.mxu0 0.0
  %3880 = vmatprep.mubr.f32.mxu0 0.0
  %3881 = vmatmul.mubr.f32.gmra.mrb[0].mxu0 %v3616
  %v3882 = vpop.f32.mrb[0].mxu0
  %v3883 = vadd.f32 0.0, %v3882
  %v3884 = vpop.f32.mrb[0].mxu0
  %3885 = vmatprep.mubr.f32.mxu0 0.0
  %3886 = vmatmul.mubr.f32.gmra.mrb[0].mxu0 %v3619
  %v3887 = vpop.f32.mrb[0].mxu0
  %v3888 = vadd.f32 0.0, %v3887
  %v3889 = vpop.f32.mrb[0].mxu0
  %3890 = vmatprep.mubr.f32.mxu0 0.0
  %3891 = vmatmul.mubr.f32.gmra.mrb[0].mxu0 %v3622
  %v3892 = vpop.f32.mrb[0].mxu0
  %v3893 = vadd.f32 0.0, %v3892
  %v3894 = vpop.f32.mrb[0].mxu0
  %3895 = vmatprep.mubr.f32.mxu0 0.0
  %3896 = vmatmul.mubr.f32.gmra.mrb[0].mxu0 %v3625
  %v3897 = vpop.f32.mrb[0].mxu0
  %v3898 = vadd.f32 0.0, %v3897
  %v3899 = vpop.f32.mrb[0].mxu0
  %3900 = vmatprep.mubr.f32.mxu0 0.0
  %3901 = vmatmul.mubr.f32.gmra.mrb[0].mxu0 %v3628
  %v3902 = vpop.f32.mrb[0].mxu0
  %v3903 = vadd.f32 0.0, %v3902
  %v3904 = vpop.f32.mrb[0].mxu0
  %3905 = vmatprep.mubr.f32.mxu0 0.0
  %3906 = vmatmul.mubr.f32.gmra.mrb[0].mxu0 %v3631
  %v3907 = vpop.f32.mrb[0].mxu0
  %v3908 = vadd.f32 0.0, %v3907
  %v3909 = vpop.f32.mrb[0].mxu0
  %3910 = vmatprep.mubr.f32.mxu0 0.0
  %3911 = vmatmul.mubr.f32.gmra.mrb[0].mxu0 %v3634
  %v3912 = vpop.f32.mrb[0].mxu0
  %v3913 = vadd.f32 0.0, %v3912
  %v3914 = vpop.f32.mrb[0].mxu0
  %3915 = vmatprep.mubr.f32.mxu0 0.0
  %3916 = vmatmul.mubr.f32.gmra.mrb[0].mxu0 %v3637
  %v3917 = vpop.f32.mrb[0].mxu0
  %v3918 = vadd.f32 0.0, %v3917
  %v3919 = vpop.f32.mrb[0].mxu0
  %3920 = vmatprep.mubr.f32.mxu0 0.0
  %3921 = vmatmul.mubr.f32.gmra.mrb[0].mxu0 %v3640
  %v3922 = vpop.f32.mrb[0].mxu0
  %v3923 = vadd.f32 0.0, %v3922
  %v3924 = vpop.f32.mrb[0].mxu0
  %3925 = vmatprep.mubr.f32.mxu0 0.0
  %3926 = vmatmul.mubr.f32.gmra.mrb[0].mxu0 %v3643
  %v3927 = vpop.f32.mrb[0].mxu0
  %v3928 = vadd.f32 0.0, %v3927
  %v3929 = vpop.f32.mrb[0].mxu0
  %3930 = vmatprep.mubr.f32.mxu0 0.0
  %3931 = vmatmul.mubr.f32.gmra.mrb[0].mxu0 %v3646
  %v3932 = vpop.f32.mrb[0].mxu0
  %v3933 = vadd.f32 0.0, %v3932
  %v3934 = vpop.f32.mrb[0].mxu0
  %3935 = vmatprep.mubr.f32.mxu0 0.0
  %3936 = vmatmul.mubr.f32.gmra.mrb[0].mxu0 %v3649
  %v3937 = vpop.f32.mrb[0].mxu0
  %v3938 = vadd.f32 0.0, %v3937
  %v3939 = vpop.f32.mrb[0].mxu0
  %3940 = vmatprep.mubr.f32.mxu0 0.0
  %3941 = vmatmul.mubr.f32.gmra.mrb[0].mxu0 %v3652
  %v3942 = vpop.f32.mrb[0].mxu0
  %v3943 = vadd.f32 0.0, %v3942
  %v3944 = vpop.f32.mrb[0].mxu0
  %3945 = vmatprep.mubr.f32.mxu0 0.0
  %3946 = vmatmul.mubr.f32.gmra.mrb[0].mxu0 %v3655
  %v3947 = vpop.f32.mrb[0].mxu0
  %v3948 = vadd.f32 0.0, %v3947
  %v3949 = vpop.f32.mrb[0].mxu0
  %3950 = vmatprep.mubr.f32.mxu0 0.0
  %3951 = vmatmul.mubr.f32.gmra.mrb[0].mxu0 %v3658
  %v3952 = vpop.f32.mrb[0].mxu0
  %v3953 = vadd.f32 0.0, %v3952
  %v3954 = vpop.f32.mrb[0].mxu0
  %3955 = vmatprep.mubr.f32.mxu0 0.0
  %3956 = vmatmul.mubr.f32.gmra.mrb[0].mxu0 %v3661
  %v3957 = vpop.f32.mrb[0].mxu0
  %v3958 = vadd.f32 0.0, %v3957
  %v3959 = vpop.f32.mrb[0].mxu0
  %3960 = vmatprep.mubr.f32.mxu0 0.0
  %3961 = vmatmul.mubr.f32.gmra.mrb[0].mxu0 %v3664
  %v3962 = vpop.f32.mrb[0].mxu0
  %v3963 = vadd.f32 0.0, %v3962
  %v3964 = vpop.f32.mrb[0].mxu0
  %3965 = vmatprep.mubr.f32.mxu0 0.0
  %3966 = vmatmul.mubr.f32.gmra.mrb[0].mxu0 %v3667
  %v3967 = vpop.f32.mrb[0].mxu0
  %v3968 = vadd.f32 0.0, %v3967
  %v3969 = vpop.f32.mrb[0].mxu0
  %3970 = vmatprep.mubr.f32.mxu0 0.0
  %3971 = vmatmul.mubr.f32.gmra.mrb[0].mxu0 %v3670
  %v3972 = vpop.f32.mrb[0].mxu0
  %v3973 = vadd.f32 0.0, %v3972
  %v3974 = vpop.f32.mrb[0].mxu0
  %3975 = vmatprep.mubr.f32.mxu0 0.0
  %3976 = vmatmul.mubr.f32.gmra.mrb[0].mxu0 %v3673
  %v3977 = vpop.f32.mrb[0].mxu0
  %v3978 = vadd.f32 0.0, %v3977
  %v3979 = vpop.f32.mrb[0].mxu0
  %3980 = vmatprep.mubr.f32.mxu0 0.0
  %3981 = vmatmul.mubr.f32.gmra.mrb[0].mxu0 %v3676
  %v3982 = vpop.f32.mrb[0].mxu0
  %v3983 = vadd.f32 0.0, %v3982
  %v3984 = vpop.f32.mrb[0].mxu0
  %3985 = vmatprep.mubr.f32.mxu0 0.0
  %3986 = vmatmul.mubr.f32.gmra.mrb[0].mxu0 %v3679
  %v3987 = vpop.f32.mrb[0].mxu0
  %v3988 = vadd.f32 0.0, %v3987
  %v3989 = vpop.f32.mrb[0].mxu0
  %3990 = vmatprep.mubr.f32.mxu0 0.0
  %3991 = vmatmul.mubr.f32.gmra.mrb[0].mxu0 %v3682
  %v3992 = vpop.f32.mrb[0].mxu0
  %v3993 = vadd.f32 0.0, %v3992
  %v3994 = vpop.f32.mrb[0].mxu0
  %3995 = vmatprep.mubr.f32.mxu0 0.0
  %3996 = vmatmul.mubr.f32.gmra.mrb[0].mxu0 %v3685
  %v3997 = vpop.f32.mrb[0].mxu0
  %v3998 = vadd.f32 0.0, %v3997
  %v3999 = vpop.f32.mrb[0].mxu0
  %4000 = vmatprep.mubr.f32.mxu0 0.0
  %4001 = vmatmul.mubr.f32.gmra.mrb[0].mxu0 %v3688
  %v4002 = vpop.f32.mrb[0].mxu0
  %v4003 = vadd.f32 0.0, %v4002
  %v4004 = vpop.f32.mrb[0].mxu0
  %4005 = vmatprep.mubr.f32.mxu0 0.0
  %4006 = vmatmul.mubr.f32.gmra.mrb[0].mxu0 %v3691
  %v4007 = vpop.f32.mrb[0].mxu0
  %v4008 = vadd.f32 0.0, %v4007
  %v4009 = vpop.f32.mrb[0].mxu0
  %4010 = vmatprep.mubr.f32.mxu0 0.0
  %4011 = vmatmul.mubr.f32.gmra.mrb[0].mxu0 %v3694
  %v4012 = vpop.f32.mrb[0].mxu0
  %v4013 = vadd.f32 0.0, %v4012
  %v4014 = vpop.f32.mrb[0].mxu0
  %4015 = vmatprep.mubr.f32.mxu0 0.0
  %4016 = vmatmul.mubr.f32.gmra.mrb[0].mxu0 %v3697
  %v4017 = vpop.f32.mrb[0].mxu0
  %v4018 = vadd.f32 0.0, %v4017
  %v4019 = vpop.f32.mrb[0].mxu0
  %4020 = vmatprep.mubr.f32.mxu0 0.0
  %4021 = vmatmul.mubr.f32.gmra.mrb[0].mxu0 %v3700
  %v4022 = vpop.f32.mrb[0].mxu0
  %v4023 = vadd.f32 0.0, %v4022
  %v4024 = vpop.f32.mrb[0].mxu0
  %4025 = vmatprep.mubr.f32.mxu0 0.0
  %4026 = vmatmul.mubr.f32.gmra.mrb[0].mxu0 %v3703
  %v4027 = vpop.f32.mrb[0].mxu0
  %v4028 = vadd.f32 0.0, %v4027
  %v4029 = vpop.f32.mrb[0].mxu0
  %4030 = vmatprep.mubr.f32.mxu0 0.0
  %4031 = vmatmul.mubr.f32.gmra.mrb[0].mxu0 %v3706
  %v4032 = vpop.f32.mrb[0].mxu0
  %v4033 = vadd.f32 0.0, %v4032
  %v4034 = vpop.f32.mrb[0].mxu0
  %4035 = vmatprep.mubr.f32.mxu0 0.0
  %4036 = vmatmul.mubr.f32.gmra.mrb[0].mxu0 %v3709
  %v4037 = vpop.f32.mrb[0].mxu0
  %v4038 = vadd.f32 0.0, %v4037
  %v4039 = vpop.f32.mrb[0].mxu0
  %4040 = vmatprep.mubr.f32.mxu0 0.0
  %4041 = vmatmul.mubr.f32.gmra.mrb[0].mxu0 %v3712
  %v4042 = vpop.f32.mrb[0].mxu0
  %v4043 = vadd.f32 0.0, %v4042
  %v4044 = vpop.f32.mrb[0].mxu0
  %4045 = vmatprep.mubr.f32.mxu0 0.0
  %4046 = vmatmul.mubr.f32.gmra.mrb[0].mxu0 %v3715
  %v4047 = vpop.f32.mrb[0].mxu0
  %v4048 = vadd.f32 0.0, %v4047
  %v4049 = vpop.f32.mrb[0].mxu0
  %4050 = vmatprep.mubr.f32.mxu0 0.0
  %4051 = vmatmul.mubr.f32.gmra.mrb[0].mxu0 %v3718
  %v4052 = vpop.f32.mrb[0].mxu0
  %v4053 = vadd.f32 0.0, %v4052
  %v4054 = vpop.f32.mrb[0].mxu0
  %4055 = vmatprep.mubr.f32.mxu0 0.0
  %4056 = vmatmul.mubr.f32.gmra.mrb[0].mxu0 %v3721
  %v4057 = vpop.f32.mrb[0].mxu0
  %v4058 = vadd.f32 0.0, %v4057
  %v4059 = vpop.f32.mrb[0].mxu0
  %4060 = vmatprep.mubr.f32.mxu0 0.0
  %4061 = vmatmul.mubr.f32.gmra.mrb[0].mxu0 %v3724
  %v4062 = vpop.f32.mrb[0].mxu0
  %v4063 = vadd.f32 0.0, %v4062
  %v4064 = vpop.f32.mrb[0].mxu0
  %4065 = vmatprep.mubr.f32.mxu0 0.0
  %4066 = vmatmul.mubr.f32.gmra.mrb[0].mxu0 %v3727
  %v4067 = vpop.f32.mrb[0].mxu0
  %v4068 = vadd.f32 0.0, %v4067
  %v4069 = vpop.f32.mrb[0].mxu0
  %4070 = vmatprep.mubr.f32.mxu0 0.0
  %4071 = vmatmul.mubr.f32.gmra.mrb[0].mxu0 %v3730
  %v4072 = vpop.f32.mrb[0].mxu0
  %v4073 = vadd.f32 0.0, %v4072
  %v4074 = vpop.f32.mrb[0].mxu0
  %4075 = vmatprep.mubr.f32.mxu0 0.0
  %4076 = vmatmul.mubr.f32.gmra.mrb[0].mxu0 %v3733
  %v4077 = vpop.f32.mrb[0].mxu0
  %v4078 = vadd.f32 0.0, %v4077
  %v4079 = vpop.f32.mrb[0].mxu0
  %4080 = vmatprep.mubr.f32.mxu0 0.0
  %4081 = vmatmul.mubr.f32.gmra.mrb[0].mxu0 %v3736
  %v4082 = vpop.f32.mrb[0].mxu0
  %v4083 = vadd.f32 0.0, %v4082
  %v4084 = vpop.f32.mrb[0].mxu0
  %4085 = vmatprep.mubr.f32.mxu0 0.0
  %4086 = vmatmul.mubr.f32.gmra.mrb[0].mxu0 %v3739
  %v4087 = vpop.f32.mrb[0].mxu0
  %v4088 = vadd.f32 0.0, %v4087
  %v4089 = vpop.f32.mrb[0].mxu0
  %4090 = vmatprep.mubr.f32.mxu0 0.0
  %4091 = vmatmul.mubr.f32.gmra.mrb[0].mxu0 %v3742
  %v4092 = vpop.f32.mrb[0].mxu0
  %v4093 = vadd.f32 0.0, %v4092
  %v4094 = vpop.f32.mrb[0].mxu0
  %4095 = vmatprep.mubr.f32.mxu0 0.0
  %4096 = vmatmul.mubr.f32.gmra.mrb[0].mxu0 %v3745
  %v4097 = vpop.f32.mrb[0].mxu0
  %v4098 = vadd.f32 0.0, %v4097
  %v4099 = vpop.f32.mrb[0].mxu0
  %4100 = vmatprep.mubr.f32.mxu0 0.0
  %4101 = vmatmul.mubr.f32.gmra.mrb[0].mxu0 %v3748
  %v4102 = vpop.f32.mrb[0].mxu0
  %v4103 = vadd.f32 0.0, %v4102
  %v4104 = vpop.f32.mrb[0].mxu0
  %4105 = vmatprep.mubr.f32.mxu0 0.0
  %4106 = vmatmul.mubr.f32.gmra.mrb[0].mxu0 %v3751
  %v4107 = vpop.f32.mrb[0].mxu0
  %v4108 = vadd.f32 0.0, %v4107
  %v4109 = vpop.f32.mrb[0].mxu0
  %4110 = vmatprep.mubr.f32.mxu0 0.0
  %4111 = vmatmul.mubr.f32.gmra.mrb[0].mxu0 %v3754
  %v4112 = vpop.f32.mrb[0].mxu0
  %v4113 = vadd.f32 0.0, %v4112
  %v4114 = vpop.f32.mrb[0].mxu0
  %4115 = vmatprep.mubr.f32.mxu0 0.0
  %4116 = vmatmul.mubr.f32.gmra.mrb[0].mxu0 %v3757
  %v4117 = vpop.f32.mrb[0].mxu0
  %v4118 = vadd.f32 0.0, %v4117
  %v4119 = vpop.f32.mrb[0].mxu0
  %4120 = vmatprep.mubr.f32.mxu0 0.0
  %4121 = vmatmul.mubr.f32.gmra.mrb[0].mxu0 %v3760
  %v4122 = vpop.f32.mrb[0].mxu0
  %v4123 = vadd.f32 0.0, %v4122
  %v4124 = vpop.f32.mrb[0].mxu0
  %4125 = vmatprep.mubr.f32.mxu0 0.0
  %4126 = vmatmul.mubr.f32.gmra.mrb[0].mxu0 %v3763
  %v4127 = vpop.f32.mrb[0].mxu0
  %v4128 = vadd.f32 0.0, %v4127
  %v4129 = vpop.f32.mrb[0].mxu0
  %4130 = vmatprep.mubr.f32.mxu0 0.0
  %4131 = vmatmul.mubr.f32.gmra.mrb[0].mxu0 %v3766
  %v4132 = vpop.f32.mrb[0].mxu0
  %v4133 = vadd.f32 0.0, %v4132
  %v4134 = vpop.f32.mrb[0].mxu0
  %4135 = vmatprep.mubr.f32.mxu0 0.0
  %4136 = vmatmul.mubr.f32.gmra.mrb[0].mxu0 %v3769
  %v4137 = vpop.f32.mrb[0].mxu0
  %v4138 = vadd.f32 0.0, %v4137
  %v4139 = vpop.f32.mrb[0].mxu0
  %4140 = vmatprep.mubr.f32.mxu0 0.0
  %4141 = vmatmul.mubr.f32.gmra.mrb[0].mxu0 %v3772
  %v4142 = vpop.f32.mrb[0].mxu0
  %v4143 = vadd.f32 0.0, %v4142
  %v4144 = vpop.f32.mrb[0].mxu0
  %4145 = vmatprep.mubr.f32.mxu0 0.0
  %4146 = vmatmul.mubr.f32.gmra.mrb[0].mxu0 %v3775
  %v4147 = vpop.f32.mrb[0].mxu0
  %v4148 = vadd.f32 0.0, %v4147
  %v4149 = vpop.f32.mrb[0].mxu0
  %4150 = vmatprep.mubr.f32.mxu0 0.0
  %4151 = vmatmul.mubr.f32.gmra.mrb[0].mxu0 %v3778
  %v4152 = vpop.f32.mrb[0].mxu0
  %v4153 = vadd.f32 0.0, %v4152
  %v4154 = vpop.f32.mrb[0].mxu0
  %4155 = vmatprep.mubr.f32.mxu0 0.0
  %4156 = vmatmul.mubr.f32.gmra.mrb[0].mxu0 %v3781
  %v4157 = vpop.f32.mrb[0].mxu0
  %v4158 = vadd.f32 0.0, %v4157
  %v4159 = vpop.f32.mrb[0].mxu0
  %4160 = vmatprep.mubr.f32.mxu0 0.0
  %4161 = vmatmul.mubr.f32.gmra.mrb[0].mxu0 %v3784
  %v4162 = vpop.f32.mrb[0].mxu0
  %v4163 = vadd.f32 0.0, %v4162
  %v4164 = vpop.f32.mrb[0].mxu0
  %4165 = vmatprep.mubr.f32.mxu0 0.0
  %4166 = vmatmul.mubr.f32.gmra.mrb[0].mxu0 %v3787
  %v4167 = vpop.f32.mrb[0].mxu0
  %v4168 = vadd.f32 0.0, %v4167
  %v4169 = vpop.f32.mrb[0].mxu0
  %4170 = vmatprep.mubr.f32.mxu0 0.0
  %4171 = vmatmul.mubr.f32.gmra.mrb[0].mxu0 %v3790
  %v4172 = vpop.f32.mrb[0].mxu0
  %v4173 = vadd.f32 0.0, %v4172
  %v4174 = vpop.f32.mrb[0].mxu0
  %4175 = vmatprep.mubr.f32.mxu0 0.0
  %4176 = vmatmul.mubr.f32.gmra.mrb[0].mxu0 %v3793
  %v4177 = vpop.f32.mrb[0].mxu0
  %v4178 = vadd.f32 0.0, %v4177
  %v4179 = vpop.f32.mrb[0].mxu0
  %4180 = vmatprep.mubr.f32.mxu0 0.0
  %4181 = vmatmul.mubr.f32.gmra.mrb[0].mxu0 %v3796
  %v4182 = vpop.f32.mrb[0].mxu0
  %v4183 = vadd.f32 0.0, %v4182
  %v4184 = vpop.f32.mrb[0].mxu0
  %4185 = vmatprep.mubr.f32.mxu0 0.0
  %4186 = vmatmul.mubr.f32.gmra.mrb[0].mxu0 %v3799
  %v4187 = vpop.f32.mrb[0].mxu0
  %v4188 = vadd.f32 0.0, %v4187
  %v4189 = vpop.f32.mrb[0].mxu0
  %4190 = vmatprep.mubr.f32.mxu0 0.0
  %4191 = vmatmul.mubr.f32.gmra.mrb[0].mxu0 %v3802
  %v4192 = vpop.f32.mrb[0].mxu0
  %v4193 = vadd.f32 0.0, %v4192
  %v4194 = vpop.f32.mrb[0].mxu0
  %4195 = vmatprep.mubr.f32.mxu0 0.0
  %4196 = vmatmul.mubr.f32.gmra.mrb[0].mxu0 %v3805
  %v4197 = vpop.f32.mrb[0].mxu0
  %v4198 = vadd.f32 0.0, %v4197
  %v4199 = vpop.f32.mrb[0].mxu0
  %4200 = vmatprep.mubr.f32.mxu0 0.0
  %4201 = vmatmul.mubr.f32.gmra.mrb[0].mxu0 %v3808
  %v4202 = vpop.f32.mrb[0].mxu0
  %v4203 = vadd.f32 0.0, %v4202
  %v4204 = vpop.f32.mrb[0].mxu0
  %4205 = vmatprep.mubr.f32.mxu0 0.0
  %4206 = vmatmul.mubr.f32.gmra.mrb[0].mxu0 %v3811
  %v4207 = vpop.f32.mrb[0].mxu0
  %v4208 = vadd.f32 0.0, %v4207
  %v4209 = vpop.f32.mrb[0].mxu0
  %4210 = vdwg.mxu0
  %v4211 = vadd.f32 %v3481, %v3883
  %v4212 = vadd.f32 %v3482, %v3888
  %v4213 = vadd.f32 %v3483, %v3893
  %v4214 = vadd.f32 %v3484, %v3898
  %v4215 = vadd.f32 %v3485, %v3903
  %v4216 = vadd.f32 %v3486, %v3908
  %v4217 = vadd.f32 %v3487, %v3913
  %v4218 = vadd.f32 %v3488, %v3918
  %v4219 = vadd.f32 %v3489, %v3923
  %v4220 = vadd.f32 %v3490, %v3928
  %v4221 = vadd.f32 %v3491, %v3933
  %v4222 = vadd.f32 %v3492, %v3938
  %v4223 = vadd.f32 %v3493, %v3943
  %v4224 = vadd.f32 %v3494, %v3948
  %v4225 = vadd.f32 %v3495, %v3953
  %v4226 = vadd.f32 %v3496, %v3958
  %v4227 = vadd.f32 %v3497, %v3963
  %v4228 = vadd.f32 %v3498, %v3968
  %v4229 = vadd.f32 %v3499, %v3973
  %v4230 = vadd.f32 %v3500, %v3978
  %v4231 = vadd.f32 %v3501, %v3983
  %v4232 = vadd.f32 %v3502, %v3988
  %v4233 = vadd.f32 %v3503, %v3993
  %v4234 = vadd.f32 %v3504, %v3998
  %v4235 = vadd.f32 %v3505, %v4003
  %v4236 = vadd.f32 %v3506, %v4008
  %v4237 = vadd.f32 %v3507, %v4013
  %v4238 = vadd.f32 %v3508, %v4018
  %v4239 = vadd.f32 %v3509, %v4023
  %v4240 = vadd.f32 %v3510, %v4028
  %v4241 = vadd.f32 %v3511, %v4033
  %v4242 = vadd.f32 %v3512, %v4038
  %v4243 = vadd.f32 %v3513, %v4043
  %v4244 = vadd.f32 %v3514, %v4048
  %v4245 = vadd.f32 %v3515, %v4053
  %v4246 = vadd.f32 %v3516, %v4058
  %v4247 = vadd.f32 %v3517, %v4063
  %v4248 = vadd.f32 %v3518, %v4068
  %v4249 = vadd.f32 %v3519, %v4073
  %v4250 = vadd.f32 %v3520, %v4078
  %v4251 = vadd.f32 %v3521, %v4083
  %v4252 = vadd.f32 %v3522, %v4088
  %v4253 = vadd.f32 %v3523, %v4093
  %v4254 = vadd.f32 %v3524, %v4098
  %v4255 = vadd.f32 %v3525, %v4103
  %v4256 = vadd.f32 %v3526, %v4108
  %v4257 = vadd.f32 %v3527, %v4113
  %v4258 = vadd.f32 %v3528, %v4118
  %v4259 = vadd.f32 %v3529, %v4123
  %v4260 = vadd.f32 %v3530, %v4128
  %v4261 = vadd.f32 %v3531, %v4133
  %v4262 = vadd.f32 %v3532, %v4138
  %v4263 = vadd.f32 %v3533, %v4143
  %v4264 = vadd.f32 %v3534, %v4148
  %v4265 = vadd.f32 %v3535, %v4153
  %v4266 = vadd.f32 %v3536, %v4158
  %v4267 = vadd.f32 %v3537, %v4163
  %v4268 = vadd.f32 %v3538, %v4168
  %v4269 = vadd.f32 %v3539, %v4173
  %v4270 = vadd.f32 %v3540, %v4178
  %v4271 = vadd.f32 %v3541, %v4183
  %v4272 = vadd.f32 %v3542, %v4188
  %v4273 = vadd.f32 %v3543, %v4193
  %v4274 = vadd.f32 %v3544, %v4198
  %v4275 = vadd.f32 %v3545, %v4203
  %v4276 = vadd.f32 %v3546, %v4208
  %v4277 = vld [vmem:[%s0 + $0x30] sm:$0xff]
  %v4278 = vld [vmem:[%s0 + $0x38] sm:$0xff]
  %v4279 = vld [vmem:[%s0 + $0x40] sm:$0xff]
  %v4280 = vld [vmem:[%s0 + $0x48] sm:$0xff]
  %v4281 = vld [vmem:[%s0 + $0x50] sm:$0xff]
  %v4282 = vld [vmem:[%s0 + $0x58] sm:$0xff]
  %v4283 = vld [vmem:[%s0 + $0x60] sm:$0xff]
  %v4284 = vld [vmem:[%s0 + $0x68] sm:$0xff]
  %v4285 = vld [vmem:[%s0 + $0x70] sm:$0xff]
  %v4286 = vld [vmem:[%s0 + $0x78] sm:$0xff]
  %v4287 = vld [vmem:[%s0 + $0x80] sm:$0xff]
  %v4288 = vld [vmem:[%s0 + $0x88] sm:$0xff]
  %v4289 = vld [vmem:[%s0 + $0x90] sm:$0xff]
  %v4290 = vld [vmem:[%s0 + $0x98] sm:$0xff]
  %v4291 = vld [vmem:[%s0 + $0xa0] sm:$0xff]
  %v4292 = vld [vmem:[%s0 + $0xa8] sm:$0xff]
  %v4293 = vld [vmem:[%s0 + $0xb0] sm:$0xff]
  %v4294 = vld [vmem:[%s0 + $0xb8] sm:$0xff]
  %v4295 = vld [vmem:[%s0 + $0xc0] sm:$0xff]
  %v4296 = vld [vmem:[%s0 + $0xc8] sm:$0xff]
  %v4297 = vld [vmem:[%s0 + $0xd0] sm:$0xff]
  %v4298 = vld [vmem:[%s0 + $0xd8] sm:$0xff]
  %v4299 = vld [vmem:[%s0 + $0xe0] sm:$0xff]
  %v4300 = vld [vmem:[%s0 + $0xe8] sm:$0xff]
  %v4301 = vld [vmem:[%s0 + $0xf0] sm:$0xff]
  %v4302 = vld [vmem:[%s0 + $0xf8] sm:$0xff]
  %v4303 = vld [vmem:[%s0 + $0x100] sm:$0xff]
  %v4304 = vld [vmem:[%s0 + $0x108] sm:$0xff]
  %v4305 = vld [vmem:[%s0 + $0x110] sm:$0xff]
  %v4306 = vld [vmem:[%s0 + $0x118] sm:$0xff]
  %v4307 = vld [vmem:[%s0 + $0x120] sm:$0xff]
  %v4308 = vld [vmem:[%s0 + $0x128] sm:$0xff]
  %v4309 = vld [vmem:[%s0 + $0x130] sm:$0xff]
  %v4310 = vld [vmem:[%s0 + $0x138] sm:$0xff]
  %v4311 = vld [vmem:[%s0 + $0x140] sm:$0xff]
  %v4312 = vld [vmem:[%s0 + $0x148] sm:$0xff]
  %v4313 = vld [vmem:[%s0 + $0x150] sm:$0xff]
  %v4314 = vld [vmem:[%s0 + $0x158] sm:$0xff]
  %v4315 = vld [vmem:[%s0 + $0x160] sm:$0xff]
  %v4316 = vld [vmem:[%s0 + $0x168] sm:$0xff]
  %v4317 = vld [vmem:[%s0 + $0x170] sm:$0xff]
  %v4318 = vld [vmem:[%s0 + $0x178] sm:$0xff]
  %v4319 = vld [vmem:[%s0 + $0x180] sm:$0xff]
  %v4320 = vld [vmem:[%s0 + $0x188] sm:$0xff]
  %v4321 = vld [vmem:[%s0 + $0x190] sm:$0xff]
  %v4322 = vld [vmem:[%s0 + $0x198] sm:$0xff]
  %v4323 = vld [vmem:[%s0 + $0x1a0] sm:$0xff]
  %v4324 = vld [vmem:[%s0 + $0x1a8] sm:$0xff]
  %v4325 = vld [vmem:[%s0 + $0x1b0] sm:$0xff]
  %v4326 = vld [vmem:[%s0 + $0x1b8] sm:$0xff]
  %v4327 = vld [vmem:[%s0 + $0x1c0] sm:$0xff]
  %v4328 = vld [vmem:[%s0 + $0x1c8] sm:$0xff]
  %v4329 = vld [vmem:[%s0 + $0x1d0] sm:$0xff]
  %v4330 = vld [vmem:[%s0 + $0x1d8] sm:$0xff]
  %v4331 = vld [vmem:[%s0 + $0x1e0] sm:$0xff]
  %v4332 = vld [vmem:[%s0 + $0x1e8] sm:$0xff]
  %v4333 = vld [vmem:[%s0 + $0x1f0] sm:$0xff]
  %v4334 = vld [vmem:[%s0 + $0x1f8] sm:$0xff]
  %v4335 = vld [vmem:[%s0 + $0x200] sm:$0xff]
  %v4336 = vld [vmem:[%s0 + $0x208] sm:$0xff]
  %v4337 = vld [vmem:[%s0 + $0x210] sm:$0xff]
  %v4338 = vld [vmem:[%s0 + $0x218] sm:$0xff]
  %v4339 = vld [vmem:[%s0 + $0x220] sm:$0xff]
  %v4340 = vld [vmem:[%s0 + $0x228] sm:$0xff]
  %v4341 = vld [vmem:[%s0 + $0x230] sm:$0xff]
  %v4342 = vld [vmem:[%s0 + $0x238] sm:$0xff]
  %s4343 = scalar_lea.vmem %s1, 24
  %v4344 = vld [vmem:[%s4343] sm:$0x7]
  %v4346 = vsel %vm163, %v4277, 0
  %v4349 = vsel %vm163, %v4278, 0
  %v4352 = vsel %vm163, %v4279, 0
  %v4355 = vsel %vm163, %v4280, 0
  %v4358 = vsel %vm163, %v4281, 0
  %v4361 = vsel %vm163, %v4282, 0
  %v4364 = vsel %vm163, %v4283, 0
  %v4367 = vsel %vm163, %v4284, 0
  %v4370 = vsel %vm163, %v4285, 0
  %v4373 = vsel %vm163, %v4286, 0
  %v4376 = vsel %vm163, %v4287, 0
  %v4379 = vsel %vm163, %v4288, 0
  %v4382 = vsel %vm163, %v4289, 0
  %v4385 = vsel %vm163, %v4290, 0
  %v4388 = vsel %vm163, %v4291, 0
  %v4391 = vsel %vm163, %v4292, 0
  %v4394 = vsel %vm163, %v4293, 0
  %v4397 = vsel %vm163, %v4294, 0
  %v4400 = vsel %vm163, %v4295, 0
  %v4403 = vsel %vm163, %v4296, 0
  %v4406 = vsel %vm163, %v4297, 0
  %v4409 = vsel %vm163, %v4298, 0
  %v4412 = vsel %vm163, %v4299, 0
  %v4415 = vsel %vm163, %v4300, 0
  %v4418 = vsel %vm163, %v4301, 0
  %v4421 = vsel %vm163, %v4302, 0
  %v4424 = vsel %vm163, %v4303, 0
  %v4427 = vsel %vm163, %v4304, 0
  %v4430 = vsel %vm163, %v4305, 0
  %v4433 = vsel %vm163, %v4306, 0
  %v4436 = vsel %vm163, %v4307, 0
  %v4439 = vsel %vm163, %v4308, 0
  %v4442 = vsel %vm163, %v4309, 0
  %v4445 = vsel %vm163, %v4310, 0
  %v4448 = vsel %vm163, %v4311, 0
  %v4451 = vsel %vm163, %v4312, 0
  %v4454 = vsel %vm163, %v4313, 0
  %v4457 = vsel %vm163, %v4314, 0
  %v4460 = vsel %vm163, %v4315, 0
  %v4463 = vsel %vm163, %v4316, 0
  %v4466 = vsel %vm163, %v4317, 0
  %v4469 = vsel %vm163, %v4318, 0
  %v4472 = vsel %vm163, %v4319, 0
  %v4475 = vsel %vm163, %v4320, 0
  %v4478 = vsel %vm163, %v4321, 0
  %v4481 = vsel %vm163, %v4322, 0
  %v4484 = vsel %vm163, %v4323, 0
  %v4487 = vsel %vm163, %v4324, 0
  %v4490 = vsel %vm163, %v4325, 0
  %v4493 = vsel %vm163, %v4326, 0
  %v4496 = vsel %vm163, %v4327, 0
  %v4499 = vsel %vm163, %v4328, 0
  %v4502 = vsel %vm163, %v4329, 0
  %v4505 = vsel %vm163, %v4330, 0
  %v4508 = vsel %vm163, %v4331, 0
  %v4511 = vsel %vm163, %v4332, 0
  %v4514 = vsel %vm163, %v4333, 0
  %v4517 = vsel %vm163, %v4334, 0
  %v4520 = vsel %vm163, %v4335, 0
  %v4523 = vsel %vm163, %v4336, 0
  %v4526 = vsel %vm163, %v4337, 0
  %v4529 = vsel %vm163, %v4338, 0
  %v4532 = vsel %vm163, %v4339, 0
  %v4535 = vsel %vm163, %v4340, 0
  %v4538 = vsel %vm163, %v4341, 0
  %v4541 = vsel %vm163, %v4342, 0
  %v4544 = vsel %vm362, %v4344, 0
  %4546 = vmatprep.subr.mxu0 0.0
  %4547 = vmatpush1.msra.mxu0 %v4544
  %4548 = vmatprep.subr.mxu0 0.0
  %4549 = vmatpush1.msra.mxu0 0.0
  %4550 = vmatprep.subr.mxu0 0.0
  %4551 = vmatpush1.msra.mxu0 0.0
  %4552 = vmatprep.subr.mxu0 0.0
  %4553 = vmatpush1.msra.mxu0 0.0
  %4554 = vmatprep.subr.mxu0 0.0
  %4555 = vmatpush1.msra.mxu0 0.0
  %4556 = vmatprep.subr.mxu0 0.0
  %4557 = vmatpush1.msra.mxu0 0.0
  %4558 = vmatprep.subr.mxu0 0.0
  %4559 = vmatpush1.msra.mxu0 0.0
  %4560 = vmatprep.subr.mxu0 0.0
  %4561 = vmatpush1.msra.mxu0 0.0
  %4562 = vmatprep.subr.mxu0 0.0
  %4563 = vmatpush1.msra.mxu0 0.0
  %4564 = vmatprep.subr.mxu0 0.0
  %4565 = vmatpush1.msra.mxu0 0.0
  %4566 = vmatprep.subr.mxu0 0.0
  %4567 = vmatpush1.msra.mxu0 0.0
  %4568 = vmatprep.subr.mxu0 0.0
  %4569 = vmatpush1.msra.mxu0 0.0
  %4570 = vmatprep.subr.mxu0 0.0
  %4571 = vmatpush1.msra.mxu0 0.0
  %4572 = vmatprep.subr.mxu0 0.0
  %4573 = vmatpush1.msra.mxu0 0.0
  %4574 = vmatprep.subr.mxu0 0.0
  %4575 = vmatpush1.msra.mxu0 0.0
  %4576 = vmatprep.subr.mxu0 0.0
  %4577 = vmatpush1.msra.mxu0 0.0
  %4578 = vmatprep.subr.mxu0 0.0
  %4579 = vmatpush1.msra.mxu0 0.0
  %4580 = vmatprep.subr.mxu0 0.0
  %4581 = vmatpush1.msra.mxu0 0.0
  %4582 = vmatprep.subr.mxu0 0.0
  %4583 = vmatpush1.msra.mxu0 0.0
  %4584 = vmatprep.subr.mxu0 0.0
  %4585 = vmatpush1.msra.mxu0 0.0
  %4586 = vmatprep.subr.mxu0 0.0
  %4587 = vmatpush1.msra.mxu0 0.0
  %4588 = vmatprep.subr.mxu0 0.0
  %4589 = vmatpush1.msra.mxu0 0.0
  %4590 = vmatprep.subr.mxu0 0.0
  %4591 = vmatpush1.msra.mxu0 0.0
  %4592 = vmatprep.subr.mxu0 0.0
  %4593 = vmatpush1.msra.mxu0 0.0
  %4594 = vmatprep.subr.mxu0 0.0
  %4595 = vmatpush1.msra.mxu0 0.0
  %4596 = vmatprep.subr.mxu0 0.0
  %4597 = vmatpush1.msra.mxu0 0.0
  %4598 = vmatprep.subr.mxu0 0.0
  %4599 = vmatpush1.msra.mxu0 0.0
  %4600 = vmatprep.subr.mxu0 0.0
  %4601 = vmatpush1.msra.mxu0 0.0
  %4602 = vmatprep.subr.mxu0 0.0
  %4603 = vmatpush1.msra.mxu0 0.0
  %4604 = vmatprep.subr.mxu0 0.0
  %4605 = vmatpush1.msra.mxu0 0.0
  %4606 = vmatprep.subr.mxu0 0.0
  %4607 = vmatpush1.msra.mxu0 0.0
  %4608 = vmatprep.subr.mxu0 0.0
  %4609 = vmatpush1.msra.mxu0 0.0
  %4610 = vmatprep.mubr.f32.mxu0 0.0
  %4611 = vmatmul.mubr.f32.gmra.mrb[0].mxu0 %v4346
  %v4612 = vpop.f32.mrb[0].mxu0
  %v4613 = vadd.f32 0.0, %v4612
  %v4614 = vpop.f32.mrb[0].mxu0
  %4615 = vmatprep.mubr.f32.mxu0 0.0
  %4616 = vmatmul.mubr.f32.gmra.mrb[0].mxu0 %v4349
  %v4617 = vpop.f32.mrb[0].mxu0
  %v4618 = vadd.f32 0.0, %v4617
  %v4619 = vpop.f32.mrb[0].mxu0
  %4620 = vmatprep.mubr.f32.mxu0 0.0
  %4621 = vmatmul.mubr.f32.gmra.mrb[0].mxu0 %v4352
  %v4622 = vpop.f32.mrb[0].mxu0
  %v4623 = vadd.f32 0.0, %v4622
  %v4624 = vpop.f32.mrb[0].mxu0
  %4625 = vmatprep.mubr.f32.mxu0 0.0
  %4626 = vmatmul.mubr.f32.gmra.mrb[0].mxu0 %v4355
  %v4627 = vpop.f32.mrb[0].mxu0
  %v4628 = vadd.f32 0.0, %v4627
  %v4629 = vpop.f32.mrb[0].mxu0
  %4630 = vmatprep.mubr.f32.mxu0 0.0
  %4631 = vmatmul.mubr.f32.gmra.mrb[0].mxu0 %v4358
  %v4632 = vpop.f32.mrb[0].mxu0
  %v4633 = vadd.f32 0.0, %v4632
  %v4634 = vpop.f32.mrb[0].mxu0
  %4635 = vmatprep.mubr.f32.mxu0 0.0
  %4636 = vmatmul.mubr.f32.gmra.mrb[0].mxu0 %v4361
  %v4637 = vpop.f32.mrb[0].mxu0
  %v4638 = vadd.f32 0.0, %v4637
  %v4639 = vpop.f32.mrb[0].mxu0
  %4640 = vmatprep.mubr.f32.mxu0 0.0
  %4641 = vmatmul.mubr.f32.gmra.mrb[0].mxu0 %v4364
  %v4642 = vpop.f32.mrb[0].mxu0
  %v4643 = vadd.f32 0.0, %v4642
  %v4644 = vpop.f32.mrb[0].mxu0
  %4645 = vmatprep.mubr.f32.mxu0 0.0
  %4646 = vmatmul.mubr.f32.gmra.mrb[0].mxu0 %v4367
  %v4647 = vpop.f32.mrb[0].mxu0
  %v4648 = vadd.f32 0.0, %v4647
  %v4649 = vpop.f32.mrb[0].mxu0
  %4650 = vmatprep.mubr.f32.mxu0 0.0
  %4651 = vmatmul.mubr.f32.gmra.mrb[0].mxu0 %v4370
  %v4652 = vpop.f32.mrb[0].mxu0
  %v4653 = vadd.f32 0.0, %v4652
  %v4654 = vpop.f32.mrb[0].mxu0
  %4655 = vmatprep.mubr.f32.mxu0 0.0
  %4656 = vmatmul.mubr.f32.gmra.mrb[0].mxu0 %v4373
  %v4657 = vpop.f32.mrb[0].mxu0
  %v4658 = vadd.f32 0.0, %v4657
  %v4659 = vpop.f32.mrb[0].mxu0
  %4660 = vmatprep.mubr.f32.mxu0 0.0
  %4661 = vmatmul.mubr.f32.gmra.mrb[0].mxu0 %v4376
  %v4662 = vpop.f32.mrb[0].mxu0
  %v4663 = vadd.f32 0.0, %v4662
  %v4664 = vpop.f32.mrb[0].mxu0
  %4665 = vmatprep.mubr.f32.mxu0 0.0
  %4666 = vmatmul.mubr.f32.gmra.mrb[0].mxu0 %v4379
  %v4667 = vpop.f32.mrb[0].mxu0
  %v4668 = vadd.f32 0.0, %v4667
  %v4669 = vpop.f32.mrb[0].mxu0
  %4670 = vmatprep.mubr.f32.mxu0 0.0
  %4671 = vmatmul.mubr.f32.gmra.mrb[0].mxu0 %v4382
  %v4672 = vpop.f32.mrb[0].mxu0
  %v4673 = vadd.f32 0.0, %v4672
  %v4674 = vpop.f32.mrb[0].mxu0
  %4675 = vmatprep.mubr.f32.mxu0 0.0
  %4676 = vmatmul.mubr.f32.gmra.mrb[0].mxu0 %v4385
  %v4677 = vpop.f32.mrb[0].mxu0
  %v4678 = vadd.f32 0.0, %v4677
  %v4679 = vpop.f32.mrb[0].mxu0
  %4680 = vmatprep.mubr.f32.mxu0 0.0
  %4681 = vmatmul.mubr.f32.gmra.mrb[0].mxu0 %v4388
  %v4682 = vpop.f32.mrb[0].mxu0
  %v4683 = vadd.f32 0.0, %v4682
  %v4684 = vpop.f32.mrb[0].mxu0
  %4685 = vmatprep.mubr.f32.mxu0 0.0
  %4686 = vmatmul.mubr.f32.gmra.mrb[0].mxu0 %v4391
  %v4687 = vpop.f32.mrb[0].mxu0
  %v4688 = vadd.f32 0.0, %v4687
  %v4689 = vpop.f32.mrb[0].mxu0
  %4690 = vmatprep.mubr.f32.mxu0 0.0
  %4691 = vmatmul.mubr.f32.gmra.mrb[0].mxu0 %v4394
  %v4692 = vpop.f32.mrb[0].mxu0
  %v4693 = vadd.f32 0.0, %v4692
  %v4694 = vpop.f32.mrb[0].mxu0
  %4695 = vmatprep.mubr.f32.mxu0 0.0
  %4696 = vmatmul.mubr.f32.gmra.mrb[0].mxu0 %v4397
  %v4697 = vpop.f32.mrb[0].mxu0
  %v4698 = vadd.f32 0.0, %v4697
  %v4699 = vpop.f32.mrb[0].mxu0
  %4700 = vmatprep.mubr.f32.mxu0 0.0
  %4701 = vmatmul.mubr.f32.gmra.mrb[0].mxu0 %v4400
  %v4702 = vpop.f32.mrb[0].mxu0
  %v4703 = vadd.f32 0.0, %v4702
  %v4704 = vpop.f32.mrb[0].mxu0
  %4705 = vmatprep.mubr.f32.mxu0 0.0
  %4706 = vmatmul.mubr.f32.gmra.mrb[0].mxu0 %v4403
  %v4707 = vpop.f32.mrb[0].mxu0
  %v4708 = vadd.f32 0.0, %v4707
  %v4709 = vpop.f32.mrb[0].mxu0
  %4710 = vmatprep.mubr.f32.mxu0 0.0
  %4711 = vmatmul.mubr.f32.gmra.mrb[0].mxu0 %v4406
  %v4712 = vpop.f32.mrb[0].mxu0
  %v4713 = vadd.f32 0.0, %v4712
  %v4714 = vpop.f32.mrb[0].mxu0
  %4715 = vmatprep.mubr.f32.mxu0 0.0
  %4716 = vmatmul.mubr.f32.gmra.mrb[0].mxu0 %v4409
  %v4717 = vpop.f32.mrb[0].mxu0
  %v4718 = vadd.f32 0.0, %v4717
  %v4719 = vpop.f32.mrb[0].mxu0
  %4720 = vmatprep.mubr.f32.mxu0 0.0
  %4721 = vmatmul.mubr.f32.gmra.mrb[0].mxu0 %v4412
  %v4722 = vpop.f32.mrb[0].mxu0
  %v4723 = vadd.f32 0.0, %v4722
  %v4724 = vpop.f32.mrb[0].mxu0
  %4725 = vmatprep.mubr.f32.mxu0 0.0
  %4726 = vmatmul.mubr.f32.gmra.mrb[0].mxu0 %v4415
  %v4727 = vpop.f32.mrb[0].mxu0
  %v4728 = vadd.f32 0.0, %v4727
  %v4729 = vpop.f32.mrb[0].mxu0
  %4730 = vmatprep.mubr.f32.mxu0 0.0
  %4731 = vmatmul.mubr.f32.gmra.mrb[0].mxu0 %v4418
  %v4732 = vpop.f32.mrb[0].mxu0
  %v4733 = vadd.f32 0.0, %v4732
  %v4734 = vpop.f32.mrb[0].mxu0
  %4735 = vmatprep.mubr.f32.mxu0 0.0
  %4736 = vmatmul.mubr.f32.gmra.mrb[0].mxu0 %v4421
  %v4737 = vpop.f32.mrb[0].mxu0
  %v4738 = vadd.f32 0.0, %v4737
  %v4739 = vpop.f32.mrb[0].mxu0
  %4740 = vmatprep.mubr.f32.mxu0 0.0
  %4741 = vmatmul.mubr.f32.gmra.mrb[0].mxu0 %v4424
  %v4742 = vpop.f32.mrb[0].mxu0
  %v4743 = vadd.f32 0.0, %v4742
  %v4744 = vpop.f32.mrb[0].mxu0
  %4745 = vmatprep.mubr.f32.mxu0 0.0
  %4746 = vmatmul.mubr.f32.gmra.mrb[0].mxu0 %v4427
  %v4747 = vpop.f32.mrb[0].mxu0
  %v4748 = vadd.f32 0.0, %v4747
  %v4749 = vpop.f32.mrb[0].mxu0
  %4750 = vmatprep.mubr.f32.mxu0 0.0
  %4751 = vmatmul.mubr.f32.gmra.mrb[0].mxu0 %v4430
  %v4752 = vpop.f32.mrb[0].mxu0
  %v4753 = vadd.f32 0.0, %v4752
  %v4754 = vpop.f32.mrb[0].mxu0
  %4755 = vmatprep.mubr.f32.mxu0 0.0
  %4756 = vmatmul.mubr.f32.gmra.mrb[0].mxu0 %v4433
  %v4757 = vpop.f32.mrb[0].mxu0
  %v4758 = vadd.f32 0.0, %v4757
  %v4759 = vpop.f32.mrb[0].mxu0
  %4760 = vmatprep.mubr.f32.mxu0 0.0
  %4761 = vmatmul.mubr.f32.gmra.mrb[0].mxu0 %v4436
  %v4762 = vpop.f32.mrb[0].mxu0
  %v4763 = vadd.f32 0.0, %v4762
  %v4764 = vpop.f32.mrb[0].mxu0
  %4765 = vmatprep.mubr.f32.mxu0 0.0
  %4766 = vmatmul.mubr.f32.gmra.mrb[0].mxu0 %v4439
  %v4767 = vpop.f32.mrb[0].mxu0
  %v4768 = vadd.f32 0.0, %v4767
  %v4769 = vpop.f32.mrb[0].mxu0
  %4770 = vmatprep.mubr.f32.mxu0 0.0
  %4771 = vmatmul.mubr.f32.gmra.mrb[0].mxu0 %v4442
  %v4772 = vpop.f32.mrb[0].mxu0
  %v4773 = vadd.f32 0.0, %v4772
  %v4774 = vpop.f32.mrb[0].mxu0
  %4775 = vmatprep.mubr.f32.mxu0 0.0
  %4776 = vmatmul.mubr.f32.gmra.mrb[0].mxu0 %v4445
  %v4777 = vpop.f32.mrb[0].mxu0
  %v4778 = vadd.f32 0.0, %v4777
  %v4779 = vpop.f32.mrb[0].mxu0
  %4780 = vmatprep.mubr.f32.mxu0 0.0
  %4781 = vmatmul.mubr.f32.gmra.mrb[0].mxu0 %v4448
  %v4782 = vpop.f32.mrb[0].mxu0
  %v4783 = vadd.f32 0.0, %v4782
  %v4784 = vpop.f32.mrb[0].mxu0
  %4785 = vmatprep.mubr.f32.mxu0 0.0
  %4786 = vmatmul.mubr.f32.gmra.mrb[0].mxu0 %v4451
  %v4787 = vpop.f32.mrb[0].mxu0
  %v4788 = vadd.f32 0.0, %v4787
  %v4789 = vpop.f32.mrb[0].mxu0
  %4790 = vmatprep.mubr.f32.mxu0 0.0
  %4791 = vmatmul.mubr.f32.gmra.mrb[0].mxu0 %v4454
  %v4792 = vpop.f32.mrb[0].mxu0
  %v4793 = vadd.f32 0.0, %v4792
  %v4794 = vpop.f32.mrb[0].mxu0
  %4795 = vmatprep.mubr.f32.mxu0 0.0
  %4796 = vmatmul.mubr.f32.gmra.mrb[0].mxu0 %v4457
  %v4797 = vpop.f32.mrb[0].mxu0
  %v4798 = vadd.f32 0.0, %v4797
  %v4799 = vpop.f32.mrb[0].mxu0
  %4800 = vmatprep.mubr.f32.mxu0 0.0
  %4801 = vmatmul.mubr.f32.gmra.mrb[0].mxu0 %v4460
  %v4802 = vpop.f32.mrb[0].mxu0
  %v4803 = vadd.f32 0.0, %v4802
  %v4804 = vpop.f32.mrb[0].mxu0
  %4805 = vmatprep.mubr.f32.mxu0 0.0
  %4806 = vmatmul.mubr.f32.gmra.mrb[0].mxu0 %v4463
  %v4807 = vpop.f32.mrb[0].mxu0
  %v4808 = vadd.f32 0.0, %v4807
  %v4809 = vpop.f32.mrb[0].mxu0
  %4810 = vmatprep.mubr.f32.mxu0 0.0
  %4811 = vmatmul.mubr.f32.gmra.mrb[0].mxu0 %v4466
  %v4812 = vpop.f32.mrb[0].mxu0
  %v4813 = vadd.f32 0.0, %v4812
  %v4814 = vpop.f32.mrb[0].mxu0
  %4815 = vmatprep.mubr.f32.mxu0 0.0
  %4816 = vmatmul.mubr.f32.gmra.mrb[0].mxu0 %v4469
  %v4817 = vpop.f32.mrb[0].mxu0
  %v4818 = vadd.f32 0.0, %v4817
  %v4819 = vpop.f32.mrb[0].mxu0
  %4820 = vmatprep.mubr.f32.mxu0 0.0
  %4821 = vmatmul.mubr.f32.gmra.mrb[0].mxu0 %v4472
  %v4822 = vpop.f32.mrb[0].mxu0
  %v4823 = vadd.f32 0.0, %v4822
  %v4824 = vpop.f32.mrb[0].mxu0
  %4825 = vmatprep.mubr.f32.mxu0 0.0
  %4826 = vmatmul.mubr.f32.gmra.mrb[0].mxu0 %v4475
  %v4827 = vpop.f32.mrb[0].mxu0
  %v4828 = vadd.f32 0.0, %v4827
  %v4829 = vpop.f32.mrb[0].mxu0
  %4830 = vmatprep.mubr.f32.mxu0 0.0
  %4831 = vmatmul.mubr.f32.gmra.mrb[0].mxu0 %v4478
  %v4832 = vpop.f32.mrb[0].mxu0
  %v4833 = vadd.f32 0.0, %v4832
  %v4834 = vpop.f32.mrb[0].mxu0
  %4835 = vmatprep.mubr.f32.mxu0 0.0
  %4836 = vmatmul.mubr.f32.gmra.mrb[0].mxu0 %v4481
  %v4837 = vpop.f32.mrb[0].mxu0
  %v4838 = vadd.f32 0.0, %v4837
  %v4839 = vpop.f32.mrb[0].mxu0
  %4840 = vmatprep.mubr.f32.mxu0 0.0
  %4841 = vmatmul.mubr.f32.gmra.mrb[0].mxu0 %v4484
  %v4842 = vpop.f32.mrb[0].mxu0
  %v4843 = vadd.f32 0.0, %v4842
  %v4844 = vpop.f32.mrb[0].mxu0
  %4845 = vmatprep.mubr.f32.mxu0 0.0
  %4846 = vmatmul.mubr.f32.gmra.mrb[0].mxu0 %v4487
  %v4847 = vpop.f32.mrb[0].mxu0
  %v4848 = vadd.f32 0.0, %v4847
  %v4849 = vpop.f32.mrb[0].mxu0
  %4850 = vmatprep.mubr.f32.mxu0 0.0
  %4851 = vmatmul.mubr.f32.gmra.mrb[0].mxu0 %v4490
  %v4852 = vpop.f32.mrb[0].mxu0
  %v4853 = vadd.f32 0.0, %v4852
  %v4854 = vpop.f32.mrb[0].mxu0
  %4855 = vmatprep.mubr.f32.mxu0 0.0
  %4856 = vmatmul.mubr.f32.gmra.mrb[0].mxu0 %v4493
  %v4857 = vpop.f32.mrb[0].mxu0
  %v4858 = vadd.f32 0.0, %v4857
  %v4859 = vpop.f32.mrb[0].mxu0
  %4860 = vmatprep.mubr.f32.mxu0 0.0
  %4861 = vmatmul.mubr.f32.gmra.mrb[0].mxu0 %v4496
  %v4862 = vpop.f32.mrb[0].mxu0
  %v4863 = vadd.f32 0.0, %v4862
  %v4864 = vpop.f32.mrb[0].mxu0
  %4865 = vmatprep.mubr.f32.mxu0 0.0
  %4866 = vmatmul.mubr.f32.gmra.mrb[0].mxu0 %v4499
  %v4867 = vpop.f32.mrb[0].mxu0
  %v4868 = vadd.f32 0.0, %v4867
  %v4869 = vpop.f32.mrb[0].mxu0
  %4870 = vmatprep.mubr.f32.mxu0 0.0
  %4871 = vmatmul.mubr.f32.gmra.mrb[0].mxu0 %v4502
  %v4872 = vpop.f32.mrb[0].mxu0
  %v4873 = vadd.f32 0.0, %v4872
  %v4874 = vpop.f32.mrb[0].mxu0
  %4875 = vmatprep.mubr.f32.mxu0 0.0
  %4876 = vmatmul.mubr.f32.gmra.mrb[0].mxu0 %v4505
  %v4877 = vpop.f32.mrb[0].mxu0
  %v4878 = vadd.f32 0.0, %v4877
  %v4879 = vpop.f32.mrb[0].mxu0
  %4880 = vmatprep.mubr.f32.mxu0 0.0
  %4881 = vmatmul.mubr.f32.gmra.mrb[0].mxu0 %v4508
  %v4882 = vpop.f32.mrb[0].mxu0
  %v4883 = vadd.f32 0.0, %v4882
  %v4884 = vpop.f32.mrb[0].mxu0
  %4885 = vmatprep.mubr.f32.mxu0 0.0
  %4886 = vmatmul.mubr.f32.gmra.mrb[0].mxu0 %v4511
  %v4887 = vpop.f32.mrb[0].mxu0
  %v4888 = vadd.f32 0.0, %v4887
  %v4889 = vpop.f32.mrb[0].mxu0
  %4890 = vmatprep.mubr.f32.mxu0 0.0
  %4891 = vmatmul.mubr.f32.gmra.mrb[0].mxu0 %v4514
  %v4892 = vpop.f32.mrb[0].mxu0
  %v4893 = vadd.f32 0.0, %v4892
  %v4894 = vpop.f32.mrb[0].mxu0
  %4895 = vmatprep.mubr.f32.mxu0 0.0
  %4896 = vmatmul.mubr.f32.gmra.mrb[0].mxu0 %v4517
  %v4897 = vpop.f32.mrb[0].mxu0
  %v4898 = vadd.f32 0.0, %v4897
  %v4899 = vpop.f32.mrb[0].mxu0
  %4900 = vmatprep.mubr.f32.mxu0 0.0
  %4901 = vmatmul.mubr.f32.gmra.mrb[0].mxu0 %v4520
  %v4902 = vpop.f32.mrb[0].mxu0
  %v4903 = vadd.f32 0.0, %v4902
  %v4904 = vpop.f32.mrb[0].mxu0
  %4905 = vmatprep.mubr.f32.mxu0 0.0
  %4906 = vmatmul.mubr.f32.gmra.mrb[0].mxu0 %v4523
  %v4907 = vpop.f32.mrb[0].mxu0
  %v4908 = vadd.f32 0.0, %v4907
  %v4909 = vpop.f32.mrb[0].mxu0
  %4910 = vmatprep.mubr.f32.mxu0 0.0
  %4911 = vmatmul.mubr.f32.gmra.mrb[0].mxu0 %v4526
  %v4912 = vpop.f32.mrb[0].mxu0
  %v4913 = vadd.f32 0.0, %v4912
  %v4914 = vpop.f32.mrb[0].mxu0
  %4915 = vmatprep.mubr.f32.mxu0 0.0
  %4916 = vmatmul.mubr.f32.gmra.mrb[0].mxu0 %v4529
  %v4917 = vpop.f32.mrb[0].mxu0
  %v4918 = vadd.f32 0.0, %v4917
  %v4919 = vpop.f32.mrb[0].mxu0
  %4920 = vmatprep.mubr.f32.mxu0 0.0
  %4921 = vmatmul.mubr.f32.gmra.mrb[0].mxu0 %v4532
  %v4922 = vpop.f32.mrb[0].mxu0
  %v4923 = vadd.f32 0.0, %v4922
  %v4924 = vpop.f32.mrb[0].mxu0
  %4925 = vmatprep.mubr.f32.mxu0 0.0
  %4926 = vmatmul.mubr.f32.gmra.mrb[0].mxu0 %v4535
  %v4927 = vpop.f32.mrb[0].mxu0
  %v4928 = vadd.f32 0.0, %v4927
  %v4929 = vpop.f32.mrb[0].mxu0
  %4930 = vmatprep.mubr.f32.mxu0 0.0
  %4931 = vmatmul.mubr.f32.gmra.mrb[0].mxu0 %v4538
  %v4932 = vpop.f32.mrb[0].mxu0
  %v4933 = vadd.f32 0.0, %v4932
  %v4934 = vpop.f32.mrb[0].mxu0
  %4935 = vmatprep.mubr.f32.mxu0 0.0
  %4936 = vmatmul.mubr.f32.gmra.mrb[0].mxu0 %v4541
  %v4937 = vpop.f32.mrb[0].mxu0
  %v4938 = vadd.f32 0.0, %v4937
  %v4939 = vpop.f32.mrb[0].mxu0
  %4940 = vdwg.mxu0
  %v4941 = vadd.f32 %v4211, %v4613
  %v4942 = vadd.f32 %v4212, %v4618
  %v4943 = vadd.f32 %v4213, %v4623
  %v4944 = vadd.f32 %v4214, %v4628
  %v4945 = vadd.f32 %v4215, %v4633
  %v4946 = vadd.f32 %v4216, %v4638
  %v4947 = vadd.f32 %v4217, %v4643
  %v4948 = vadd.f32 %v4218, %v4648
  %v4949 = vadd.f32 %v4219, %v4653
  %v4950 = vadd.f32 %v4220, %v4658
  %v4951 = vadd.f32 %v4221, %v4663
  %v4952 = vadd.f32 %v4222, %v4668
  %v4953 = vadd.f32 %v4223, %v4673
  %v4954 = vadd.f32 %v4224, %v4678
  %v4955 = vadd.f32 %v4225, %v4683
  %v4956 = vadd.f32 %v4226, %v4688
  %v4957 = vadd.f32 %v4227, %v4693
  %v4958 = vadd.f32 %v4228, %v4698
  %v4959 = vadd.f32 %v4229, %v4703
  %v4960 = vadd.f32 %v4230, %v4708
  %v4961 = vadd.f32 %v4231, %v4713
  %v4962 = vadd.f32 %v4232, %v4718
  %v4963 = vadd.f32 %v4233, %v4723
  %v4964 = vadd.f32 %v4234, %v4728
  %v4965 = vadd.f32 %v4235, %v4733
  %v4966 = vadd.f32 %v4236, %v4738
  %v4967 = vadd.f32 %v4237, %v4743
  %v4968 = vadd.f32 %v4238, %v4748
  %v4969 = vadd.f32 %v4239, %v4753
  %v4970 = vadd.f32 %v4240, %v4758
  %v4971 = vadd.f32 %v4241, %v4763
  %v4972 = vadd.f32 %v4242, %v4768
  %v4973 = vadd.f32 %v4243, %v4773
  %v4974 = vadd.f32 %v4244, %v4778
  %v4975 = vadd.f32 %v4245, %v4783
  %v4976 = vadd.f32 %v4246, %v4788
  %v4977 = vadd.f32 %v4247, %v4793
  %v4978 = vadd.f32 %v4248, %v4798
  %v4979 = vadd.f32 %v4249, %v4803
  %v4980 = vadd.f32 %v4250, %v4808
  %v4981 = vadd.f32 %v4251, %v4813
  %v4982 = vadd.f32 %v4252, %v4818
  %v4983 = vadd.f32 %v4253, %v4823
  %v4984 = vadd.f32 %v4254, %v4828
  %v4985 = vadd.f32 %v4255, %v4833
  %v4986 = vadd.f32 %v4256, %v4838
  %v4987 = vadd.f32 %v4257, %v4843
  %v4988 = vadd.f32 %v4258, %v4848
  %v4989 = vadd.f32 %v4259, %v4853
  %v4990 = vadd.f32 %v4260, %v4858
  %v4991 = vadd.f32 %v4261, %v4863
  %v4992 = vadd.f32 %v4262, %v4868
  %v4993 = vadd.f32 %v4263, %v4873
  %v4994 = vadd.f32 %v4264, %v4878
  %v4995 = vadd.f32 %v4265, %v4883
  %v4996 = vadd.f32 %v4266, %v4888
  %v4997 = vadd.f32 %v4267, %v4893
  %v4998 = vadd.f32 %v4268, %v4898
  %v4999 = vadd.f32 %v4269, %v4903
  %v5000 = vadd.f32 %v4270, %v4908
  %v5001 = vadd.f32 %v4271, %v4913
  %v5002 = vadd.f32 %v4272, %v4918
  %v5003 = vadd.f32 %v4273, %v4923
  %v5004 = vadd.f32 %v4274, %v4928
  %v5005 = vadd.f32 %v4275, %v4933
  %v5006 = vadd.f32 %v4276, %v4938
  %v5007 = vld [vmem:[%s0 + $0x31] sm:$0xff]
  %v5008 = vld [vmem:[%s0 + $0x39] sm:$0xff]
  %v5009 = vld [vmem:[%s0 + $0x41] sm:$0xff]
  %v5010 = vld [vmem:[%s0 + $0x49] sm:$0xff]
  %v5011 = vld [vmem:[%s0 + $0x51] sm:$0xff]
  %v5012 = vld [vmem:[%s0 + $0x59] sm:$0xff]
  %v5013 = vld [vmem:[%s0 + $0x61] sm:$0xff]
  %v5014 = vld [vmem:[%s0 + $0x69] sm:$0xff]
  %v5015 = vld [vmem:[%s0 + $0x71] sm:$0xff]
  %v5016 = vld [vmem:[%s0 + $0x79] sm:$0xff]
  %v5017 = vld [vmem:[%s0 + $0x81] sm:$0xff]
  %v5018 = vld [vmem:[%s0 + $0x89] sm:$0xff]
  %v5019 = vld [vmem:[%s0 + $0x91] sm:$0xff]
  %v5020 = vld [vmem:[%s0 + $0x99] sm:$0xff]
  %v5021 = vld [vmem:[%s0 + $0xa1] sm:$0xff]
  %v5022 = vld [vmem:[%s0 + $0xa9] sm:$0xff]
  %v5023 = vld [vmem:[%s0 + $0xb1] sm:$0xff]
  %v5024 = vld [vmem:[%s0 + $0xb9] sm:$0xff]
  %v5025 = vld [vmem:[%s0 + $0xc1] sm:$0xff]
  %v5026 = vld [vmem:[%s0 + $0xc9] sm:$0xff]
  %v5027 = vld [vmem:[%s0 + $0xd1] sm:$0xff]
  %v5028 = vld [vmem:[%s0 + $0xd9] sm:$0xff]
  %v5029 = vld [vmem:[%s0 + $0xe1] sm:$0xff]
  %v5030 = vld [vmem:[%s0 + $0xe9] sm:$0xff]
  %v5031 = vld [vmem:[%s0 + $0xf1] sm:$0xff]
  %v5032 = vld [vmem:[%s0 + $0xf9] sm:$0xff]
  %v5033 = vld [vmem:[%s0 + $0x101] sm:$0xff]
  %v5034 = vld [vmem:[%s0 + $0x109] sm:$0xff]
  %v5035 = vld [vmem:[%s0 + $0x111] sm:$0xff]
  %v5036 = vld [vmem:[%s0 + $0x119] sm:$0xff]
  %v5037 = vld [vmem:[%s0 + $0x121] sm:$0xff]
  %v5038 = vld [vmem:[%s0 + $0x129] sm:$0xff]
  %v5039 = vld [vmem:[%s0 + $0x131] sm:$0xff]
  %v5040 = vld [vmem:[%s0 + $0x139] sm:$0xff]
  %v5041 = vld [vmem:[%s0 + $0x141] sm:$0xff]
  %v5042 = vld [vmem:[%s0 + $0x149] sm:$0xff]
  %v5043 = vld [vmem:[%s0 + $0x151] sm:$0xff]
  %v5044 = vld [vmem:[%s0 + $0x159] sm:$0xff]
  %v5045 = vld [vmem:[%s0 + $0x161] sm:$0xff]
  %v5046 = vld [vmem:[%s0 + $0x169] sm:$0xff]
  %v5047 = vld [vmem:[%s0 + $0x171] sm:$0xff]
  %v5048 = vld [vmem:[%s0 + $0x179] sm:$0xff]
  %v5049 = vld [vmem:[%s0 + $0x181] sm:$0xff]
  %v5050 = vld [vmem:[%s0 + $0x189] sm:$0xff]
  %v5051 = vld [vmem:[%s0 + $0x191] sm:$0xff]
  %v5052 = vld [vmem:[%s0 + $0x199] sm:$0xff]
  %v5053 = vld [vmem:[%s0 + $0x1a1] sm:$0xff]
  %v5054 = vld [vmem:[%s0 + $0x1a9] sm:$0xff]
  %v5055 = vld [vmem:[%s0 + $0x1b1] sm:$0xff]
  %v5056 = vld [vmem:[%s0 + $0x1b9] sm:$0xff]
  %v5057 = vld [vmem:[%s0 + $0x1c1] sm:$0xff]
  %v5058 = vld [vmem:[%s0 + $0x1c9] sm:$0xff]
  %v5059 = vld [vmem:[%s0 + $0x1d1] sm:$0xff]
  %v5060 = vld [vmem:[%s0 + $0x1d9] sm:$0xff]
  %v5061 = vld [vmem:[%s0 + $0x1e1] sm:$0xff]
  %v5062 = vld [vmem:[%s0 + $0x1e9] sm:$0xff]
  %v5063 = vld [vmem:[%s0 + $0x1f1] sm:$0xff]
  %v5064 = vld [vmem:[%s0 + $0x1f9] sm:$0xff]
  %v5065 = vld [vmem:[%s0 + $0x201] sm:$0xff]
  %v5066 = vld [vmem:[%s0 + $0x209] sm:$0xff]
  %v5067 = vld [vmem:[%s0 + $0x211] sm:$0xff]
  %v5068 = vld [vmem:[%s0 + $0x219] sm:$0xff]
  %v5069 = vld [vmem:[%s0 + $0x221] sm:$0xff]
  %v5070 = vld [vmem:[%s0 + $0x229] sm:$0xff]
  %v5071 = vld [vmem:[%s0 + $0x231] sm:$0xff]
  %v5072 = vld [vmem:[%s0 + $0x239] sm:$0xff]
  %s5073 = scalar_lea.vmem %s1, 28
  %v5074 = vld [vmem:[%s5073] sm:$0x7]
  %v5076 = vsel %vm163, %v5007, 0
  %v5079 = vsel %vm163, %v5008, 0
  %v5082 = vsel %vm163, %v5009, 0
  %v5085 = vsel %vm163, %v5010, 0
  %v5088 = vsel %vm163, %v5011, 0
  %v5091 = vsel %vm163, %v5012, 0
  %v5094 = vsel %vm163, %v5013, 0
  %v5097 = vsel %vm163, %v5014, 0
  %v5100 = vsel %vm163, %v5015, 0
  %v5103 = vsel %vm163, %v5016, 0
  %v5106 = vsel %vm163, %v5017, 0
  %v5109 = vsel %vm163, %v5018, 0
  %v5112 = vsel %vm163, %v5019, 0
  %v5115 = vsel %vm163, %v5020, 0
  %v5118 = vsel %vm163, %v5021, 0
  %v5121 = vsel %vm163, %v5022, 0
  %v5124 = vsel %vm163, %v5023, 0
  %v5127 = vsel %vm163, %v5024, 0
  %v5130 = vsel %vm163, %v5025, 0
  %v5133 = vsel %vm163, %v5026, 0
  %v5136 = vsel %vm163, %v5027, 0
  %v5139 = vsel %vm163, %v5028, 0
  %v5142 = vsel %vm163, %v5029, 0
  %v5145 = vsel %vm163, %v5030, 0
  %v5148 = vsel %vm163, %v5031, 0
  %v5151 = vsel %vm163, %v5032, 0
  %v5154 = vsel %vm163, %v5033, 0
  %v5157 = vsel %vm163, %v5034, 0
  %v5160 = vsel %vm163, %v5035, 0
  %v5163 = vsel %vm163, %v5036, 0
  %v5166 = vsel %vm163, %v5037, 0
  %v5169 = vsel %vm163, %v5038, 0
  %v5172 = vsel %vm163, %v5039, 0
  %v5175 = vsel %vm163, %v5040, 0
  %v5178 = vsel %vm163, %v5041, 0
  %v5181 = vsel %vm163, %v5042, 0
  %v5184 = vsel %vm163, %v5043, 0
  %v5187 = vsel %vm163, %v5044, 0
  %v5190 = vsel %vm163, %v5045, 0
  %v5193 = vsel %vm163, %v5046, 0
  %v5196 = vsel %vm163, %v5047, 0
  %v5199 = vsel %vm163, %v5048, 0
  %v5202 = vsel %vm163, %v5049, 0
  %v5205 = vsel %vm163, %v5050, 0
  %v5208 = vsel %vm163, %v5051, 0
  %v5211 = vsel %vm163, %v5052, 0
  %v5214 = vsel %vm163, %v5053, 0
  %v5217 = vsel %vm163, %v5054, 0
  %v5220 = vsel %vm163, %v5055, 0
  %v5223 = vsel %vm163, %v5056, 0
  %v5226 = vsel %vm163, %v5057, 0
  %v5229 = vsel %vm163, %v5058, 0
  %v5232 = vsel %vm163, %v5059, 0
  %v5235 = vsel %vm163, %v5060, 0
  %v5238 = vsel %vm163, %v5061, 0
  %v5241 = vsel %vm163, %v5062, 0
  %v5244 = vsel %vm163, %v5063, 0
  %v5247 = vsel %vm163, %v5064, 0
  %v5250 = vsel %vm163, %v5065, 0
  %v5253 = vsel %vm163, %v5066, 0
  %v5256 = vsel %vm163, %v5067, 0
  %v5259 = vsel %vm163, %v5068, 0
  %v5262 = vsel %vm163, %v5069, 0
  %v5265 = vsel %vm163, %v5070, 0
  %v5268 = vsel %vm163, %v5071, 0
  %v5271 = vsel %vm163, %v5072, 0
  %v5274 = vsel %vm362, %v5074, 0
  %5276 = vmatprep.subr.mxu0 0.0
  %5277 = vmatpush1.msra.mxu0 %v5274
  %5278 = vmatprep.subr.mxu0 0.0
  %5279 = vmatpush1.msra.mxu0 0.0
  %5280 = vmatprep.subr.mxu0 0.0
  %5281 = vmatpush1.msra.mxu0 0.0
  %5282 = vmatprep.subr.mxu0 0.0
  %5283 = vmatpush1.msra.mxu0 0.0
  %5284 = vmatprep.subr.mxu0 0.0
  %5285 = vmatpush1.msra.mxu0 0.0
  %5286 = vmatprep.subr.mxu0 0.0
  %5287 = vmatpush1.msra.mxu0 0.0
  %5288 = vmatprep.subr.mxu0 0.0
  %5289 = vmatpush1.msra.mxu0 0.0
  %5290 = vmatprep.subr.mxu0 0.0
  %5291 = vmatpush1.msra.mxu0 0.0
  %5292 = vmatprep.subr.mxu0 0.0
  %5293 = vmatpush1.msra.mxu0 0.0
  %5294 = vmatprep.subr.mxu0 0.0
  %5295 = vmatpush1.msra.mxu0 0.0
  %5296 = vmatprep.subr.mxu0 0.0
  %5297 = vmatpush1.msra.mxu0 0.0
  %5298 = vmatprep.subr.mxu0 0.0
  %5299 = vmatpush1.msra.mxu0 0.0
  %5300 = vmatprep.subr.mxu0 0.0
  %5301 = vmatpush1.msra.mxu0 0.0
  %5302 = vmatprep.subr.mxu0 0.0
  %5303 = vmatpush1.msra.mxu0 0.0
  %5304 = vmatprep.subr.mxu0 0.0
  %5305 = vmatpush1.msra.mxu0 0.0
  %5306 = vmatprep.subr.mxu0 0.0
  %5307 = vmatpush1.msra.mxu0 0.0
  %5308 = vmatprep.subr.mxu0 0.0
  %5309 = vmatpush1.msra.mxu0 0.0
  %5310 = vmatprep.subr.mxu0 0.0
  %5311 = vmatpush1.msra.mxu0 0.0
  %5312 = vmatprep.subr.mxu0 0.0
  %5313 = vmatpush1.msra.mxu0 0.0
  %5314 = vmatprep.subr.mxu0 0.0
  %5315 = vmatpush1.msra.mxu0 0.0
  %5316 = vmatprep.subr.mxu0 0.0
  %5317 = vmatpush1.msra.mxu0 0.0
  %5318 = vmatprep.subr.mxu0 0.0
  %5319 = vmatpush1.msra.mxu0 0.0
  %5320 = vmatprep.subr.mxu0 0.0
  %5321 = vmatpush1.msra.mxu0 0.0
  %5322 = vmatprep.subr.mxu0 0.0
  %5323 = vmatpush1.msra.mxu0 0.0
  %5324 = vmatprep.subr.mxu0 0.0
  %5325 = vmatpush1.msra.mxu0 0.0
  %5326 = vmatprep.subr.mxu0 0.0
  %5327 = vmatpush1.msra.mxu0 0.0
  %5328 = vmatprep.subr.mxu0 0.0
  %5329 = vmatpush1.msra.mxu0 0.0
  %5330 = vmatprep.subr.mxu0 0.0
  %5331 = vmatpush1.msra.mxu0 0.0
  %5332 = vmatprep.subr.mxu0 0.0
  %5333 = vmatpush1.msra.mxu0 0.0
  %5334 = vmatprep.subr.mxu0 0.0
  %5335 = vmatpush1.msra.mxu0 0.0
  %5336 = vmatprep.subr.mxu0 0.0
  %5337 = vmatpush1.msra.mxu0 0.0
  %5338 = vmatprep.subr.mxu0 0.0
  %5339 = vmatpush1.msra.mxu0 0.0
  %5340 = vmatprep.mubr.f32.mxu0 0.0
  %5341 = vmatmul.mubr.f32.gmra.mrb[0].mxu0 %v5076
  %v5342 = vpop.f32.mrb[0].mxu0
  %v5343 = vadd.f32 0.0, %v5342
  %v5344 = vpop.f32.mrb[0].mxu0
  %5345 = vmatprep.mubr.f32.mxu0 0.0
  %5346 = vmatmul.mubr.f32.gmra.mrb[0].mxu0 %v5079
  %v5347 = vpop.f32.mrb[0].mxu0
  %v5348 = vadd.f32 0.0, %v5347
  %v5349 = vpop.f32.mrb[0].mxu0
  %5350 = vmatprep.mubr.f32.mxu0 0.0
  %5351 = vmatmul.mubr.f32.gmra.mrb[0].mxu0 %v5082
  %v5352 = vpop.f32.mrb[0].mxu0
  %v5353 = vadd.f32 0.0, %v5352
  %v5354 = vpop.f32.mrb[0].mxu0
  %5355 = vmatprep.mubr.f32.mxu0 0.0
  %5356 = vmatmul.mubr.f32.gmra.mrb[0].mxu0 %v5085
  %v5357 = vpop.f32.mrb[0].mxu0
  %v5358 = vadd.f32 0.0, %v5357
  %v5359 = vpop.f32.mrb[0].mxu0
  %5360 = vmatprep.mubr.f32.mxu0 0.0
  %5361 = vmatmul.mubr.f32.gmra.mrb[0].mxu0 %v5088
  %v5362 = vpop.f32.mrb[0].mxu0
  %v5363 = vadd.f32 0.0, %v5362
  %v5364 = vpop.f32.mrb[0].mxu0
  %5365 = vmatprep.mubr.f32.mxu0 0.0
  %5366 = vmatmul.mubr.f32.gmra.mrb[0].mxu0 %v5091
  %v5367 = vpop.f32.mrb[0].mxu0
  %v5368 = vadd.f32 0.0, %v5367
  %v5369 = vpop.f32.mrb[0].mxu0
  %5370 = vmatprep.mubr.f32.mxu0 0.0
  %5371 = vmatmul.mubr.f32.gmra.mrb[0].mxu0 %v5094
  %v5372 = vpop.f32.mrb[0].mxu0
  %v5373 = vadd.f32 0.0, %v5372
  %v5374 = vpop.f32.mrb[0].mxu0
  %5375 = vmatprep.mubr.f32.mxu0 0.0
  %5376 = vmatmul.mubr.f32.gmra.mrb[0].mxu0 %v5097
  %v5377 = vpop.f32.mrb[0].mxu0
  %v5378 = vadd.f32 0.0, %v5377
  %v5379 = vpop.f32.mrb[0].mxu0
  %5380 = vmatprep.mubr.f32.mxu0 0.0
  %5381 = vmatmul.mubr.f32.gmra.mrb[0].mxu0 %v5100
  %v5382 = vpop.f32.mrb[0].mxu0
  %v5383 = vadd.f32 0.0, %v5382
  %v5384 = vpop.f32.mrb[0].mxu0
  %5385 = vmatprep.mubr.f32.mxu0 0.0
  %5386 = vmatmul.mubr.f32.gmra.mrb[0].mxu0 %v5103
  %v5387 = vpop.f32.mrb[0].mxu0
  %v5388 = vadd.f32 0.0, %v5387
  %v5389 = vpop.f32.mrb[0].mxu0
  %5390 = vmatprep.mubr.f32.mxu0 0.0
  %5391 = vmatmul.mubr.f32.gmra.mrb[0].mxu0 %v5106
  %v5392 = vpop.f32.mrb[0].mxu0
  %v5393 = vadd.f32 0.0, %v5392
  %v5394 = vpop.f32.mrb[0].mxu0
  %5395 = vmatprep.mubr.f32.mxu0 0.0
  %5396 = vmatmul.mubr.f32.gmra.mrb[0].mxu0 %v5109
  %v5397 = vpop.f32.mrb[0].mxu0
  %v5398 = vadd.f32 0.0, %v5397
  %v5399 = vpop.f32.mrb[0].mxu0
  %5400 = vmatprep.mubr.f32.mxu0 0.0
  %5401 = vmatmul.mubr.f32.gmra.mrb[0].mxu0 %v5112
  %v5402 = vpop.f32.mrb[0].mxu0
  %v5403 = vadd.f32 0.0, %v5402
  %v5404 = vpop.f32.mrb[0].mxu0
  %5405 = vmatprep.mubr.f32.mxu0 0.0
  %5406 = vmatmul.mubr.f32.gmra.mrb[0].mxu0 %v5115
  %v5407 = vpop.f32.mrb[0].mxu0
  %v5408 = vadd.f32 0.0, %v5407
  %v5409 = vpop.f32.mrb[0].mxu0
  %5410 = vmatprep.mubr.f32.mxu0 0.0
  %5411 = vmatmul.mubr.f32.gmra.mrb[0].mxu0 %v5118
  %v5412 = vpop.f32.mrb[0].mxu0
  %v5413 = vadd.f32 0.0, %v5412
  %v5414 = vpop.f32.mrb[0].mxu0
  %5415 = vmatprep.mubr.f32.mxu0 0.0
  %5416 = vmatmul.mubr.f32.gmra.mrb[0].mxu0 %v5121
  %v5417 = vpop.f32.mrb[0].mxu0
  %v5418 = vadd.f32 0.0, %v5417
  %v5419 = vpop.f32.mrb[0].mxu0
  %5420 = vmatprep.mubr.f32.mxu0 0.0
  %5421 = vmatmul.mubr.f32.gmra.mrb[0].mxu0 %v5124
  %v5422 = vpop.f32.mrb[0].mxu0
  %v5423 = vadd.f32 0.0, %v5422
  %v5424 = vpop.f32.mrb[0].mxu0
  %5425 = vmatprep.mubr.f32.mxu0 0.0
  %5426 = vmatmul.mubr.f32.gmra.mrb[0].mxu0 %v5127
  %v5427 = vpop.f32.mrb[0].mxu0
  %v5428 = vadd.f32 0.0, %v5427
  %v5429 = vpop.f32.mrb[0].mxu0
  %5430 = vmatprep.mubr.f32.mxu0 0.0
  %5431 = vmatmul.mubr.f32.gmra.mrb[0].mxu0 %v5130
  %v5432 = vpop.f32.mrb[0].mxu0
  %v5433 = vadd.f32 0.0, %v5432
  %v5434 = vpop.f32.mrb[0].mxu0
  %5435 = vmatprep.mubr.f32.mxu0 0.0
  %5436 = vmatmul.mubr.f32.gmra.mrb[0].mxu0 %v5133
  %v5437 = vpop.f32.mrb[0].mxu0
  %v5438 = vadd.f32 0.0, %v5437
  %v5439 = vpop.f32.mrb[0].mxu0
  %5440 = vmatprep.mubr.f32.mxu0 0.0
  %5441 = vmatmul.mubr.f32.gmra.mrb[0].mxu0 %v5136
  %v5442 = vpop.f32.mrb[0].mxu0
  %v5443 = vadd.f32 0.0, %v5442
  %v5444 = vpop.f32.mrb[0].mxu0
  %5445 = vmatprep.mubr.f32.mxu0 0.0
  %5446 = vmatmul.mubr.f32.gmra.mrb[0].mxu0 %v5139
  %v5447 = vpop.f32.mrb[0].mxu0
  %v5448 = vadd.f32 0.0, %v5447
  %v5449 = vpop.f32.mrb[0].mxu0
  %5450 = vmatprep.mubr.f32.mxu0 0.0
  %5451 = vmatmul.mubr.f32.gmra.mrb[0].mxu0 %v5142
  %v5452 = vpop.f32.mrb[0].mxu0
  %v5453 = vadd.f32 0.0, %v5452
  %v5454 = vpop.f32.mrb[0].mxu0
  %5455 = vmatprep.mubr.f32.mxu0 0.0
  %5456 = vmatmul.mubr.f32.gmra.mrb[0].mxu0 %v5145
  %v5457 = vpop.f32.mrb[0].mxu0
  %v5458 = vadd.f32 0.0, %v5457
  %v5459 = vpop.f32.mrb[0].mxu0
  %5460 = vmatprep.mubr.f32.mxu0 0.0
  %5461 = vmatmul.mubr.f32.gmra.mrb[0].mxu0 %v5148
  %v5462 = vpop.f32.mrb[0].mxu0
  %v5463 = vadd.f32 0.0, %v5462
  %v5464 = vpop.f32.mrb[0].mxu0
  %5465 = vmatprep.mubr.f32.mxu0 0.0
  %5466 = vmatmul.mubr.f32.gmra.mrb[0].mxu0 %v5151
  %v5467 = vpop.f32.mrb[0].mxu0
  %v5468 = vadd.f32 0.0, %v5467
  %v5469 = vpop.f32.mrb[0].mxu0
  %5470 = vmatprep.mubr.f32.mxu0 0.0
  %5471 = vmatmul.mubr.f32.gmra.mrb[0].mxu0 %v5154
  %v5472 = vpop.f32.mrb[0].mxu0
  %v5473 = vadd.f32 0.0, %v5472
  %v5474 = vpop.f32.mrb[0].mxu0
  %5475 = vmatprep.mubr.f32.mxu0 0.0
  %5476 = vmatmul.mubr.f32.gmra.mrb[0].mxu0 %v5157
  %v5477 = vpop.f32.mrb[0].mxu0
  %v5478 = vadd.f32 0.0, %v5477
  %v5479 = vpop.f32.mrb[0].mxu0
  %5480 = vmatprep.mubr.f32.mxu0 0.0
  %5481 = vmatmul.mubr.f32.gmra.mrb[0].mxu0 %v5160
  %v5482 = vpop.f32.mrb[0].mxu0
  %v5483 = vadd.f32 0.0, %v5482
  %v5484 = vpop.f32.mrb[0].mxu0
  %5485 = vmatprep.mubr.f32.mxu0 0.0
  %5486 = vmatmul.mubr.f32.gmra.mrb[0].mxu0 %v5163
  %v5487 = vpop.f32.mrb[0].mxu0
  %v5488 = vadd.f32 0.0, %v5487
  %v5489 = vpop.f32.mrb[0].mxu0
  %5490 = vmatprep.mubr.f32.mxu0 0.0
  %5491 = vmatmul.mubr.f32.gmra.mrb[0].mxu0 %v5166
  %v5492 = vpop.f32.mrb[0].mxu0
  %v5493 = vadd.f32 0.0, %v5492
  %v5494 = vpop.f32.mrb[0].mxu0
  %5495 = vmatprep.mubr.f32.mxu0 0.0
  %5496 = vmatmul.mubr.f32.gmra.mrb[0].mxu0 %v5169
  %v5497 = vpop.f32.mrb[0].mxu0
  %v5498 = vadd.f32 0.0, %v5497
  %v5499 = vpop.f32.mrb[0].mxu0
  %5500 = vmatprep.mubr.f32.mxu0 0.0
  %5501 = vmatmul.mubr.f32.gmra.mrb[0].mxu0 %v5172
  %v5502 = vpop.f32.mrb[0].mxu0
  %v5503 = vadd.f32 0.0, %v5502
  %v5504 = vpop.f32.mrb[0].mxu0
  %5505 = vmatprep.mubr.f32.mxu0 0.0
  %5506 = vmatmul.mubr.f32.gmra.mrb[0].mxu0 %v5175
  %v5507 = vpop.f32.mrb[0].mxu0
  %v5508 = vadd.f32 0.0, %v5507
  %v5509 = vpop.f32.mrb[0].mxu0
  %5510 = vmatprep.mubr.f32.mxu0 0.0
  %5511 = vmatmul.mubr.f32.gmra.mrb[0].mxu0 %v5178
  %v5512 = vpop.f32.mrb[0].mxu0
  %v5513 = vadd.f32 0.0, %v5512
  %v5514 = vpop.f32.mrb[0].mxu0
  %5515 = vmatprep.mubr.f32.mxu0 0.0
  %5516 = vmatmul.mubr.f32.gmra.mrb[0].mxu0 %v5181
  %v5517 = vpop.f32.mrb[0].mxu0
  %v5518 = vadd.f32 0.0, %v5517
  %v5519 = vpop.f32.mrb[0].mxu0
  %5520 = vmatprep.mubr.f32.mxu0 0.0
  %5521 = vmatmul.mubr.f32.gmra.mrb[0].mxu0 %v5184
  %v5522 = vpop.f32.mrb[0].mxu0
  %v5523 = vadd.f32 0.0, %v5522
  %v5524 = vpop.f32.mrb[0].mxu0
  %5525 = vmatprep.mubr.f32.mxu0 0.0
  %5526 = vmatmul.mubr.f32.gmra.mrb[0].mxu0 %v5187
  %v5527 = vpop.f32.mrb[0].mxu0
  %v5528 = vadd.f32 0.0, %v5527
  %v5529 = vpop.f32.mrb[0].mxu0
  %5530 = vmatprep.mubr.f32.mxu0 0.0
  %5531 = vmatmul.mubr.f32.gmra.mrb[0].mxu0 %v5190
  %v5532 = vpop.f32.mrb[0].mxu0
  %v5533 = vadd.f32 0.0, %v5532
  %v5534 = vpop.f32.mrb[0].mxu0
  %5535 = vmatprep.mubr.f32.mxu0 0.0
  %5536 = vmatmul.mubr.f32.gmra.mrb[0].mxu0 %v5193
  %v5537 = vpop.f32.mrb[0].mxu0
  %v5538 = vadd.f32 0.0, %v5537
  %v5539 = vpop.f32.mrb[0].mxu0
  %5540 = vmatprep.mubr.f32.mxu0 0.0
  %5541 = vmatmul.mubr.f32.gmra.mrb[0].mxu0 %v5196
  %v5542 = vpop.f32.mrb[0].mxu0
  %v5543 = vadd.f32 0.0, %v5542
  %v5544 = vpop.f32.mrb[0].mxu0
  %5545 = vmatprep.mubr.f32.mxu0 0.0
  %5546 = vmatmul.mubr.f32.gmra.mrb[0].mxu0 %v5199
  %v5547 = vpop.f32.mrb[0].mxu0
  %v5548 = vadd.f32 0.0, %v5547
  %v5549 = vpop.f32.mrb[0].mxu0
  %5550 = vmatprep.mubr.f32.mxu0 0.0
  %5551 = vmatmul.mubr.f32.gmra.mrb[0].mxu0 %v5202
  %v5552 = vpop.f32.mrb[0].mxu0
  %v5553 = vadd.f32 0.0, %v5552
  %v5554 = vpop.f32.mrb[0].mxu0
  %5555 = vmatprep.mubr.f32.mxu0 0.0
  %5556 = vmatmul.mubr.f32.gmra.mrb[0].mxu0 %v5205
  %v5557 = vpop.f32.mrb[0].mxu0
  %v5558 = vadd.f32 0.0, %v5557
  %v5559 = vpop.f32.mrb[0].mxu0
  %5560 = vmatprep.mubr.f32.mxu0 0.0
  %5561 = vmatmul.mubr.f32.gmra.mrb[0].mxu0 %v5208
  %v5562 = vpop.f32.mrb[0].mxu0
  %v5563 = vadd.f32 0.0, %v5562
  %v5564 = vpop.f32.mrb[0].mxu0
  %5565 = vmatprep.mubr.f32.mxu0 0.0
  %5566 = vmatmul.mubr.f32.gmra.mrb[0].mxu0 %v5211
  %v5567 = vpop.f32.mrb[0].mxu0
  %v5568 = vadd.f32 0.0, %v5567
  %v5569 = vpop.f32.mrb[0].mxu0
  %5570 = vmatprep.mubr.f32.mxu0 0.0
  %5571 = vmatmul.mubr.f32.gmra.mrb[0].mxu0 %v5214
  %v5572 = vpop.f32.mrb[0].mxu0
  %v5573 = vadd.f32 0.0, %v5572
  %v5574 = vpop.f32.mrb[0].mxu0
  %5575 = vmatprep.mubr.f32.mxu0 0.0
  %5576 = vmatmul.mubr.f32.gmra.mrb[0].mxu0 %v5217
  %v5577 = vpop.f32.mrb[0].mxu0
  %v5578 = vadd.f32 0.0, %v5577
  %v5579 = vpop.f32.mrb[0].mxu0
  %5580 = vmatprep.mubr.f32.mxu0 0.0
  %5581 = vmatmul.mubr.f32.gmra.mrb[0].mxu0 %v5220
  %v5582 = vpop.f32.mrb[0].mxu0
  %v5583 = vadd.f32 0.0, %v5582
  %v5584 = vpop.f32.mrb[0].mxu0
  %5585 = vmatprep.mubr.f32.mxu0 0.0
  %5586 = vmatmul.mubr.f32.gmra.mrb[0].mxu0 %v5223
  %v5587 = vpop.f32.mrb[0].mxu0
  %v5588 = vadd.f32 0.0, %v5587
  %v5589 = vpop.f32.mrb[0].mxu0
  %5590 = vmatprep.mubr.f32.mxu0 0.0
  %5591 = vmatmul.mubr.f32.gmra.mrb[0].mxu0 %v5226
  %v5592 = vpop.f32.mrb[0].mxu0
  %v5593 = vadd.f32 0.0, %v5592
  %v5594 = vpop.f32.mrb[0].mxu0
  %5595 = vmatprep.mubr.f32.mxu0 0.0
  %5596 = vmatmul.mubr.f32.gmra.mrb[0].mxu0 %v5229
  %v5597 = vpop.f32.mrb[0].mxu0
  %v5598 = vadd.f32 0.0, %v5597
  %v5599 = vpop.f32.mrb[0].mxu0
  %5600 = vmatprep.mubr.f32.mxu0 0.0
  %5601 = vmatmul.mubr.f32.gmra.mrb[0].mxu0 %v5232
  %v5602 = vpop.f32.mrb[0].mxu0
  %v5603 = vadd.f32 0.0, %v5602
  %v5604 = vpop.f32.mrb[0].mxu0
  %5605 = vmatprep.mubr.f32.mxu0 0.0
  %5606 = vmatmul.mubr.f32.gmra.mrb[0].mxu0 %v5235
  %v5607 = vpop.f32.mrb[0].mxu0
  %v5608 = vadd.f32 0.0, %v5607
  %v5609 = vpop.f32.mrb[0].mxu0
  %5610 = vmatprep.mubr.f32.mxu0 0.0
  %5611 = vmatmul.mubr.f32.gmra.mrb[0].mxu0 %v5238
  %v5612 = vpop.f32.mrb[0].mxu0
  %v5613 = vadd.f32 0.0, %v5612
  %v5614 = vpop.f32.mrb[0].mxu0
  %5615 = vmatprep.mubr.f32.mxu0 0.0
  %5616 = vmatmul.mubr.f32.gmra.mrb[0].mxu0 %v5241
  %v5617 = vpop.f32.mrb[0].mxu0
  %v5618 = vadd.f32 0.0, %v5617
  %v5619 = vpop.f32.mrb[0].mxu0
  %5620 = vmatprep.mubr.f32.mxu0 0.0
  %5621 = vmatmul.mubr.f32.gmra.mrb[0].mxu0 %v5244
  %v5622 = vpop.f32.mrb[0].mxu0
  %v5623 = vadd.f32 0.0, %v5622
  %v5624 = vpop.f32.mrb[0].mxu0
  %5625 = vmatprep.mubr.f32.mxu0 0.0
  %5626 = vmatmul.mubr.f32.gmra.mrb[0].mxu0 %v5247
  %v5627 = vpop.f32.mrb[0].mxu0
  %v5628 = vadd.f32 0.0, %v5627
  %v5629 = vpop.f32.mrb[0].mxu0
  %5630 = vmatprep.mubr.f32.mxu0 0.0
  %5631 = vmatmul.mubr.f32.gmra.mrb[0].mxu0 %v5250
  %v5632 = vpop.f32.mrb[0].mxu0
  %v5633 = vadd.f32 0.0, %v5632
  %v5634 = vpop.f32.mrb[0].mxu0
  %5635 = vmatprep.mubr.f32.mxu0 0.0
  %5636 = vmatmul.mubr.f32.gmra.mrb[0].mxu0 %v5253
  %v5637 = vpop.f32.mrb[0].mxu0
  %v5638 = vadd.f32 0.0, %v5637
  %v5639 = vpop.f32.mrb[0].mxu0
  %5640 = vmatprep.mubr.f32.mxu0 0.0
  %5641 = vmatmul.mubr.f32.gmra.mrb[0].mxu0 %v5256
  %v5642 = vpop.f32.mrb[0].mxu0
  %v5643 = vadd.f32 0.0, %v5642
  %v5644 = vpop.f32.mrb[0].mxu0
  %5645 = vmatprep.mubr.f32.mxu0 0.0
  %5646 = vmatmul.mubr.f32.gmra.mrb[0].mxu0 %v5259
  %v5647 = vpop.f32.mrb[0].mxu0
  %v5648 = vadd.f32 0.0, %v5647
  %v5649 = vpop.f32.mrb[0].mxu0
  %5650 = vmatprep.mubr.f32.mxu0 0.0
  %5651 = vmatmul.mubr.f32.gmra.mrb[0].mxu0 %v5262
  %v5652 = vpop.f32.mrb[0].mxu0
  %v5653 = vadd.f32 0.0, %v5652
  %v5654 = vpop.f32.mrb[0].mxu0
  %5655 = vmatprep.mubr.f32.mxu0 0.0
  %5656 = vmatmul.mubr.f32.gmra.mrb[0].mxu0 %v5265
  %v5657 = vpop.f32.mrb[0].mxu0
  %v5658 = vadd.f32 0.0, %v5657
  %v5659 = vpop.f32.mrb[0].mxu0
  %5660 = vmatprep.mubr.f32.mxu0 0.0
  %5661 = vmatmul.mubr.f32.gmra.mrb[0].mxu0 %v5268
  %v5662 = vpop.f32.mrb[0].mxu0
  %v5663 = vadd.f32 0.0, %v5662
  %v5664 = vpop.f32.mrb[0].mxu0
  %5665 = vmatprep.mubr.f32.mxu0 0.0
  %5666 = vmatmul.mubr.f32.gmra.mrb[0].mxu0 %v5271
  %v5667 = vpop.f32.mrb[0].mxu0
  %v5668 = vadd.f32 0.0, %v5667
  %v5669 = vpop.f32.mrb[0].mxu0
  %5670 = vdwg.mxu0
  %v5671 = vadd.f32 %v4941, %v5343
  %v5672 = vadd.f32 %v4942, %v5348
  %v5673 = vadd.f32 %v4943, %v5353
  %v5674 = vadd.f32 %v4944, %v5358
  %v5675 = vadd.f32 %v4945, %v5363
  %v5676 = vadd.f32 %v4946, %v5368
  %v5677 = vadd.f32 %v4947, %v5373
  %v5678 = vadd.f32 %v4948, %v5378
  %v5679 = vadd.f32 %v4949, %v5383
  %v5680 = vadd.f32 %v4950, %v5388
  %v5681 = vadd.f32 %v4951, %v5393
  %v5682 = vadd.f32 %v4952, %v5398
  %v5683 = vadd.f32 %v4953, %v5403
  %v5684 = vadd.f32 %v4954, %v5408
  %v5685 = vadd.f32 %v4955, %v5413
  %v5686 = vadd.f32 %v4956, %v5418
  %v5687 = vadd.f32 %v4957, %v5423
  %v5688 = vadd.f32 %v4958, %v5428
  %v5689 = vadd.f32 %v4959, %v5433
  %v5690 = vadd.f32 %v4960, %v5438
  %v5691 = vadd.f32 %v4961, %v5443
  %v5692 = vadd.f32 %v4962, %v5448
  %v5693 = vadd.f32 %v4963, %v5453
  %v5694 = vadd.f32 %v4964, %v5458
  %v5695 = vadd.f32 %v4965, %v5463
  %v5696 = vadd.f32 %v4966, %v5468
  %v5697 = vadd.f32 %v4967, %v5473
  %v5698 = vadd.f32 %v4968, %v5478
  %v5699 = vadd.f32 %v4969, %v5483
  %v5700 = vadd.f32 %v4970, %v5488
  %v5701 = vadd.f32 %v4971, %v5493
  %v5702 = vadd.f32 %v4972, %v5498
  %v5703 = vadd.f32 %v4973, %v5503
  %v5704 = vadd.f32 %v4974, %v5508
  %v5705 = vadd.f32 %v4975, %v5513
  %v5706 = vadd.f32 %v4976, %v5518
  %v5707 = vadd.f32 %v4977, %v5523
  %v5708 = vadd.f32 %v4978, %v5528
  %v5709 = vadd.f32 %v4979, %v5533
  %v5710 = vadd.f32 %v4980, %v5538
  %v5711 = vadd.f32 %v4981, %v5543
  %v5712 = vadd.f32 %v4982, %v5548
  %v5713 = vadd.f32 %v4983, %v5553
  %v5714 = vadd.f32 %v4984, %v5558
  %v5715 = vadd.f32 %v4985, %v5563
  %v5716 = vadd.f32 %v4986, %v5568
  %v5717 = vadd.f32 %v4987, %v5573
  %v5718 = vadd.f32 %v4988, %v5578
  %v5719 = vadd.f32 %v4989, %v5583
  %v5720 = vadd.f32 %v4990, %v5588
  %v5721 = vadd.f32 %v4991, %v5593
  %v5722 = vadd.f32 %v4992, %v5598
  %v5723 = vadd.f32 %v4993, %v5603
  %v5724 = vadd.f32 %v4994, %v5608
  %v5725 = vadd.f32 %v4995, %v5613
  %v5726 = vadd.f32 %v4996, %v5618
  %v5727 = vadd.f32 %v4997, %v5623
  %v5728 = vadd.f32 %v4998, %v5628
  %v5729 = vadd.f32 %v4999, %v5633
  %v5730 = vadd.f32 %v5000, %v5638
  %v5731 = vadd.f32 %v5001, %v5643
  %v5732 = vadd.f32 %v5002, %v5648
  %v5733 = vadd.f32 %v5003, %v5653
  %v5734 = vadd.f32 %v5004, %v5658
  %v5735 = vadd.f32 %v5005, %v5663
  %v5736 = vadd.f32 %v5006, %v5668
  %v5737 = vld [vmem:[%s0 + $0x32] sm:$0xff]
  %v5738 = vld [vmem:[%s0 + $0x3a] sm:$0xff]
  %v5739 = vld [vmem:[%s0 + $0x42] sm:$0xff]
  %v5740 = vld [vmem:[%s0 + $0x4a] sm:$0xff]
  %v5741 = vld [vmem:[%s0 + $0x52] sm:$0xff]
  %v5742 = vld [vmem:[%s0 + $0x5a] sm:$0xff]
  %v5743 = vld [vmem:[%s0 + $0x62] sm:$0xff]
  %v5744 = vld [vmem:[%s0 + $0x6a] sm:$0xff]
  %v5745 = vld [vmem:[%s0 + $0x72] sm:$0xff]
  %v5746 = vld [vmem:[%s0 + $0x7a] sm:$0xff]
  %v5747 = vld [vmem:[%s0 + $0x82] sm:$0xff]
  %v5748 = vld [vmem:[%s0 + $0x8a] sm:$0xff]
  %v5749 = vld [vmem:[%s0 + $0x92] sm:$0xff]
  %v5750 = vld [vmem:[%s0 + $0x9a] sm:$0xff]
  %v5751 = vld [vmem:[%s0 + $0xa2] sm:$0xff]
  %v5752 = vld [vmem:[%s0 + $0xaa] sm:$0xff]
  %v5753 = vld [vmem:[%s0 + $0xb2] sm:$0xff]
  %v5754 = vld [vmem:[%s0 + $0xba] sm:$0xff]
  %v5755 = vld [vmem:[%s0 + $0xc2] sm:$0xff]
  %v5756 = vld [vmem:[%s0 + $0xca] sm:$0xff]
  %v5757 = vld [vmem:[%s0 + $0xd2] sm:$0xff]
  %v5758 = vld [vmem:[%s0 + $0xda] sm:$0xff]
  %v5759 = vld [vmem:[%s0 + $0xe2] sm:$0xff]
  %v5760 = vld [vmem:[%s0 + $0xea] sm:$0xff]
  %v5761 = vld [vmem:[%s0 + $0xf2] sm:$0xff]
  %v5762 = vld [vmem:[%s0 + $0xfa] sm:$0xff]
  %v5763 = vld [vmem:[%s0 + $0x102] sm:$0xff]
  %v5764 = vld [vmem:[%s0 + $0x10a] sm:$0xff]
  %v5765 = vld [vmem:[%s0 + $0x112] sm:$0xff]
  %v5766 = vld [vmem:[%s0 + $0x11a] sm:$0xff]
  %v5767 = vld [vmem:[%s0 + $0x122] sm:$0xff]
  %v5768 = vld [vmem:[%s0 + $0x12a] sm:$0xff]
  %v5769 = vld [vmem:[%s0 + $0x132] sm:$0xff]
  %v5770 = vld [vmem:[%s0 + $0x13a] sm:$0xff]
  %v5771 = vld [vmem:[%s0 + $0x142] sm:$0xff]
  %v5772 = vld [vmem:[%s0 + $0x14a] sm:$0xff]
  %v5773 = vld [vmem:[%s0 + $0x152] sm:$0xff]
  %v5774 = vld [vmem:[%s0 + $0x15a] sm:$0xff]
  %v5775 = vld [vmem:[%s0 + $0x162] sm:$0xff]
  %v5776 = vld [vmem:[%s0 + $0x16a] sm:$0xff]
  %v5777 = vld [vmem:[%s0 + $0x172] sm:$0xff]
  %v5778 = vld [vmem:[%s0 + $0x17a] sm:$0xff]
  %v5779 = vld [vmem:[%s0 + $0x182] sm:$0xff]
  %v5780 = vld [vmem:[%s0 + $0x18a] sm:$0xff]
  %v5781 = vld [vmem:[%s0 + $0x192] sm:$0xff]
  %v5782 = vld [vmem:[%s0 + $0x19a] sm:$0xff]
  %v5783 = vld [vmem:[%s0 + $0x1a2] sm:$0xff]
  %v5784 = vld [vmem:[%s0 + $0x1aa] sm:$0xff]
  %v5785 = vld [vmem:[%s0 + $0x1b2] sm:$0xff]
  %v5786 = vld [vmem:[%s0 + $0x1ba] sm:$0xff]
  %v5787 = vld [vmem:[%s0 + $0x1c2] sm:$0xff]
  %v5788 = vld [vmem:[%s0 + $0x1ca] sm:$0xff]
  %v5789 = vld [vmem:[%s0 + $0x1d2] sm:$0xff]
  %v5790 = vld [vmem:[%s0 + $0x1da] sm:$0xff]
  %v5791 = vld [vmem:[%s0 + $0x1e2] sm:$0xff]
  %v5792 = vld [vmem:[%s0 + $0x1ea] sm:$0xff]
  %v5793 = vld [vmem:[%s0 + $0x1f2] sm:$0xff]
  %v5794 = vld [vmem:[%s0 + $0x1fa] sm:$0xff]
  %v5795 = vld [vmem:[%s0 + $0x202] sm:$0xff]
  %v5796 = vld [vmem:[%s0 + $0x20a] sm:$0xff]
  %v5797 = vld [vmem:[%s0 + $0x212] sm:$0xff]
  %v5798 = vld [vmem:[%s0 + $0x21a] sm:$0xff]
  %v5799 = vld [vmem:[%s0 + $0x222] sm:$0xff]
  %v5800 = vld [vmem:[%s0 + $0x22a] sm:$0xff]
  %v5801 = vld [vmem:[%s0 + $0x232] sm:$0xff]
  %v5802 = vld [vmem:[%s0 + $0x23a] sm:$0xff]
  %s5803 = scalar_lea.vmem %s1, 32
  %v5804 = vld [vmem:[%s5803] sm:$0x7]
  %v5806 = vsel %vm163, %v5737, 0
  %v5809 = vsel %vm163, %v5738, 0
  %v5812 = vsel %vm163, %v5739, 0
  %v5815 = vsel %vm163, %v5740, 0
  %v5818 = vsel %vm163, %v5741, 0
  %v5821 = vsel %vm163, %v5742, 0
  %v5824 = vsel %vm163, %v5743, 0
  %v5827 = vsel %vm163, %v5744, 0
  %v5830 = vsel %vm163, %v5745, 0
  %v5833 = vsel %vm163, %v5746, 0
  %v5836 = vsel %vm163, %v5747, 0
  %v5839 = vsel %vm163, %v5748, 0
  %v5842 = vsel %vm163, %v5749, 0
  %v5845 = vsel %vm163, %v5750, 0
  %v5848 = vsel %vm163, %v5751, 0
  %v5851 = vsel %vm163, %v5752, 0
  %v5854 = vsel %vm163, %v5753, 0
  %v5857 = vsel %vm163, %v5754, 0
  %v5860 = vsel %vm163, %v5755, 0
  %v5863 = vsel %vm163, %v5756, 0
  %v5866 = vsel %vm163, %v5757, 0
  %v5869 = vsel %vm163, %v5758, 0
  %v5872 = vsel %vm163, %v5759, 0
  %v5875 = vsel %vm163, %v5760, 0
  %v5878 = vsel %vm163, %v5761, 0
  %v5881 = vsel %vm163, %v5762, 0
  %v5884 = vsel %vm163, %v5763, 0
  %v5887 = vsel %vm163, %v5764, 0
  %v5890 = vsel %vm163, %v5765, 0
  %v5893 = vsel %vm163, %v5766, 0
  %v5896 = vsel %vm163, %v5767, 0
  %v5899 = vsel %vm163, %v5768, 0
  %v5902 = vsel %vm163, %v5769, 0
  %v5905 = vsel %vm163, %v5770, 0
  %v5908 = vsel %vm163, %v5771, 0
  %v5911 = vsel %vm163, %v5772, 0
  %v5914 = vsel %vm163, %v5773, 0
  %v5917 = vsel %vm163, %v5774, 0
  %v5920 = vsel %vm163, %v5775, 0
  %v5923 = vsel %vm163, %v5776, 0
  %v5926 = vsel %vm163, %v5777, 0
  %v5929 = vsel %vm163, %v5778, 0
  %v5932 = vsel %vm163, %v5779, 0
  %v5935 = vsel %vm163, %v5780, 0
  %v5938 = vsel %vm163, %v5781, 0
  %v5941 = vsel %vm163, %v5782, 0
  %v5944 = vsel %vm163, %v5783, 0
  %v5947 = vsel %vm163, %v5784, 0
  %v5950 = vsel %vm163, %v5785, 0
  %v5953 = vsel %vm163, %v5786, 0
  %v5956 = vsel %vm163, %v5787, 0
  %v5959 = vsel %vm163, %v5788, 0
  %v5962 = vsel %vm163, %v5789, 0
  %v5965 = vsel %vm163, %v5790, 0
  %v5968 = vsel %vm163, %v5791, 0
  %v5971 = vsel %vm163, %v5792, 0
  %v5974 = vsel %vm163, %v5793, 0
  %v5977 = vsel %vm163, %v5794, 0
  %v5980 = vsel %vm163, %v5795, 0
  %v5983 = vsel %vm163, %v5796, 0
  %v5986 = vsel %vm163, %v5797, 0
  %v5989 = vsel %vm163, %v5798, 0
  %v5992 = vsel %vm163, %v5799, 0
  %v5995 = vsel %vm163, %v5800, 0
  %v5998 = vsel %vm163, %v5801, 0
  %v6001 = vsel %vm163, %v5802, 0
  %v6004 = vsel %vm362, %v5804, 0
  %6006 = vmatprep.subr.mxu0 0.0
  %6007 = vmatpush1.msra.mxu0 %v6004
  %6008 = vmatprep.subr.mxu0 0.0
  %6009 = vmatpush1.msra.mxu0 0.0
  %6010 = vmatprep.subr.mxu0 0.0
  %6011 = vmatpush1.msra.mxu0 0.0
  %6012 = vmatprep.subr.mxu0 0.0
  %6013 = vmatpush1.msra.mxu0 0.0
  %6014 = vmatprep.subr.mxu0 0.0
  %6015 = vmatpush1.msra.mxu0 0.0
  %6016 = vmatprep.subr.mxu0 0.0
  %6017 = vmatpush1.msra.mxu0 0.0
  %6018 = vmatprep.subr.mxu0 0.0
  %6019 = vmatpush1.msra.mxu0 0.0
  %6020 = vmatprep.subr.mxu0 0.0
  %6021 = vmatpush1.msra.mxu0 0.0
  %6022 = vmatprep.subr.mxu0 0.0
  %6023 = vmatpush1.msra.mxu0 0.0
  %6024 = vmatprep.subr.mxu0 0.0
  %6025 = vmatpush1.msra.mxu0 0.0
  %6026 = vmatprep.subr.mxu0 0.0
  %6027 = vmatpush1.msra.mxu0 0.0
  %6028 = vmatprep.subr.mxu0 0.0
  %6029 = vmatpush1.msra.mxu0 0.0
  %6030 = vmatprep.subr.mxu0 0.0
  %6031 = vmatpush1.msra.mxu0 0.0
  %6032 = vmatprep.subr.mxu0 0.0
  %6033 = vmatpush1.msra.mxu0 0.0
  %6034 = vmatprep.subr.mxu0 0.0
  %6035 = vmatpush1.msra.mxu0 0.0
  %6036 = vmatprep.subr.mxu0 0.0
  %6037 = vmatpush1.msra.mxu0 0.0
  %6038 = vmatprep.subr.mxu0 0.0
  %6039 = vmatpush1.msra.mxu0 0.0
  %6040 = vmatprep.subr.mxu0 0.0
  %6041 = vmatpush1.msra.mxu0 0.0
  %6042 = vmatprep.subr.mxu0 0.0
  %6043 = vmatpush1.msra.mxu0 0.0
  %6044 = vmatprep.subr.mxu0 0.0
  %6045 = vmatpush1.msra.mxu0 0.0
  %6046 = vmatprep.subr.mxu0 0.0
  %6047 = vmatpush1.msra.mxu0 0.0
  %6048 = vmatprep.subr.mxu0 0.0
  %6049 = vmatpush1.msra.mxu0 0.0
  %6050 = vmatprep.subr.mxu0 0.0
  %6051 = vmatpush1.msra.mxu0 0.0
  %6052 = vmatprep.subr.mxu0 0.0
  %6053 = vmatpush1.msra.mxu0 0.0
  %6054 = vmatprep.subr.mxu0 0.0
  %6055 = vmatpush1.msra.mxu0 0.0
  %6056 = vmatprep.subr.mxu0 0.0
  %6057 = vmatpush1.msra.mxu0 0.0
  %6058 = vmatprep.subr.mxu0 0.0
  %6059 = vmatpush1.msra.mxu0 0.0
  %6060 = vmatprep.subr.mxu0 0.0
  %6061 = vmatpush1.msra.mxu0 0.0
  %6062 = vmatprep.subr.mxu0 0.0
  %6063 = vmatpush1.msra.mxu0 0.0
  %6064 = vmatprep.subr.mxu0 0.0
  %6065 = vmatpush1.msra.mxu0 0.0
  %6066 = vmatprep.subr.mxu0 0.0
  %6067 = vmatpush1.msra.mxu0 0.0
  %6068 = vmatprep.subr.mxu0 0.0
  %6069 = vmatpush1.msra.mxu0 0.0
  %6070 = vmatprep.mubr.f32.mxu0 0.0
  %6071 = vmatmul.mubr.f32.gmra.mrb[0].mxu0 %v5806
  %v6072 = vpop.f32.mrb[0].mxu0
  %v6073 = vadd.f32 0.0, %v6072
  %v6074 = vpop.f32.mrb[0].mxu0
  %6075 = vmatprep.mubr.f32.mxu0 0.0
  %6076 = vmatmul.mubr.f32.gmra.mrb[0].mxu0 %v5809
  %v6077 = vpop.f32.mrb[0].mxu0
  %v6078 = vadd.f32 0.0, %v6077
  %v6079 = vpop.f32.mrb[0].mxu0
  %6080 = vmatprep.mubr.f32.mxu0 0.0
  %6081 = vmatmul.mubr.f32.gmra.mrb[0].mxu0 %v5812
  %v6082 = vpop.f32.mrb[0].mxu0
  %v6083 = vadd.f32 0.0, %v6082
  %v6084 = vpop.f32.mrb[0].mxu0
  %6085 = vmatprep.mubr.f32.mxu0 0.0
  %6086 = vmatmul.mubr.f32.gmra.mrb[0].mxu0 %v5815
  %v6087 = vpop.f32.mrb[0].mxu0
  %v6088 = vadd.f32 0.0, %v6087
  %v6089 = vpop.f32.mrb[0].mxu0
  %6090 = vmatprep.mubr.f32.mxu0 0.0
  %6091 = vmatmul.mubr.f32.gmra.mrb[0].mxu0 %v5818
  %v6092 = vpop.f32.mrb[0].mxu0
  %v6093 = vadd.f32 0.0, %v6092
  %v6094 = vpop.f32.mrb[0].mxu0
  %6095 = vmatprep.mubr.f32.mxu0 0.0
  %6096 = vmatmul.mubr.f32.gmra.mrb[0].mxu0 %v5821
  %v6097 = vpop.f32.mrb[0].mxu0
  %v6098 = vadd.f32 0.0, %v6097
  %v6099 = vpop.f32.mrb[0].mxu0
  %6100 = vmatprep.mubr.f32.mxu0 0.0
  %6101 = vmatmul.mubr.f32.gmra.mrb[0].mxu0 %v5824
  %v6102 = vpop.f32.mrb[0].mxu0
  %v6103 = vadd.f32 0.0, %v6102
  %v6104 = vpop.f32.mrb[0].mxu0
  %6105 = vmatprep.mubr.f32.mxu0 0.0
  %6106 = vmatmul.mubr.f32.gmra.mrb[0].mxu0 %v5827
  %v6107 = vpop.f32.mrb[0].mxu0
  %v6108 = vadd.f32 0.0, %v6107
  %v6109 = vpop.f32.mrb[0].mxu0
  %6110 = vmatprep.mubr.f32.mxu0 0.0
  %6111 = vmatmul.mubr.f32.gmra.mrb[0].mxu0 %v5830
  %v6112 = vpop.f32.mrb[0].mxu0
  %v6113 = vadd.f32 0.0, %v6112
  %v6114 = vpop.f32.mrb[0].mxu0
  %6115 = vmatprep.mubr.f32.mxu0 0.0
  %6116 = vmatmul.mubr.f32.gmra.mrb[0].mxu0 %v5833
  %v6117 = vpop.f32.mrb[0].mxu0
  %v6118 = vadd.f32 0.0, %v6117
  %v6119 = vpop.f32.mrb[0].mxu0
  %6120 = vmatprep.mubr.f32.mxu0 0.0
  %6121 = vmatmul.mubr.f32.gmra.mrb[0].mxu0 %v5836
  %v6122 = vpop.f32.mrb[0].mxu0
  %v6123 = vadd.f32 0.0, %v6122
  %v6124 = vpop.f32.mrb[0].mxu0
  %6125 = vmatprep.mubr.f32.mxu0 0.0
  %6126 = vmatmul.mubr.f32.gmra.mrb[0].mxu0 %v5839
  %v6127 = vpop.f32.mrb[0].mxu0
  %v6128 = vadd.f32 0.0, %v6127
  %v6129 = vpop.f32.mrb[0].mxu0
  %6130 = vmatprep.mubr.f32.mxu0 0.0
  %6131 = vmatmul.mubr.f32.gmra.mrb[0].mxu0 %v5842
  %v6132 = vpop.f32.mrb[0].mxu0
  %v6133 = vadd.f32 0.0, %v6132
  %v6134 = vpop.f32.mrb[0].mxu0
  %6135 = vmatprep.mubr.f32.mxu0 0.0
  %6136 = vmatmul.mubr.f32.gmra.mrb[0].mxu0 %v5845
  %v6137 = vpop.f32.mrb[0].mxu0
  %v6138 = vadd.f32 0.0, %v6137
  %v6139 = vpop.f32.mrb[0].mxu0
  %6140 = vmatprep.mubr.f32.mxu0 0.0
  %6141 = vmatmul.mubr.f32.gmra.mrb[0].mxu0 %v5848
  %v6142 = vpop.f32.mrb[0].mxu0
  %v6143 = vadd.f32 0.0, %v6142
  %v6144 = vpop.f32.mrb[0].mxu0
  %6145 = vmatprep.mubr.f32.mxu0 0.0
  %6146 = vmatmul.mubr.f32.gmra.mrb[0].mxu0 %v5851
  %v6147 = vpop.f32.mrb[0].mxu0
  %v6148 = vadd.f32 0.0, %v6147
  %v6149 = vpop.f32.mrb[0].mxu0
  %6150 = vmatprep.mubr.f32.mxu0 0.0
  %6151 = vmatmul.mubr.f32.gmra.mrb[0].mxu0 %v5854
  %v6152 = vpop.f32.mrb[0].mxu0
  %v6153 = vadd.f32 0.0, %v6152
  %v6154 = vpop.f32.mrb[0].mxu0
  %6155 = vmatprep.mubr.f32.mxu0 0.0
  %6156 = vmatmul.mubr.f32.gmra.mrb[0].mxu0 %v5857
  %v6157 = vpop.f32.mrb[0].mxu0
  %v6158 = vadd.f32 0.0, %v6157
  %v6159 = vpop.f32.mrb[0].mxu0
  %6160 = vmatprep.mubr.f32.mxu0 0.0
  %6161 = vmatmul.mubr.f32.gmra.mrb[0].mxu0 %v5860
  %v6162 = vpop.f32.mrb[0].mxu0
  %v6163 = vadd.f32 0.0, %v6162
  %v6164 = vpop.f32.mrb[0].mxu0
  %6165 = vmatprep.mubr.f32.mxu0 0.0
  %6166 = vmatmul.mubr.f32.gmra.mrb[0].mxu0 %v5863
  %v6167 = vpop.f32.mrb[0].mxu0
  %v6168 = vadd.f32 0.0, %v6167
  %v6169 = vpop.f32.mrb[0].mxu0
  %6170 = vmatprep.mubr.f32.mxu0 0.0
  %6171 = vmatmul.mubr.f32.gmra.mrb[0].mxu0 %v5866
  %v6172 = vpop.f32.mrb[0].mxu0
  %v6173 = vadd.f32 0.0, %v6172
  %v6174 = vpop.f32.mrb[0].mxu0
  %6175 = vmatprep.mubr.f32.mxu0 0.0
  %6176 = vmatmul.mubr.f32.gmra.mrb[0].mxu0 %v5869
  %v6177 = vpop.f32.mrb[0].mxu0
  %v6178 = vadd.f32 0.0, %v6177
  %v6179 = vpop.f32.mrb[0].mxu0
  %6180 = vmatprep.mubr.f32.mxu0 0.0
  %6181 = vmatmul.mubr.f32.gmra.mrb[0].mxu0 %v5872
  %v6182 = vpop.f32.mrb[0].mxu0
  %v6183 = vadd.f32 0.0, %v6182
  %v6184 = vpop.f32.mrb[0].mxu0
  %6185 = vmatprep.mubr.f32.mxu0 0.0
  %6186 = vmatmul.mubr.f32.gmra.mrb[0].mxu0 %v5875
  %v6187 = vpop.f32.mrb[0].mxu0
  %v6188 = vadd.f32 0.0, %v6187
  %v6189 = vpop.f32.mrb[0].mxu0
  %6190 = vmatprep.mubr.f32.mxu0 0.0
  %6191 = vmatmul.mubr.f32.gmra.mrb[0].mxu0 %v5878
  %v6192 = vpop.f32.mrb[0].mxu0
  %v6193 = vadd.f32 0.0, %v6192
  %v6194 = vpop.f32.mrb[0].mxu0
  %6195 = vmatprep.mubr.f32.mxu0 0.0
  %6196 = vmatmul.mubr.f32.gmra.mrb[0].mxu0 %v5881
  %v6197 = vpop.f32.mrb[0].mxu0
  %v6198 = vadd.f32 0.0, %v6197
  %v6199 = vpop.f32.mrb[0].mxu0
  %6200 = vmatprep.mubr.f32.mxu0 0.0
  %6201 = vmatmul.mubr.f32.gmra.mrb[0].mxu0 %v5884
  %v6202 = vpop.f32.mrb[0].mxu0
  %v6203 = vadd.f32 0.0, %v6202
  %v6204 = vpop.f32.mrb[0].mxu0
  %6205 = vmatprep.mubr.f32.mxu0 0.0
  %6206 = vmatmul.mubr.f32.gmra.mrb[0].mxu0 %v5887
  %v6207 = vpop.f32.mrb[0].mxu0
  %v6208 = vadd.f32 0.0, %v6207
  %v6209 = vpop.f32.mrb[0].mxu0
  %6210 = vmatprep.mubr.f32.mxu0 0.0
  %6211 = vmatmul.mubr.f32.gmra.mrb[0].mxu0 %v5890
  %v6212 = vpop.f32.mrb[0].mxu0
  %v6213 = vadd.f32 0.0, %v6212
  %v6214 = vpop.f32.mrb[0].mxu0
  %6215 = vmatprep.mubr.f32.mxu0 0.0
  %6216 = vmatmul.mubr.f32.gmra.mrb[0].mxu0 %v5893
  %v6217 = vpop.f32.mrb[0].mxu0
  %v6218 = vadd.f32 0.0, %v6217
  %v6219 = vpop.f32.mrb[0].mxu0
  %6220 = vmatprep.mubr.f32.mxu0 0.0
  %6221 = vmatmul.mubr.f32.gmra.mrb[0].mxu0 %v5896
  %v6222 = vpop.f32.mrb[0].mxu0
  %v6223 = vadd.f32 0.0, %v6222
  %v6224 = vpop.f32.mrb[0].mxu0
  %6225 = vmatprep.mubr.f32.mxu0 0.0
  %6226 = vmatmul.mubr.f32.gmra.mrb[0].mxu0 %v5899
  %v6227 = vpop.f32.mrb[0].mxu0
  %v6228 = vadd.f32 0.0, %v6227
  %v6229 = vpop.f32.mrb[0].mxu0
  %6230 = vmatprep.mubr.f32.mxu0 0.0
  %6231 = vmatmul.mubr.f32.gmra.mrb[0].mxu0 %v5902
  %v6232 = vpop.f32.mrb[0].mxu0
  %v6233 = vadd.f32 0.0, %v6232
  %v6234 = vpop.f32.mrb[0].mxu0
  %6235 = vmatprep.mubr.f32.mxu0 0.0
  %6236 = vmatmul.mubr.f32.gmra.mrb[0].mxu0 %v5905
  %v6237 = vpop.f32.mrb[0].mxu0
  %v6238 = vadd.f32 0.0, %v6237
  %v6239 = vpop.f32.mrb[0].mxu0
  %6240 = vmatprep.mubr.f32.mxu0 0.0
  %6241 = vmatmul.mubr.f32.gmra.mrb[0].mxu0 %v5908
  %v6242 = vpop.f32.mrb[0].mxu0
  %v6243 = vadd.f32 0.0, %v6242
  %v6244 = vpop.f32.mrb[0].mxu0
  %6245 = vmatprep.mubr.f32.mxu0 0.0
  %6246 = vmatmul.mubr.f32.gmra.mrb[0].mxu0 %v5911
  %v6247 = vpop.f32.mrb[0].mxu0
  %v6248 = vadd.f32 0.0, %v6247
  %v6249 = vpop.f32.mrb[0].mxu0
  %6250 = vmatprep.mubr.f32.mxu0 0.0
  %6251 = vmatmul.mubr.f32.gmra.mrb[0].mxu0 %v5914
  %v6252 = vpop.f32.mrb[0].mxu0
  %v6253 = vadd.f32 0.0, %v6252
  %v6254 = vpop.f32.mrb[0].mxu0
  %6255 = vmatprep.mubr.f32.mxu0 0.0
  %6256 = vmatmul.mubr.f32.gmra.mrb[0].mxu0 %v5917
  %v6257 = vpop.f32.mrb[0].mxu0
  %v6258 = vadd.f32 0.0, %v6257
  %v6259 = vpop.f32.mrb[0].mxu0
  %6260 = vmatprep.mubr.f32.mxu0 0.0
  %6261 = vmatmul.mubr.f32.gmra.mrb[0].mxu0 %v5920
  %v6262 = vpop.f32.mrb[0].mxu0
  %v6263 = vadd.f32 0.0, %v6262
  %v6264 = vpop.f32.mrb[0].mxu0
  %6265 = vmatprep.mubr.f32.mxu0 0.0
  %6266 = vmatmul.mubr.f32.gmra.mrb[0].mxu0 %v5923
  %v6267 = vpop.f32.mrb[0].mxu0
  %v6268 = vadd.f32 0.0, %v6267
  %v6269 = vpop.f32.mrb[0].mxu0
  %6270 = vmatprep.mubr.f32.mxu0 0.0
  %6271 = vmatmul.mubr.f32.gmra.mrb[0].mxu0 %v5926
  %v6272 = vpop.f32.mrb[0].mxu0
  %v6273 = vadd.f32 0.0, %v6272
  %v6274 = vpop.f32.mrb[0].mxu0
  %6275 = vmatprep.mubr.f32.mxu0 0.0
  %6276 = vmatmul.mubr.f32.gmra.mrb[0].mxu0 %v5929
  %v6277 = vpop.f32.mrb[0].mxu0
  %v6278 = vadd.f32 0.0, %v6277
  %v6279 = vpop.f32.mrb[0].mxu0
  %6280 = vmatprep.mubr.f32.mxu0 0.0
  %6281 = vmatmul.mubr.f32.gmra.mrb[0].mxu0 %v5932
  %v6282 = vpop.f32.mrb[0].mxu0
  %v6283 = vadd.f32 0.0, %v6282
  %v6284 = vpop.f32.mrb[0].mxu0
  %6285 = vmatprep.mubr.f32.mxu0 0.0
  %6286 = vmatmul.mubr.f32.gmra.mrb[0].mxu0 %v5935
  %v6287 = vpop.f32.mrb[0].mxu0
  %v6288 = vadd.f32 0.0, %v6287
  %v6289 = vpop.f32.mrb[0].mxu0
  %6290 = vmatprep.mubr.f32.mxu0 0.0
  %6291 = vmatmul.mubr.f32.gmra.mrb[0].mxu0 %v5938
  %v6292 = vpop.f32.mrb[0].mxu0
  %v6293 = vadd.f32 0.0, %v6292
  %v6294 = vpop.f32.mrb[0].mxu0
  %6295 = vmatprep.mubr.f32.mxu0 0.0
  %6296 = vmatmul.mubr.f32.gmra.mrb[0].mxu0 %v5941
  %v6297 = vpop.f32.mrb[0].mxu0
  %v6298 = vadd.f32 0.0, %v6297
  %v6299 = vpop.f32.mrb[0].mxu0
  %6300 = vmatprep.mubr.f32.mxu0 0.0
  %6301 = vmatmul.mubr.f32.gmra.mrb[0].mxu0 %v5944
  %v6302 = vpop.f32.mrb[0].mxu0
  %v6303 = vadd.f32 0.0, %v6302
  %v6304 = vpop.f32.mrb[0].mxu0
  %6305 = vmatprep.mubr.f32.mxu0 0.0
  %6306 = vmatmul.mubr.f32.gmra.mrb[0].mxu0 %v5947
  %v6307 = vpop.f32.mrb[0].mxu0
  %v6308 = vadd.f32 0.0, %v6307
  %v6309 = vpop.f32.mrb[0].mxu0
  %6310 = vmatprep.mubr.f32.mxu0 0.0
  %6311 = vmatmul.mubr.f32.gmra.mrb[0].mxu0 %v5950
  %v6312 = vpop.f32.mrb[0].mxu0
  %v6313 = vadd.f32 0.0, %v6312
  %v6314 = vpop.f32.mrb[0].mxu0
  %6315 = vmatprep.mubr.f32.mxu0 0.0
  %6316 = vmatmul.mubr.f32.gmra.mrb[0].mxu0 %v5953
  %v6317 = vpop.f32.mrb[0].mxu0
  %v6318 = vadd.f32 0.0, %v6317
  %v6319 = vpop.f32.mrb[0].mxu0
  %6320 = vmatprep.mubr.f32.mxu0 0.0
  %6321 = vmatmul.mubr.f32.gmra.mrb[0].mxu0 %v5956
  %v6322 = vpop.f32.mrb[0].mxu0
  %v6323 = vadd.f32 0.0, %v6322
  %v6324 = vpop.f32.mrb[0].mxu0
  %6325 = vmatprep.mubr.f32.mxu0 0.0
  %6326 = vmatmul.mubr.f32.gmra.mrb[0].mxu0 %v5959
  %v6327 = vpop.f32.mrb[0].mxu0
  %v6328 = vadd.f32 0.0, %v6327
  %v6329 = vpop.f32.mrb[0].mxu0
  %6330 = vmatprep.mubr.f32.mxu0 0.0
  %6331 = vmatmul.mubr.f32.gmra.mrb[0].mxu0 %v5962
  %v6332 = vpop.f32.mrb[0].mxu0
  %v6333 = vadd.f32 0.0, %v6332
  %v6334 = vpop.f32.mrb[0].mxu0
  %6335 = vmatprep.mubr.f32.mxu0 0.0
  %6336 = vmatmul.mubr.f32.gmra.mrb[0].mxu0 %v5965
  %v6337 = vpop.f32.mrb[0].mxu0
  %v6338 = vadd.f32 0.0, %v6337
  %v6339 = vpop.f32.mrb[0].mxu0
  %6340 = vmatprep.mubr.f32.mxu0 0.0
  %6341 = vmatmul.mubr.f32.gmra.mrb[0].mxu0 %v5968
  %v6342 = vpop.f32.mrb[0].mxu0
  %v6343 = vadd.f32 0.0, %v6342
  %v6344 = vpop.f32.mrb[0].mxu0
  %6345 = vmatprep.mubr.f32.mxu0 0.0
  %6346 = vmatmul.mubr.f32.gmra.mrb[0].mxu0 %v5971
  %v6347 = vpop.f32.mrb[0].mxu0
  %v6348 = vadd.f32 0.0, %v6347
  %v6349 = vpop.f32.mrb[0].mxu0
  %6350 = vmatprep.mubr.f32.mxu0 0.0
  %6351 = vmatmul.mubr.f32.gmra.mrb[0].mxu0 %v5974
  %v6352 = vpop.f32.mrb[0].mxu0
  %v6353 = vadd.f32 0.0, %v6352
  %v6354 = vpop.f32.mrb[0].mxu0
  %6355 = vmatprep.mubr.f32.mxu0 0.0
  %6356 = vmatmul.mubr.f32.gmra.mrb[0].mxu0 %v5977
  %v6357 = vpop.f32.mrb[0].mxu0
  %v6358 = vadd.f32 0.0, %v6357
  %v6359 = vpop.f32.mrb[0].mxu0
  %6360 = vmatprep.mubr.f32.mxu0 0.0
  %6361 = vmatmul.mubr.f32.gmra.mrb[0].mxu0 %v5980
  %v6362 = vpop.f32.mrb[0].mxu0
  %v6363 = vadd.f32 0.0, %v6362
  %v6364 = vpop.f32.mrb[0].mxu0
  %6365 = vmatprep.mubr.f32.mxu0 0.0
  %6366 = vmatmul.mubr.f32.gmra.mrb[0].mxu0 %v5983
  %v6367 = vpop.f32.mrb[0].mxu0
  %v6368 = vadd.f32 0.0, %v6367
  %v6369 = vpop.f32.mrb[0].mxu0
  %6370 = vmatprep.mubr.f32.mxu0 0.0
  %6371 = vmatmul.mubr.f32.gmra.mrb[0].mxu0 %v5986
  %v6372 = vpop.f32.mrb[0].mxu0
  %v6373 = vadd.f32 0.0, %v6372
  %v6374 = vpop.f32.mrb[0].mxu0
  %6375 = vmatprep.mubr.f32.mxu0 0.0
  %6376 = vmatmul.mubr.f32.gmra.mrb[0].mxu0 %v5989
  %v6377 = vpop.f32.mrb[0].mxu0
  %v6378 = vadd.f32 0.0, %v6377
  %v6379 = vpop.f32.mrb[0].mxu0
  %6380 = vmatprep.mubr.f32.mxu0 0.0
  %6381 = vmatmul.mubr.f32.gmra.mrb[0].mxu0 %v5992
  %v6382 = vpop.f32.mrb[0].mxu0
  %v6383 = vadd.f32 0.0, %v6382
  %v6384 = vpop.f32.mrb[0].mxu0
  %6385 = vmatprep.mubr.f32.mxu0 0.0
  %6386 = vmatmul.mubr.f32.gmra.mrb[0].mxu0 %v5995
  %v6387 = vpop.f32.mrb[0].mxu0
  %v6388 = vadd.f32 0.0, %v6387
  %v6389 = vpop.f32.mrb[0].mxu0
  %6390 = vmatprep.mubr.f32.mxu0 0.0
  %6391 = vmatmul.mubr.f32.gmra.mrb[0].mxu0 %v5998
  %v6392 = vpop.f32.mrb[0].mxu0
  %v6393 = vadd.f32 0.0, %v6392
  %v6394 = vpop.f32.mrb[0].mxu0
  %6395 = vmatprep.mubr.f32.mxu0 0.0
  %6396 = vmatmul.mubr.f32.gmra.mrb[0].mxu0 %v6001
  %v6397 = vpop.f32.mrb[0].mxu0
  %v6398 = vadd.f32 0.0, %v6397
  %v6399 = vpop.f32.mrb[0].mxu0
  %6400 = vdwg.mxu0
  %v6401 = vadd.f32 %v5671, %v6073
  %v6402 = vadd.f32 %v5672, %v6078
  %v6403 = vadd.f32 %v5673, %v6083
  %v6404 = vadd.f32 %v5674, %v6088
  %v6405 = vadd.f32 %v5675, %v6093
  %v6406 = vadd.f32 %v5676, %v6098
  %v6407 = vadd.f32 %v5677, %v6103
  %v6408 = vadd.f32 %v5678, %v6108
  %v6409 = vadd.f32 %v5679, %v6113
  %v6410 = vadd.f32 %v5680, %v6118
  %v6411 = vadd.f32 %v5681, %v6123
  %v6412 = vadd.f32 %v5682, %v6128
  %v6413 = vadd.f32 %v5683, %v6133
  %v6414 = vadd.f32 %v5684, %v6138
  %v6415 = vadd.f32 %v5685, %v6143
  %v6416 = vadd.f32 %v5686, %v6148
  %v6417 = vadd.f32 %v5687, %v6153
  %v6418 = vadd.f32 %v5688, %v6158
  %v6419 = vadd.f32 %v5689, %v6163
  %v6420 = vadd.f32 %v5690, %v6168
  %v6421 = vadd.f32 %v5691, %v6173
  %v6422 = vadd.f32 %v5692, %v6178
  %v6423 = vadd.f32 %v5693, %v6183
  %v6424 = vadd.f32 %v5694, %v6188
  %v6425 = vadd.f32 %v5695, %v6193
  %v6426 = vadd.f32 %v5696, %v6198
  %v6427 = vadd.f32 %v5697, %v6203
  %v6428 = vadd.f32 %v5698, %v6208
  %v6429 = vadd.f32 %v5699, %v6213
  %v6430 = vadd.f32 %v5700, %v6218
  %v6431 = vadd.f32 %v5701, %v6223
  %v6432 = vadd.f32 %v5702, %v6228
  %v6433 = vadd.f32 %v5703, %v6233
  %v6434 = vadd.f32 %v5704, %v6238
  %v6435 = vadd.f32 %v5705, %v6243
  %v6436 = vadd.f32 %v5706, %v6248
  %v6437 = vadd.f32 %v5707, %v6253
  %v6438 = vadd.f32 %v5708, %v6258
  %v6439 = vadd.f32 %v5709, %v6263
  %v6440 = vadd.f32 %v5710, %v6268
  %v6441 = vadd.f32 %v5711, %v6273
  %v6442 = vadd.f32 %v5712, %v6278
  %v6443 = vadd.f32 %v5713, %v6283
  %v6444 = vadd.f32 %v5714, %v6288
  %v6445 = vadd.f32 %v5715, %v6293
  %v6446 = vadd.f32 %v5716, %v6298
  %v6447 = vadd.f32 %v5717, %v6303
  %v6448 = vadd.f32 %v5718, %v6308
  %v6449 = vadd.f32 %v5719, %v6313
  %v6450 = vadd.f32 %v5720, %v6318
  %v6451 = vadd.f32 %v5721, %v6323
  %v6452 = vadd.f32 %v5722, %v6328
  %v6453 = vadd.f32 %v5723, %v6333
  %v6454 = vadd.f32 %v5724, %v6338
  %v6455 = vadd.f32 %v5725, %v6343
  %v6456 = vadd.f32 %v5726, %v6348
  %v6457 = vadd.f32 %v5727, %v6353
  %v6458 = vadd.f32 %v5728, %v6358
  %v6459 = vadd.f32 %v5729, %v6363
  %v6460 = vadd.f32 %v5730, %v6368
  %v6461 = vadd.f32 %v5731, %v6373
  %v6462 = vadd.f32 %v5732, %v6378
  %v6463 = vadd.f32 %v5733, %v6383
  %v6464 = vadd.f32 %v5734, %v6388
  %v6465 = vadd.f32 %v5735, %v6393
  %v6466 = vadd.f32 %v5736, %v6398
  %v6467 = vld [vmem:[%s2] sm:$0x1]
  %v6469 = vlaneseq
  %v6470 = vshrl.u32 %v6469, 7
  %v6471 = vsub.s32 0, %v6470
  %v6472 = vrot.slane %v6467, %v6471
  %v6474 = vadd.f32 %v6401, %v6472
  %v6475 = vadd.f32 %v6402, %v6472
  %v6476 = vadd.f32 %v6403, %v6472
  %v6477 = vadd.f32 %v6404, %v6472
  %v6478 = vadd.f32 %v6405, %v6472
  %v6479 = vadd.f32 %v6406, %v6472
  %v6480 = vadd.f32 %v6407, %v6472
  %v6481 = vadd.f32 %v6408, %v6472
  %v6482 = vadd.f32 %v6409, %v6472
  %v6483 = vadd.f32 %v6410, %v6472
  %v6484 = vadd.f32 %v6411, %v6472
  %v6485 = vadd.f32 %v6412, %v6472
  %v6486 = vadd.f32 %v6413, %v6472
  %v6487 = vadd.f32 %v6414, %v6472
  %v6488 = vadd.f32 %v6415, %v6472
  %v6489 = vadd.f32 %v6416, %v6472
  %v6490 = vadd.f32 %v6417, %v6472
  %v6491 = vadd.f32 %v6418, %v6472
  %v6492 = vadd.f32 %v6419, %v6472
  %v6493 = vadd.f32 %v6420, %v6472
  %v6494 = vadd.f32 %v6421, %v6472
  %v6495 = vadd.f32 %v6422, %v6472
  %v6496 = vadd.f32 %v6423, %v6472
  %v6497 = vadd.f32 %v6424, %v6472
  %v6498 = vadd.f32 %v6425, %v6472
  %v6499 = vadd.f32 %v6426, %v6472
  %v6500 = vadd.f32 %v6427, %v6472
  %v6501 = vadd.f32 %v6428, %v6472
  %v6502 = vadd.f32 %v6429, %v6472
  %v6503 = vadd.f32 %v6430, %v6472
  %v6504 = vadd.f32 %v6431, %v6472
  %v6505 = vadd.f32 %v6432, %v6472
  %v6506 = vadd.f32 %v6433, %v6472
  %v6507 = vadd.f32 %v6434, %v6472
  %v6508 = vadd.f32 %v6435, %v6472
  %v6509 = vadd.f32 %v6436, %v6472
  %v6510 = vadd.f32 %v6437, %v6472
  %v6511 = vadd.f32 %v6438, %v6472
  %v6512 = vadd.f32 %v6439, %v6472
  %v6513 = vadd.f32 %v6440, %v6472
  %v6514 = vadd.f32 %v6441, %v6472
  %v6515 = vadd.f32 %v6442, %v6472
  %v6516 = vadd.f32 %v6443, %v6472
  %v6517 = vadd.f32 %v6444, %v6472
  %v6518 = vadd.f32 %v6445, %v6472
  %v6519 = vadd.f32 %v6446, %v6472
  %v6520 = vadd.f32 %v6447, %v6472
  %v6521 = vadd.f32 %v6448, %v6472
  %v6522 = vadd.f32 %v6449, %v6472
  %v6523 = vadd.f32 %v6450, %v6472
  %v6524 = vadd.f32 %v6451, %v6472
  %v6525 = vadd.f32 %v6452, %v6472
  %v6526 = vadd.f32 %v6453, %v6472
  %v6527 = vadd.f32 %v6454, %v6472
  %v6528 = vadd.f32 %v6455, %v6472
  %v6529 = vadd.f32 %v6456, %v6472
  %v6530 = vadd.f32 %v6457, %v6472
  %v6531 = vadd.f32 %v6458, %v6472
  %v6532 = vadd.f32 %v6459, %v6472
  %v6533 = vadd.f32 %v6460, %v6472
  %v6534 = vadd.f32 %v6461, %v6472
  %v6535 = vadd.f32 %v6462, %v6472
  %v6536 = vadd.f32 %v6463, %v6472
  %v6537 = vadd.f32 %v6464, %v6472
  %v6538 = vadd.f32 %v6465, %v6472
  %v6539 = vadd.f32 %v6466, %v6472
  %v6540 = vmax.f32 %v6474, 0.0
  %v6541 = vmax.f32 %v6475, 0.0
  %v6542 = vmax.f32 %v6476, 0.0
  %v6543 = vmax.f32 %v6477, 0.0
  %v6544 = vmax.f32 %v6478, 0.0
  %v6545 = vmax.f32 %v6479, 0.0
  %v6546 = vmax.f32 %v6480, 0.0
  %v6547 = vmax.f32 %v6481, 0.0
  %v6548 = vmax.f32 %v6482, 0.0
  %v6549 = vmax.f32 %v6483, 0.0
  %v6550 = vmax.f32 %v6484, 0.0
  %v6551 = vmax.f32 %v6485, 0.0
  %v6552 = vmax.f32 %v6486, 0.0
  %v6553 = vmax.f32 %v6487, 0.0
  %v6554 = vmax.f32 %v6488, 0.0
  %v6555 = vmax.f32 %v6489, 0.0
  %v6556 = vmax.f32 %v6490, 0.0
  %v6557 = vmax.f32 %v6491, 0.0
  %v6558 = vmax.f32 %v6492, 0.0
  %v6559 = vmax.f32 %v6493, 0.0
  %v6560 = vmax.f32 %v6494, 0.0
  %v6561 = vmax.f32 %v6495, 0.0
  %v6562 = vmax.f32 %v6496, 0.0
  %v6563 = vmax.f32 %v6497, 0.0
  %v6564 = vmax.f32 %v6498, 0.0
  %v6565 = vmax.f32 %v6499, 0.0
  %v6566 = vmax.f32 %v6500, 0.0
  %v6567 = vmax.f32 %v6501, 0.0
  %v6568 = vmax.f32 %v6502, 0.0
  %v6569 = vmax.f32 %v6503, 0.0
  %v6570 = vmax.f32 %v6504, 0.0
  %v6571 = vmax.f32 %v6505, 0.0
  %v6572 = vmax.f32 %v6506, 0.0
  %v6573 = vmax.f32 %v6507, 0.0
  %v6574 = vmax.f32 %v6508, 0.0
  %v6575 = vmax.f32 %v6509, 0.0
  %v6576 = vmax.f32 %v6510, 0.0
  %v6577 = vmax.f32 %v6511, 0.0
  %v6578 = vmax.f32 %v6512, 0.0
  %v6579 = vmax.f32 %v6513, 0.0
  %v6580 = vmax.f32 %v6514, 0.0
  %v6581 = vmax.f32 %v6515, 0.0
  %v6582 = vmax.f32 %v6516, 0.0
  %v6583 = vmax.f32 %v6517, 0.0
  %v6584 = vmax.f32 %v6518, 0.0
  %v6585 = vmax.f32 %v6519, 0.0
  %v6586 = vmax.f32 %v6520, 0.0
  %v6587 = vmax.f32 %v6521, 0.0
  %v6588 = vmax.f32 %v6522, 0.0
  %v6589 = vmax.f32 %v6523, 0.0
  %v6590 = vmax.f32 %v6524, 0.0
  %v6591 = vmax.f32 %v6525, 0.0
  %v6592 = vmax.f32 %v6526, 0.0
  %v6593 = vmax.f32 %v6527, 0.0
  %v6594 = vmax.f32 %v6528, 0.0
  %v6595 = vmax.f32 %v6529, 0.0
  %v6596 = vmax.f32 %v6530, 0.0
  %v6597 = vmax.f32 %v6531, 0.0
  %v6598 = vmax.f32 %v6532, 0.0
  %v6599 = vmax.f32 %v6533, 0.0
  %v6600 = vmax.f32 %v6534, 0.0
  %v6601 = vmax.f32 %v6535, 0.0
  %v6602 = vmax.f32 %v6536, 0.0
  %v6603 = vmax.f32 %v6537, 0.0
  %v6604 = vmax.f32 %v6538, 0.0
  %v6605 = vmax.f32 %v6539, 0.0
  %vm6606 = vcmask 523264
  %6607 = vst.msk [vmem:[#allocation2] sm:$0xff] %vm6606, %v6540
  %6608 = vst.msk [vmem:[#allocation2 + $0x8] sm:$0xff] %vm6606, %v6541
  %6609 = vst.msk [vmem:[#allocation2 + $0x10] sm:$0xff] %vm6606, %v6542
  %6610 = vst.msk [vmem:[#allocation2 + $0x18] sm:$0xff] %vm6606, %v6543
  %6611 = vst.msk [vmem:[#allocation2 + $0x20] sm:$0xff] %vm6606, %v6544
  %6612 = vst.msk [vmem:[#allocation2 + $0x28] sm:$0xff] %vm6606, %v6545
  %6613 = vst.msk [vmem:[#allocation2 + $0x30] sm:$0xff] %vm6606, %v6546
  %6614 = vst.msk [vmem:[#allocation2 + $0x38] sm:$0xff] %vm6606, %v6547
  %6615 = vst.msk [vmem:[#allocation2 + $0x40] sm:$0xff] %vm6606, %v6548
  %6616 = vst.msk [vmem:[#allocation2 + $0x48] sm:$0xff] %vm6606, %v6549
  %6617 = vst.msk [vmem:[#allocation2 + $0x50] sm:$0xff] %vm6606, %v6550
  %6618 = vst.msk [vmem:[#allocation2 + $0x58] sm:$0xff] %vm6606, %v6551
  %6619 = vst.msk [vmem:[#allocation2 + $0x60] sm:$0xff] %vm6606, %v6552
  %6620 = vst.msk [vmem:[#allocation2 + $0x68] sm:$0xff] %vm6606, %v6553
  %6621 = vst.msk [vmem:[#allocation2 + $0x70] sm:$0xff] %vm6606, %v6554
  %6622 = vst.msk [vmem:[#allocation2 + $0x78] sm:$0xff] %vm6606, %v6555
  %6623 = vst.msk [vmem:[#allocation2 + $0x80] sm:$0xff] %vm6606, %v6556
  %6624 = vst.msk [vmem:[#allocation2 + $0x88] sm:$0xff] %vm6606, %v6557
  %6625 = vst.msk [vmem:[#allocation2 + $0x90] sm:$0xff] %vm6606, %v6558
  %6626 = vst.msk [vmem:[#allocation2 + $0x98] sm:$0xff] %vm6606, %v6559
  %6627 = vst.msk [vmem:[#allocation2 + $0xa0] sm:$0xff] %vm6606, %v6560
  %6628 = vst.msk [vmem:[#allocation2 + $0xa8] sm:$0xff] %vm6606, %v6561
  %6629 = vst.msk [vmem:[#allocation2 + $0xb0] sm:$0xff] %vm6606, %v6562
  %6630 = vst.msk [vmem:[#allocation2 + $0xb8] sm:$0xff] %vm6606, %v6563
  %6631 = vst.msk [vmem:[#allocation2 + $0xc0] sm:$0xff] %vm6606, %v6564
  %6632 = vst.msk [vmem:[#allocation2 + $0xc8] sm:$0xff] %vm6606, %v6565
  %6633 = vst.msk [vmem:[#allocation2 + $0xd0] sm:$0xff] %vm6606, %v6566
  %6634 = vst.msk [vmem:[#allocation2 + $0xd8] sm:$0xff] %vm6606, %v6567
  %6635 = vst.msk [vmem:[#allocation2 + $0xe0] sm:$0xff] %vm6606, %v6568
  %6636 = vst.msk [vmem:[#allocation2 + $0xe8] sm:$0xff] %vm6606, %v6569
  %6637 = vst.msk [vmem:[#allocation2 + $0xf0] sm:$0xff] %vm6606, %v6570
  %6638 = vst.msk [vmem:[#allocation2 + $0xf8] sm:$0xff] %vm6606, %v6571
  %6639 = vst.msk [vmem:[#allocation2 + $0x100] sm:$0xff] %vm6606, %v6572
  %6640 = vst.msk [vmem:[#allocation2 + $0x108] sm:$0xff] %vm6606, %v6573
  %6641 = vst.msk [vmem:[#allocation2 + $0x110] sm:$0xff] %vm6606, %v6574
  %6642 = vst.msk [vmem:[#allocation2 + $0x118] sm:$0xff] %vm6606, %v6575
  %6643 = vst.msk [vmem:[#allocation2 + $0x120] sm:$0xff] %vm6606, %v6576
  %6644 = vst.msk [vmem:[#allocation2 + $0x128] sm:$0xff] %vm6606, %v6577
  %6645 = vst.msk [vmem:[#allocation2 + $0x130] sm:$0xff] %vm6606, %v6578
  %6646 = vst.msk [vmem:[#allocation2 + $0x138] sm:$0xff] %vm6606, %v6579
  %6647 = vst.msk [vmem:[#allocation2 + $0x140] sm:$0xff] %vm6606, %v6580
  %6648 = vst.msk [vmem:[#allocation2 + $0x148] sm:$0xff] %vm6606, %v6581
  %6649 = vst.msk [vmem:[#allocation2 + $0x150] sm:$0xff] %vm6606, %v6582
  %6650 = vst.msk [vmem:[#allocation2 + $0x158] sm:$0xff] %vm6606, %v6583
  %6651 = vst.msk [vmem:[#allocation2 + $0x160] sm:$0xff] %vm6606, %v6584
  %6652 = vst.msk [vmem:[#allocation2 + $0x168] sm:$0xff] %vm6606, %v6585
  %6653 = vst.msk [vmem:[#allocation2 + $0x170] sm:$0xff] %vm6606, %v6586
  %6654 = vst.msk [vmem:[#allocation2 + $0x178] sm:$0xff] %vm6606, %v6587
  %6655 = vst.msk [vmem:[#allocation2 + $0x180] sm:$0xff] %vm6606, %v6588
  %6656 = vst.msk [vmem:[#allocation2 + $0x188] sm:$0xff] %vm6606, %v6589
  %6657 = vst.msk [vmem:[#allocation2 + $0x190] sm:$0xff] %vm6606, %v6590
  %6658 = vst.msk [vmem:[#allocation2 + $0x198] sm:$0xff] %vm6606, %v6591
  %6659 = vst.msk [vmem:[#allocation2 + $0x1a0] sm:$0xff] %vm6606, %v6592
  %6660 = vst.msk [vmem:[#allocation2 + $0x1a8] sm:$0xff] %vm6606, %v6593
  %6661 = vst.msk [vmem:[#allocation2 + $0x1b0] sm:$0xff] %vm6606, %v6594
  %6662 = vst.msk [vmem:[#allocation2 + $0x1b8] sm:$0xff] %vm6606, %v6595
  %6663 = vst.msk [vmem:[#allocation2 + $0x1c0] sm:$0xff] %vm6606, %v6596
  %6664 = vst.msk [vmem:[#allocation2 + $0x1c8] sm:$0xff] %vm6606, %v6597
  %6665 = vst.msk [vmem:[#allocation2 + $0x1d0] sm:$0xff] %vm6606, %v6598
  %6666 = vst.msk [vmem:[#allocation2 + $0x1d8] sm:$0xff] %vm6606, %v6599
  %6667 = vst.msk [vmem:[#allocation2 + $0x1e0] sm:$0xff] %vm6606, %v6600
  %6668 = vst.msk [vmem:[#allocation2 + $0x1e8] sm:$0xff] %vm6606, %v6601
  %6669 = vst.msk [vmem:[#allocation2 + $0x1f0] sm:$0xff] %vm6606, %v6602
  %6670 = vst.msk [vmem:[#allocation2 + $0x1f8] sm:$0xff] %vm6606, %v6603
  %6671 = vst.msk [vmem:[#allocation2 + $0x200] sm:$0xff] %vm6606, %v6604
  %6672 = vst.msk [vmem:[#allocation2 + $0x208] sm:$0xff] %vm6606, %v6605
  %6673 = vst.msk [vmem:[#allocation3] sm:$0xff] %vm6606, 0.0
  %6674 = vst.msk [vmem:[#allocation3 + $0x8] sm:$0xff] %vm6606, 0.0
  %6675 = vst.msk [vmem:[#allocation3 + $0x10] sm:$0xff] %vm6606, 0.0
  %6676 = vst.msk [vmem:[#allocation3 + $0x18] sm:$0xff] %vm6606, 0.0
  %6677 = vst.msk [vmem:[#allocation3 + $0x20] sm:$0xff] %vm6606, 0.0
  %6678 = vst.msk [vmem:[#allocation3 + $0x28] sm:$0xff] %vm6606, 0.0
  %6679 = vst.msk [vmem:[#allocation3 + $0x30] sm:$0xff] %vm6606, 0.0
  %6680 = vst.msk [vmem:[#allocation3 + $0x38] sm:$0xff] %vm6606, 0.0
  %6681 = vst.msk [vmem:[#allocation3 + $0x40] sm:$0xff] %vm6606, 0.0
  %6682 = vst.msk [vmem:[#allocation3 + $0x48] sm:$0xff] %vm6606, 0.0
  %6683 = vst.msk [vmem:[#allocation3 + $0x50] sm:$0xff] %vm6606, 0.0
  %6684 = vst.msk [vmem:[#allocation3 + $0x58] sm:$0xff] %vm6606, 0.0
  %6685 = vst.msk [vmem:[#allocation3 + $0x60] sm:$0xff] %vm6606, 0.0
  %6686 = vst.msk [vmem:[#allocation3 + $0x68] sm:$0xff] %vm6606, 0.0
  %6687 = vst.msk [vmem:[#allocation3 + $0x70] sm:$0xff] %vm6606, 0.0
  %6688 = vst.msk [vmem:[#allocation3 + $0x78] sm:$0xff] %vm6606, 0.0
  %6689 = vst.msk [vmem:[#allocation3 + $0x80] sm:$0xff] %vm6606, 0.0
  %6690 = vst.msk [vmem:[#allocation3 + $0x88] sm:$0xff] %vm6606, 0.0
  %6691 = vst.msk [vmem:[#allocation3 + $0x90] sm:$0xff] %vm6606, 0.0
  %6692 = vst.msk [vmem:[#allocation3 + $0x98] sm:$0xff] %vm6606, 0.0
  %6693 = vst.msk [vmem:[#allocation3 + $0xa0] sm:$0xff] %vm6606, 0.0
  %6694 = vst.msk [vmem:[#allocation3 + $0xa8] sm:$0xff] %vm6606, 0.0
  %6695 = vst.msk [vmem:[#allocation3 + $0xb0] sm:$0xff] %vm6606, 0.0
  %6696 = vst.msk [vmem:[#allocation3 + $0xb8] sm:$0xff] %vm6606, 0.0
  %v6697 = vld [vmem:[#allocation2] ss:$2 sm:$0xff]
  %s6698 = scalar_lea.vmem [#allocation2], 16
  %v6699 = vld [vmem:[%s6698] ss:$2 sm:$0x7]
  %s6700 = scalar_lea.vmem [#allocation2], 1
  %v6701 = vld [vmem:[%s6700] ss:$2 sm:$0xff]
  %s6702 = scalar_lea.vmem [#allocation2], 17
  %v6703 = vld [vmem:[%s6702] ss:$2 sm:$0x7]
  %s6704 = scalar_lea.vmem [#allocation2], 24
  %v6705 = vld [vmem:[%s6704] ss:$2 sm:$0xff]
  %s6706 = scalar_lea.vmem [#allocation2], 40
  %v6707 = vld [vmem:[%s6706] ss:$2 sm:$0x7]
  %s6708 = scalar_lea.vmem [#allocation2], 25
  %v6709 = vld [vmem:[%s6708] ss:$2 sm:$0xff]
  %s6710 = scalar_lea.vmem [#allocation2], 41
  %v6711 = vld [vmem:[%s6710] ss:$2 sm:$0x7]
  %v6712 = vmax.f32 %v6697, %v6701
  %v6713 = vmax.f32 %v6699, %v6703
  %v6714 = vmax.f32 %v6705, %v6709
  %v6715 = vmax.f32 %v6707, %v6711
  %v6716 = vmax.f32 %v6712, %v6714
  %v6717 = vmax.f32 %v6713, %v6715
  %6718 = vst.msk [vmem:[#allocation3] sm:$0xff] %vm6606, %v6716
  %vm6719 = vcmask 518144
  %6720 = vst.msk [vmem:[#allocation3 + $0x8] sm:$0x7] %vm6719, %v6717
  %s6721 = scalar_lea.vmem [#allocation2], 48
  %v6722 = vld [vmem:[%s6721] ss:$2 sm:$0xff]
  %s6723 = scalar_lea.vmem [#allocation2], 64
  %v6724 = vld [vmem:[%s6723] ss:$2 sm:$0x7]
  %s6725 = scalar_lea.vmem [#allocation2], 49
  %v6726 = vld [vmem:[%s6725] ss:$2 sm:$0xff]
  %s6727 = scalar_lea.vmem [#allocation2], 65
  %v6728 = vld [vmem:[%s6727] ss:$2 sm:$0x7]
  %s6729 = scalar_lea.vmem [#allocation2], 72
  %v6730 = vld [vmem:[%s6729] ss:$2 sm:$0xff]
  %s6731 = scalar_lea.vmem [#allocation2], 88
  %v6732 = vld [vmem:[%s6731] ss:$2 sm:$0x7]
  %s6733 = scalar_lea.vmem [#allocation2], 73
  %v6734 = vld [vmem:[%s6733] ss:$2 sm:$0xff]
  %s6735 = scalar_lea.vmem [#allocation2], 89
  %v6736 = vld [vmem:[%s6735] ss:$2 sm:$0x7]
  %v6737 = vmax.f32 %v6722, %v6726
  %v6738 = vmax.f32 %v6724, %v6728
  %v6739 = vmax.f32 %v6730, %v6734
  %v6740 = vmax.f32 %v6732, %v6736
  %v6741 = vmax.f32 %v6737, %v6739
  %v6742 = vmax.f32 %v6738, %v6740
  %6743 = vst.msk [vmem:[#allocation3 + $0x10] sm:$0xff] %vm6606, %v6741
  %6744 = vst.msk [vmem:[#allocation3 + $0x18] sm:$0x7] %vm6719, %v6742
  %s6745 = scalar_lea.vmem [#allocation2], 96
  %v6746 = vld [vmem:[%s6745] ss:$2 sm:$0xff]
  %s6747 = scalar_lea.vmem [#allocation2], 112
  %v6748 = vld [vmem:[%s6747] ss:$2 sm:$0x7]
  %s6749 = scalar_lea.vmem [#allocation2], 97
  %v6750 = vld [vmem:[%s6749] ss:$2 sm:$0xff]
  %s6751 = scalar_lea.vmem [#allocation2], 113
  %v6752 = vld [vmem:[%s6751] ss:$2 sm:$0x7]
  %s6753 = scalar_lea.vmem [#allocation2], 120
  %v6754 = vld [vmem:[%s6753] ss:$2 sm:$0xff]
  %s6755 = scalar_lea.vmem [#allocation2], 136
  %v6756 = vld [vmem:[%s6755] ss:$2 sm:$0x7]
  %s6757 = scalar_lea.vmem [#allocation2], 121
  %v6758 = vld [vmem:[%s6757] ss:$2 sm:$0xff]
  %s6759 = scalar_lea.vmem [#allocation2], 137
  %v6760 = vld [vmem:[%s6759] ss:$2 sm:$0x7]
  %v6761 = vmax.f32 %v6746, %v6750
  %v6762 = vmax.f32 %v6748, %v6752
  %v6763 = vmax.f32 %v6754, %v6758
  %v6764 = vmax.f32 %v6756, %v6760
  %v6765 = vmax.f32 %v6761, %v6763
  %v6766 = vmax.f32 %v6762, %v6764
  %6767 = vst.msk [vmem:[#allocation3 + $0x20] sm:$0xff] %vm6606, %v6765
  %6768 = vst.msk [vmem:[#allocation3 + $0x28] sm:$0x7] %vm6719, %v6766
  %s6769 = scalar_lea.vmem [#allocation2], 144
  %v6770 = vld [vmem:[%s6769] ss:$2 sm:$0xff]
  %s6771 = scalar_lea.vmem [#allocation2], 160
  %v6772 = vld [vmem:[%s6771] ss:$2 sm:$0x7]
  %s6773 = scalar_lea.vmem [#allocation2], 145
  %v6774 = vld [vmem:[%s6773] ss:$2 sm:$0xff]
  %s6775 = scalar_lea.vmem [#allocation2], 161
  %v6776 = vld [vmem:[%s6775] ss:$2 sm:$0x7]
  %s6777 = scalar_lea.vmem [#allocation2], 168
  %v6778 = vld [vmem:[%s6777] ss:$2 sm:$0xff]
  %s6779 = scalar_lea.vmem [#allocation2], 184
  %v6780 = vld [vmem:[%s6779] ss:$2 sm:$0x7]
  %s6781 = scalar_lea.vmem [#allocation2], 169
  %v6782 = vld [vmem:[%s6781] ss:$2 sm:$0xff]
  %s6783 = scalar_lea.vmem [#allocation2], 185
  %v6784 = vld [vmem:[%s6783] ss:$2 sm:$0x7]
  %v6785 = vmax.f32 %v6770, %v6774
  %v6786 = vmax.f32 %v6772, %v6776
  %v6787 = vmax.f32 %v6778, %v6782
  %v6788 = vmax.f32 %v6780, %v6784
  %v6789 = vmax.f32 %v6785, %v6787
  %v6790 = vmax.f32 %v6786, %v6788
  %6791 = vst.msk [vmem:[#allocation3 + $0x30] sm:$0xff] %vm6606, %v6789
  %6792 = vst.msk [vmem:[#allocation3 + $0x38] sm:$0x7] %vm6719, %v6790
  %s6793 = scalar_lea.vmem [#allocation2], 192
  %v6794 = vld [vmem:[%s6793] ss:$2 sm:$0xff]
  %s6795 = scalar_lea.vmem [#allocation2], 208
  %v6796 = vld [vmem:[%s6795] ss:$2 sm:$0x7]
  %s6797 = scalar_lea.vmem [#allocation2], 193
  %v6798 = vld [vmem:[%s6797] ss:$2 sm:$0xff]
  %s6799 = scalar_lea.vmem [#allocation2], 209
  %v6800 = vld [vmem:[%s6799] ss:$2 sm:$0x7]
  %s6801 = scalar_lea.vmem [#allocation2], 216
  %v6802 = vld [vmem:[%s6801] ss:$2 sm:$0xff]
  %s6803 = scalar_lea.vmem [#allocation2], 232
  %v6804 = vld [vmem:[%s6803] ss:$2 sm:$0x7]
  %s6805 = scalar_lea.vmem [#allocation2], 217
  %v6806 = vld [vmem:[%s6805] ss:$2 sm:$0xff]
  %s6807 = scalar_lea.vmem [#allocation2], 233
  %v6808 = vld [vmem:[%s6807] ss:$2 sm:$0x7]
  %v6809 = vmax.f32 %v6794, %v6798
  %v6810 = vmax.f32 %v6796, %v6800
  %v6811 = vmax.f32 %v6802, %v6806
  %v6812 = vmax.f32 %v6804, %v6808
  %v6813 = vmax.f32 %v6809, %v6811
  %v6814 = vmax.f32 %v6810, %v6812
  %6815 = vst.msk [vmem:[#allocation3 + $0x40] sm:$0xff] %vm6606, %v6813
  %6816 = vst.msk [vmem:[#allocation3 + $0x48] sm:$0x7] %vm6719, %v6814
  %s6817 = scalar_lea.vmem [#allocation2], 240
  %v6818 = vld [vmem:[%s6817] ss:$2 sm:$0xff]
  %s6819 = scalar_lea.vmem [#allocation2], 256
  %v6820 = vld [vmem:[%s6819] ss:$2 sm:$0x7]
  %s6821 = scalar_lea.vmem [#allocation2], 241
  %v6822 = vld [vmem:[%s6821] ss:$2 sm:$0xff]
  %s6823 = scalar_lea.vmem [#allocation2], 257
  %v6824 = vld [vmem:[%s6823] ss:$2 sm:$0x7]
  %s6825 = scalar_lea.vmem [#allocation2], 264
  %v6826 = vld [vmem:[%s6825] ss:$2 sm:$0xff]
  %s6827 = scalar_lea.vmem [#allocation2], 280
  %v6828 = vld [vmem:[%s6827] ss:$2 sm:$0x7]
  %s6829 = scalar_lea.vmem [#allocation2], 265
  %v6830 = vld [vmem:[%s6829] ss:$2 sm:$0xff]
  %s6831 = scalar_lea.vmem [#allocation2], 281
  %v6832 = vld [vmem:[%s6831] ss:$2 sm:$0x7]
  %v6833 = vmax.f32 %v6818, %v6822
  %v6834 = vmax.f32 %v6820, %v6824
  %v6835 = vmax.f32 %v6826, %v6830
  %v6836 = vmax.f32 %v6828, %v6832
  %v6837 = vmax.f32 %v6833, %v6835
  %v6838 = vmax.f32 %v6834, %v6836
  %6839 = vst.msk [vmem:[#allocation3 + $0x50] sm:$0xff] %vm6606, %v6837
  %6840 = vst.msk [vmem:[#allocation3 + $0x58] sm:$0x7] %vm6719, %v6838
  %s6841 = scalar_lea.vmem [#allocation2], 288
  %v6842 = vld [vmem:[%s6841] ss:$2 sm:$0xff]
  %s6843 = scalar_lea.vmem [#allocation2], 304
  %v6844 = vld [vmem:[%s6843] ss:$2 sm:$0x7]
  %s6845 = scalar_lea.vmem [#allocation2], 289
  %v6846 = vld [vmem:[%s6845] ss:$2 sm:$0xff]
  %s6847 = scalar_lea.vmem [#allocation2], 305
  %v6848 = vld [vmem:[%s6847] ss:$2 sm:$0x7]
  %s6849 = scalar_lea.vmem [#allocation2], 312
  %v6850 = vld [vmem:[%s6849] ss:$2 sm:$0xff]
  %s6851 = scalar_lea.vmem [#allocation2], 328
  %v6852 = vld [vmem:[%s6851] ss:$2 sm:$0x7]
  %s6853 = scalar_lea.vmem [#allocation2], 313
  %v6854 = vld [vmem:[%s6853] ss:$2 sm:$0xff]
  %s6855 = scalar_lea.vmem [#allocation2], 329
  %v6856 = vld [vmem:[%s6855] ss:$2 sm:$0x7]
  %v6857 = vmax.f32 %v6842, %v6846
  %v6858 = vmax.f32 %v6844, %v6848
  %v6859 = vmax.f32 %v6850, %v6854
  %v6860 = vmax.f32 %v6852, %v6856
  %v6861 = vmax.f32 %v6857, %v6859
  %v6862 = vmax.f32 %v6858, %v6860
  %6863 = vst.msk [vmem:[#allocation3 + $0x60] sm:$0xff] %vm6606, %v6861
  %6864 = vst.msk [vmem:[#allocation3 + $0x68] sm:$0x7] %vm6719, %v6862
  %s6865 = scalar_lea.vmem [#allocation2], 336
  %v6866 = vld [vmem:[%s6865] ss:$2 sm:$0xff]
  %s6867 = scalar_lea.vmem [#allocation2], 352
  %v6868 = vld [vmem:[%s6867] ss:$2 sm:$0x7]
  %s6869 = scalar_lea.vmem [#allocation2], 337
  %v6870 = vld [vmem:[%s6869] ss:$2 sm:$0xff]
  %s6871 = scalar_lea.vmem [#allocation2], 353
  %v6872 = vld [vmem:[%s6871] ss:$2 sm:$0x7]
  %s6873 = scalar_lea.vmem [#allocation2], 360
  %v6874 = vld [vmem:[%s6873] ss:$2 sm:$0xff]
  %s6875 = scalar_lea.vmem [#allocation2], 376
  %v6876 = vld [vmem:[%s6875] ss:$2 sm:$0x7]
  %s6877 = scalar_lea.vmem [#allocation2], 361
  %v6878 = vld [vmem:[%s6877] ss:$2 sm:$0xff]
  %s6879 = scalar_lea.vmem [#allocation2], 377
  %v6880 = vld [vmem:[%s6879] ss:$2 sm:$0x7]
  %v6881 = vmax.f32 %v6866, %v6870
  %v6882 = vmax.f32 %v6868, %v6872
  %v6883 = vmax.f32 %v6874, %v6878
  %v6884 = vmax.f32 %v6876, %v6880
  %v6885 = vmax.f32 %v6881, %v6883
  %v6886 = vmax.f32 %v6882, %v6884
  %6887 = vst.msk [vmem:[#allocation3 + $0x70] sm:$0xff] %vm6606, %v6885
  %6888 = vst.msk [vmem:[#allocation3 + $0x78] sm:$0x7] %vm6719, %v6886
  %s6889 = scalar_lea.vmem [#allocation2], 384
  %v6890 = vld [vmem:[%s6889] ss:$2 sm:$0xff]
  %s6891 = scalar_lea.vmem [#allocation2], 400
  %v6892 = vld [vmem:[%s6891] ss:$2 sm:$0x7]
  %s6893 = scalar_lea.vmem [#allocation2], 385
  %v6894 = vld [vmem:[%s6893] ss:$2 sm:$0xff]
  %s6895 = scalar_lea.vmem [#allocation2], 401
  %v6896 = vld [vmem:[%s6895] ss:$2 sm:$0x7]
  %s6897 = scalar_lea.vmem [#allocation2], 408
  %v6898 = vld [vmem:[%s6897] ss:$2 sm:$0xff]
  %s6899 = scalar_lea.vmem [#allocation2], 424
  %v6900 = vld [vmem:[%s6899] ss:$2 sm:$0x7]
  %s6901 = scalar_lea.vmem [#allocation2], 409
  %v6902 = vld [vmem:[%s6901] ss:$2 sm:$0xff]
  %s6903 = scalar_lea.vmem [#allocation2], 425
  %v6904 = vld [vmem:[%s6903] ss:$2 sm:$0x7]
  %v6905 = vmax.f32 %v6890, %v6894
  %v6906 = vmax.f32 %v6892, %v6896
  %v6907 = vmax.f32 %v6898, %v6902
  %v6908 = vmax.f32 %v6900, %v6904
  %v6909 = vmax.f32 %v6905, %v6907
  %v6910 = vmax.f32 %v6906, %v6908
  %6911 = vst.msk [vmem:[#allocation3 + $0x80] sm:$0xff] %vm6606, %v6909
  %6912 = vst.msk [vmem:[#allocation3 + $0x88] sm:$0x7] %vm6719, %v6910
  %s6913 = scalar_lea.vmem [#allocation2], 432
  %v6914 = vld [vmem:[%s6913] ss:$2 sm:$0xff]
  %s6915 = scalar_lea.vmem [#allocation2], 448
  %v6916 = vld [vmem:[%s6915] ss:$2 sm:$0x7]
  %s6917 = scalar_lea.vmem [#allocation2], 433
  %v6918 = vld [vmem:[%s6917] ss:$2 sm:$0xff]
  %s6919 = scalar_lea.vmem [#allocation2], 449
  %v6920 = vld [vmem:[%s6919] ss:$2 sm:$0x7]
  %s6921 = scalar_lea.vmem [#allocation2], 456
  %v6922 = vld [vmem:[%s6921] ss:$2 sm:$0xff]
  %s6923 = scalar_lea.vmem [#allocation2], 472
  %v6924 = vld [vmem:[%s6923] ss:$2 sm:$0x7]
  %s6925 = scalar_lea.vmem [#allocation2], 457
  %v6926 = vld [vmem:[%s6925] ss:$2 sm:$0xff]
  %s6927 = scalar_lea.vmem [#allocation2], 473
  %v6928 = vld [vmem:[%s6927] ss:$2 sm:$0x7]
  %v6929 = vmax.f32 %v6914, %v6918
  %v6930 = vmax.f32 %v6916, %v6920
  %v6931 = vmax.f32 %v6922, %v6926
  %v6932 = vmax.f32 %v6924, %v6928
  %v6933 = vmax.f32 %v6929, %v6931
  %v6934 = vmax.f32 %v6930, %v6932
  %6935 = vst.msk [vmem:[#allocation3 + $0x90] sm:$0xff] %vm6606, %v6933
  %6936 = vst.msk [vmem:[#allocation3 + $0x98] sm:$0x7] %vm6719, %v6934
  %s6937 = scalar_lea.vmem [#allocation2], 480
  %v6938 = vld [vmem:[%s6937] ss:$2 sm:$0xff]
  %s6939 = scalar_lea.vmem [#allocation2], 496
  %v6940 = vld [vmem:[%s6939] ss:$2 sm:$0x7]
  %s6941 = scalar_lea.vmem [#allocation2], 481
  %v6942 = vld [vmem:[%s6941] ss:$2 sm:$0xff]
  %s6943 = scalar_lea.vmem [#allocation2], 497
  %v6944 = vld [vmem:[%s6943] ss:$2 sm:$0x7]
  %s6945 = scalar_lea.vmem [#allocation2], 504
  %v6946 = vld [vmem:[%s6945] ss:$2 sm:$0xff]
  %s6947 = scalar_lea.vmem [#allocation2], 520
  %v6948 = vld [vmem:[%s6947] ss:$2 sm:$0x7]
  %s6949 = scalar_lea.vmem [#allocation2], 505
  %v6950 = vld [vmem:[%s6949] ss:$2 sm:$0xff]
  %s6951 = scalar_lea.vmem [#allocation2], 521
  %v6952 = vld [vmem:[%s6951] ss:$2 sm:$0x7]
  %v6953 = vmax.f32 %v6938, %v6942
  %v6954 = vmax.f32 %v6940, %v6944
  %v6955 = vmax.f32 %v6946, %v6950
  %v6956 = vmax.f32 %v6948, %v6952
  %v6957 = vmax.f32 %v6953, %v6955
  %v6958 = vmax.f32 %v6954, %v6956
  %6959 = vst.msk [vmem:[#allocation3 + $0xa0] sm:$0xff] %vm6606, %v6957
  %6960 = vst.msk [vmem:[#allocation3 + $0xa8] sm:$0x7] %vm6719, %v6958
  %v6961 = vld [vmem:[#allocation3] sm:$0xff]
  %v6962 = vld [vmem:[#allocation3 + $0x8] sm:$0xff]
  %v6963 = vld [vmem:[#allocation3 + $0x10] sm:$0xff]
  %v6964 = vld [vmem:[#allocation3 + $0x18] sm:$0xff]
  %v6965 = vld [vmem:[#allocation3 + $0x20] sm:$0xff]
  %v6966 = vld [vmem:[#allocation3 + $0x28] sm:$0xff]
  %v6967 = vld [vmem:[#allocation3 + $0x30] sm:$0xff]
  %v6968 = vld [vmem:[#allocation3 + $0x38] sm:$0xff]
  %v6969 = vld [vmem:[#allocation3 + $0x40] sm:$0xff]
  %v6970 = vld [vmem:[#allocation3 + $0x48] sm:$0xff]
  %v6971 = vld [vmem:[#allocation3 + $0x50] sm:$0xff]
  %v6972 = vld [vmem:[#allocation3 + $0x58] sm:$0xff]
  %v6973 = vld [vmem:[#allocation3 + $0x60] sm:$0xff]
  %v6974 = vld [vmem:[#allocation3 + $0x68] sm:$0xff]
  %v6975 = vld [vmem:[#allocation3 + $0x70] sm:$0xff]
  %v6976 = vld [vmem:[#allocation3 + $0x78] sm:$0xff]
  %v6977 = vld [vmem:[#allocation3 + $0x80] sm:$0xff]
  %v6978 = vld [vmem:[#allocation3 + $0x88] sm:$0xff]
  %v6979 = vld [vmem:[%s3] sm:$0xff]
  %v6980 = vld [vmem:[%s3 + $0x8] sm:$0xff]
  %v6981 = vld [vmem:[%s3 + $0x10] sm:$0xff]
  %v6982 = vld [vmem:[%s3 + $0x18] sm:$0xff]
  %v6983 = vld [vmem:[%s3 + $0x20] sm:$0xff]
  %v6984 = vld [vmem:[%s3 + $0x28] sm:$0xff]
  %v6985 = vld [vmem:[%s3 + $0x30] sm:$0xff]
  %v6986 = vld [vmem:[%s3 + $0x38] sm:$0xff]
  %v6987 = vld [vmem:[#allocation3 + $0x1] sm:$0xff]
  %v6988 = vld [vmem:[#allocation3 + $0x9] sm:$0xff]
  %v6989 = vld [vmem:[#allocation3 + $0x11] sm:$0xff]
  %v6990 = vld [vmem:[#allocation3 + $0x19] sm:$0xff]
  %v6991 = vld [vmem:[#allocation3 + $0x21] sm:$0xff]
  %v6992 = vld [vmem:[#allocation3 + $0x29] sm:$0xff]
  %v6993 = vld [vmem:[#allocation3 + $0x31] sm:$0xff]
  %v6994 = vld [vmem:[#allocation3 + $0x39] sm:$0xff]
  %v6995 = vld [vmem:[#allocation3 + $0x41] sm:$0xff]
  %v6996 = vld [vmem:[#allocation3 + $0x49] sm:$0xff]
  %v6997 = vld [vmem:[#allocation3 + $0x51] sm:$0xff]
  %v6998 = vld [vmem:[#allocation3 + $0x59] sm:$0xff]
  %v6999 = vld [vmem:[#allocation3 + $0x61] sm:$0xff]
  %v7000 = vld [vmem:[#allocation3 + $0x69] sm:$0xff]
  %v7001 = vld [vmem:[#allocation3 + $0x71] sm:$0xff]
  %v7002 = vld [vmem:[#allocation3 + $0x79] sm:$0xff]
  %v7003 = vld [vmem:[#allocation3 + $0x81] sm:$0xff]
  %v7004 = vld [vmem:[#allocation3 + $0x89] sm:$0xff]
  %s7005 = scalar_lea.vmem %s3, 64
  %v7006 = vld [vmem:[%s7005] sm:$0xff]
  %v7007 = vld [vmem:[%s7005 + $0x8] sm:$0xff]
  %v7008 = vld [vmem:[%s7005 + $0x10] sm:$0xff]
  %v7009 = vld [vmem:[%s7005 + $0x18] sm:$0xff]
  %v7010 = vld [vmem:[%s7005 + $0x20] sm:$0xff]
  %v7011 = vld [vmem:[%s7005 + $0x28] sm:$0xff]
  %v7012 = vld [vmem:[%s7005 + $0x30] sm:$0xff]
  %v7013 = vld [vmem:[%s7005 + $0x38] sm:$0xff]
  %v7015 = vsel %vm6606, %v6987, 0
  %v7018 = vsel %vm6606, %v6988, 0
  %v7021 = vsel %vm6606, %v6989, 0
  %v7024 = vsel %vm6606, %v6990, 0
  %v7027 = vsel %vm6606, %v6991, 0
  %v7030 = vsel %vm6606, %v6992, 0
  %v7033 = vsel %vm6606, %v6993, 0
  %v7036 = vsel %vm6606, %v6994, 0
  %v7039 = vsel %vm6606, %v6995, 0
  %v7042 = vsel %vm6606, %v6996, 0
  %v7045 = vsel %vm6606, %v6997, 0
  %v7048 = vsel %vm6606, %v6998, 0
  %v7051 = vsel %vm6606, %v6999, 0
  %v7054 = vsel %vm6606, %v7000, 0
  %v7057 = vsel %vm6606, %v7001, 0
  %v7060 = vsel %vm6606, %v7002, 0
  %v7063 = vsel %vm6606, %v7003, 0
  %v7066 = vsel %vm6606, %v7004, 0
  %7068 = vmatprep.subr.mxu0 0.0
  %7069 = vmatpush1.msra.mxu0 %v7006
  %7070 = vmatprep.subr.mxu0 0.0
  %7071 = vmatpush1.msra.mxu0 %v7007
  %7072 = vmatprep.subr.mxu0 0.0
  %7073 = vmatpush1.msra.mxu0 %v7008
  %7074 = vmatprep.subr.mxu0 0.0
  %7075 = vmatpush1.msra.mxu0 %v7009
  %7076 = vmatprep.subr.mxu0 0.0
  %7077 = vmatpush1.msra.mxu0 %v7010
  %7078 = vmatprep.subr.mxu0 0.0
  %7079 = vmatpush1.msra.mxu0 %v7011
  %7080 = vmatprep.subr.mxu0 0.0
  %7081 = vmatpush1.msra.mxu0 %v7012
  %7082 = vmatprep.subr.mxu0 0.0
  %7083 = vmatpush1.msra.mxu0 %v7013
  %7084 = vmatprep.subr.mxu0 0.0
  %7085 = vmatpush1.msra.mxu0 0.0
  %7086 = vmatprep.subr.mxu0 0.0
  %7087 = vmatpush1.msra.mxu0 0.0
  %7088 = vmatprep.subr.mxu0 0.0
  %7089 = vmatpush1.msra.mxu0 0.0
  %7090 = vmatprep.subr.mxu0 0.0
  %7091 = vmatpush1.msra.mxu0 0.0
  %7092 = vmatprep.subr.mxu0 0.0
  %7093 = vmatpush1.msra.mxu0 0.0
  %7094 = vmatprep.subr.mxu0 0.0
  %7095 = vmatpush1.msra.mxu0 0.0
  %7096 = vmatprep.subr.mxu0 0.0
  %7097 = vmatpush1.msra.mxu0 0.0
  %7098 = vmatprep.subr.mxu0 0.0
  %7099 = vmatpush1.msra.mxu0 0.0
  %7100 = vmatprep.subr.mxu0 0.0
  %7101 = vmatpush1.msra.mxu0 0.0
  %7102 = vmatprep.subr.mxu0 0.0
  %7103 = vmatpush1.msra.mxu0 0.0
  %7104 = vmatprep.subr.mxu0 0.0
  %7105 = vmatpush1.msra.mxu0 0.0
  %7106 = vmatprep.subr.mxu0 0.0
  %7107 = vmatpush1.msra.mxu0 0.0
  %7108 = vmatprep.subr.mxu0 0.0
  %7109 = vmatpush1.msra.mxu0 0.0
  %7110 = vmatprep.subr.mxu0 0.0
  %7111 = vmatpush1.msra.mxu0 0.0
  %7112 = vmatprep.subr.mxu0 0.0
  %7113 = vmatpush1.msra.mxu0 0.0
  %7114 = vmatprep.subr.mxu0 0.0
  %7115 = vmatpush1.msra.mxu0 0.0
  %7116 = vmatprep.subr.mxu0 0.0
  %7117 = vmatpush1.msra.mxu0 0.0
  %7118 = vmatprep.subr.mxu0 0.0
  %7119 = vmatpush1.msra.mxu0 0.0
  %7120 = vmatprep.subr.mxu0 0.0
  %7121 = vmatpush1.msra.mxu0 0.0
  %7122 = vmatprep.subr.mxu0 0.0
  %7123 = vmatpush1.msra.mxu0 0.0
  %7124 = vmatprep.subr.mxu0 0.0
  %7125 = vmatpush1.msra.mxu0 0.0
  %7126 = vmatprep.subr.mxu0 0.0
  %7127 = vmatpush1.msra.mxu0 0.0
  %7128 = vmatprep.subr.mxu0 0.0
  %7129 = vmatpush1.msra.mxu0 0.0
  %7130 = vmatprep.subr.mxu0 0.0
  %7131 = vmatpush1.msra.mxu0 0.0
  %7132 = vmatprep.mubr.f32.mxu0 0.0
  %7133 = vmatmul.mubr.f32.gmra.mrb[0].mxu0 %v7015
  %v7134 = vpop.f32.mrb[0].mxu0
  %v7135 = vadd.f32 0.0, %v7134
  %v7136 = vpop.f32.mrb[0].mxu0
  %7137 = vmatprep.mubr.f32.mxu0 0.0
  %7138 = vmatmul.mubr.f32.gmra.mrb[0].mxu0 %v7018
  %v7139 = vpop.f32.mrb[0].mxu0
  %v7140 = vadd.f32 0.0, %v7139
  %v7141 = vpop.f32.mrb[0].mxu0
  %7142 = vmatprep.mubr.f32.mxu0 0.0
  %7143 = vmatmul.mubr.f32.gmra.mrb[0].mxu0 %v7021
  %v7144 = vpop.f32.mrb[0].mxu0
  %v7145 = vadd.f32 0.0, %v7144
  %v7146 = vpop.f32.mrb[0].mxu0
  %7147 = vmatprep.mubr.f32.mxu0 0.0
  %7148 = vmatmul.mubr.f32.gmra.mrb[0].mxu0 %v7024
  %v7149 = vpop.f32.mrb[0].mxu0
  %v7150 = vadd.f32 0.0, %v7149
  %v7151 = vpop.f32.mrb[0].mxu0
  %7152 = vmatprep.mubr.f32.mxu0 0.0
  %7153 = vmatmul.mubr.f32.gmra.mrb[0].mxu0 %v7027
  %v7154 = vpop.f32.mrb[0].mxu0
  %v7155 = vadd.f32 0.0, %v7154
  %v7156 = vpop.f32.mrb[0].mxu0
  %7157 = vmatprep.mubr.f32.mxu0 0.0
  %7158 = vmatmul.mubr.f32.gmra.mrb[0].mxu0 %v7030
  %v7159 = vpop.f32.mrb[0].mxu0
  %v7160 = vadd.f32 0.0, %v7159
  %v7161 = vpop.f32.mrb[0].mxu0
  %7162 = vmatprep.mubr.f32.mxu0 0.0
  %7163 = vmatmul.mubr.f32.gmra.mrb[0].mxu0 %v7033
  %v7164 = vpop.f32.mrb[0].mxu0
  %v7165 = vadd.f32 0.0, %v7164
  %v7166 = vpop.f32.mrb[0].mxu0
  %7167 = vmatprep.mubr.f32.mxu0 0.0
  %7168 = vmatmul.mubr.f32.gmra.mrb[0].mxu0 %v7036
  %v7169 = vpop.f32.mrb[0].mxu0
  %v7170 = vadd.f32 0.0, %v7169
  %v7171 = vpop.f32.mrb[0].mxu0
  %7172 = vmatprep.mubr.f32.mxu0 0.0
  %7173 = vmatmul.mubr.f32.gmra.mrb[0].mxu0 %v7039
  %v7174 = vpop.f32.mrb[0].mxu0
  %v7175 = vadd.f32 0.0, %v7174
  %v7176 = vpop.f32.mrb[0].mxu0
  %7177 = vmatprep.mubr.f32.mxu0 0.0
  %7178 = vmatmul.mubr.f32.gmra.mrb[0].mxu0 %v7042
  %v7179 = vpop.f32.mrb[0].mxu0
  %v7180 = vadd.f32 0.0, %v7179
  %v7181 = vpop.f32.mrb[0].mxu0
  %7182 = vmatprep.mubr.f32.mxu0 0.0
  %7183 = vmatmul.mubr.f32.gmra.mrb[0].mxu0 %v7045
  %v7184 = vpop.f32.mrb[0].mxu0
  %v7185 = vadd.f32 0.0, %v7184
  %v7186 = vpop.f32.mrb[0].mxu0
  %7187 = vmatprep.mubr.f32.mxu0 0.0
  %7188 = vmatmul.mubr.f32.gmra.mrb[0].mxu0 %v7048
  %v7189 = vpop.f32.mrb[0].mxu0
  %v7190 = vadd.f32 0.0, %v7189
  %v7191 = vpop.f32.mrb[0].mxu0
  %7192 = vmatprep.mubr.f32.mxu0 0.0
  %7193 = vmatmul.mubr.f32.gmra.mrb[0].mxu0 %v7051
  %v7194 = vpop.f32.mrb[0].mxu0
  %v7195 = vadd.f32 0.0, %v7194
  %v7196 = vpop.f32.mrb[0].mxu0
  %7197 = vmatprep.mubr.f32.mxu0 0.0
  %7198 = vmatmul.mubr.f32.gmra.mrb[0].mxu0 %v7054
  %v7199 = vpop.f32.mrb[0].mxu0
  %v7200 = vadd.f32 0.0, %v7199
  %v7201 = vpop.f32.mrb[0].mxu0
  %7202 = vmatprep.mubr.f32.mxu0 0.0
  %7203 = vmatmul.mubr.f32.gmra.mrb[0].mxu0 %v7057
  %v7204 = vpop.f32.mrb[0].mxu0
  %v7205 = vadd.f32 0.0, %v7204
  %v7206 = vpop.f32.mrb[0].mxu0
  %7207 = vmatprep.mubr.f32.mxu0 0.0
  %7208 = vmatmul.mubr.f32.gmra.mrb[0].mxu0 %v7060
  %v7209 = vpop.f32.mrb[0].mxu0
  %v7210 = vadd.f32 0.0, %v7209
  %v7211 = vpop.f32.mrb[0].mxu0
  %7212 = vmatprep.mubr.f32.mxu0 0.0
  %7213 = vmatmul.mubr.f32.gmra.mrb[0].mxu0 %v7063
  %v7214 = vpop.f32.mrb[0].mxu0
  %v7215 = vadd.f32 0.0, %v7214
  %v7216 = vpop.f32.mrb[0].mxu0
  %7217 = vmatprep.mubr.f32.mxu0 0.0
  %7218 = vmatmul.mubr.f32.gmra.mrb[0].mxu0 %v7066
  %v7219 = vpop.f32.mrb[0].mxu0
  %v7220 = vadd.f32 0.0, %v7219
  %v7221 = vpop.f32.mrb[0].mxu0
  %7222 = vdwg.mxu0
  %v7224 = vsel %vm6606, %v6961, 0
  %v7227 = vsel %vm6606, %v6962, 0
  %v7230 = vsel %vm6606, %v6963, 0
  %v7233 = vsel %vm6606, %v6964, 0
  %v7236 = vsel %vm6606, %v6965, 0
  %v7239 = vsel %vm6606, %v6966, 0
  %v7242 = vsel %vm6606, %v6967, 0
  %v7245 = vsel %vm6606, %v6968, 0
  %v7248 = vsel %vm6606, %v6969, 0
  %v7251 = vsel %vm6606, %v6970, 0
  %v7254 = vsel %vm6606, %v6971, 0
  %v7257 = vsel %vm6606, %v6972, 0
  %v7260 = vsel %vm6606, %v6973, 0
  %v7263 = vsel %vm6606, %v6974, 0
  %v7266 = vsel %vm6606, %v6975, 0
  %v7269 = vsel %vm6606, %v6976, 0
  %v7272 = vsel %vm6606, %v6977, 0
  %v7275 = vsel %vm6606, %v6978, 0
  %7277 = vmatprep.subr.mxu0 0.0
  %7278 = vmatpush1.msra.mxu0 %v6979
  %7279 = vmatprep.subr.mxu0 0.0
  %7280 = vmatpush1.msra.mxu0 %v6980
  %7281 = vmatprep.subr.mxu0 0.0
  %7282 = vmatpush1.msra.mxu0 %v6981
  %7283 = vmatprep.subr.mxu0 0.0
  %7284 = vmatpush1.msra.mxu0 %v6982
  %7285 = vmatprep.subr.mxu0 0.0
  %7286 = vmatpush1.msra.mxu0 %v6983
  %7287 = vmatprep.subr.mxu0 0.0
  %7288 = vmatpush1.msra.mxu0 %v6984
  %7289 = vmatprep.subr.mxu0 0.0
  %7290 = vmatpush1.msra.mxu0 %v6985
  %7291 = vmatprep.subr.mxu0 0.0
  %7292 = vmatpush1.msra.mxu0 %v6986
  %7293 = vmatprep.subr.mxu0 0.0
  %7294 = vmatpush1.msra.mxu0 0.0
  %7295 = vmatprep.subr.mxu0 0.0
  %7296 = vmatpush1.msra.mxu0 0.0
  %7297 = vmatprep.subr.mxu0 0.0
  %7298 = vmatpush1.msra.mxu0 0.0
  %7299 = vmatprep.subr.mxu0 0.0
  %7300 = vmatpush1.msra.mxu0 0.0
  %7301 = vmatprep.subr.mxu0 0.0
  %7302 = vmatpush1.msra.mxu0 0.0
  %7303 = vmatprep.subr.mxu0 0.0
  %7304 = vmatpush1.msra.mxu0 0.0
  %7305 = vmatprep.subr.mxu0 0.0
  %7306 = vmatpush1.msra.mxu0 0.0
  %7307 = vmatprep.subr.mxu0 0.0
  %7308 = vmatpush1.msra.mxu0 0.0
  %7309 = vmatprep.subr.mxu0 0.0
  %7310 = vmatpush1.msra.mxu0 0.0
  %7311 = vmatprep.subr.mxu0 0.0
  %7312 = vmatpush1.msra.mxu0 0.0
  %7313 = vmatprep.subr.mxu0 0.0
  %7314 = vmatpush1.msra.mxu0 0.0
  %7315 = vmatprep.subr.mxu0 0.0
  %7316 = vmatpush1.msra.mxu0 0.0
  %7317 = vmatprep.subr.mxu0 0.0
  %7318 = vmatpush1.msra.mxu0 0.0
  %7319 = vmatprep.subr.mxu0 0.0
  %7320 = vmatpush1.msra.mxu0 0.0
  %7321 = vmatprep.subr.mxu0 0.0
  %7322 = vmatpush1.msra.mxu0 0.0
  %7323 = vmatprep.subr.mxu0 0.0
  %7324 = vmatpush1.msra.mxu0 0.0
  %7325 = vmatprep.subr.mxu0 0.0
  %7326 = vmatpush1.msra.mxu0 0.0
  %7327 = vmatprep.subr.mxu0 0.0
  %7328 = vmatpush1.msra.mxu0 0.0
  %7329 = vmatprep.subr.mxu0 0.0
  %7330 = vmatpush1.msra.mxu0 0.0
  %7331 = vmatprep.subr.mxu0 0.0
  %7332 = vmatpush1.msra.mxu0 0.0
  %7333 = vmatprep.subr.mxu0 0.0
  %7334 = vmatpush1.msra.mxu0 0.0
  %7335 = vmatprep.subr.mxu0 0.0
  %7336 = vmatpush1.msra.mxu0 0.0
  %7337 = vmatprep.subr.mxu0 0.0
  %7338 = vmatpush1.msra.mxu0 0.0
  %7339 = vmatprep.subr.mxu0 0.0
  %7340 = vmatpush1.msra.mxu0 0.0
  %7341 = vmatprep.mubr.f32.mxu0 0.0
  %7342 = vmatmul.mubr.f32.gmra.mrb[0].mxu0 %v7224
  %v7343 = vpop.f32.mrb[0].mxu0
  %v7344 = vadd.f32 %v7135, %v7343
  %v7345 = vpop.f32.mrb[0].mxu0
  %7346 = vmatprep.mubr.f32.mxu0 0.0
  %7347 = vmatmul.mubr.f32.gmra.mrb[0].mxu0 %v7227
  %v7348 = vpop.f32.mrb[0].mxu0
  %v7349 = vadd.f32 %v7140, %v7348
  %v7350 = vpop.f32.mrb[0].mxu0
  %7351 = vmatprep.mubr.f32.mxu0 0.0
  %7352 = vmatmul.mubr.f32.gmra.mrb[0].mxu0 %v7230
  %v7353 = vpop.f32.mrb[0].mxu0
  %v7354 = vadd.f32 %v7145, %v7353
  %v7355 = vpop.f32.mrb[0].mxu0
  %7356 = vmatprep.mubr.f32.mxu0 0.0
  %7357 = vmatmul.mubr.f32.gmra.mrb[0].mxu0 %v7233
  %v7358 = vpop.f32.mrb[0].mxu0
  %v7359 = vadd.f32 %v7150, %v7358
  %v7360 = vpop.f32.mrb[0].mxu0
  %7361 = vmatprep.mubr.f32.mxu0 0.0
  %7362 = vmatmul.mubr.f32.gmra.mrb[0].mxu0 %v7236
  %v7363 = vpop.f32.mrb[0].mxu0
  %v7364 = vadd.f32 %v7155, %v7363
  %v7365 = vpop.f32.mrb[0].mxu0
  %7366 = vmatprep.mubr.f32.mxu0 0.0
  %7367 = vmatmul.mubr.f32.gmra.mrb[0].mxu0 %v7239
  %v7368 = vpop.f32.mrb[0].mxu0
  %v7369 = vadd.f32 %v7160, %v7368
  %v7370 = vpop.f32.mrb[0].mxu0
  %7371 = vmatprep.mubr.f32.mxu0 0.0
  %7372 = vmatmul.mubr.f32.gmra.mrb[0].mxu0 %v7242
  %v7373 = vpop.f32.mrb[0].mxu0
  %v7374 = vadd.f32 %v7165, %v7373
  %v7375 = vpop.f32.mrb[0].mxu0
  %7376 = vmatprep.mubr.f32.mxu0 0.0
  %7377 = vmatmul.mubr.f32.gmra.mrb[0].mxu0 %v7245
  %v7378 = vpop.f32.mrb[0].mxu0
  %v7379 = vadd.f32 %v7170, %v7378
  %v7380 = vpop.f32.mrb[0].mxu0
  %7381 = vmatprep.mubr.f32.mxu0 0.0
  %7382 = vmatmul.mubr.f32.gmra.mrb[0].mxu0 %v7248
  %v7383 = vpop.f32.mrb[0].mxu0
  %v7384 = vadd.f32 %v7175, %v7383
  %v7385 = vpop.f32.mrb[0].mxu0
  %7386 = vmatprep.mubr.f32.mxu0 0.0
  %7387 = vmatmul.mubr.f32.gmra.mrb[0].mxu0 %v7251
  %v7388 = vpop.f32.mrb[0].mxu0
  %v7389 = vadd.f32 %v7180, %v7388
  %v7390 = vpop.f32.mrb[0].mxu0
  %7391 = vmatprep.mubr.f32.mxu0 0.0
  %7392 = vmatmul.mubr.f32.gmra.mrb[0].mxu0 %v7254
  %v7393 = vpop.f32.mrb[0].mxu0
  %v7394 = vadd.f32 %v7185, %v7393
  %v7395 = vpop.f32.mrb[0].mxu0
  %7396 = vmatprep.mubr.f32.mxu0 0.0
  %7397 = vmatmul.mubr.f32.gmra.mrb[0].mxu0 %v7257
  %v7398 = vpop.f32.mrb[0].mxu0
  %v7399 = vadd.f32 %v7190, %v7398
  %v7400 = vpop.f32.mrb[0].mxu0
  %7401 = vmatprep.mubr.f32.mxu0 0.0
  %7402 = vmatmul.mubr.f32.gmra.mrb[0].mxu0 %v7260
  %v7403 = vpop.f32.mrb[0].mxu0
  %v7404 = vadd.f32 %v7195, %v7403
  %v7405 = vpop.f32.mrb[0].mxu0
  %7406 = vmatprep.mubr.f32.mxu0 0.0
  %7407 = vmatmul.mubr.f32.gmra.mrb[0].mxu0 %v7263
  %v7408 = vpop.f32.mrb[0].mxu0
  %v7409 = vadd.f32 %v7200, %v7408
  %v7410 = vpop.f32.mrb[0].mxu0
  %7411 = vmatprep.mubr.f32.mxu0 0.0
  %7412 = vmatmul.mubr.f32.gmra.mrb[0].mxu0 %v7266
  %v7413 = vpop.f32.mrb[0].mxu0
  %v7414 = vadd.f32 %v7205, %v7413
  %v7415 = vpop.f32.mrb[0].mxu0
  %7416 = vmatprep.mubr.f32.mxu0 0.0
  %7417 = vmatmul.mubr.f32.gmra.mrb[0].mxu0 %v7269
  %v7418 = vpop.f32.mrb[0].mxu0
  %v7419 = vadd.f32 %v7210, %v7418
  %v7420 = vpop.f32.mrb[0].mxu0
  %7421 = vmatprep.mubr.f32.mxu0 0.0
  %7422 = vmatmul.mubr.f32.gmra.mrb[0].mxu0 %v7272
  %v7423 = vpop.f32.mrb[0].mxu0
  %v7424 = vadd.f32 %v7215, %v7423
  %v7425 = vpop.f32.mrb[0].mxu0
  %7426 = vmatprep.mubr.f32.mxu0 0.0
  %7427 = vmatmul.mubr.f32.gmra.mrb[0].mxu0 %v7275
  %v7428 = vpop.f32.mrb[0].mxu0
  %v7429 = vadd.f32 %v7220, %v7428
  %v7430 = vpop.f32.mrb[0].mxu0
  %7431 = vdwg.mxu0
  %v7432 = vld [vmem:[#allocation3 + $0x2] sm:$0xff]
  %v7433 = vld [vmem:[#allocation3 + $0xa] sm:$0xff]
  %v7434 = vld [vmem:[#allocation3 + $0x12] sm:$0xff]
  %v7435 = vld [vmem:[#allocation3 + $0x1a] sm:$0xff]
  %v7436 = vld [vmem:[#allocation3 + $0x22] sm:$0xff]
  %v7437 = vld [vmem:[#allocation3 + $0x2a] sm:$0xff]
  %v7438 = vld [vmem:[#allocation3 + $0x32] sm:$0xff]
  %v7439 = vld [vmem:[#allocation3 + $0x3a] sm:$0xff]
  %v7440 = vld [vmem:[#allocation3 + $0x42] sm:$0xff]
  %v7441 = vld [vmem:[#allocation3 + $0x4a] sm:$0xff]
  %v7442 = vld [vmem:[#allocation3 + $0x52] sm:$0xff]
  %v7443 = vld [vmem:[#allocation3 + $0x5a] sm:$0xff]
  %v7444 = vld [vmem:[#allocation3 + $0x62] sm:$0xff]
  %v7445 = vld [vmem:[#allocation3 + $0x6a] sm:$0xff]
  %v7446 = vld [vmem:[#allocation3 + $0x72] sm:$0xff]
  %v7447 = vld [vmem:[#allocation3 + $0x7a] sm:$0xff]
  %v7448 = vld [vmem:[#allocation3 + $0x82] sm:$0xff]
  %v7449 = vld [vmem:[#allocation3 + $0x8a] sm:$0xff]
  %s7450 = scalar_lea.vmem %s3, 128
  %v7451 = vld [vmem:[%s7450] sm:$0xff]
  %v7452 = vld [vmem:[%s7450 + $0x8] sm:$0xff]
  %v7453 = vld [vmem:[%s7450 + $0x10] sm:$0xff]
  %v7454 = vld [vmem:[%s7450 + $0x18] sm:$0xff]
  %v7455 = vld [vmem:[%s7450 + $0x20] sm:$0xff]
  %v7456 = vld [vmem:[%s7450 + $0x28] sm:$0xff]
  %v7457 = vld [vmem:[%s7450 + $0x30] sm:$0xff]
  %v7458 = vld [vmem:[%s7450 + $0x38] sm:$0xff]
  %v7460 = vsel %vm6606, %v7432, 0
  %v7463 = vsel %vm6606, %v7433, 0
  %v7466 = vsel %vm6606, %v7434, 0
  %v7469 = vsel %vm6606, %v7435, 0
  %v7472 = vsel %vm6606, %v7436, 0
  %v7475 = vsel %vm6606, %v7437, 0
  %v7478 = vsel %vm6606, %v7438, 0
  %v7481 = vsel %vm6606, %v7439, 0
  %v7484 = vsel %vm6606, %v7440, 0
  %v7487 = vsel %vm6606, %v7441, 0
  %v7490 = vsel %vm6606, %v7442, 0
  %v7493 = vsel %vm6606, %v7443, 0
  %v7496 = vsel %vm6606, %v7444, 0
  %v7499 = vsel %vm6606, %v7445, 0
  %v7502 = vsel %vm6606, %v7446, 0
  %v7505 = vsel %vm6606, %v7447, 0
  %v7508 = vsel %vm6606, %v7448, 0
  %v7511 = vsel %vm6606, %v7449, 0
  %7513 = vmatprep.subr.mxu0 0.0
  %7514 = vmatpush1.msra.mxu0 %v7451
  %7515 = vmatprep.subr.mxu0 0.0
  %7516 = vmatpush1.msra.mxu0 %v7452
  %7517 = vmatprep.subr.mxu0 0.0
  %7518 = vmatpush1.msra.mxu0 %v7453
  %7519 = vmatprep.subr.mxu0 0.0
  %7520 = vmatpush1.msra.mxu0 %v7454
  %7521 = vmatprep.subr.mxu0 0.0
  %7522 = vmatpush1.msra.mxu0 %v7455
  %7523 = vmatprep.subr.mxu0 0.0
  %7524 = vmatpush1.msra.mxu0 %v7456
  %7525 = vmatprep.subr.mxu0 0.0
  %7526 = vmatpush1.msra.mxu0 %v7457
  %7527 = vmatprep.subr.mxu0 0.0
  %7528 = vmatpush1.msra.mxu0 %v7458
  %7529 = vmatprep.subr.mxu0 0.0
  %7530 = vmatpush1.msra.mxu0 0.0
  %7531 = vmatprep.subr.mxu0 0.0
  %7532 = vmatpush1.msra.mxu0 0.0
  %7533 = vmatprep.subr.mxu0 0.0
  %7534 = vmatpush1.msra.mxu0 0.0
  %7535 = vmatprep.subr.mxu0 0.0
  %7536 = vmatpush1.msra.mxu0 0.0
  %7537 = vmatprep.subr.mxu0 0.0
  %7538 = vmatpush1.msra.mxu0 0.0
  %7539 = vmatprep.subr.mxu0 0.0
  %7540 = vmatpush1.msra.mxu0 0.0
  %7541 = vmatprep.subr.mxu0 0.0
  %7542 = vmatpush1.msra.mxu0 0.0
  %7543 = vmatprep.subr.mxu0 0.0
  %7544 = vmatpush1.msra.mxu0 0.0
  %7545 = vmatprep.subr.mxu0 0.0
  %7546 = vmatpush1.msra.mxu0 0.0
  %7547 = vmatprep.subr.mxu0 0.0
  %7548 = vmatpush1.msra.mxu0 0.0
  %7549 = vmatprep.subr.mxu0 0.0
  %7550 = vmatpush1.msra.mxu0 0.0
  %7551 = vmatprep.subr.mxu0 0.0
  %7552 = vmatpush1.msra.mxu0 0.0
  %7553 = vmatprep.subr.mxu0 0.0
  %7554 = vmatpush1.msra.mxu0 0.0
  %7555 = vmatprep.subr.mxu0 0.0
  %7556 = vmatpush1.msra.mxu0 0.0
  %7557 = vmatprep.subr.mxu0 0.0
  %7558 = vmatpush1.msra.mxu0 0.0
  %7559 = vmatprep.subr.mxu0 0.0
  %7560 = vmatpush1.msra.mxu0 0.0
  %7561 = vmatprep.subr.mxu0 0.0
  %7562 = vmatpush1.msra.mxu0 0.0
  %7563 = vmatprep.subr.mxu0 0.0
  %7564 = vmatpush1.msra.mxu0 0.0
  %7565 = vmatprep.subr.mxu0 0.0
  %7566 = vmatpush1.msra.mxu0 0.0
  %7567 = vmatprep.subr.mxu0 0.0
  %7568 = vmatpush1.msra.mxu0 0.0
  %7569 = vmatprep.subr.mxu0 0.0
  %7570 = vmatpush1.msra.mxu0 0.0
  %7571 = vmatprep.subr.mxu0 0.0
  %7572 = vmatpush1.msra.mxu0 0.0
  %7573 = vmatprep.subr.mxu0 0.0
  %7574 = vmatpush1.msra.mxu0 0.0
  %7575 = vmatprep.subr.mxu0 0.0
  %7576 = vmatpush1.msra.mxu0 0.0
  %7577 = vmatprep.mubr.f32.mxu0 0.0
  %7578 = vmatmul.mubr.f32.gmra.mrb[0].mxu0 %v7460
  %v7579 = vpop.f32.mrb[0].mxu0
  %v7580 = vadd.f32 0.0, %v7579
  %v7581 = vpop.f32.mrb[0].mxu0
  %7582 = vmatprep.mubr.f32.mxu0 0.0
  %7583 = vmatmul.mubr.f32.gmra.mrb[0].mxu0 %v7463
  %v7584 = vpop.f32.mrb[0].mxu0
  %v7585 = vadd.f32 0.0, %v7584
  %v7586 = vpop.f32.mrb[0].mxu0
  %7587 = vmatprep.mubr.f32.mxu0 0.0
  %7588 = vmatmul.mubr.f32.gmra.mrb[0].mxu0 %v7466
  %v7589 = vpop.f32.mrb[0].mxu0
  %v7590 = vadd.f32 0.0, %v7589
  %v7591 = vpop.f32.mrb[0].mxu0
  %7592 = vmatprep.mubr.f32.mxu0 0.0
  %7593 = vmatmul.mubr.f32.gmra.mrb[0].mxu0 %v7469
  %v7594 = vpop.f32.mrb[0].mxu0
  %v7595 = vadd.f32 0.0, %v7594
  %v7596 = vpop.f32.mrb[0].mxu0
  %7597 = vmatprep.mubr.f32.mxu0 0.0
  %7598 = vmatmul.mubr.f32.gmra.mrb[0].mxu0 %v7472
  %v7599 = vpop.f32.mrb[0].mxu0
  %v7600 = vadd.f32 0.0, %v7599
  %v7601 = vpop.f32.mrb[0].mxu0
  %7602 = vmatprep.mubr.f32.mxu0 0.0
  %7603 = vmatmul.mubr.f32.gmra.mrb[0].mxu0 %v7475
  %v7604 = vpop.f32.mrb[0].mxu0
  %v7605 = vadd.f32 0.0, %v7604
  %v7606 = vpop.f32.mrb[0].mxu0
  %7607 = vmatprep.mubr.f32.mxu0 0.0
  %7608 = vmatmul.mubr.f32.gmra.mrb[0].mxu0 %v7478
  %v7609 = vpop.f32.mrb[0].mxu0
  %v7610 = vadd.f32 0.0, %v7609
  %v7611 = vpop.f32.mrb[0].mxu0
  %7612 = vmatprep.mubr.f32.mxu0 0.0
  %7613 = vmatmul.mubr.f32.gmra.mrb[0].mxu0 %v7481
  %v7614 = vpop.f32.mrb[0].mxu0
  %v7615 = vadd.f32 0.0, %v7614
  %v7616 = vpop.f32.mrb[0].mxu0
  %7617 = vmatprep.mubr.f32.mxu0 0.0
  %7618 = vmatmul.mubr.f32.gmra.mrb[0].mxu0 %v7484
  %v7619 = vpop.f32.mrb[0].mxu0
  %v7620 = vadd.f32 0.0, %v7619
  %v7621 = vpop.f32.mrb[0].mxu0
  %7622 = vmatprep.mubr.f32.mxu0 0.0
  %7623 = vmatmul.mubr.f32.gmra.mrb[0].mxu0 %v7487
  %v7624 = vpop.f32.mrb[0].mxu0
  %v7625 = vadd.f32 0.0, %v7624
  %v7626 = vpop.f32.mrb[0].mxu0
  %7627 = vmatprep.mubr.f32.mxu0 0.0
  %7628 = vmatmul.mubr.f32.gmra.mrb[0].mxu0 %v7490
  %v7629 = vpop.f32.mrb[0].mxu0
  %v7630 = vadd.f32 0.0, %v7629
  %v7631 = vpop.f32.mrb[0].mxu0
  %7632 = vmatprep.mubr.f32.mxu0 0.0
  %7633 = vmatmul.mubr.f32.gmra.mrb[0].mxu0 %v7493
  %v7634 = vpop.f32.mrb[0].mxu0
  %v7635 = vadd.f32 0.0, %v7634
  %v7636 = vpop.f32.mrb[0].mxu0
  %7637 = vmatprep.mubr.f32.mxu0 0.0
  %7638 = vmatmul.mubr.f32.gmra.mrb[0].mxu0 %v7496
  %v7639 = vpop.f32.mrb[0].mxu0
  %v7640 = vadd.f32 0.0, %v7639
  %v7641 = vpop.f32.mrb[0].mxu0
  %7642 = vmatprep.mubr.f32.mxu0 0.0
  %7643 = vmatmul.mubr.f32.gmra.mrb[0].mxu0 %v7499
  %v7644 = vpop.f32.mrb[0].mxu0
  %v7645 = vadd.f32 0.0, %v7644
  %v7646 = vpop.f32.mrb[0].mxu0
  %7647 = vmatprep.mubr.f32.mxu0 0.0
  %7648 = vmatmul.mubr.f32.gmra.mrb[0].mxu0 %v7502
  %v7649 = vpop.f32.mrb[0].mxu0
  %v7650 = vadd.f32 0.0, %v7649
  %v7651 = vpop.f32.mrb[0].mxu0
  %7652 = vmatprep.mubr.f32.mxu0 0.0
  %7653 = vmatmul.mubr.f32.gmra.mrb[0].mxu0 %v7505
  %v7654 = vpop.f32.mrb[0].mxu0
  %v7655 = vadd.f32 0.0, %v7654
  %v7656 = vpop.f32.mrb[0].mxu0
  %7657 = vmatprep.mubr.f32.mxu0 0.0
  %7658 = vmatmul.mubr.f32.gmra.mrb[0].mxu0 %v7508
  %v7659 = vpop.f32.mrb[0].mxu0
  %v7660 = vadd.f32 0.0, %v7659
  %v7661 = vpop.f32.mrb[0].mxu0
  %7662 = vmatprep.mubr.f32.mxu0 0.0
  %7663 = vmatmul.mubr.f32.gmra.mrb[0].mxu0 %v7511
  %v7664 = vpop.f32.mrb[0].mxu0
  %v7665 = vadd.f32 0.0, %v7664
  %v7666 = vpop.f32.mrb[0].mxu0
  %7667 = vdwg.mxu0
  %v7668 = vadd.f32 %v7344, %v7580
  %v7669 = vadd.f32 %v7349, %v7585
  %v7670 = vadd.f32 %v7354, %v7590
  %v7671 = vadd.f32 %v7359, %v7595
  %v7672 = vadd.f32 %v7364, %v7600
  %v7673 = vadd.f32 %v7369, %v7605
  %v7674 = vadd.f32 %v7374, %v7610
  %v7675 = vadd.f32 %v7379, %v7615
  %v7676 = vadd.f32 %v7384, %v7620
  %v7677 = vadd.f32 %v7389, %v7625
  %v7678 = vadd.f32 %v7394, %v7630
  %v7679 = vadd.f32 %v7399, %v7635
  %v7680 = vadd.f32 %v7404, %v7640
  %v7681 = vadd.f32 %v7409, %v7645
  %v7682 = vadd.f32 %v7414, %v7650
  %v7683 = vadd.f32 %v7419, %v7655
  %v7684 = vadd.f32 %v7424, %v7660
  %v7685 = vadd.f32 %v7429, %v7665
  %v7686 = vld [vmem:[#allocation3 + $0x10] sm:$0xff]
  %v7687 = vld [vmem:[#allocation3 + $0x18] sm:$0xff]
  %v7688 = vld [vmem:[#allocation3 + $0x20] sm:$0xff]
  %v7689 = vld [vmem:[#allocation3 + $0x28] sm:$0xff]
  %v7690 = vld [vmem:[#allocation3 + $0x30] sm:$0xff]
  %v7691 = vld [vmem:[#allocation3 + $0x38] sm:$0xff]
  %v7692 = vld [vmem:[#allocation3 + $0x40] sm:$0xff]
  %v7693 = vld [vmem:[#allocation3 + $0x48] sm:$0xff]
  %v7694 = vld [vmem:[#allocation3 + $0x50] sm:$0xff]
  %v7695 = vld [vmem:[#allocation3 + $0x58] sm:$0xff]
  %v7696 = vld [vmem:[#allocation3 + $0x60] sm:$0xff]
  %v7697 = vld [vmem:[#allocation3 + $0x68] sm:$0xff]
  %v7698 = vld [vmem:[#allocation3 + $0x70] sm:$0xff]
  %v7699 = vld [vmem:[#allocation3 + $0x78] sm:$0xff]
  %v7700 = vld [vmem:[#allocation3 + $0x80] sm:$0xff]
  %v7701 = vld [vmem:[#allocation3 + $0x88] sm:$0xff]
  %v7702 = vld [vmem:[#allocation3 + $0x90] sm:$0xff]
  %v7703 = vld [vmem:[#allocation3 + $0x98] sm:$0xff]
  %s7704 = scalar_lea.vmem %s3, 192
  %v7705 = vld [vmem:[%s7704] sm:$0xff]
  %v7706 = vld [vmem:[%s7704 + $0x8] sm:$0xff]
  %v7707 = vld [vmem:[%s7704 + $0x10] sm:$0xff]
  %v7708 = vld [vmem:[%s7704 + $0x18] sm:$0xff]
  %v7709 = vld [vmem:[%s7704 + $0x20] sm:$0xff]
  %v7710 = vld [vmem:[%s7704 + $0x28] sm:$0xff]
  %v7711 = vld [vmem:[%s7704 + $0x30] sm:$0xff]
  %v7712 = vld [vmem:[%s7704 + $0x38] sm:$0xff]
  %v7714 = vsel %vm6606, %v7686, 0
  %v7717 = vsel %vm6606, %v7687, 0
  %v7720 = vsel %vm6606, %v7688, 0
  %v7723 = vsel %vm6606, %v7689, 0
  %v7726 = vsel %vm6606, %v7690, 0
  %v7729 = vsel %vm6606, %v7691, 0
  %v7732 = vsel %vm6606, %v7692, 0
  %v7735 = vsel %vm6606, %v7693, 0
  %v7738 = vsel %vm6606, %v7694, 0
  %v7741 = vsel %vm6606, %v7695, 0
  %v7744 = vsel %vm6606, %v7696, 0
  %v7747 = vsel %vm6606, %v7697, 0
  %v7750 = vsel %vm6606, %v7698, 0
  %v7753 = vsel %vm6606, %v7699, 0
  %v7756 = vsel %vm6606, %v7700, 0
  %v7759 = vsel %vm6606, %v7701, 0
  %v7762 = vsel %vm6606, %v7702, 0
  %v7765 = vsel %vm6606, %v7703, 0
  %7767 = vmatprep.subr.mxu0 0.0
  %7768 = vmatpush1.msra.mxu0 %v7705
  %7769 = vmatprep.subr.mxu0 0.0
  %7770 = vmatpush1.msra.mxu0 %v7706
  %7771 = vmatprep.subr.mxu0 0.0
  %7772 = vmatpush1.msra.mxu0 %v7707
  %7773 = vmatprep.subr.mxu0 0.0
  %7774 = vmatpush1.msra.mxu0 %v7708
  %7775 = vmatprep.subr.mxu0 0.0
  %7776 = vmatpush1.msra.mxu0 %v7709
  %7777 = vmatprep.subr.mxu0 0.0
  %7778 = vmatpush1.msra.mxu0 %v7710
  %7779 = vmatprep.subr.mxu0 0.0
  %7780 = vmatpush1.msra.mxu0 %v7711
  %7781 = vmatprep.subr.mxu0 0.0
  %7782 = vmatpush1.msra.mxu0 %v7712
  %7783 = vmatprep.subr.mxu0 0.0
  %7784 = vmatpush1.msra.mxu0 0.0
  %7785 = vmatprep.subr.mxu0 0.0
  %7786 = vmatpush1.msra.mxu0 0.0
  %7787 = vmatprep.subr.mxu0 0.0
  %7788 = vmatpush1.msra.mxu0 0.0
  %7789 = vmatprep.subr.mxu0 0.0
  %7790 = vmatpush1.msra.mxu0 0.0
  %7791 = vmatprep.subr.mxu0 0.0
  %7792 = vmatpush1.msra.mxu0 0.0
  %7793 = vmatprep.subr.mxu0 0.0
  %7794 = vmatpush1.msra.mxu0 0.0
  %7795 = vmatprep.subr.mxu0 0.0
  %7796 = vmatpush1.msra.mxu0 0.0
  %7797 = vmatprep.subr.mxu0 0.0
  %7798 = vmatpush1.msra.mxu0 0.0
  %7799 = vmatprep.subr.mxu0 0.0
  %7800 = vmatpush1.msra.mxu0 0.0
  %7801 = vmatprep.subr.mxu0 0.0
  %7802 = vmatpush1.msra.mxu0 0.0
  %7803 = vmatprep.subr.mxu0 0.0
  %7804 = vmatpush1.msra.mxu0 0.0
  %7805 = vmatprep.subr.mxu0 0.0
  %7806 = vmatpush1.msra.mxu0 0.0
  %7807 = vmatprep.subr.mxu0 0.0
  %7808 = vmatpush1.msra.mxu0 0.0
  %7809 = vmatprep.subr.mxu0 0.0
  %7810 = vmatpush1.msra.mxu0 0.0
  %7811 = vmatprep.subr.mxu0 0.0
  %7812 = vmatpush1.msra.mxu0 0.0
  %7813 = vmatprep.subr.mxu0 0.0
  %7814 = vmatpush1.msra.mxu0 0.0
  %7815 = vmatprep.subr.mxu0 0.0
  %7816 = vmatpush1.msra.mxu0 0.0
  %7817 = vmatprep.subr.mxu0 0.0
  %7818 = vmatpush1.msra.mxu0 0.0
  %7819 = vmatprep.subr.mxu0 0.0
  %7820 = vmatpush1.msra.mxu0 0.0
  %7821 = vmatprep.subr.mxu0 0.0
  %7822 = vmatpush1.msra.mxu0 0.0
  %7823 = vmatprep.subr.mxu0 0.0
  %7824 = vmatpush1.msra.mxu0 0.0
  %7825 = vmatprep.subr.mxu0 0.0
  %7826 = vmatpush1.msra.mxu0 0.0
  %7827 = vmatprep.subr.mxu0 0.0
  %7828 = vmatpush1.msra.mxu0 0.0
  %7829 = vmatprep.subr.mxu0 0.0
  %7830 = vmatpush1.msra.mxu0 0.0
  %7831 = vmatprep.mubr.f32.mxu0 0.0
  %7832 = vmatmul.mubr.f32.gmra.mrb[0].mxu0 %v7714
  %v7833 = vpop.f32.mrb[0].mxu0
  %v7834 = vadd.f32 0.0, %v7833
  %v7835 = vpop.f32.mrb[0].mxu0
  %7836 = vmatprep.mubr.f32.mxu0 0.0
  %7837 = vmatmul.mubr.f32.gmra.mrb[0].mxu0 %v7717
  %v7838 = vpop.f32.mrb[0].mxu0
  %v7839 = vadd.f32 0.0, %v7838
  %v7840 = vpop.f32.mrb[0].mxu0
  %7841 = vmatprep.mubr.f32.mxu0 0.0
  %7842 = vmatmul.mubr.f32.gmra.mrb[0].mxu0 %v7720
  %v7843 = vpop.f32.mrb[0].mxu0
  %v7844 = vadd.f32 0.0, %v7843
  %v7845 = vpop.f32.mrb[0].mxu0
  %7846 = vmatprep.mubr.f32.mxu0 0.0
  %7847 = vmatmul.mubr.f32.gmra.mrb[0].mxu0 %v7723
  %v7848 = vpop.f32.mrb[0].mxu0
  %v7849 = vadd.f32 0.0, %v7848
  %v7850 = vpop.f32.mrb[0].mxu0
  %7851 = vmatprep.mubr.f32.mxu0 0.0
  %7852 = vmatmul.mubr.f32.gmra.mrb[0].mxu0 %v7726
  %v7853 = vpop.f32.mrb[0].mxu0
  %v7854 = vadd.f32 0.0, %v7853
  %v7855 = vpop.f32.mrb[0].mxu0
  %7856 = vmatprep.mubr.f32.mxu0 0.0
  %7857 = vmatmul.mubr.f32.gmra.mrb[0].mxu0 %v7729
  %v7858 = vpop.f32.mrb[0].mxu0
  %v7859 = vadd.f32 0.0, %v7858
  %v7860 = vpop.f32.mrb[0].mxu0
  %7861 = vmatprep.mubr.f32.mxu0 0.0
  %7862 = vmatmul.mubr.f32.gmra.mrb[0].mxu0 %v7732
  %v7863 = vpop.f32.mrb[0].mxu0
  %v7864 = vadd.f32 0.0, %v7863
  %v7865 = vpop.f32.mrb[0].mxu0
  %7866 = vmatprep.mubr.f32.mxu0 0.0
  %7867 = vmatmul.mubr.f32.gmra.mrb[0].mxu0 %v7735
  %v7868 = vpop.f32.mrb[0].mxu0
  %v7869 = vadd.f32 0.0, %v7868
  %v7870 = vpop.f32.mrb[0].mxu0
  %7871 = vmatprep.mubr.f32.mxu0 0.0
  %7872 = vmatmul.mubr.f32.gmra.mrb[0].mxu0 %v7738
  %v7873 = vpop.f32.mrb[0].mxu0
  %v7874 = vadd.f32 0.0, %v7873
  %v7875 = vpop.f32.mrb[0].mxu0
  %7876 = vmatprep.mubr.f32.mxu0 0.0
  %7877 = vmatmul.mubr.f32.gmra.mrb[0].mxu0 %v7741
  %v7878 = vpop.f32.mrb[0].mxu0
  %v7879 = vadd.f32 0.0, %v7878
  %v7880 = vpop.f32.mrb[0].mxu0
  %7881 = vmatprep.mubr.f32.mxu0 0.0
  %7882 = vmatmul.mubr.f32.gmra.mrb[0].mxu0 %v7744
  %v7883 = vpop.f32.mrb[0].mxu0
  %v7884 = vadd.f32 0.0, %v7883
  %v7885 = vpop.f32.mrb[0].mxu0
  %7886 = vmatprep.mubr.f32.mxu0 0.0
  %7887 = vmatmul.mubr.f32.gmra.mrb[0].mxu0 %v7747
  %v7888 = vpop.f32.mrb[0].mxu0
  %v7889 = vadd.f32 0.0, %v7888
  %v7890 = vpop.f32.mrb[0].mxu0
  %7891 = vmatprep.mubr.f32.mxu0 0.0
  %7892 = vmatmul.mubr.f32.gmra.mrb[0].mxu0 %v7750
  %v7893 = vpop.f32.mrb[0].mxu0
  %v7894 = vadd.f32 0.0, %v7893
  %v7895 = vpop.f32.mrb[0].mxu0
  %7896 = vmatprep.mubr.f32.mxu0 0.0
  %7897 = vmatmul.mubr.f32.gmra.mrb[0].mxu0 %v7753
  %v7898 = vpop.f32.mrb[0].mxu0
  %v7899 = vadd.f32 0.0, %v7898
  %v7900 = vpop.f32.mrb[0].mxu0
  %7901 = vmatprep.mubr.f32.mxu0 0.0
  %7902 = vmatmul.mubr.f32.gmra.mrb[0].mxu0 %v7756
  %v7903 = vpop.f32.mrb[0].mxu0
  %v7904 = vadd.f32 0.0, %v7903
  %v7905 = vpop.f32.mrb[0].mxu0
  %7906 = vmatprep.mubr.f32.mxu0 0.0
  %7907 = vmatmul.mubr.f32.gmra.mrb[0].mxu0 %v7759
  %v7908 = vpop.f32.mrb[0].mxu0
  %v7909 = vadd.f32 0.0, %v7908
  %v7910 = vpop.f32.mrb[0].mxu0
  %7911 = vmatprep.mubr.f32.mxu0 0.0
  %7912 = vmatmul.mubr.f32.gmra.mrb[0].mxu0 %v7762
  %v7913 = vpop.f32.mrb[0].mxu0
  %v7914 = vadd.f32 0.0, %v7913
  %v7915 = vpop.f32.mrb[0].mxu0
  %7916 = vmatprep.mubr.f32.mxu0 0.0
  %7917 = vmatmul.mubr.f32.gmra.mrb[0].mxu0 %v7765
  %v7918 = vpop.f32.mrb[0].mxu0
  %v7919 = vadd.f32 0.0, %v7918
  %v7920 = vpop.f32.mrb[0].mxu0
  %7921 = vdwg.mxu0
  %v7922 = vadd.f32 %v7668, %v7834
  %v7923 = vadd.f32 %v7669, %v7839
  %v7924 = vadd.f32 %v7670, %v7844
  %v7925 = vadd.f32 %v7671, %v7849
  %v7926 = vadd.f32 %v7672, %v7854
  %v7927 = vadd.f32 %v7673, %v7859
  %v7928 = vadd.f32 %v7674, %v7864
  %v7929 = vadd.f32 %v7675, %v7869
  %v7930 = vadd.f32 %v7676, %v7874
  %v7931 = vadd.f32 %v7677, %v7879
  %v7932 = vadd.f32 %v7678, %v7884
  %v7933 = vadd.f32 %v7679, %v7889
  %v7934 = vadd.f32 %v7680, %v7894
  %v7935 = vadd.f32 %v7681, %v7899
  %v7936 = vadd.f32 %v7682, %v7904
  %v7937 = vadd.f32 %v7683, %v7909
  %v7938 = vadd.f32 %v7684, %v7914
  %v7939 = vadd.f32 %v7685, %v7919
  %v7940 = vld [vmem:[#allocation3 + $0x11] sm:$0xff]
  %v7941 = vld [vmem:[#allocation3 + $0x19] sm:$0xff]
  %v7942 = vld [vmem:[#allocation3 + $0x21] sm:$0xff]
  %v7943 = vld [vmem:[#allocation3 + $0x29] sm:$0xff]
  %v7944 = vld [vmem:[#allocation3 + $0x31] sm:$0xff]
  %v7945 = vld [vmem:[#allocation3 + $0x39] sm:$0xff]
  %v7946 = vld [vmem:[#allocation3 + $0x41] sm:$0xff]
  %v7947 = vld [vmem:[#allocation3 + $0x49] sm:$0xff]
  %v7948 = vld [vmem:[#allocation3 + $0x51] sm:$0xff]
  %v7949 = vld [vmem:[#allocation3 + $0x59] sm:$0xff]
  %v7950 = vld [vmem:[#allocation3 + $0x61] sm:$0xff]
  %v7951 = vld [vmem:[#allocation3 + $0x69] sm:$0xff]
  %v7952 = vld [vmem:[#allocation3 + $0x71] sm:$0xff]
  %v7953 = vld [vmem:[#allocation3 + $0x79] sm:$0xff]
  %v7954 = vld [vmem:[#allocation3 + $0x81] sm:$0xff]
  %v7955 = vld [vmem:[#allocation3 + $0x89] sm:$0xff]
  %v7956 = vld [vmem:[#allocation3 + $0x91] sm:$0xff]
  %v7957 = vld [vmem:[#allocation3 + $0x99] sm:$0xff]
  %s7958 = scalar_lea.vmem %s3, 256
  %v7959 = vld [vmem:[%s7958] sm:$0xff]
  %v7960 = vld [vmem:[%s7958 + $0x8] sm:$0xff]
  %v7961 = vld [vmem:[%s7958 + $0x10] sm:$0xff]
  %v7962 = vld [vmem:[%s7958 + $0x18] sm:$0xff]
  %v7963 = vld [vmem:[%s7958 + $0x20] sm:$0xff]
  %v7964 = vld [vmem:[%s7958 + $0x28] sm:$0xff]
  %v7965 = vld [vmem:[%s7958 + $0x30] sm:$0xff]
  %v7966 = vld [vmem:[%s7958 + $0x38] sm:$0xff]
  %v7968 = vsel %vm6606, %v7940, 0
  %v7971 = vsel %vm6606, %v7941, 0
  %v7974 = vsel %vm6606, %v7942, 0
  %v7977 = vsel %vm6606, %v7943, 0
  %v7980 = vsel %vm6606, %v7944, 0
  %v7983 = vsel %vm6606, %v7945, 0
  %v7986 = vsel %vm6606, %v7946, 0
  %v7989 = vsel %vm6606, %v7947, 0
  %v7992 = vsel %vm6606, %v7948, 0
  %v7995 = vsel %vm6606, %v7949, 0
  %v7998 = vsel %vm6606, %v7950, 0
  %v8001 = vsel %vm6606, %v7951, 0
  %v8004 = vsel %vm6606, %v7952, 0
  %v8007 = vsel %vm6606, %v7953, 0
  %v8010 = vsel %vm6606, %v7954, 0
  %v8013 = vsel %vm6606, %v7955, 0
  %v8016 = vsel %vm6606, %v7956, 0
  %v8019 = vsel %vm6606, %v7957, 0
  %8021 = vmatprep.subr.mxu0 0.0
  %8022 = vmatpush1.msra.mxu0 %v7959
  %8023 = vmatprep.subr.mxu0 0.0
  %8024 = vmatpush1.msra.mxu0 %v7960
  %8025 = vmatprep.subr.mxu0 0.0
  %8026 = vmatpush1.msra.mxu0 %v7961
  %8027 = vmatprep.subr.mxu0 0.0
  %8028 = vmatpush1.msra.mxu0 %v7962
  %8029 = vmatprep.subr.mxu0 0.0
  %8030 = vmatpush1.msra.mxu0 %v7963
  %8031 = vmatprep.subr.mxu0 0.0
  %8032 = vmatpush1.msra.mxu0 %v7964
  %8033 = vmatprep.subr.mxu0 0.0
  %8034 = vmatpush1.msra.mxu0 %v7965
  %8035 = vmatprep.subr.mxu0 0.0
  %8036 = vmatpush1.msra.mxu0 %v7966
  %8037 = vmatprep.subr.mxu0 0.0
  %8038 = vmatpush1.msra.mxu0 0.0
  %8039 = vmatprep.subr.mxu0 0.0
  %8040 = vmatpush1.msra.mxu0 0.0
  %8041 = vmatprep.subr.mxu0 0.0
  %8042 = vmatpush1.msra.mxu0 0.0
  %8043 = vmatprep.subr.mxu0 0.0
  %8044 = vmatpush1.msra.mxu0 0.0
  %8045 = vmatprep.subr.mxu0 0.0
  %8046 = vmatpush1.msra.mxu0 0.0
  %8047 = vmatprep.subr.mxu0 0.0
  %8048 = vmatpush1.msra.mxu0 0.0
  %8049 = vmatprep.subr.mxu0 0.0
  %8050 = vmatpush1.msra.mxu0 0.0
  %8051 = vmatprep.subr.mxu0 0.0
  %8052 = vmatpush1.msra.mxu0 0.0
  %8053 = vmatprep.subr.mxu0 0.0
  %8054 = vmatpush1.msra.mxu0 0.0
  %8055 = vmatprep.subr.mxu0 0.0
  %8056 = vmatpush1.msra.mxu0 0.0
  %8057 = vmatprep.subr.mxu0 0.0
  %8058 = vmatpush1.msra.mxu0 0.0
  %8059 = vmatprep.subr.mxu0 0.0
  %8060 = vmatpush1.msra.mxu0 0.0
  %8061 = vmatprep.subr.mxu0 0.0
  %8062 = vmatpush1.msra.mxu0 0.0
  %8063 = vmatprep.subr.mxu0 0.0
  %8064 = vmatpush1.msra.mxu0 0.0
  %8065 = vmatprep.subr.mxu0 0.0
  %8066 = vmatpush1.msra.mxu0 0.0
  %8067 = vmatprep.subr.mxu0 0.0
  %8068 = vmatpush1.msra.mxu0 0.0
  %8069 = vmatprep.subr.mxu0 0.0
  %8070 = vmatpush1.msra.mxu0 0.0
  %8071 = vmatprep.subr.mxu0 0.0
  %8072 = vmatpush1.msra.mxu0 0.0
  %8073 = vmatprep.subr.mxu0 0.0
  %8074 = vmatpush1.msra.mxu0 0.0
  %8075 = vmatprep.subr.mxu0 0.0
  %8076 = vmatpush1.msra.mxu0 0.0
  %8077 = vmatprep.subr.mxu0 0.0
  %8078 = vmatpush1.msra.mxu0 0.0
  %8079 = vmatprep.subr.mxu0 0.0
  %8080 = vmatpush1.msra.mxu0 0.0
  %8081 = vmatprep.subr.mxu0 0.0
  %8082 = vmatpush1.msra.mxu0 0.0
  %8083 = vmatprep.subr.mxu0 0.0
  %8084 = vmatpush1.msra.mxu0 0.0
  %8085 = vmatprep.mubr.f32.mxu0 0.0
  %8086 = vmatmul.mubr.f32.gmra.mrb[0].mxu0 %v7968
  %v8087 = vpop.f32.mrb[0].mxu0
  %v8088 = vadd.f32 0.0, %v8087
  %v8089 = vpop.f32.mrb[0].mxu0
  %8090 = vmatprep.mubr.f32.mxu0 0.0
  %8091 = vmatmul.mubr.f32.gmra.mrb[0].mxu0 %v7971
  %v8092 = vpop.f32.mrb[0].mxu0
  %v8093 = vadd.f32 0.0, %v8092
  %v8094 = vpop.f32.mrb[0].mxu0
  %8095 = vmatprep.mubr.f32.mxu0 0.0
  %8096 = vmatmul.mubr.f32.gmra.mrb[0].mxu0 %v7974
  %v8097 = vpop.f32.mrb[0].mxu0
  %v8098 = vadd.f32 0.0, %v8097
  %v8099 = vpop.f32.mrb[0].mxu0
  %8100 = vmatprep.mubr.f32.mxu0 0.0
  %8101 = vmatmul.mubr.f32.gmra.mrb[0].mxu0 %v7977
  %v8102 = vpop.f32.mrb[0].mxu0
  %v8103 = vadd.f32 0.0, %v8102
  %v8104 = vpop.f32.mrb[0].mxu0
  %8105 = vmatprep.mubr.f32.mxu0 0.0
  %8106 = vmatmul.mubr.f32.gmra.mrb[0].mxu0 %v7980
  %v8107 = vpop.f32.mrb[0].mxu0
  %v8108 = vadd.f32 0.0, %v8107
  %v8109 = vpop.f32.mrb[0].mxu0
  %8110 = vmatprep.mubr.f32.mxu0 0.0
  %8111 = vmatmul.mubr.f32.gmra.mrb[0].mxu0 %v7983
  %v8112 = vpop.f32.mrb[0].mxu0
  %v8113 = vadd.f32 0.0, %v8112
  %v8114 = vpop.f32.mrb[0].mxu0
  %8115 = vmatprep.mubr.f32.mxu0 0.0
  %8116 = vmatmul.mubr.f32.gmra.mrb[0].mxu0 %v7986
  %v8117 = vpop.f32.mrb[0].mxu0
  %v8118 = vadd.f32 0.0, %v8117
  %v8119 = vpop.f32.mrb[0].mxu0
  %8120 = vmatprep.mubr.f32.mxu0 0.0
  %8121 = vmatmul.mubr.f32.gmra.mrb[0].mxu0 %v7989
  %v8122 = vpop.f32.mrb[0].mxu0
  %v8123 = vadd.f32 0.0, %v8122
  %v8124 = vpop.f32.mrb[0].mxu0
  %8125 = vmatprep.mubr.f32.mxu0 0.0
  %8126 = vmatmul.mubr.f32.gmra.mrb[0].mxu0 %v7992
  %v8127 = vpop.f32.mrb[0].mxu0
  %v8128 = vadd.f32 0.0, %v8127
  %v8129 = vpop.f32.mrb[0].mxu0
  %8130 = vmatprep.mubr.f32.mxu0 0.0
  %8131 = vmatmul.mubr.f32.gmra.mrb[0].mxu0 %v7995
  %v8132 = vpop.f32.mrb[0].mxu0
  %v8133 = vadd.f32 0.0, %v8132
  %v8134 = vpop.f32.mrb[0].mxu0
  %8135 = vmatprep.mubr.f32.mxu0 0.0
  %8136 = vmatmul.mubr.f32.gmra.mrb[0].mxu0 %v7998
  %v8137 = vpop.f32.mrb[0].mxu0
  %v8138 = vadd.f32 0.0, %v8137
  %v8139 = vpop.f32.mrb[0].mxu0
  %8140 = vmatprep.mubr.f32.mxu0 0.0
  %8141 = vmatmul.mubr.f32.gmra.mrb[0].mxu0 %v8001
  %v8142 = vpop.f32.mrb[0].mxu0
  %v8143 = vadd.f32 0.0, %v8142
  %v8144 = vpop.f32.mrb[0].mxu0
  %8145 = vmatprep.mubr.f32.mxu0 0.0
  %8146 = vmatmul.mubr.f32.gmra.mrb[0].mxu0 %v8004
  %v8147 = vpop.f32.mrb[0].mxu0
  %v8148 = vadd.f32 0.0, %v8147
  %v8149 = vpop.f32.mrb[0].mxu0
  %8150 = vmatprep.mubr.f32.mxu0 0.0
  %8151 = vmatmul.mubr.f32.gmra.mrb[0].mxu0 %v8007
  %v8152 = vpop.f32.mrb[0].mxu0
  %v8153 = vadd.f32 0.0, %v8152
  %v8154 = vpop.f32.mrb[0].mxu0
  %8155 = vmatprep.mubr.f32.mxu0 0.0
  %8156 = vmatmul.mubr.f32.gmra.mrb[0].mxu0 %v8010
  %v8157 = vpop.f32.mrb[0].mxu0
  %v8158 = vadd.f32 0.0, %v8157
  %v8159 = vpop.f32.mrb[0].mxu0
  %8160 = vmatprep.mubr.f32.mxu0 0.0
  %8161 = vmatmul.mubr.f32.gmra.mrb[0].mxu0 %v8013
  %v8162 = vpop.f32.mrb[0].mxu0
  %v8163 = vadd.f32 0.0, %v8162
  %v8164 = vpop.f32.mrb[0].mxu0
  %8165 = vmatprep.mubr.f32.mxu0 0.0
  %8166 = vmatmul.mubr.f32.gmra.mrb[0].mxu0 %v8016
  %v8167 = vpop.f32.mrb[0].mxu0
  %v8168 = vadd.f32 0.0, %v8167
  %v8169 = vpop.f32.mrb[0].mxu0
  %8170 = vmatprep.mubr.f32.mxu0 0.0
  %8171 = vmatmul.mubr.f32.gmra.mrb[0].mxu0 %v8019
  %v8172 = vpop.f32.mrb[0].mxu0
  %v8173 = vadd.f32 0.0, %v8172
  %v8174 = vpop.f32.mrb[0].mxu0
  %8175 = vdwg.mxu0
  %v8176 = vadd.f32 %v7922, %v8088
  %v8177 = vadd.f32 %v7923, %v8093
  %v8178 = vadd.f32 %v7924, %v8098
  %v8179 = vadd.f32 %v7925, %v8103
  %v8180 = vadd.f32 %v7926, %v8108
  %v8181 = vadd.f32 %v7927, %v8113
  %v8182 = vadd.f32 %v7928, %v8118
  %v8183 = vadd.f32 %v7929, %v8123
  %v8184 = vadd.f32 %v7930, %v8128
  %v8185 = vadd.f32 %v7931, %v8133
  %v8186 = vadd.f32 %v7932, %v8138
  %v8187 = vadd.f32 %v7933, %v8143
  %v8188 = vadd.f32 %v7934, %v8148
  %v8189 = vadd.f32 %v7935, %v8153
  %v8190 = vadd.f32 %v7936, %v8158
  %v8191 = vadd.f32 %v7937, %v8163
  %v8192 = vadd.f32 %v7938, %v8168
  %v8193 = vadd.f32 %v7939, %v8173
  %v8194 = vld [vmem:[#allocation3 + $0x12] sm:$0xff]
  %v8195 = vld [vmem:[#allocation3 + $0x1a] sm:$0xff]
  %v8196 = vld [vmem:[#allocation3 + $0x22] sm:$0xff]
  %v8197 = vld [vmem:[#allocation3 + $0x2a] sm:$0xff]
  %v8198 = vld [vmem:[#allocation3 + $0x32] sm:$0xff]
  %v8199 = vld [vmem:[#allocation3 + $0x3a] sm:$0xff]
  %v8200 = vld [vmem:[#allocation3 + $0x42] sm:$0xff]
  %v8201 = vld [vmem:[#allocation3 + $0x4a] sm:$0xff]
  %v8202 = vld [vmem:[#allocation3 + $0x52] sm:$0xff]
  %v8203 = vld [vmem:[#allocation3 + $0x5a] sm:$0xff]
  %v8204 = vld [vmem:[#allocation3 + $0x62] sm:$0xff]
  %v8205 = vld [vmem:[#allocation3 + $0x6a] sm:$0xff]
  %v8206 = vld [vmem:[#allocation3 + $0x72] sm:$0xff]
  %v8207 = vld [vmem:[#allocation3 + $0x7a] sm:$0xff]
  %v8208 = vld [vmem:[#allocation3 + $0x82] sm:$0xff]
  %v8209 = vld [vmem:[#allocation3 + $0x8a] sm:$0xff]
  %v8210 = vld [vmem:[#allocation3 + $0x92] sm:$0xff]
  %v8211 = vld [vmem:[#allocation3 + $0x9a] sm:$0xff]
  %s8212 = scalar_lea.vmem %s3, 320
  %v8213 = vld [vmem:[%s8212] sm:$0xff]
  %v8214 = vld [vmem:[%s8212 + $0x8] sm:$0xff]
  %v8215 = vld [vmem:[%s8212 + $0x10] sm:$0xff]
  %v8216 = vld [vmem:[%s8212 + $0x18] sm:$0xff]
  %v8217 = vld [vmem:[%s8212 + $0x20] sm:$0xff]
  %v8218 = vld [vmem:[%s8212 + $0x28] sm:$0xff]
  %v8219 = vld [vmem:[%s8212 + $0x30] sm:$0xff]
  %v8220 = vld [vmem:[%s8212 + $0x38] sm:$0xff]
  %v8222 = vsel %vm6606, %v8194, 0
  %v8225 = vsel %vm6606, %v8195, 0
  %v8228 = vsel %vm6606, %v8196, 0
  %v8231 = vsel %vm6606, %v8197, 0
  %v8234 = vsel %vm6606, %v8198, 0
  %v8237 = vsel %vm6606, %v8199, 0
  %v8240 = vsel %vm6606, %v8200, 0
  %v8243 = vsel %vm6606, %v8201, 0
  %v8246 = vsel %vm6606, %v8202, 0
  %v8249 = vsel %vm6606, %v8203, 0
  %v8252 = vsel %vm6606, %v8204, 0
  %v8255 = vsel %vm6606, %v8205, 0
  %v8258 = vsel %vm6606, %v8206, 0
  %v8261 = vsel %vm6606, %v8207, 0
  %v8264 = vsel %vm6606, %v8208, 0
  %v8267 = vsel %vm6606, %v8209, 0
  %v8270 = vsel %vm6606, %v8210, 0
  %v8273 = vsel %vm6606, %v8211, 0
  %8275 = vmatprep.subr.mxu0 0.0
  %8276 = vmatpush1.msra.mxu0 %v8213
  %8277 = vmatprep.subr.mxu0 0.0
  %8278 = vmatpush1.msra.mxu0 %v8214
  %8279 = vmatprep.subr.mxu0 0.0
  %8280 = vmatpush1.msra.mxu0 %v8215
  %8281 = vmatprep.subr.mxu0 0.0
  %8282 = vmatpush1.msra.mxu0 %v8216
  %8283 = vmatprep.subr.mxu0 0.0
  %8284 = vmatpush1.msra.mxu0 %v8217
  %8285 = vmatprep.subr.mxu0 0.0
  %8286 = vmatpush1.msra.mxu0 %v8218
  %8287 = vmatprep.subr.mxu0 0.0
  %8288 = vmatpush1.msra.mxu0 %v8219
  %8289 = vmatprep.subr.mxu0 0.0
  %8290 = vmatpush1.msra.mxu0 %v8220
  %8291 = vmatprep.subr.mxu0 0.0
  %8292 = vmatpush1.msra.mxu0 0.0
  %8293 = vmatprep.subr.mxu0 0.0
  %8294 = vmatpush1.msra.mxu0 0.0
  %8295 = vmatprep.subr.mxu0 0.0
  %8296 = vmatpush1.msra.mxu0 0.0
  %8297 = vmatprep.subr.mxu0 0.0
  %8298 = vmatpush1.msra.mxu0 0.0
  %8299 = vmatprep.subr.mxu0 0.0
  %8300 = vmatpush1.msra.mxu0 0.0
  %8301 = vmatprep.subr.mxu0 0.0
  %8302 = vmatpush1.msra.mxu0 0.0
  %8303 = vmatprep.subr.mxu0 0.0
  %8304 = vmatpush1.msra.mxu0 0.0
  %8305 = vmatprep.subr.mxu0 0.0
  %8306 = vmatpush1.msra.mxu0 0.0
  %8307 = vmatprep.subr.mxu0 0.0
  %8308 = vmatpush1.msra.mxu0 0.0
  %8309 = vmatprep.subr.mxu0 0.0
  %8310 = vmatpush1.msra.mxu0 0.0
  %8311 = vmatprep.subr.mxu0 0.0
  %8312 = vmatpush1.msra.mxu0 0.0
  %8313 = vmatprep.subr.mxu0 0.0
  %8314 = vmatpush1.msra.mxu0 0.0
  %8315 = vmatprep.subr.mxu0 0.0
  %8316 = vmatpush1.msra.mxu0 0.0
  %8317 = vmatprep.subr.mxu0 0.0
  %8318 = vmatpush1.msra.mxu0 0.0
  %8319 = vmatprep.subr.mxu0 0.0
  %8320 = vmatpush1.msra.mxu0 0.0
  %8321 = vmatprep.subr.mxu0 0.0
  %8322 = vmatpush1.msra.mxu0 0.0
  %8323 = vmatprep.subr.mxu0 0.0
  %8324 = vmatpush1.msra.mxu0 0.0
  %8325 = vmatprep.subr.mxu0 0.0
  %8326 = vmatpush1.msra.mxu0 0.0
  %8327 = vmatprep.subr.mxu0 0.0
  %8328 = vmatpush1.msra.mxu0 0.0
  %8329 = vmatprep.subr.mxu0 0.0
  %8330 = vmatpush1.msra.mxu0 0.0
  %8331 = vmatprep.subr.mxu0 0.0
  %8332 = vmatpush1.msra.mxu0 0.0
  %8333 = vmatprep.subr.mxu0 0.0
  %8334 = vmatpush1.msra.mxu0 0.0
  %8335 = vmatprep.subr.mxu0 0.0
  %8336 = vmatpush1.msra.mxu0 0.0
  %8337 = vmatprep.subr.mxu0 0.0
  %8338 = vmatpush1.msra.mxu0 0.0
  %8339 = vmatprep.mubr.f32.mxu0 0.0
  %8340 = vmatmul.mubr.f32.gmra.mrb[0].mxu0 %v8222
  %v8341 = vpop.f32.mrb[0].mxu0
  %v8342 = vadd.f32 0.0, %v8341
  %v8343 = vpop.f32.mrb[0].mxu0
  %8344 = vmatprep.mubr.f32.mxu0 0.0
  %8345 = vmatmul.mubr.f32.gmra.mrb[0].mxu0 %v8225
  %v8346 = vpop.f32.mrb[0].mxu0
  %v8347 = vadd.f32 0.0, %v8346
  %v8348 = vpop.f32.mrb[0].mxu0
  %8349 = vmatprep.mubr.f32.mxu0 0.0
  %8350 = vmatmul.mubr.f32.gmra.mrb[0].mxu0 %v8228
  %v8351 = vpop.f32.mrb[0].mxu0
  %v8352 = vadd.f32 0.0, %v8351
  %v8353 = vpop.f32.mrb[0].mxu0
  %8354 = vmatprep.mubr.f32.mxu0 0.0
  %8355 = vmatmul.mubr.f32.gmra.mrb[0].mxu0 %v8231
  %v8356 = vpop.f32.mrb[0].mxu0
  %v8357 = vadd.f32 0.0, %v8356
  %v8358 = vpop.f32.mrb[0].mxu0
  %8359 = vmatprep.mubr.f32.mxu0 0.0
  %8360 = vmatmul.mubr.f32.gmra.mrb[0].mxu0 %v8234
  %v8361 = vpop.f32.mrb[0].mxu0
  %v8362 = vadd.f32 0.0, %v8361
  %v8363 = vpop.f32.mrb[0].mxu0
  %8364 = vmatprep.mubr.f32.mxu0 0.0
  %8365 = vmatmul.mubr.f32.gmra.mrb[0].mxu0 %v8237
  %v8366 = vpop.f32.mrb[0].mxu0
  %v8367 = vadd.f32 0.0, %v8366
  %v8368 = vpop.f32.mrb[0].mxu0
  %8369 = vmatprep.mubr.f32.mxu0 0.0
  %8370 = vmatmul.mubr.f32.gmra.mrb[0].mxu0 %v8240
  %v8371 = vpop.f32.mrb[0].mxu0
  %v8372 = vadd.f32 0.0, %v8371
  %v8373 = vpop.f32.mrb[0].mxu0
  %8374 = vmatprep.mubr.f32.mxu0 0.0
  %8375 = vmatmul.mubr.f32.gmra.mrb[0].mxu0 %v8243
  %v8376 = vpop.f32.mrb[0].mxu0
  %v8377 = vadd.f32 0.0, %v8376
  %v8378 = vpop.f32.mrb[0].mxu0
  %8379 = vmatprep.mubr.f32.mxu0 0.0
  %8380 = vmatmul.mubr.f32.gmra.mrb[0].mxu0 %v8246
  %v8381 = vpop.f32.mrb[0].mxu0
  %v8382 = vadd.f32 0.0, %v8381
  %v8383 = vpop.f32.mrb[0].mxu0
  %8384 = vmatprep.mubr.f32.mxu0 0.0
  %8385 = vmatmul.mubr.f32.gmra.mrb[0].mxu0 %v8249
  %v8386 = vpop.f32.mrb[0].mxu0
  %v8387 = vadd.f32 0.0, %v8386
  %v8388 = vpop.f32.mrb[0].mxu0
  %8389 = vmatprep.mubr.f32.mxu0 0.0
  %8390 = vmatmul.mubr.f32.gmra.mrb[0].mxu0 %v8252
  %v8391 = vpop.f32.mrb[0].mxu0
  %v8392 = vadd.f32 0.0, %v8391
  %v8393 = vpop.f32.mrb[0].mxu0
  %8394 = vmatprep.mubr.f32.mxu0 0.0
  %8395 = vmatmul.mubr.f32.gmra.mrb[0].mxu0 %v8255
  %v8396 = vpop.f32.mrb[0].mxu0
  %v8397 = vadd.f32 0.0, %v8396
  %v8398 = vpop.f32.mrb[0].mxu0
  %8399 = vmatprep.mubr.f32.mxu0 0.0
  %8400 = vmatmul.mubr.f32.gmra.mrb[0].mxu0 %v8258
  %v8401 = vpop.f32.mrb[0].mxu0
  %v8402 = vadd.f32 0.0, %v8401
  %v8403 = vpop.f32.mrb[0].mxu0
  %8404 = vmatprep.mubr.f32.mxu0 0.0
  %8405 = vmatmul.mubr.f32.gmra.mrb[0].mxu0 %v8261
  %v8406 = vpop.f32.mrb[0].mxu0
  %v8407 = vadd.f32 0.0, %v8406
  %v8408 = vpop.f32.mrb[0].mxu0
  %8409 = vmatprep.mubr.f32.mxu0 0.0
  %8410 = vmatmul.mubr.f32.gmra.mrb[0].mxu0 %v8264
  %v8411 = vpop.f32.mrb[0].mxu0
  %v8412 = vadd.f32 0.0, %v8411
  %v8413 = vpop.f32.mrb[0].mxu0
  %8414 = vmatprep.mubr.f32.mxu0 0.0
  %8415 = vmatmul.mubr.f32.gmra.mrb[0].mxu0 %v8267
  %v8416 = vpop.f32.mrb[0].mxu0
  %v8417 = vadd.f32 0.0, %v8416
  %v8418 = vpop.f32.mrb[0].mxu0
  %8419 = vmatprep.mubr.f32.mxu0 0.0
  %8420 = vmatmul.mubr.f32.gmra.mrb[0].mxu0 %v8270
  %v8421 = vpop.f32.mrb[0].mxu0
  %v8422 = vadd.f32 0.0, %v8421
  %v8423 = vpop.f32.mrb[0].mxu0
  %8424 = vmatprep.mubr.f32.mxu0 0.0
  %8425 = vmatmul.mubr.f32.gmra.mrb[0].mxu0 %v8273
  %v8426 = vpop.f32.mrb[0].mxu0
  %v8427 = vadd.f32 0.0, %v8426
  %v8428 = vpop.f32.mrb[0].mxu0
  %8429 = vdwg.mxu0
  %v8430 = vadd.f32 %v8176, %v8342
  %v8431 = vadd.f32 %v8177, %v8347
  %v8432 = vadd.f32 %v8178, %v8352
  %v8433 = vadd.f32 %v8179, %v8357
  %v8434 = vadd.f32 %v8180, %v8362
  %v8435 = vadd.f32 %v8181, %v8367
  %v8436 = vadd.f32 %v8182, %v8372
  %v8437 = vadd.f32 %v8183, %v8377
  %v8438 = vadd.f32 %v8184, %v8382
  %v8439 = vadd.f32 %v8185, %v8387
  %v8440 = vadd.f32 %v8186, %v8392
  %v8441 = vadd.f32 %v8187, %v8397
  %v8442 = vadd.f32 %v8188, %v8402
  %v8443 = vadd.f32 %v8189, %v8407
  %v8444 = vadd.f32 %v8190, %v8412
  %v8445 = vadd.f32 %v8191, %v8417
  %v8446 = vadd.f32 %v8192, %v8422
  %v8447 = vadd.f32 %v8193, %v8427
  %v8448 = vld [vmem:[#allocation3 + $0x20] sm:$0xff]
  %v8449 = vld [vmem:[#allocation3 + $0x28] sm:$0xff]
  %v8450 = vld [vmem:[#allocation3 + $0x30] sm:$0xff]
  %v8451 = vld [vmem:[#allocation3 + $0x38] sm:$0xff]
  %v8452 = vld [vmem:[#allocation3 + $0x40] sm:$0xff]
  %v8453 = vld [vmem:[#allocation3 + $0x48] sm:$0xff]
  %v8454 = vld [vmem:[#allocation3 + $0x50] sm:$0xff]
  %v8455 = vld [vmem:[#allocation3 + $0x58] sm:$0xff]
  %v8456 = vld [vmem:[#allocation3 + $0x60] sm:$0xff]
  %v8457 = vld [vmem:[#allocation3 + $0x68] sm:$0xff]
  %v8458 = vld [vmem:[#allocation3 + $0x70] sm:$0xff]
  %v8459 = vld [vmem:[#allocation3 + $0x78] sm:$0xff]
  %v8460 = vld [vmem:[#allocation3 + $0x80] sm:$0xff]
  %v8461 = vld [vmem:[#allocation3 + $0x88] sm:$0xff]
  %v8462 = vld [vmem:[#allocation3 + $0x90] sm:$0xff]
  %v8463 = vld [vmem:[#allocation3 + $0x98] sm:$0xff]
  %v8464 = vld [vmem:[#allocation3 + $0xa0] sm:$0xff]
  %v8465 = vld [vmem:[#allocation3 + $0xa8] sm:$0xff]
  %s8466 = scalar_lea.vmem %s3, 384
  %v8467 = vld [vmem:[%s8466] sm:$0xff]
  %v8468 = vld [vmem:[%s8466 + $0x8] sm:$0xff]
  %v8469 = vld [vmem:[%s8466 + $0x10] sm:$0xff]
  %v8470 = vld [vmem:[%s8466 + $0x18] sm:$0xff]
  %v8471 = vld [vmem:[%s8466 + $0x20] sm:$0xff]
  %v8472 = vld [vmem:[%s8466 + $0x28] sm:$0xff]
  %v8473 = vld [vmem:[%s8466 + $0x30] sm:$0xff]
  %v8474 = vld [vmem:[%s8466 + $0x38] sm:$0xff]
  %v8476 = vsel %vm6606, %v8448, 0
  %v8479 = vsel %vm6606, %v8449, 0
  %v8482 = vsel %vm6606, %v8450, 0
  %v8485 = vsel %vm6606, %v8451, 0
  %v8488 = vsel %vm6606, %v8452, 0
  %v8491 = vsel %vm6606, %v8453, 0
  %v8494 = vsel %vm6606, %v8454, 0
  %v8497 = vsel %vm6606, %v8455, 0
  %v8500 = vsel %vm6606, %v8456, 0
  %v8503 = vsel %vm6606, %v8457, 0
  %v8506 = vsel %vm6606, %v8458, 0
  %v8509 = vsel %vm6606, %v8459, 0
  %v8512 = vsel %vm6606, %v8460, 0
  %v8515 = vsel %vm6606, %v8461, 0
  %v8518 = vsel %vm6606, %v8462, 0
  %v8521 = vsel %vm6606, %v8463, 0
  %v8524 = vsel %vm6606, %v8464, 0
  %v8527 = vsel %vm6606, %v8465, 0
  %8529 = vmatprep.subr.mxu0 0.0
  %8530 = vmatpush1.msra.mxu0 %v8467
  %8531 = vmatprep.subr.mxu0 0.0
  %8532 = vmatpush1.msra.mxu0 %v8468
  %8533 = vmatprep.subr.mxu0 0.0
  %8534 = vmatpush1.msra.mxu0 %v8469
  %8535 = vmatprep.subr.mxu0 0.0
  %8536 = vmatpush1.msra.mxu0 %v8470
  %8537 = vmatprep.subr.mxu0 0.0
  %8538 = vmatpush1.msra.mxu0 %v8471
  %8539 = vmatprep.subr.mxu0 0.0
  %8540 = vmatpush1.msra.mxu0 %v8472
  %8541 = vmatprep.subr.mxu0 0.0
  %8542 = vmatpush1.msra.mxu0 %v8473
  %8543 = vmatprep.subr.mxu0 0.0
  %8544 = vmatpush1.msra.mxu0 %v8474
  %8545 = vmatprep.subr.mxu0 0.0
  %8546 = vmatpush1.msra.mxu0 0.0
  %8547 = vmatprep.subr.mxu0 0.0
  %8548 = vmatpush1.msra.mxu0 0.0
  %8549 = vmatprep.subr.mxu0 0.0
  %8550 = vmatpush1.msra.mxu0 0.0
  %8551 = vmatprep.subr.mxu0 0.0
  %8552 = vmatpush1.msra.mxu0 0.0
  %8553 = vmatprep.subr.mxu0 0.0
  %8554 = vmatpush1.msra.mxu0 0.0
  %8555 = vmatprep.subr.mxu0 0.0
  %8556 = vmatpush1.msra.mxu0 0.0
  %8557 = vmatprep.subr.mxu0 0.0
  %8558 = vmatpush1.msra.mxu0 0.0
  %8559 = vmatprep.subr.mxu0 0.0
  %8560 = vmatpush1.msra.mxu0 0.0
  %8561 = vmatprep.subr.mxu0 0.0
  %8562 = vmatpush1.msra.mxu0 0.0
  %8563 = vmatprep.subr.mxu0 0.0
  %8564 = vmatpush1.msra.mxu0 0.0
  %8565 = vmatprep.subr.mxu0 0.0
  %8566 = vmatpush1.msra.mxu0 0.0
  %8567 = vmatprep.subr.mxu0 0.0
  %8568 = vmatpush1.msra.mxu0 0.0
  %8569 = vmatprep.subr.mxu0 0.0
  %8570 = vmatpush1.msra.mxu0 0.0
  %8571 = vmatprep.subr.mxu0 0.0
  %8572 = vmatpush1.msra.mxu0 0.0
  %8573 = vmatprep.subr.mxu0 0.0
  %8574 = vmatpush1.msra.mxu0 0.0
  %8575 = vmatprep.subr.mxu0 0.0
  %8576 = vmatpush1.msra.mxu0 0.0
  %8577 = vmatprep.subr.mxu0 0.0
  %8578 = vmatpush1.msra.mxu0 0.0
  %8579 = vmatprep.subr.mxu0 0.0
  %8580 = vmatpush1.msra.mxu0 0.0
  %8581 = vmatprep.subr.mxu0 0.0
  %8582 = vmatpush1.msra.mxu0 0.0
  %8583 = vmatprep.subr.mxu0 0.0
  %8584 = vmatpush1.msra.mxu0 0.0
  %8585 = vmatprep.subr.mxu0 0.0
  %8586 = vmatpush1.msra.mxu0 0.0
  %8587 = vmatprep.subr.mxu0 0.0
  %8588 = vmatpush1.msra.mxu0 0.0
  %8589 = vmatprep.subr.mxu0 0.0
  %8590 = vmatpush1.msra.mxu0 0.0
  %8591 = vmatprep.subr.mxu0 0.0
  %8592 = vmatpush1.msra.mxu0 0.0
  %8593 = vmatprep.mubr.f32.mxu0 0.0
  %8594 = vmatmul.mubr.f32.gmra.mrb[0].mxu0 %v8476
  %v8595 = vpop.f32.mrb[0].mxu0
  %v8596 = vadd.f32 0.0, %v8595
  %v8597 = vpop.f32.mrb[0].mxu0
  %8598 = vmatprep.mubr.f32.mxu0 0.0
  %8599 = vmatmul.mubr.f32.gmra.mrb[0].mxu0 %v8479
  %v8600 = vpop.f32.mrb[0].mxu0
  %v8601 = vadd.f32 0.0, %v8600
  %v8602 = vpop.f32.mrb[0].mxu0
  %8603 = vmatprep.mubr.f32.mxu0 0.0
  %8604 = vmatmul.mubr.f32.gmra.mrb[0].mxu0 %v8482
  %v8605 = vpop.f32.mrb[0].mxu0
  %v8606 = vadd.f32 0.0, %v8605
  %v8607 = vpop.f32.mrb[0].mxu0
  %8608 = vmatprep.mubr.f32.mxu0 0.0
  %8609 = vmatmul.mubr.f32.gmra.mrb[0].mxu0 %v8485
  %v8610 = vpop.f32.mrb[0].mxu0
  %v8611 = vadd.f32 0.0, %v8610
  %v8612 = vpop.f32.mrb[0].mxu0
  %8613 = vmatprep.mubr.f32.mxu0 0.0
  %8614 = vmatmul.mubr.f32.gmra.mrb[0].mxu0 %v8488
  %v8615 = vpop.f32.mrb[0].mxu0
  %v8616 = vadd.f32 0.0, %v8615
  %v8617 = vpop.f32.mrb[0].mxu0
  %8618 = vmatprep.mubr.f32.mxu0 0.0
  %8619 = vmatmul.mubr.f32.gmra.mrb[0].mxu0 %v8491
  %v8620 = vpop.f32.mrb[0].mxu0
  %v8621 = vadd.f32 0.0, %v8620
  %v8622 = vpop.f32.mrb[0].mxu0
  %8623 = vmatprep.mubr.f32.mxu0 0.0
  %8624 = vmatmul.mubr.f32.gmra.mrb[0].mxu0 %v8494
  %v8625 = vpop.f32.mrb[0].mxu0
  %v8626 = vadd.f32 0.0, %v8625
  %v8627 = vpop.f32.mrb[0].mxu0
  %8628 = vmatprep.mubr.f32.mxu0 0.0
  %8629 = vmatmul.mubr.f32.gmra.mrb[0].mxu0 %v8497
  %v8630 = vpop.f32.mrb[0].mxu0
  %v8631 = vadd.f32 0.0, %v8630
  %v8632 = vpop.f32.mrb[0].mxu0
  %8633 = vmatprep.mubr.f32.mxu0 0.0
  %8634 = vmatmul.mubr.f32.gmra.mrb[0].mxu0 %v8500
  %v8635 = vpop.f32.mrb[0].mxu0
  %v8636 = vadd.f32 0.0, %v8635
  %v8637 = vpop.f32.mrb[0].mxu0
  %8638 = vmatprep.mubr.f32.mxu0 0.0
  %8639 = vmatmul.mubr.f32.gmra.mrb[0].mxu0 %v8503
  %v8640 = vpop.f32.mrb[0].mxu0
  %v8641 = vadd.f32 0.0, %v8640
  %v8642 = vpop.f32.mrb[0].mxu0
  %8643 = vmatprep.mubr.f32.mxu0 0.0
  %8644 = vmatmul.mubr.f32.gmra.mrb[0].mxu0 %v8506
  %v8645 = vpop.f32.mrb[0].mxu0
  %v8646 = vadd.f32 0.0, %v8645
  %v8647 = vpop.f32.mrb[0].mxu0
  %8648 = vmatprep.mubr.f32.mxu0 0.0
  %8649 = vmatmul.mubr.f32.gmra.mrb[0].mxu0 %v8509
  %v8650 = vpop.f32.mrb[0].mxu0
  %v8651 = vadd.f32 0.0, %v8650
  %v8652 = vpop.f32.mrb[0].mxu0
  %8653 = vmatprep.mubr.f32.mxu0 0.0
  %8654 = vmatmul.mubr.f32.gmra.mrb[0].mxu0 %v8512
  %v8655 = vpop.f32.mrb[0].mxu0
  %v8656 = vadd.f32 0.0, %v8655
  %v8657 = vpop.f32.mrb[0].mxu0
  %8658 = vmatprep.mubr.f32.mxu0 0.0
  %8659 = vmatmul.mubr.f32.gmra.mrb[0].mxu0 %v8515
  %v8660 = vpop.f32.mrb[0].mxu0
  %v8661 = vadd.f32 0.0, %v8660
  %v8662 = vpop.f32.mrb[0].mxu0
  %8663 = vmatprep.mubr.f32.mxu0 0.0
  %8664 = vmatmul.mubr.f32.gmra.mrb[0].mxu0 %v8518
  %v8665 = vpop.f32.mrb[0].mxu0
  %v8666 = vadd.f32 0.0, %v8665
  %v8667 = vpop.f32.mrb[0].mxu0
  %8668 = vmatprep.mubr.f32.mxu0 0.0
  %8669 = vmatmul.mubr.f32.gmra.mrb[0].mxu0 %v8521
  %v8670 = vpop.f32.mrb[0].mxu0
  %v8671 = vadd.f32 0.0, %v8670
  %v8672 = vpop.f32.mrb[0].mxu0
  %8673 = vmatprep.mubr.f32.mxu0 0.0
  %8674 = vmatmul.mubr.f32.gmra.mrb[0].mxu0 %v8524
  %v8675 = vpop.f32.mrb[0].mxu0
  %v8676 = vadd.f32 0.0, %v8675
  %v8677 = vpop.f32.mrb[0].mxu0
  %8678 = vmatprep.mubr.f32.mxu0 0.0
  %8679 = vmatmul.mubr.f32.gmra.mrb[0].mxu0 %v8527
  %v8680 = vpop.f32.mrb[0].mxu0
  %v8681 = vadd.f32 0.0, %v8680
  %v8682 = vpop.f32.mrb[0].mxu0
  %8683 = vdwg.mxu0
  %v8684 = vadd.f32 %v8430, %v8596
  %v8685 = vadd.f32 %v8431, %v8601
  %v8686 = vadd.f32 %v8432, %v8606
  %v8687 = vadd.f32 %v8433, %v8611
  %v8688 = vadd.f32 %v8434, %v8616
  %v8689 = vadd.f32 %v8435, %v8621
  %v8690 = vadd.f32 %v8436, %v8626
  %v8691 = vadd.f32 %v8437, %v8631
  %v8692 = vadd.f32 %v8438, %v8636
  %v8693 = vadd.f32 %v8439, %v8641
  %v8694 = vadd.f32 %v8440, %v8646
  %v8695 = vadd.f32 %v8441, %v8651
  %v8696 = vadd.f32 %v8442, %v8656
  %v8697 = vadd.f32 %v8443, %v8661
  %v8698 = vadd.f32 %v8444, %v8666
  %v8699 = vadd.f32 %v8445, %v8671
  %v8700 = vadd.f32 %v8446, %v8676
  %v8701 = vadd.f32 %v8447, %v8681
  %v8702 = vld [vmem:[#allocation3 + $0x21] sm:$0xff]
  %v8703 = vld [vmem:[#allocation3 + $0x29] sm:$0xff]
  %v8704 = vld [vmem:[#allocation3 + $0x31] sm:$0xff]
  %v8705 = vld [vmem:[#allocation3 + $0x39] sm:$0xff]
  %v8706 = vld [vmem:[#allocation3 + $0x41] sm:$0xff]
  %v8707 = vld [vmem:[#allocation3 + $0x49] sm:$0xff]
  %v8708 = vld [vmem:[#allocation3 + $0x51] sm:$0xff]
  %v8709 = vld [vmem:[#allocation3 + $0x59] sm:$0xff]
  %v8710 = vld [vmem:[#allocation3 + $0x61] sm:$0xff]
  %v8711 = vld [vmem:[#allocation3 + $0x69] sm:$0xff]
  %v8712 = vld [vmem:[#allocation3 + $0x71] sm:$0xff]
  %v8713 = vld [vmem:[#allocation3 + $0x79] sm:$0xff]
  %v8714 = vld [vmem:[#allocation3 + $0x81] sm:$0xff]
  %v8715 = vld [vmem:[#allocation3 + $0x89] sm:$0xff]
  %v8716 = vld [vmem:[#allocation3 + $0x91] sm:$0xff]
  %v8717 = vld [vmem:[#allocation3 + $0x99] sm:$0xff]
  %v8718 = vld [vmem:[#allocation3 + $0xa1] sm:$0xff]
  %v8719 = vld [vmem:[#allocation3 + $0xa9] sm:$0xff]
  %s8720 = scalar_lea.vmem %s3, 448
  %v8721 = vld [vmem:[%s8720] sm:$0xff]
  %v8722 = vld [vmem:[%s8720 + $0x8] sm:$0xff]
  %v8723 = vld [vmem:[%s8720 + $0x10] sm:$0xff]
  %v8724 = vld [vmem:[%s8720 + $0x18] sm:$0xff]
  %v8725 = vld [vmem:[%s8720 + $0x20] sm:$0xff]
  %v8726 = vld [vmem:[%s8720 + $0x28] sm:$0xff]
  %v8727 = vld [vmem:[%s8720 + $0x30] sm:$0xff]
  %v8728 = vld [vmem:[%s8720 + $0x38] sm:$0xff]
  %v8730 = vsel %vm6606, %v8702, 0
  %v8733 = vsel %vm6606, %v8703, 0
  %v8736 = vsel %vm6606, %v8704, 0
  %v8739 = vsel %vm6606, %v8705, 0
  %v8742 = vsel %vm6606, %v8706, 0
  %v8745 = vsel %vm6606, %v8707, 0
  %v8748 = vsel %vm6606, %v8708, 0
  %v8751 = vsel %vm6606, %v8709, 0
  %v8754 = vsel %vm6606, %v8710, 0
  %v8757 = vsel %vm6606, %v8711, 0
  %v8760 = vsel %vm6606, %v8712, 0
  %v8763 = vsel %vm6606, %v8713, 0
  %v8766 = vsel %vm6606, %v8714, 0
  %v8769 = vsel %vm6606, %v8715, 0
  %v8772 = vsel %vm6606, %v8716, 0
  %v8775 = vsel %vm6606, %v8717, 0
  %v8778 = vsel %vm6606, %v8718, 0
  %v8781 = vsel %vm6606, %v8719, 0
  %8783 = vmatprep.subr.mxu0 0.0
  %8784 = vmatpush1.msra.mxu0 %v8721
  %8785 = vmatprep.subr.mxu0 0.0
  %8786 = vmatpush1.msra.mxu0 %v8722
  %8787 = vmatprep.subr.mxu0 0.0
  %8788 = vmatpush1.msra.mxu0 %v8723
  %8789 = vmatprep.subr.mxu0 0.0
  %8790 = vmatpush1.msra.mxu0 %v8724
  %8791 = vmatprep.subr.mxu0 0.0
  %8792 = vmatpush1.msra.mxu0 %v8725
  %8793 = vmatprep.subr.mxu0 0.0
  %8794 = vmatpush1.msra.mxu0 %v8726
  %8795 = vmatprep.subr.mxu0 0.0
  %8796 = vmatpush1.msra.mxu0 %v8727
  %8797 = vmatprep.subr.mxu0 0.0
  %8798 = vmatpush1.msra.mxu0 %v8728
  %8799 = vmatprep.subr.mxu0 0.0
  %8800 = vmatpush1.msra.mxu0 0.0
  %8801 = vmatprep.subr.mxu0 0.0
  %8802 = vmatpush1.msra.mxu0 0.0
  %8803 = vmatprep.subr.mxu0 0.0
  %8804 = vmatpush1.msra.mxu0 0.0
  %8805 = vmatprep.subr.mxu0 0.0
  %8806 = vmatpush1.msra.mxu0 0.0
  %8807 = vmatprep.subr.mxu0 0.0
  %8808 = vmatpush1.msra.mxu0 0.0
  %8809 = vmatprep.subr.mxu0 0.0
  %8810 = vmatpush1.msra.mxu0 0.0
  %8811 = vmatprep.subr.mxu0 0.0
  %8812 = vmatpush1.msra.mxu0 0.0
  %8813 = vmatprep.subr.mxu0 0.0
  %8814 = vmatpush1.msra.mxu0 0.0
  %8815 = vmatprep.subr.mxu0 0.0
  %8816 = vmatpush1.msra.mxu0 0.0
  %8817 = vmatprep.subr.mxu0 0.0
  %8818 = vmatpush1.msra.mxu0 0.0
  %8819 = vmatprep.subr.mxu0 0.0
  %8820 = vmatpush1.msra.mxu0 0.0
  %8821 = vmatprep.subr.mxu0 0.0
  %8822 = vmatpush1.msra.mxu0 0.0
  %8823 = vmatprep.subr.mxu0 0.0
  %8824 = vmatpush1.msra.mxu0 0.0
  %8825 = vmatprep.subr.mxu0 0.0
  %8826 = vmatpush1.msra.mxu0 0.0
  %8827 = vmatprep.subr.mxu0 0.0
  %8828 = vmatpush1.msra.mxu0 0.0
  %8829 = vmatprep.subr.mxu0 0.0
  %8830 = vmatpush1.msra.mxu0 0.0
  %8831 = vmatprep.subr.mxu0 0.0
  %8832 = vmatpush1.msra.mxu0 0.0
  %8833 = vmatprep.subr.mxu0 0.0
  %8834 = vmatpush1.msra.mxu0 0.0
  %8835 = vmatprep.subr.mxu0 0.0
  %8836 = vmatpush1.msra.mxu0 0.0
  %8837 = vmatprep.subr.mxu0 0.0
  %8838 = vmatpush1.msra.mxu0 0.0
  %8839 = vmatprep.subr.mxu0 0.0
  %8840 = vmatpush1.msra.mxu0 0.0
  %8841 = vmatprep.subr.mxu0 0.0
  %8842 = vmatpush1.msra.mxu0 0.0
  %8843 = vmatprep.subr.mxu0 0.0
  %8844 = vmatpush1.msra.mxu0 0.0
  %8845 = vmatprep.subr.mxu0 0.0
  %8846 = vmatpush1.msra.mxu0 0.0
  %8847 = vmatprep.mubr.f32.mxu0 0.0
  %8848 = vmatmul.mubr.f32.gmra.mrb[0].mxu0 %v8730
  %v8849 = vpop.f32.mrb[0].mxu0
  %v8850 = vadd.f32 0.0, %v8849
  %v8851 = vpop.f32.mrb[0].mxu0
  %8852 = vmatprep.mubr.f32.mxu0 0.0
  %8853 = vmatmul.mubr.f32.gmra.mrb[0].mxu0 %v8733
  %v8854 = vpop.f32.mrb[0].mxu0
  %v8855 = vadd.f32 0.0, %v8854
  %v8856 = vpop.f32.mrb[0].mxu0
  %8857 = vmatprep.mubr.f32.mxu0 0.0
  %8858 = vmatmul.mubr.f32.gmra.mrb[0].mxu0 %v8736
  %v8859 = vpop.f32.mrb[0].mxu0
  %v8860 = vadd.f32 0.0, %v8859
  %v8861 = vpop.f32.mrb[0].mxu0
  %8862 = vmatprep.mubr.f32.mxu0 0.0
  %8863 = vmatmul.mubr.f32.gmra.mrb[0].mxu0 %v8739
  %v8864 = vpop.f32.mrb[0].mxu0
  %v8865 = vadd.f32 0.0, %v8864
  %v8866 = vpop.f32.mrb[0].mxu0
  %8867 = vmatprep.mubr.f32.mxu0 0.0
  %8868 = vmatmul.mubr.f32.gmra.mrb[0].mxu0 %v8742
  %v8869 = vpop.f32.mrb[0].mxu0
  %v8870 = vadd.f32 0.0, %v8869
  %v8871 = vpop.f32.mrb[0].mxu0
  %8872 = vmatprep.mubr.f32.mxu0 0.0
  %8873 = vmatmul.mubr.f32.gmra.mrb[0].mxu0 %v8745
  %v8874 = vpop.f32.mrb[0].mxu0
  %v8875 = vadd.f32 0.0, %v8874
  %v8876 = vpop.f32.mrb[0].mxu0
  %8877 = vmatprep.mubr.f32.mxu0 0.0
  %8878 = vmatmul.mubr.f32.gmra.mrb[0].mxu0 %v8748
  %v8879 = vpop.f32.mrb[0].mxu0
  %v8880 = vadd.f32 0.0, %v8879
  %v8881 = vpop.f32.mrb[0].mxu0
  %8882 = vmatprep.mubr.f32.mxu0 0.0
  %8883 = vmatmul.mubr.f32.gmra.mrb[0].mxu0 %v8751
  %v8884 = vpop.f32.mrb[0].mxu0
  %v8885 = vadd.f32 0.0, %v8884
  %v8886 = vpop.f32.mrb[0].mxu0
  %8887 = vmatprep.mubr.f32.mxu0 0.0
  %8888 = vmatmul.mubr.f32.gmra.mrb[0].mxu0 %v8754
  %v8889 = vpop.f32.mrb[0].mxu0
  %v8890 = vadd.f32 0.0, %v8889
  %v8891 = vpop.f32.mrb[0].mxu0
  %8892 = vmatprep.mubr.f32.mxu0 0.0
  %8893 = vmatmul.mubr.f32.gmra.mrb[0].mxu0 %v8757
  %v8894 = vpop.f32.mrb[0].mxu0
  %v8895 = vadd.f32 0.0, %v8894
  %v8896 = vpop.f32.mrb[0].mxu0
  %8897 = vmatprep.mubr.f32.mxu0 0.0
  %8898 = vmatmul.mubr.f32.gmra.mrb[0].mxu0 %v8760
  %v8899 = vpop.f32.mrb[0].mxu0
  %v8900 = vadd.f32 0.0, %v8899
  %v8901 = vpop.f32.mrb[0].mxu0
  %8902 = vmatprep.mubr.f32.mxu0 0.0
  %8903 = vmatmul.mubr.f32.gmra.mrb[0].mxu0 %v8763
  %v8904 = vpop.f32.mrb[0].mxu0
  %v8905 = vadd.f32 0.0, %v8904
  %v8906 = vpop.f32.mrb[0].mxu0
  %8907 = vmatprep.mubr.f32.mxu0 0.0
  %8908 = vmatmul.mubr.f32.gmra.mrb[0].mxu0 %v8766
  %v8909 = vpop.f32.mrb[0].mxu0
  %v8910 = vadd.f32 0.0, %v8909
  %v8911 = vpop.f32.mrb[0].mxu0
  %8912 = vmatprep.mubr.f32.mxu0 0.0
  %8913 = vmatmul.mubr.f32.gmra.mrb[0].mxu0 %v8769
  %v8914 = vpop.f32.mrb[0].mxu0
  %v8915 = vadd.f32 0.0, %v8914
  %v8916 = vpop.f32.mrb[0].mxu0
  %8917 = vmatprep.mubr.f32.mxu0 0.0
  %8918 = vmatmul.mubr.f32.gmra.mrb[0].mxu0 %v8772
  %v8919 = vpop.f32.mrb[0].mxu0
  %v8920 = vadd.f32 0.0, %v8919
  %v8921 = vpop.f32.mrb[0].mxu0
  %8922 = vmatprep.mubr.f32.mxu0 0.0
  %8923 = vmatmul.mubr.f32.gmra.mrb[0].mxu0 %v8775
  %v8924 = vpop.f32.mrb[0].mxu0
  %v8925 = vadd.f32 0.0, %v8924
  %v8926 = vpop.f32.mrb[0].mxu0
  %8927 = vmatprep.mubr.f32.mxu0 0.0
  %8928 = vmatmul.mubr.f32.gmra.mrb[0].mxu0 %v8778
  %v8929 = vpop.f32.mrb[0].mxu0
  %v8930 = vadd.f32 0.0, %v8929
  %v8931 = vpop.f32.mrb[0].mxu0
  %8932 = vmatprep.mubr.f32.mxu0 0.0
  %8933 = vmatmul.mubr.f32.gmra.mrb[0].mxu0 %v8781
  %v8934 = vpop.f32.mrb[0].mxu0
  %v8935 = vadd.f32 0.0, %v8934
  %v8936 = vpop.f32.mrb[0].mxu0
  %8937 = vdwg.mxu0
  %v8938 = vadd.f32 %v8684, %v8850
  %v8939 = vadd.f32 %v8685, %v8855
  %v8940 = vadd.f32 %v8686, %v8860
  %v8941 = vadd.f32 %v8687, %v8865
  %v8942 = vadd.f32 %v8688, %v8870
  %v8943 = vadd.f32 %v8689, %v8875
  %v8944 = vadd.f32 %v8690, %v8880
  %v8945 = vadd.f32 %v8691, %v8885
  %v8946 = vadd.f32 %v8692, %v8890
  %v8947 = vadd.f32 %v8693, %v8895
  %v8948 = vadd.f32 %v8694, %v8900
  %v8949 = vadd.f32 %v8695, %v8905
  %v8950 = vadd.f32 %v8696, %v8910
  %v8951 = vadd.f32 %v8697, %v8915
  %v8952 = vadd.f32 %v8698, %v8920
  %v8953 = vadd.f32 %v8699, %v8925
  %v8954 = vadd.f32 %v8700, %v8930
  %v8955 = vadd.f32 %v8701, %v8935
  %v8956 = vld [vmem:[#allocation3 + $0x22] sm:$0xff]
  %v8957 = vld [vmem:[#allocation3 + $0x2a] sm:$0xff]
  %v8958 = vld [vmem:[#allocation3 + $0x32] sm:$0xff]
  %v8959 = vld [vmem:[#allocation3 + $0x3a] sm:$0xff]
  %v8960 = vld [vmem:[#allocation3 + $0x42] sm:$0xff]
  %v8961 = vld [vmem:[#allocation3 + $0x4a] sm:$0xff]
  %v8962 = vld [vmem:[#allocation3 + $0x52] sm:$0xff]
  %v8963 = vld [vmem:[#allocation3 + $0x5a] sm:$0xff]
  %v8964 = vld [vmem:[#allocation3 + $0x62] sm:$0xff]
  %v8965 = vld [vmem:[#allocation3 + $0x6a] sm:$0xff]
  %v8966 = vld [vmem:[#allocation3 + $0x72] sm:$0xff]
  %v8967 = vld [vmem:[#allocation3 + $0x7a] sm:$0xff]
  %v8968 = vld [vmem:[#allocation3 + $0x82] sm:$0xff]
  %v8969 = vld [vmem:[#allocation3 + $0x8a] sm:$0xff]
  %v8970 = vld [vmem:[#allocation3 + $0x92] sm:$0xff]
  %v8971 = vld [vmem:[#allocation3 + $0x9a] sm:$0xff]
  %v8972 = vld [vmem:[#allocation3 + $0xa2] sm:$0xff]
  %v8973 = vld [vmem:[#allocation3 + $0xaa] sm:$0xff]
  %s8974 = scalar_lea.vmem %s3, 512
  %v8975 = vld [vmem:[%s8974] sm:$0xff]
  %v8976 = vld [vmem:[%s8974 + $0x8] sm:$0xff]
  %v8977 = vld [vmem:[%s8974 + $0x10] sm:$0xff]
  %v8978 = vld [vmem:[%s8974 + $0x18] sm:$0xff]
  %v8979 = vld [vmem:[%s8974 + $0x20] sm:$0xff]
  %v8980 = vld [vmem:[%s8974 + $0x28] sm:$0xff]
  %v8981 = vld [vmem:[%s8974 + $0x30] sm:$0xff]
  %v8982 = vld [vmem:[%s8974 + $0x38] sm:$0xff]
  %v8984 = vsel %vm6606, %v8956, 0
  %v8987 = vsel %vm6606, %v8957, 0
  %v8990 = vsel %vm6606, %v8958, 0
  %v8993 = vsel %vm6606, %v8959, 0
  %v8996 = vsel %vm6606, %v8960, 0
  %v8999 = vsel %vm6606, %v8961, 0
  %v9002 = vsel %vm6606, %v8962, 0
  %v9005 = vsel %vm6606, %v8963, 0
  %v9008 = vsel %vm6606, %v8964, 0
  %v9011 = vsel %vm6606, %v8965, 0
  %v9014 = vsel %vm6606, %v8966, 0
  %v9017 = vsel %vm6606, %v8967, 0
  %v9020 = vsel %vm6606, %v8968, 0
  %v9023 = vsel %vm6606, %v8969, 0
  %v9026 = vsel %vm6606, %v8970, 0
  %v9029 = vsel %vm6606, %v8971, 0
  %v9032 = vsel %vm6606, %v8972, 0
  %v9035 = vsel %vm6606, %v8973, 0
  %9037 = vmatprep.subr.mxu0 0.0
  %9038 = vmatpush1.msra.mxu0 %v8975
  %9039 = vmatprep.subr.mxu0 0.0
  %9040 = vmatpush1.msra.mxu0 %v8976
  %9041 = vmatprep.subr.mxu0 0.0
  %9042 = vmatpush1.msra.mxu0 %v8977
  %9043 = vmatprep.subr.mxu0 0.0
  %9044 = vmatpush1.msra.mxu0 %v8978
  %9045 = vmatprep.subr.mxu0 0.0
  %9046 = vmatpush1.msra.mxu0 %v8979
  %9047 = vmatprep.subr.mxu0 0.0
  %9048 = vmatpush1.msra.mxu0 %v8980
  %9049 = vmatprep.subr.mxu0 0.0
  %9050 = vmatpush1.msra.mxu0 %v8981
  %9051 = vmatprep.subr.mxu0 0.0
  %9052 = vmatpush1.msra.mxu0 %v8982
  %9053 = vmatprep.subr.mxu0 0.0
  %9054 = vmatpush1.msra.mxu0 0.0
  %9055 = vmatprep.subr.mxu0 0.0
  %9056 = vmatpush1.msra.mxu0 0.0
  %9057 = vmatprep.subr.mxu0 0.0
  %9058 = vmatpush1.msra.mxu0 0.0
  %9059 = vmatprep.subr.mxu0 0.0
  %9060 = vmatpush1.msra.mxu0 0.0
  %9061 = vmatprep.subr.mxu0 0.0
  %9062 = vmatpush1.msra.mxu0 0.0
  %9063 = vmatprep.subr.mxu0 0.0
  %9064 = vmatpush1.msra.mxu0 0.0
  %9065 = vmatprep.subr.mxu0 0.0
  %9066 = vmatpush1.msra.mxu0 0.0
  %9067 = vmatprep.subr.mxu0 0.0
  %9068 = vmatpush1.msra.mxu0 0.0
  %9069 = vmatprep.subr.mxu0 0.0
  %9070 = vmatpush1.msra.mxu0 0.0
  %9071 = vmatprep.subr.mxu0 0.0
  %9072 = vmatpush1.msra.mxu0 0.0
  %9073 = vmatprep.subr.mxu0 0.0
  %9074 = vmatpush1.msra.mxu0 0.0
  %9075 = vmatprep.subr.mxu0 0.0
  %9076 = vmatpush1.msra.mxu0 0.0
  %9077 = vmatprep.subr.mxu0 0.0
  %9078 = vmatpush1.msra.mxu0 0.0
  %9079 = vmatprep.subr.mxu0 0.0
  %9080 = vmatpush1.msra.mxu0 0.0
  %9081 = vmatprep.subr.mxu0 0.0
  %9082 = vmatpush1.msra.mxu0 0.0
  %9083 = vmatprep.subr.mxu0 0.0
  %9084 = vmatpush1.msra.mxu0 0.0
  %9085 = vmatprep.subr.mxu0 0.0
  %9086 = vmatpush1.msra.mxu0 0.0
  %9087 = vmatprep.subr.mxu0 0.0
  %9088 = vmatpush1.msra.mxu0 0.0
  %9089 = vmatprep.subr.mxu0 0.0
  %9090 = vmatpush1.msra.mxu0 0.0
  %9091 = vmatprep.subr.mxu0 0.0
  %9092 = vmatpush1.msra.mxu0 0.0
  %9093 = vmatprep.subr.mxu0 0.0
  %9094 = vmatpush1.msra.mxu0 0.0
  %9095 = vmatprep.subr.mxu0 0.0
  %9096 = vmatpush1.msra.mxu0 0.0
  %9097 = vmatprep.subr.mxu0 0.0
  %9098 = vmatpush1.msra.mxu0 0.0
  %9099 = vmatprep.subr.mxu0 0.0
  %9100 = vmatpush1.msra.mxu0 0.0
  %9101 = vmatprep.mubr.f32.mxu0 0.0
  %9102 = vmatmul.mubr.f32.gmra.mrb[0].mxu0 %v8984
  %v9103 = vpop.f32.mrb[0].mxu0
  %v9104 = vadd.f32 0.0, %v9103
  %v9105 = vpop.f32.mrb[0].mxu0
  %9106 = vmatprep.mubr.f32.mxu0 0.0
  %9107 = vmatmul.mubr.f32.gmra.mrb[0].mxu0 %v8987
  %v9108 = vpop.f32.mrb[0].mxu0
  %v9109 = vadd.f32 0.0, %v9108
  %v9110 = vpop.f32.mrb[0].mxu0
  %9111 = vmatprep.mubr.f32.mxu0 0.0
  %9112 = vmatmul.mubr.f32.gmra.mrb[0].mxu0 %v8990
  %v9113 = vpop.f32.mrb[0].mxu0
  %v9114 = vadd.f32 0.0, %v9113
  %v9115 = vpop.f32.mrb[0].mxu0
  %9116 = vmatprep.mubr.f32.mxu0 0.0
  %9117 = vmatmul.mubr.f32.gmra.mrb[0].mxu0 %v8993
  %v9118 = vpop.f32.mrb[0].mxu0
  %v9119 = vadd.f32 0.0, %v9118
  %v9120 = vpop.f32.mrb[0].mxu0
  %9121 = vmatprep.mubr.f32.mxu0 0.0
  %9122 = vmatmul.mubr.f32.gmra.mrb[0].mxu0 %v8996
  %v9123 = vpop.f32.mrb[0].mxu0
  %v9124 = vadd.f32 0.0, %v9123
  %v9125 = vpop.f32.mrb[0].mxu0
  %9126 = vmatprep.mubr.f32.mxu0 0.0
  %9127 = vmatmul.mubr.f32.gmra.mrb[0].mxu0 %v8999
  %v9128 = vpop.f32.mrb[0].mxu0
  %v9129 = vadd.f32 0.0, %v9128
  %v9130 = vpop.f32.mrb[0].mxu0
  %9131 = vmatprep.mubr.f32.mxu0 0.0
  %9132 = vmatmul.mubr.f32.gmra.mrb[0].mxu0 %v9002
  %v9133 = vpop.f32.mrb[0].mxu0
  %v9134 = vadd.f32 0.0, %v9133
  %v9135 = vpop.f32.mrb[0].mxu0
  %9136 = vmatprep.mubr.f32.mxu0 0.0
  %9137 = vmatmul.mubr.f32.gmra.mrb[0].mxu0 %v9005
  %v9138 = vpop.f32.mrb[0].mxu0
  %v9139 = vadd.f32 0.0, %v9138
  %v9140 = vpop.f32.mrb[0].mxu0
  %9141 = vmatprep.mubr.f32.mxu0 0.0
  %9142 = vmatmul.mubr.f32.gmra.mrb[0].mxu0 %v9008
  %v9143 = vpop.f32.mrb[0].mxu0
  %v9144 = vadd.f32 0.0, %v9143
  %v9145 = vpop.f32.mrb[0].mxu0
  %9146 = vmatprep.mubr.f32.mxu0 0.0
  %9147 = vmatmul.mubr.f32.gmra.mrb[0].mxu0 %v9011
  %v9148 = vpop.f32.mrb[0].mxu0
  %v9149 = vadd.f32 0.0, %v9148
  %v9150 = vpop.f32.mrb[0].mxu0
  %9151 = vmatprep.mubr.f32.mxu0 0.0
  %9152 = vmatmul.mubr.f32.gmra.mrb[0].mxu0 %v9014
  %v9153 = vpop.f32.mrb[0].mxu0
  %v9154 = vadd.f32 0.0, %v9153
  %v9155 = vpop.f32.mrb[0].mxu0
  %9156 = vmatprep.mubr.f32.mxu0 0.0
  %9157 = vmatmul.mubr.f32.gmra.mrb[0].mxu0 %v9017
  %v9158 = vpop.f32.mrb[0].mxu0
  %v9159 = vadd.f32 0.0, %v9158
  %v9160 = vpop.f32.mrb[0].mxu0
  %9161 = vmatprep.mubr.f32.mxu0 0.0
  %9162 = vmatmul.mubr.f32.gmra.mrb[0].mxu0 %v9020
  %v9163 = vpop.f32.mrb[0].mxu0
  %v9164 = vadd.f32 0.0, %v9163
  %v9165 = vpop.f32.mrb[0].mxu0
  %9166 = vmatprep.mubr.f32.mxu0 0.0
  %9167 = vmatmul.mubr.f32.gmra.mrb[0].mxu0 %v9023
  %v9168 = vpop.f32.mrb[0].mxu0
  %v9169 = vadd.f32 0.0, %v9168
  %v9170 = vpop.f32.mrb[0].mxu0
  %9171 = vmatprep.mubr.f32.mxu0 0.0
  %9172 = vmatmul.mubr.f32.gmra.mrb[0].mxu0 %v9026
  %v9173 = vpop.f32.mrb[0].mxu0
  %v9174 = vadd.f32 0.0, %v9173
  %v9175 = vpop.f32.mrb[0].mxu0
  %9176 = vmatprep.mubr.f32.mxu0 0.0
  %9177 = vmatmul.mubr.f32.gmra.mrb[0].mxu0 %v9029
  %v9178 = vpop.f32.mrb[0].mxu0
  %v9179 = vadd.f32 0.0, %v9178
  %v9180 = vpop.f32.mrb[0].mxu0
  %9181 = vmatprep.mubr.f32.mxu0 0.0
  %9182 = vmatmul.mubr.f32.gmra.mrb[0].mxu0 %v9032
  %v9183 = vpop.f32.mrb[0].mxu0
  %v9184 = vadd.f32 0.0, %v9183
  %v9185 = vpop.f32.mrb[0].mxu0
  %9186 = vmatprep.mubr.f32.mxu0 0.0
  %9187 = vmatmul.mubr.f32.gmra.mrb[0].mxu0 %v9035
  %v9188 = vpop.f32.mrb[0].mxu0
  %v9189 = vadd.f32 0.0, %v9188
  %v9190 = vpop.f32.mrb[0].mxu0
  %9191 = vdwg.mxu0
  %v9192 = vadd.f32 %v8938, %v9104
  %v9193 = vadd.f32 %v8939, %v9109
  %v9194 = vadd.f32 %v8940, %v9114
  %v9195 = vadd.f32 %v8941, %v9119
  %v9196 = vadd.f32 %v8942, %v9124
  %v9197 = vadd.f32 %v8943, %v9129
  %v9198 = vadd.f32 %v8944, %v9134
  %v9199 = vadd.f32 %v8945, %v9139
  %v9200 = vadd.f32 %v8946, %v9144
  %v9201 = vadd.f32 %v8947, %v9149
  %v9202 = vadd.f32 %v8948, %v9154
  %v9203 = vadd.f32 %v8949, %v9159
  %v9204 = vadd.f32 %v8950, %v9164
  %v9205 = vadd.f32 %v8951, %v9169
  %v9206 = vadd.f32 %v8952, %v9174
  %v9207 = vadd.f32 %v8953, %v9179
  %v9208 = vadd.f32 %v8954, %v9184
  %v9209 = vadd.f32 %v8955, %v9189
  %v9210 = vld [vmem:[%s4] sm:$0x1]
  %v9212 = vlaneseq
  %v9213 = vshrl.u32 %v9212, 7
  %v9214 = vsub.s32 0, %v9213
  %v9215 = vrot.slane %v9210, %v9214
  %v9217 = vadd.f32 %v9192, %v9215
  %v9218 = vadd.f32 %v9193, %v9215
  %v9219 = vadd.f32 %v9194, %v9215
  %v9220 = vadd.f32 %v9195, %v9215
  %v9221 = vadd.f32 %v9196, %v9215
  %v9222 = vadd.f32 %v9197, %v9215
  %v9223 = vadd.f32 %v9198, %v9215
  %v9224 = vadd.f32 %v9199, %v9215
  %v9225 = vadd.f32 %v9200, %v9215
  %v9226 = vadd.f32 %v9201, %v9215
  %v9227 = vadd.f32 %v9202, %v9215
  %v9228 = vadd.f32 %v9203, %v9215
  %v9229 = vadd.f32 %v9204, %v9215
  %v9230 = vadd.f32 %v9205, %v9215
  %v9231 = vadd.f32 %v9206, %v9215
  %v9232 = vadd.f32 %v9207, %v9215
  %v9233 = vadd.f32 %v9208, %v9215
  %v9234 = vadd.f32 %v9209, %v9215
  %v9235 = vmax.f32 %v9217, 0.0
  %v9236 = vmax.f32 %v9218, 0.0
  %v9237 = vmax.f32 %v9219, 0.0
  %v9238 = vmax.f32 %v9220, 0.0
  %v9239 = vmax.f32 %v9221, 0.0
  %v9240 = vmax.f32 %v9222, 0.0
  %v9241 = vmax.f32 %v9223, 0.0
  %v9242 = vmax.f32 %v9224, 0.0
  %v9243 = vmax.f32 %v9225, 0.0
  %v9244 = vmax.f32 %v9226, 0.0
  %v9245 = vmax.f32 %v9227, 0.0
  %v9246 = vmax.f32 %v9228, 0.0
  %v9247 = vmax.f32 %v9229, 0.0
  %v9248 = vmax.f32 %v9230, 0.0
  %v9249 = vmax.f32 %v9231, 0.0
  %v9250 = vmax.f32 %v9232, 0.0
  %v9251 = vmax.f32 %v9233, 0.0
  %v9252 = vmax.f32 %v9234, 0.0
  %9253 = vst [vmem:[#allocation4] sm:$0xff] %v9235
  %9254 = vst [vmem:[#allocation4 + $0x8] sm:$0xff] %v9236
  %9255 = vst [vmem:[#allocation4 + $0x10] sm:$0xff] %v9237
  %9256 = vst [vmem:[#allocation4 + $0x18] sm:$0xff] %v9238
  %9257 = vst [vmem:[#allocation4 + $0x20] sm:$0xff] %v9239
  %9258 = vst [vmem:[#allocation4 + $0x28] sm:$0xff] %v9240
  %9259 = vst [vmem:[#allocation4 + $0x30] sm:$0xff] %v9241
  %9260 = vst [vmem:[#allocation4 + $0x38] sm:$0xff] %v9242
  %9261 = vst [vmem:[#allocation4 + $0x40] sm:$0xff] %v9243
  %9262 = vst [vmem:[#allocation4 + $0x48] sm:$0xff] %v9244
  %9263 = vst [vmem:[#allocation4 + $0x50] sm:$0xff] %v9245
  %9264 = vst [vmem:[#allocation4 + $0x58] sm:$0xff] %v9246
  %9265 = vst [vmem:[#allocation4 + $0x60] sm:$0xff] %v9247
  %9266 = vst [vmem:[#allocation4 + $0x68] sm:$0xff] %v9248
  %9267 = vst [vmem:[#allocation4 + $0x70] sm:$0xff] %v9249
  %9268 = vst [vmem:[#allocation4 + $0x78] sm:$0xff] %v9250
  %9269 = vst [vmem:[#allocation4 + $0x80] sm:$0xff] %v9251
  %9270 = vst [vmem:[#allocation4 + $0x88] sm:$0xff] %v9252
  %v9271 = vld [vmem:[#allocation4] ss:$2 sm:$0xf]
  %s9272 = scalar_lea.vmem [#allocation4], 1
  %v9273 = vld [vmem:[%s9272] ss:$2 sm:$0xf]
  %s9274 = scalar_lea.vmem [#allocation4], 16
  %v9275 = vld [vmem:[%s9274] ss:$2 sm:$0xf]
  %s9276 = scalar_lea.vmem [#allocation4], 17
  %v9277 = vld [vmem:[%s9276] ss:$2 sm:$0xf]
  %v9278 = vmax.f32 %v9271, %v9273
  %v9279 = vmax.f32 %v9275, %v9277
  %v9280 = vmax.f32 %v9278, %v9279
  %v9281 = vld [vmem:[%s5] sm:$0xf]
  %v9282 = vmul.f32 %v9280, %v9281
  %v9283 = vadd.f32 %v9282, 0.0
  %s9284 = scalar_lea.vmem [#allocation4], 32
  %v9285 = vld [vmem:[%s9284] ss:$2 sm:$0xf]
  %s9286 = scalar_lea.vmem [#allocation4], 33
  %v9287 = vld [vmem:[%s9286] ss:$2 sm:$0xf]
  %s9288 = scalar_lea.vmem [#allocation4], 48
  %v9289 = vld [vmem:[%s9288] ss:$2 sm:$0xf]
  %s9290 = scalar_lea.vmem [#allocation4], 49
  %v9291 = vld [vmem:[%s9290] ss:$2 sm:$0xf]
  %v9292 = vmax.f32 %v9285, %v9287
  %v9293 = vmax.f32 %v9289, %v9291
  %v9294 = vmax.f32 %v9292, %v9293
  %v9295 = vld [vmem:[%s5 + $0x4] sm:$0xf]
  %v9296 = vmul.f32 %v9294, %v9295
  %v9297 = vadd.f32 %v9283, %v9296
  %s9298 = scalar_lea.vmem [#allocation4], 64
  %v9299 = vld [vmem:[%s9298] ss:$2 sm:$0xf]
  %s9300 = scalar_lea.vmem [#allocation4], 65
  %v9301 = vld [vmem:[%s9300] ss:$2 sm:$0xf]
  %s9302 = scalar_lea.vmem [#allocation4], 80
  %v9303 = vld [vmem:[%s9302] ss:$2 sm:$0xf]
  %s9304 = scalar_lea.vmem [#allocation4], 81
  %v9305 = vld [vmem:[%s9304] ss:$2 sm:$0xf]
  %v9306 = vmax.f32 %v9299, %v9301
  %v9307 = vmax.f32 %v9303, %v9305
  %v9308 = vmax.f32 %v9306, %v9307
  %v9309 = vld [vmem:[%s5 + $0x8] sm:$0xf]
  %v9310 = vmul.f32 %v9308, %v9309
  %v9311 = vadd.f32 %v9297, %v9310
  %s9312 = scalar_lea.vmem [#allocation4], 96
  %v9313 = vld [vmem:[%s9312] ss:$2 sm:$0xf]
  %s9314 = scalar_lea.vmem [#allocation4], 97
  %v9315 = vld [vmem:[%s9314] ss:$2 sm:$0xf]
  %s9316 = scalar_lea.vmem [#allocation4], 112
  %v9317 = vld [vmem:[%s9316] ss:$2 sm:$0xf]
  %s9318 = scalar_lea.vmem [#allocation4], 113
  %v9319 = vld [vmem:[%s9318] ss:$2 sm:$0xf]
  %v9320 = vmax.f32 %v9313, %v9315
  %v9321 = vmax.f32 %v9317, %v9319
  %v9322 = vmax.f32 %v9320, %v9321
  %v9323 = vld [vmem:[%s5 + $0xc] sm:$0xf]
  %v9324 = vmul.f32 %v9322, %v9323
  %v9325 = vadd.f32 %v9311, %v9324
  %vm9326 = vcmask 1043456
  %v9327 = vsel %vm9326, %v9325, 0.0
  %v9328 = vrot.slane %v9327, 4
  %v9329 = vadd.f32 %v9327, %v9328
  %v9330 = vrot.slane %v9329, 2
  %v9331 = vadd.f32 %v9329, %v9330
  %v9332 = vrot.slane %v9331, 1
  %v9333 = vadd.f32 %v9331, %v9332
  %9334 = vadd.xlane.f32.xlu0 %v9333
  %v9335 = vpop.xlane.xlu0 %9334
  %v9336 = vld [vmem:[#allocation5] sm:$0x1]
  %v9337 = vadd.f32 %v9335, %v9336
  %v9339 = vlaneseq
  %v9340 = vshrl.u32 %v9339, 7
  %v9341 = vsub.s32 0, %v9340
  %v9342 = vrot.slane %v9337, %v9341
  %9343 = vset.pattern.permute.xlu0 0
  %9344 = vperm.xlu0 %9343, %v9342
  %v9345 = vpop.permute.xlu0 %9344
  %9347 = vst [vmem:[%s7] sm:$0xff] %v9345
  // Predicated region
  $region30: #{image_evaluator_forward.1} parent=0 // pred_check
    _
  $region31: #{image_evaluator_forward.1} parent=0 // pred_check_branch
    %9349 = sbr.rel (0) target = $region33
  $region32: #{image_evaluator_forward.1} parent=0 // pred_region
    _
  $region33: #{image_evaluator_forward.1} parent=0 // pred_fallthru
    _
  // Predicated region
  $region34: #{image_evaluator_forward.1} parent=0 // pred_check
    _
  $region35: #{image_evaluator_forward.1} parent=0 // pred_check_branch
    %9351 = sbr.rel (0) target = $region37
  $region36: #{image_evaluator_forward.1} parent=0 // pred_region
    _
  $region37: #{image_evaluator_forward.1} parent=0 // pred_fallthru
    _

</llo_original>
